<compile_context>
chip_gen: v7x
topology: tpu7x:2x2x1
jax: 0.10.0
libtpu: 0.0.40
codegen_flags: <defaults>
</compile_context>

<pallas_src>
import functools

import jax
import jax.numpy as jnp
import numpy as np
from jax.experimental import pallas as pl
from jax.experimental.pallas import tpu as pltpu


# ----------------------------------------------------------------------------
# Trace-time constant builders (static architecture -> tiny constant matrices)
# ----------------------------------------------------------------------------
def _row_select_np(B, Li, Lo, K, stride, pad):
    """0/1 selection stack: S[k, b*Lo+lo, b*Li+li] = 1 iff li == lo*stride + k - pad (in range)."""
    S = np.zeros((K, B * Lo, B * Li), np.float32)
    for k in range(K):
        for b in range(B):
            for lo in range(Lo):
                li = lo * stride + k - pad
                if 0 <= li < Li:
                    S[k, b * Lo + lo, b * Li + li] = 1.0
    return S


def _avg_matrix(B, L):
    """Global-average-pool matrix: pooled (B, C) = A (B, B*L) @ x (B*L, C)."""
    A = np.zeros((B, B * L), np.float32)
    for b in range(B):
        A[b, b * L:(b + 1) * L] = 1.0 / L
    return jnp.asarray(A)


def _bn_fold(w, bn, eps=1e-5):
    """Conv weight (Co, Ci, K) + eval-mode BN -> scaled taps (K, Ci, Co) and bias (1, Co)."""
    scale = bn["gamma"] / jnp.sqrt(bn["var"] + eps)                 # (Co,)
    bias = (bn["beta"] - bn["mean"] * scale).reshape(1, -1)         # (1, Co)
    w_taps = jnp.transpose(w, (2, 1, 0)) * scale[None, None, :]     # (K, Ci, Co)
    return w_taps.astype(jnp.float32), bias.astype(jnp.float32)


# ----------------------------------------------------------------------------
# Fused whole-network Pallas kernel
# ----------------------------------------------------------------------------
def _conv_apply(x, s_ref, w_ref, b_ref, K, relu, identity_taps=None, residual=None):
    """Conv1d + folded-BN (+ residual) (+ ReLU) on a VMEM-resident activation x: (Mi, Ci)."""
    y = None
    for k in range(K):
        if identity_taps is not None and identity_taps[k]:
            xk = x                                                   # S_k == I: skip gather matmul
        else:
            xk = jnp.dot(s_ref[k], x, preferred_element_type=jnp.float32)   # (Mo, Ci) row gather
        t = jnp.dot(xk, w_ref[k], preferred_element_type=jnp.float32)       # (Mo, Co)
        y = t if y is None else y + t
    y = y + b_ref[...]
    if residual is not None:
        y = y + residual
    if relu:
        y = jnp.maximum(y, 0.0)
    return y


def _make_fused_kernel(plan):
    """Build the whole-network kernel body from the static layer plan."""

    def kernel(*refs):
        x_ref, out_ref = refs[0], refs[-1]
        op_refs = refs[1:-1]
        pos = 0

        def take(n):
            nonlocal pos
            r = op_refs[pos:pos + n]
            pos += n
            return r

        x = x_ref[...].astype(jnp.float32)           # (B*L, C_in) rows-of-positions
        for step in plan:
            kind = step[0]
            if kind == "conv":
                _, K, relu, ident = step
                s, w, b = take(3)
                x = _conv_apply(x, s, w, b, K, relu=relu, identity_taps=ident)
            elif kind == "maxpool":
                (s,) = take(1)
                # zero-fill of padded taps == -inf padding here since x >= 0 (post-ReLU)
                y = jnp.dot(s[0], x, preferred_element_type=jnp.float32)
                y = jnp.maximum(y, jnp.dot(s[1], x, preferred_element_type=jnp.float32))
                y = jnp.maximum(y, jnp.dot(s[2], x, preferred_element_type=jnp.float32))
                x = y
            elif kind == "block":
                _, has_down, K1, K2, identd, ident1, ident2 = step
                if has_down:
                    sd, wd, bd = take(3)
                    identity = _conv_apply(x, sd, wd, bd, 1, relu=False, identity_taps=identd)
                else:
                    identity = x
                s1, w1, b1 = take(3)
                s2, w2, b2 = take(3)
                h = _conv_apply(x, s1, w1, b1, K1, relu=True, identity_taps=ident1)
                x = _conv_apply(h, s2, w2, b2, K2, relu=True, identity_taps=ident2,
                                residual=identity)
            else:  # "head": adaptive avg pool + flatten + dropout(eval=id) + fc
                a, wfc, bfc = take(3)
                pooled = jnp.dot(a[...], x, preferred_element_type=jnp.float32)        # (B, C)
                x = jnp.dot(pooled, wfc[...], preferred_element_type=jnp.float32) + bfc[...]
        out_ref[...] = x.astype(out_ref.dtype)

    return kernel


# ----------------------------------------------------------------------------
# Forward wrapper: builds operands + static plan, launches one pallas_call
# ----------------------------------------------------------------------------
def resnet1d_small_forward(x, params, arch):
    """x: (B, C_in, L) NCL -> logits (B, num_classes).  `arch` is static Python config."""
    B, C_in, L = x.shape
    num_classes = params["fc_w"].shape[0]

    # The only layout shuffle of the whole forward: NCL -> rows-of-positions (B*L, C_in).
    x_rows = jnp.transpose(x, (0, 2, 1)).reshape(B * L, C_in).astype(jnp.float32)

    operands = []
    plan = []

    def add_conv(w, bn, Li, stride, pad):
        Co, Ci, K = w.shape
        Lo = (Li + 2 * pad - K) // stride + 1
        S = _row_select_np(B, Li, Lo, K, stride, pad)
        ident = tuple(
            bool(Lo == Li and np.array_equal(S[k], np.eye(B * Li, dtype=np.float32)))
            for k in range(K))
        w_taps, bias = _bn_fold(w, bn)
        operands.extend([jnp.asarray(S), w_taps, bias])
        return K, Lo, ident

    # --- stem: conv1 + bn1 + relu ---
    K, Lc, ident = add_conv(params["conv1_w"], params["bn1"], L,
                            stride=arch["first_stride"], pad=arch["first_pad"])
    plan.append(("conv", K, True, ident))

    # --- maxpool(kernel=3, stride=2, padding=1) ---
    Lp = (Lc + 2 - 3) // 2 + 1
    operands.append(jnp.asarray(_row_select_np(B, Lc, Lp, 3, 2, 1)))
    plan.append(("maxpool",))
    Lc = Lp

    # --- residual BasicBlocks ---
    for blk, binfo in zip(params["blocks"], arch["blocks"]):
        stride, has_down = binfo["stride"], binfo["has_down"]
        identd = None
        if has_down:
            _, _, identd = add_conv(blk["down_w"], blk["down_bn"], Lc, stride=stride, pad=0)
        K1, Lo, ident1 = add_conv(blk["w1"], blk["bn1"], Lc, stride=stride, pad=1)
        K2, _, ident2 = add_conv(blk["w2"], blk["bn2"], Lo, stride=1, pad=1)
        plan.append(("block", has_down, K1, K2, identd, ident1, ident2))
        Lc = Lo

    # --- head: AdaptiveAvgPool1d(1) + flatten + dropout(eval=id) + fc ---
    operands.extend([
        _avg_matrix(B, Lc),
        params["fc_w"].T.astype(jnp.float32),
        params["fc_b"].reshape(1, num_classes).astype(jnp.float32),
    ])
    plan.append(("head",))

    vmem = pl.BlockSpec(memory_space=pltpu.MemorySpace.VMEM)
    return pl.pallas_call(
        _make_fused_kernel(tuple(plan)),
        out_shape=jax.ShapeDtypeStruct((B, num_classes), jnp.float32),
        in_specs=[vmem] * (1 + len(operands)),
        out_specs=vmem,
    )(x_rows, *operands)


# ----------------------------------------------------------------------------
# Parameter init (matches PyTorch module structure; arch is returned separately so it
# stays static under jit)
# ----------------------------------------------------------------------------
def _init_conv(key, c_out, c_in, k):
    std = (2.0 / (c_out * k)) ** 0.5   # kaiming_normal_(mode='fan_out', nonlinearity='relu')
    return std * jax.random.normal(key, (c_out, c_in, k), jnp.float32)


def _init_bn(key, c):
    k1, k2, k3, k4 = jax.random.split(key, 4)
    return {
        "gamma": 1.0 + 0.1 * jax.random.normal(k1, (c,), jnp.float32),
        "beta": 0.1 * jax.random.normal(k2, (c,), jnp.float32),
        "mean": 0.05 * jax.random.normal(k3, (c,), jnp.float32),
        "var": 1.0 + 0.1 * jnp.abs(jax.random.normal(k4, (c,), jnp.float32)),
    }


def _make_block_params(key, inplanes, planes, stride):
    k1, k2, k3, k4, k5, k6 = jax.random.split(key, 6)
    p = {
        "w1": _init_conv(k1, planes, inplanes, 3),
        "bn1": _init_bn(k2, planes),
        "w2": _init_conv(k3, planes, planes, 3),
        "bn2": _init_bn(k4, planes),
    }
    if stride != 1 or inplanes != planes:
        p["down_w"] = _init_conv(k5, planes, inplanes, 1)
        p["down_bn"] = _init_bn(k6, planes)
    return p


def build_model(key, in_channels=3, first_layer_channels=16, first_layer_kernel_size=7,
                layer_size_multiplier=(1, 1, 2, 2), layers=(1, 1, 1, 1), num_classes=10):
    """Returns (params pytree of arrays, static architecture description)."""
    n_channels = [first_layer_channels] + [int(first_layer_channels * m)
                                           for m in layer_size_multiplier]
    keys = jax.random.split(key, 5)
    params = {
        "conv1_w": _init_conv(keys[0], first_layer_channels, in_channels,
                              first_layer_kernel_size),
        "bn1": _init_bn(keys[1], first_layer_channels),
        "blocks": [],
    }
    arch = {"first_stride": 2, "first_pad": 3, "blocks": []}
    inplanes = first_layer_channels
    layer_strides = (1, 2, 2, 2)
    bkeys = jax.random.split(keys[2], sum(layers))
    bidx = 0
    for li in range(4):
        planes = n_channels[li + 1]
        for j in range(layers[li]):
            s = layer_strides[li] if j == 0 else 1
            params["blocks"].append(_make_block_params(bkeys[bidx], inplanes, planes, s))
            arch["blocks"].append({"stride": s, "has_down": (s != 1 or inplanes != planes)})
            inplanes = planes
            bidx += 1
    c_final = n_channels[4]
    params["fc_w"] = (1.0 / (c_final ** 0.5)) * jax.random.normal(
        keys[3], (num_classes, c_final), jnp.float32)
    params["fc_b"] = (1.0 / (c_final ** 0.5)) * jax.random.normal(
        keys[4], (num_classes,), jnp.float32)
    return params, arch


# ----------------------------------------------------------------------------
if __name__ == "__main__":
    key = jax.random.PRNGKey(0)
    kx, kp = jax.random.split(key)

    B, C_in, L = 2, 3, 64
    x = jax.random.normal(kx, (B, C_in, L), jnp.float32)
    params, arch = build_model(kp, in_channels=C_in, first_layer_channels=16,
                               layers=(1, 1, 1, 1), num_classes=10)

    fwd = jax.jit(functools.partial(resnet1d_small_forward, arch=arch))
    out = fwd(x, params)
    jax.block_until_ready(out)
    assert out.shape == (B, 10)
    assert bool(jnp.all(jnp.isfinite(out)))
    print("KERNEL_OK")
</pallas_src>

<mosaic_0001>
module attributes {stable_mosaic.version = 11 : i64} {
  func.func @kernel(%arg0: memref<128x3xf32, #tpu.memory_space<vmem>>, %arg1: memref<7x64x128xf32, #tpu.memory_space<vmem>>, %arg2: memref<7x3x16xf32, #tpu.memory_space<vmem>>, %arg3: memref<1x16xf32, #tpu.memory_space<vmem>>, %arg4: memref<3x32x64xf32, #tpu.memory_space<vmem>>, %arg5: memref<3x32x32xf32, #tpu.memory_space<vmem>>, %arg6: memref<3x16x16xf32, #tpu.memory_space<vmem>>, %arg7: memref<1x16xf32, #tpu.memory_space<vmem>>, %arg8: memref<3x32x32xf32, #tpu.memory_space<vmem>>, %arg9: memref<3x16x16xf32, #tpu.memory_space<vmem>>, %arg10: memref<1x16xf32, #tpu.memory_space<vmem>>, %arg11: memref<1x16x32xf32, #tpu.memory_space<vmem>>, %arg12: memref<1x16x16xf32, #tpu.memory_space<vmem>>, %arg13: memref<1x16xf32, #tpu.memory_space<vmem>>, %arg14: memref<3x16x32xf32, #tpu.memory_space<vmem>>, %arg15: memref<3x16x16xf32, #tpu.memory_space<vmem>>, %arg16: memref<1x16xf32, #tpu.memory_space<vmem>>, %arg17: memref<3x16x16xf32, #tpu.memory_space<vmem>>, %arg18: memref<3x16x16xf32, #tpu.memory_space<vmem>>, %arg19: memref<1x16xf32, #tpu.memory_space<vmem>>, %arg20: memref<1x8x16xf32, #tpu.memory_space<vmem>>, %arg21: memref<1x16x32xf32, #tpu.memory_space<vmem>>, %arg22: memref<1x32xf32, #tpu.memory_space<vmem>>, %arg23: memref<3x8x16xf32, #tpu.memory_space<vmem>>, %arg24: memref<3x16x32xf32, #tpu.memory_space<vmem>>, %arg25: memref<1x32xf32, #tpu.memory_space<vmem>>, %arg26: memref<3x8x8xf32, #tpu.memory_space<vmem>>, %arg27: memref<3x32x32xf32, #tpu.memory_space<vmem>>, %arg28: memref<1x32xf32, #tpu.memory_space<vmem>>, %arg29: memref<1x4x8xf32, #tpu.memory_space<vmem>>, %arg30: memref<1x32x32xf32, #tpu.memory_space<vmem>>, %arg31: memref<1x32xf32, #tpu.memory_space<vmem>>, %arg32: memref<3x4x8xf32, #tpu.memory_space<vmem>>, %arg33: memref<3x32x32xf32, #tpu.memory_space<vmem>>, %arg34: memref<1x32xf32, #tpu.memory_space<vmem>>, %arg35: memref<3x4x4xf32, #tpu.memory_space<vmem>>, %arg36: memref<3x32x32xf32, #tpu.memory_space<vmem>>, %arg37: memref<1x32xf32, #tpu.memory_space<vmem>>, %arg38: memref<2x4xf32, #tpu.memory_space<vmem>>, %arg39: memref<32x10xf32, #tpu.memory_space<vmem>>, %arg40: memref<1x10xf32, #tpu.memory_space<vmem>>, %arg41: memref<2x10xf32, #tpu.memory_space<vmem>>) attributes {dimension_semantics = [], scalar_prefetch = 0 : i64, scratch_operands = 0 : i64, tpu.core_type = #tpu.core_type<tc>} {
    %c0 = arith.constant 0 : index
    %c0_0 = arith.constant 0 : index
    %0 = vector.load %arg0[%c0, %c0_0] : memref<128x3xf32, #tpu.memory_space<vmem>>, vector<128x3xf32>
    %c0_1 = arith.constant 0 : index
    %c0_2 = arith.constant 0 : index
    %c0_3 = arith.constant 0 : index
    %1 = vector.load %arg1[%c0_1, %c0_2, %c0_3] : memref<7x64x128xf32, #tpu.memory_space<vmem>>, vector<1x64x128xf32>
    %2 = vector.shape_cast %1 : vector<1x64x128xf32> to vector<64x128xf32>
    %cst = arith.constant dense<0.000000e+00> : vector<64x3xf32>
    %3 = tpu.matmul %2, %0, %cst {dimension_numbers = #tpu.dot_dimension_numbers<[1], [0], [0], [1], [0, 0, 1, 1], [], []>} : vector<64x128xf32>, vector<128x3xf32>, vector<64x3xf32> -> vector<64x3xf32>
    %c0_4 = arith.constant 0 : index
    %c0_5 = arith.constant 0 : index
    %c0_6 = arith.constant 0 : index
    %4 = vector.load %arg2[%c0_4, %c0_5, %c0_6] : memref<7x3x16xf32, #tpu.memory_space<vmem>>, vector<1x3x16xf32>
    %5 = vector.shape_cast %4 : vector<1x3x16xf32> to vector<3x16xf32>
    %cst_7 = arith.constant dense<0.000000e+00> : vector<64x16xf32>
    %6 = tpu.matmul %3, %5, %cst_7 {dimension_numbers = #tpu.dot_dimension_numbers<[1], [0], [0], [1], [0, 0, 1, 1], [], []>} : vector<64x3xf32>, vector<3x16xf32>, vector<64x16xf32> -> vector<64x16xf32>
    %c1 = arith.constant 1 : index
    %c0_8 = arith.constant 0 : index
    %c0_9 = arith.constant 0 : index
    %7 = vector.load %arg1[%c1, %c0_8, %c0_9] : memref<7x64x128xf32, #tpu.memory_space<vmem>>, vector<1x64x128xf32>
    %8 = vector.shape_cast %7 : vector<1x64x128xf32> to vector<64x128xf32>
    %cst_10 = arith.constant dense<0.000000e+00> : vector<64x3xf32>
    %9 = tpu.matmul %8, %0, %cst_10 {dimension_numbers = #tpu.dot_dimension_numbers<[1], [0], [0], [1], [0, 0, 1, 1], [], []>} : vector<64x128xf32>, vector<128x3xf32>, vector<64x3xf32> -> vector<64x3xf32>
    %c1_11 = arith.constant 1 : index
    %c0_12 = arith.constant 0 : index
    %c0_13 = arith.constant 0 : index
    %10 = vector.load %arg2[%c1_11, %c0_12, %c0_13] : memref<7x3x16xf32, #tpu.memory_space<vmem>>, vector<1x3x16xf32>
    %11 = vector.shape_cast %10 : vector<1x3x16xf32> to vector<3x16xf32>
    %cst_14 = arith.constant dense<0.000000e+00> : vector<64x16xf32>
    %12 = tpu.matmul %9, %11, %cst_14 {dimension_numbers = #tpu.dot_dimension_numbers<[1], [0], [0], [1], [0, 0, 1, 1], [], []>} : vector<64x3xf32>, vector<3x16xf32>, vector<64x16xf32> -> vector<64x16xf32>
    %13 = arith.addf %6, %12 : vector<64x16xf32>
    %c2 = arith.constant 2 : index
    %c0_15 = arith.constant 0 : index
    %c0_16 = arith.constant 0 : index
    %14 = vector.load %arg1[%c2, %c0_15, %c0_16] : memref<7x64x128xf32, #tpu.memory_space<vmem>>, vector<1x64x128xf32>
    %15 = vector.shape_cast %14 : vector<1x64x128xf32> to vector<64x128xf32>
    %cst_17 = arith.constant dense<0.000000e+00> : vector<64x3xf32>
    %16 = tpu.matmul %15, %0, %cst_17 {dimension_numbers = #tpu.dot_dimension_numbers<[1], [0], [0], [1], [0, 0, 1, 1], [], []>} : vector<64x128xf32>, vector<128x3xf32>, vector<64x3xf32> -> vector<64x3xf32>
    %c2_18 = arith.constant 2 : index
    %c0_19 = arith.constant 0 : index
    %c0_20 = arith.constant 0 : index
    %17 = vector.load %arg2[%c2_18, %c0_19, %c0_20] : memref<7x3x16xf32, #tpu.memory_space<vmem>>, vector<1x3x16xf32>
    %18 = vector.shape_cast %17 : vector<1x3x16xf32> to vector<3x16xf32>
    %cst_21 = arith.constant dense<0.000000e+00> : vector<64x16xf32>
    %19 = tpu.matmul %16, %18, %cst_21 {dimension_numbers = #tpu.dot_dimension_numbers<[1], [0], [0], [1], [0, 0, 1, 1], [], []>} : vector<64x3xf32>, vector<3x16xf32>, vector<64x16xf32> -> vector<64x16xf32>
    %20 = arith.addf %13, %19 : vector<64x16xf32>
    %c3 = arith.constant 3 : index
    %c0_22 = arith.constant 0 : index
    %c0_23 = arith.constant 0 : index
    %21 = vector.load %arg1[%c3, %c0_22, %c0_23] : memref<7x64x128xf32, #tpu.memory_space<vmem>>, vector<1x64x128xf32>
    %22 = vector.shape_cast %21 : vector<1x64x128xf32> to vector<64x128xf32>
    %cst_24 = arith.constant dense<0.000000e+00> : vector<64x3xf32>
    %23 = tpu.matmul %22, %0, %cst_24 {dimension_numbers = #tpu.dot_dimension_numbers<[1], [0], [0], [1], [0, 0, 1, 1], [], []>} : vector<64x128xf32>, vector<128x3xf32>, vector<64x3xf32> -> vector<64x3xf32>
    %c3_25 = arith.constant 3 : index
    %c0_26 = arith.constant 0 : index
    %c0_27 = arith.constant 0 : index
    %24 = vector.load %arg2[%c3_25, %c0_26, %c0_27] : memref<7x3x16xf32, #tpu.memory_space<vmem>>, vector<1x3x16xf32>
    %25 = vector.shape_cast %24 : vector<1x3x16xf32> to vector<3x16xf32>
    %cst_28 = arith.constant dense<0.000000e+00> : vector<64x16xf32>
    %26 = tpu.matmul %23, %25, %cst_28 {dimension_numbers = #tpu.dot_dimension_numbers<[1], [0], [0], [1], [0, 0, 1, 1], [], []>} : vector<64x3xf32>, vector<3x16xf32>, vector<64x16xf32> -> vector<64x16xf32>
    %27 = arith.addf %20, %26 : vector<64x16xf32>
    %c4 = arith.constant 4 : index
    %c0_29 = arith.constant 0 : index
    %c0_30 = arith.constant 0 : index
    %28 = vector.load %arg1[%c4, %c0_29, %c0_30] : memref<7x64x128xf32, #tpu.memory_space<vmem>>, vector<1x64x128xf32>
    %29 = vector.shape_cast %28 : vector<1x64x128xf32> to vector<64x128xf32>
    %cst_31 = arith.constant dense<0.000000e+00> : vector<64x3xf32>
    %30 = tpu.matmul %29, %0, %cst_31 {dimension_numbers = #tpu.dot_dimension_numbers<[1], [0], [0], [1], [0, 0, 1, 1], [], []>} : vector<64x128xf32>, vector<128x3xf32>, vector<64x3xf32> -> vector<64x3xf32>
    %c4_32 = arith.constant 4 : index
    %c0_33 = arith.constant 0 : index
    %c0_34 = arith.constant 0 : index
    %31 = vector.load %arg2[%c4_32, %c0_33, %c0_34] : memref<7x3x16xf32, #tpu.memory_space<vmem>>, vector<1x3x16xf32>
    %32 = vector.shape_cast %31 : vector<1x3x16xf32> to vector<3x16xf32>
    %cst_35 = arith.constant dense<0.000000e+00> : vector<64x16xf32>
    %33 = tpu.matmul %30, %32, %cst_35 {dimension_numbers = #tpu.dot_dimension_numbers<[1], [0], [0], [1], [0, 0, 1, 1], [], []>} : vector<64x3xf32>, vector<3x16xf32>, vector<64x16xf32> -> vector<64x16xf32>
    %34 = arith.addf %27, %33 : vector<64x16xf32>
    %c5 = arith.constant 5 : index
    %c0_36 = arith.constant 0 : index
    %c0_37 = arith.constant 0 : index
    %35 = vector.load %arg1[%c5, %c0_36, %c0_37] : memref<7x64x128xf32, #tpu.memory_space<vmem>>, vector<1x64x128xf32>
    %36 = vector.shape_cast %35 : vector<1x64x128xf32> to vector<64x128xf32>
    %cst_38 = arith.constant dense<0.000000e+00> : vector<64x3xf32>
    %37 = tpu.matmul %36, %0, %cst_38 {dimension_numbers = #tpu.dot_dimension_numbers<[1], [0], [0], [1], [0, 0, 1, 1], [], []>} : vector<64x128xf32>, vector<128x3xf32>, vector<64x3xf32> -> vector<64x3xf32>
    %c5_39 = arith.constant 5 : index
    %c0_40 = arith.constant 0 : index
    %c0_41 = arith.constant 0 : index
    %38 = vector.load %arg2[%c5_39, %c0_40, %c0_41] : memref<7x3x16xf32, #tpu.memory_space<vmem>>, vector<1x3x16xf32>
    %39 = vector.shape_cast %38 : vector<1x3x16xf32> to vector<3x16xf32>
    %cst_42 = arith.constant dense<0.000000e+00> : vector<64x16xf32>
    %40 = tpu.matmul %37, %39, %cst_42 {dimension_numbers = #tpu.dot_dimension_numbers<[1], [0], [0], [1], [0, 0, 1, 1], [], []>} : vector<64x3xf32>, vector<3x16xf32>, vector<64x16xf32> -> vector<64x16xf32>
    %41 = arith.addf %34, %40 : vector<64x16xf32>
    %c6 = arith.constant 6 : index
    %c0_43 = arith.constant 0 : index
    %c0_44 = arith.constant 0 : index
    %42 = vector.load %arg1[%c6, %c0_43, %c0_44] : memref<7x64x128xf32, #tpu.memory_space<vmem>>, vector<1x64x128xf32>
    %43 = vector.shape_cast %42 : vector<1x64x128xf32> to vector<64x128xf32>
    %cst_45 = arith.constant dense<0.000000e+00> : vector<64x3xf32>
    %44 = tpu.matmul %43, %0, %cst_45 {dimension_numbers = #tpu.dot_dimension_numbers<[1], [0], [0], [1], [0, 0, 1, 1], [], []>} : vector<64x128xf32>, vector<128x3xf32>, vector<64x3xf32> -> vector<64x3xf32>
    %c6_46 = arith.constant 6 : index
    %c0_47 = arith.constant 0 : index
    %c0_48 = arith.constant 0 : index
    %45 = vector.load %arg2[%c6_46, %c0_47, %c0_48] : memref<7x3x16xf32, #tpu.memory_space<vmem>>, vector<1x3x16xf32>
    %46 = vector.shape_cast %45 : vector<1x3x16xf32> to vector<3x16xf32>
    %cst_49 = arith.constant dense<0.000000e+00> : vector<64x16xf32>
    %47 = tpu.matmul %44, %46, %cst_49 {dimension_numbers = #tpu.dot_dimension_numbers<[1], [0], [0], [1], [0, 0, 1, 1], [], []>} : vector<64x3xf32>, vector<3x16xf32>, vector<64x16xf32> -> vector<64x16xf32>
    %48 = arith.addf %41, %47 : vector<64x16xf32>
    %c0_50 = arith.constant 0 : index
    %c0_51 = arith.constant 0 : index
    %49 = vector.load %arg3[%c0_50, %c0_51] : memref<1x16xf32, #tpu.memory_space<vmem>>, vector<1x16xf32>
    %50 = vector.broadcast %49 : vector<1x16xf32> to vector<64x16xf32>
    %51 = arith.addf %48, %50 : vector<64x16xf32>
    %cst_52 = arith.constant 0.000000e+00 : f32
    %52 = vector.broadcast %cst_52 : f32 to vector<64x16xf32>
    %53 = arith.maximumf %51, %52 : vector<64x16xf32>
    %c0_53 = arith.constant 0 : index
    %c0_54 = arith.constant 0 : index
    %c0_55 = arith.constant 0 : index
    %54 = vector.load %arg4[%c0_53, %c0_54, %c0_55] : memref<3x32x64xf32, #tpu.memory_space<vmem>>, vector<1x32x64xf32>
    %55 = vector.shape_cast %54 : vector<1x32x64xf32> to vector<32x64xf32>
    %cst_56 = arith.constant dense<0.000000e+00> : vector<32x16xf32>
    %56 = tpu.matmul %55, %53, %cst_56 {dimension_numbers = #tpu.dot_dimension_numbers<[1], [0], [0], [1], [0, 0, 1, 1], [], []>} : vector<32x64xf32>, vector<64x16xf32>, vector<32x16xf32> -> vector<32x16xf32>
    %c1_57 = arith.constant 1 : index
    %c0_58 = arith.constant 0 : index
    %c0_59 = arith.constant 0 : index
    %57 = vector.load %arg4[%c1_57, %c0_58, %c0_59] : memref<3x32x64xf32, #tpu.memory_space<vmem>>, vector<1x32x64xf32>
    %58 = vector.shape_cast %57 : vector<1x32x64xf32> to vector<32x64xf32>
    %cst_60 = arith.constant dense<0.000000e+00> : vector<32x16xf32>
    %59 = tpu.matmul %58, %53, %cst_60 {dimension_numbers = #tpu.dot_dimension_numbers<[1], [0], [0], [1], [0, 0, 1, 1], [], []>} : vector<32x64xf32>, vector<64x16xf32>, vector<32x16xf32> -> vector<32x16xf32>
    %60 = arith.maximumf %56, %59 : vector<32x16xf32>
    %c2_61 = arith.constant 2 : index
    %c0_62 = arith.constant 0 : index
    %c0_63 = arith.constant 0 : index
    %61 = vector.load %arg4[%c2_61, %c0_62, %c0_63] : memref<3x32x64xf32, #tpu.memory_space<vmem>>, vector<1x32x64xf32>
    %62 = vector.shape_cast %61 : vector<1x32x64xf32> to vector<32x64xf32>
    %cst_64 = arith.constant dense<0.000000e+00> : vector<32x16xf32>
    %63 = tpu.matmul %62, %53, %cst_64 {dimension_numbers = #tpu.dot_dimension_numbers<[1], [0], [0], [1], [0, 0, 1, 1], [], []>} : vector<32x64xf32>, vector<64x16xf32>, vector<32x16xf32> -> vector<32x16xf32>
    %64 = arith.maximumf %60, %63 : vector<32x16xf32>
    %c0_65 = arith.constant 0 : index
    %c0_66 = arith.constant 0 : index
    %c0_67 = arith.constant 0 : index
    %65 = vector.load %arg5[%c0_65, %c0_66, %c0_67] : memref<3x32x32xf32, #tpu.memory_space<vmem>>, vector<1x32x32xf32>
    %66 = vector.shape_cast %65 : vector<1x32x32xf32> to vector<32x32xf32>
    %cst_68 = arith.constant dense<0.000000e+00> : vector<32x16xf32>
    %67 = tpu.matmul %66, %64, %cst_68 {dimension_numbers = #tpu.dot_dimension_numbers<[1], [0], [0], [1], [0, 0, 1, 1], [], []>} : vector<32x32xf32>, vector<32x16xf32>, vector<32x16xf32> -> vector<32x16xf32>
    %c0_69 = arith.constant 0 : index
    %c0_70 = arith.constant 0 : index
    %c0_71 = arith.constant 0 : index
    %68 = vector.load %arg6[%c0_69, %c0_70, %c0_71] : memref<3x16x16xf32, #tpu.memory_space<vmem>>, vector<1x16x16xf32>
    %69 = vector.shape_cast %68 : vector<1x16x16xf32> to vector<16x16xf32>
    %cst_72 = arith.constant dense<0.000000e+00> : vector<32x16xf32>
    %70 = tpu.matmul %67, %69, %cst_72 {dimension_numbers = #tpu.dot_dimension_numbers<[1], [0], [0], [1], [0, 0, 1, 1], [], []>} : vector<32x16xf32>, vector<16x16xf32>, vector<32x16xf32> -> vector<32x16xf32>
    %c1_73 = arith.constant 1 : index
    %c0_74 = arith.constant 0 : index
    %c0_75 = arith.constant 0 : index
    %71 = vector.load %arg6[%c1_73, %c0_74, %c0_75] : memref<3x16x16xf32, #tpu.memory_space<vmem>>, vector<1x16x16xf32>
    %72 = vector.shape_cast %71 : vector<1x16x16xf32> to vector<16x16xf32>
    %cst_76 = arith.constant dense<0.000000e+00> : vector<32x16xf32>
    %73 = tpu.matmul %64, %72, %cst_76 {dimension_numbers = #tpu.dot_dimension_numbers<[1], [0], [0], [1], [0, 0, 1, 1], [], []>} : vector<32x16xf32>, vector<16x16xf32>, vector<32x16xf32> -> vector<32x16xf32>
    %74 = arith.addf %70, %73 : vector<32x16xf32>
    %c2_77 = arith.constant 2 : index
    %c0_78 = arith.constant 0 : index
    %c0_79 = arith.constant 0 : index
    %75 = vector.load %arg5[%c2_77, %c0_78, %c0_79] : memref<3x32x32xf32, #tpu.memory_space<vmem>>, vector<1x32x32xf32>
    %76 = vector.shape_cast %75 : vector<1x32x32xf32> to vector<32x32xf32>
    %cst_80 = arith.constant dense<0.000000e+00> : vector<32x16xf32>
    %77 = tpu.matmul %76, %64, %cst_80 {dimension_numbers = #tpu.dot_dimension_numbers<[1], [0], [0], [1], [0, 0, 1, 1], [], []>} : vector<32x32xf32>, vector<32x16xf32>, vector<32x16xf32> -> vector<32x16xf32>
    %c2_81 = arith.constant 2 : index
    %c0_82 = arith.constant 0 : index
    %c0_83 = arith.constant 0 : index
    %78 = vector.load %arg6[%c2_81, %c0_82, %c0_83] : memref<3x16x16xf32, #tpu.memory_space<vmem>>, vector<1x16x16xf32>
    %79 = vector.shape_cast %78 : vector<1x16x16xf32> to vector<16x16xf32>
    %cst_84 = arith.constant dense<0.000000e+00> : vector<32x16xf32>
    %80 = tpu.matmul %77, %79, %cst_84 {dimension_numbers = #tpu.dot_dimension_numbers<[1], [0], [0], [1], [0, 0, 1, 1], [], []>} : vector<32x16xf32>, vector<16x16xf32>, vector<32x16xf32> -> vector<32x16xf32>
    %81 = arith.addf %74, %80 : vector<32x16xf32>
    %c0_85 = arith.constant 0 : index
    %c0_86 = arith.constant 0 : index
    %82 = vector.load %arg7[%c0_85, %c0_86] : memref<1x16xf32, #tpu.memory_space<vmem>>, vector<1x16xf32>
    %83 = vector.broadcast %82 : vector<1x16xf32> to vector<32x16xf32>
    %84 = arith.addf %81, %83 : vector<32x16xf32>
    %cst_87 = arith.constant 0.000000e+00 : f32
    %85 = vector.broadcast %cst_87 : f32 to vector<32x16xf32>
    %86 = arith.maximumf %84, %85 : vector<32x16xf32>
    %c0_88 = arith.constant 0 : index
    %c0_89 = arith.constant 0 : index
    %c0_90 = arith.constant 0 : index
    %87 = vector.load %arg8[%c0_88, %c0_89, %c0_90] : memref<3x32x32xf32, #tpu.memory_space<vmem>>, vector<1x32x32xf32>
    %88 = vector.shape_cast %87 : vector<1x32x32xf32> to vector<32x32xf32>
    %cst_91 = arith.constant dense<0.000000e+00> : vector<32x16xf32>
    %89 = tpu.matmul %88, %86, %cst_91 {dimension_numbers = #tpu.dot_dimension_numbers<[1], [0], [0], [1], [0, 0, 1, 1], [], []>} : vector<32x32xf32>, vector<32x16xf32>, vector<32x16xf32> -> vector<32x16xf32>
    %c0_92 = arith.constant 0 : index
    %c0_93 = arith.constant 0 : index
    %c0_94 = arith.constant 0 : index
    %90 = vector.load %arg9[%c0_92, %c0_93, %c0_94] : memref<3x16x16xf32, #tpu.memory_space<vmem>>, vector<1x16x16xf32>
    %91 = vector.shape_cast %90 : vector<1x16x16xf32> to vector<16x16xf32>
    %cst_95 = arith.constant dense<0.000000e+00> : vector<32x16xf32>
    %92 = tpu.matmul %89, %91, %cst_95 {dimension_numbers = #tpu.dot_dimension_numbers<[1], [0], [0], [1], [0, 0, 1, 1], [], []>} : vector<32x16xf32>, vector<16x16xf32>, vector<32x16xf32> -> vector<32x16xf32>
    %c1_96 = arith.constant 1 : index
    %c0_97 = arith.constant 0 : index
    %c0_98 = arith.constant 0 : index
    %93 = vector.load %arg9[%c1_96, %c0_97, %c0_98] : memref<3x16x16xf32, #tpu.memory_space<vmem>>, vector<1x16x16xf32>
    %94 = vector.shape_cast %93 : vector<1x16x16xf32> to vector<16x16xf32>
    %cst_99 = arith.constant dense<0.000000e+00> : vector<32x16xf32>
    %95 = tpu.matmul %86, %94, %cst_99 {dimension_numbers = #tpu.dot_dimension_numbers<[1], [0], [0], [1], [0, 0, 1, 1], [], []>} : vector<32x16xf32>, vector<16x16xf32>, vector<32x16xf32> -> vector<32x16xf32>
    %96 = arith.addf %92, %95 : vector<32x16xf32>
    %c2_100 = arith.constant 2 : index
    %c0_101 = arith.constant 0 : index
    %c0_102 = arith.constant 0 : index
    %97 = vector.load %arg8[%c2_100, %c0_101, %c0_102] : memref<3x32x32xf32, #tpu.memory_space<vmem>>, vector<1x32x32xf32>
    %98 = vector.shape_cast %97 : vector<1x32x32xf32> to vector<32x32xf32>
    %cst_103 = arith.constant dense<0.000000e+00> : vector<32x16xf32>
    %99 = tpu.matmul %98, %86, %cst_103 {dimension_numbers = #tpu.dot_dimension_numbers<[1], [0], [0], [1], [0, 0, 1, 1], [], []>} : vector<32x32xf32>, vector<32x16xf32>, vector<32x16xf32> -> vector<32x16xf32>
    %c2_104 = arith.constant 2 : index
    %c0_105 = arith.constant 0 : index
    %c0_106 = arith.constant 0 : index
    %100 = vector.load %arg9[%c2_104, %c0_105, %c0_106] : memref<3x16x16xf32, #tpu.memory_space<vmem>>, vector<1x16x16xf32>
    %101 = vector.shape_cast %100 : vector<1x16x16xf32> to vector<16x16xf32>
    %cst_107 = arith.constant dense<0.000000e+00> : vector<32x16xf32>
    %102 = tpu.matmul %99, %101, %cst_107 {dimension_numbers = #tpu.dot_dimension_numbers<[1], [0], [0], [1], [0, 0, 1, 1], [], []>} : vector<32x16xf32>, vector<16x16xf32>, vector<32x16xf32> -> vector<32x16xf32>
    %103 = arith.addf %96, %102 : vector<32x16xf32>
    %c0_108 = arith.constant 0 : index
    %c0_109 = arith.constant 0 : index
    %104 = vector.load %arg10[%c0_108, %c0_109] : memref<1x16xf32, #tpu.memory_space<vmem>>, vector<1x16xf32>
    %105 = vector.broadcast %104 : vector<1x16xf32> to vector<32x16xf32>
    %106 = arith.addf %103, %105 : vector<32x16xf32>
    %107 = arith.addf %106, %64 : vector<32x16xf32>
    %cst_110 = arith.constant 0.000000e+00 : f32
    %108 = vector.broadcast %cst_110 : f32 to vector<32x16xf32>
    %109 = arith.maximumf %107, %108 : vector<32x16xf32>
    %c0_111 = arith.constant 0 : index
    %c0_112 = arith.constant 0 : index
    %c0_113 = arith.constant 0 : index
    %110 = vector.load %arg11[%c0_111, %c0_112, %c0_113] : memref<1x16x32xf32, #tpu.memory_space<vmem>>, vector<1x16x32xf32>
    %111 = vector.shape_cast %110 : vector<1x16x32xf32> to vector<16x32xf32>
    %cst_114 = arith.constant dense<0.000000e+00> : vector<16x16xf32>
    %112 = tpu.matmul %111, %109, %cst_114 {dimension_numbers = #tpu.dot_dimension_numbers<[1], [0], [0], [1], [0, 0, 1, 1], [], []>} : vector<16x32xf32>, vector<32x16xf32>, vector<16x16xf32> -> vector<16x16xf32>
    %c0_115 = arith.constant 0 : index
    %c0_116 = arith.constant 0 : index
    %c0_117 = arith.constant 0 : index
    %113 = vector.load %arg12[%c0_115, %c0_116, %c0_117] : memref<1x16x16xf32, #tpu.memory_space<vmem>>, vector<1x16x16xf32>
    %114 = vector.shape_cast %113 : vector<1x16x16xf32> to vector<16x16xf32>
    %cst_118 = arith.constant dense<0.000000e+00> : vector<16x16xf32>
    %115 = tpu.matmul %112, %114, %cst_118 {dimension_numbers = #tpu.dot_dimension_numbers<[1], [0], [0], [1], [0, 0, 1, 1], [], []>} : vector<16x16xf32>, vector<16x16xf32>, vector<16x16xf32> -> vector<16x16xf32>
    %c0_119 = arith.constant 0 : index
    %c0_120 = arith.constant 0 : index
    %116 = vector.load %arg13[%c0_119, %c0_120] : memref<1x16xf32, #tpu.memory_space<vmem>>, vector<1x16xf32>
    %117 = vector.broadcast %116 : vector<1x16xf32> to vector<16x16xf32>
    %118 = arith.addf %115, %117 : vector<16x16xf32>
    %c0_121 = arith.constant 0 : index
    %c0_122 = arith.constant 0 : index
    %c0_123 = arith.constant 0 : index
    %119 = vector.load %arg14[%c0_121, %c0_122, %c0_123] : memref<3x16x32xf32, #tpu.memory_space<vmem>>, vector<1x16x32xf32>
    %120 = vector.shape_cast %119 : vector<1x16x32xf32> to vector<16x32xf32>
    %cst_124 = arith.constant dense<0.000000e+00> : vector<16x16xf32>
    %121 = tpu.matmul %120, %109, %cst_124 {dimension_numbers = #tpu.dot_dimension_numbers<[1], [0], [0], [1], [0, 0, 1, 1], [], []>} : vector<16x32xf32>, vector<32x16xf32>, vector<16x16xf32> -> vector<16x16xf32>
    %c0_125 = arith.constant 0 : index
    %c0_126 = arith.constant 0 : index
    %c0_127 = arith.constant 0 : index
    %122 = vector.load %arg15[%c0_125, %c0_126, %c0_127] : memref<3x16x16xf32, #tpu.memory_space<vmem>>, vector<1x16x16xf32>
    %123 = vector.shape_cast %122 : vector<1x16x16xf32> to vector<16x16xf32>
    %cst_128 = arith.constant dense<0.000000e+00> : vector<16x16xf32>
    %124 = tpu.matmul %121, %123, %cst_128 {dimension_numbers = #tpu.dot_dimension_numbers<[1], [0], [0], [1], [0, 0, 1, 1], [], []>} : vector<16x16xf32>, vector<16x16xf32>, vector<16x16xf32> -> vector<16x16xf32>
    %c1_129 = arith.constant 1 : index
    %c0_130 = arith.constant 0 : index
    %c0_131 = arith.constant 0 : index
    %125 = vector.load %arg14[%c1_129, %c0_130, %c0_131] : memref<3x16x32xf32, #tpu.memory_space<vmem>>, vector<1x16x32xf32>
    %126 = vector.shape_cast %125 : vector<1x16x32xf32> to vector<16x32xf32>
    %cst_132 = arith.constant dense<0.000000e+00> : vector<16x16xf32>
    %127 = tpu.matmul %126, %109, %cst_132 {dimension_numbers = #tpu.dot_dimension_numbers<[1], [0], [0], [1], [0, 0, 1, 1], [], []>} : vector<16x32xf32>, vector<32x16xf32>, vector<16x16xf32> -> vector<16x16xf32>
    %c1_133 = arith.constant 1 : index
    %c0_134 = arith.constant 0 : index
    %c0_135 = arith.constant 0 : index
    %128 = vector.load %arg15[%c1_133, %c0_134, %c0_135] : memref<3x16x16xf32, #tpu.memory_space<vmem>>, vector<1x16x16xf32>
    %129 = vector.shape_cast %128 : vector<1x16x16xf32> to vector<16x16xf32>
    %cst_136 = arith.constant dense<0.000000e+00> : vector<16x16xf32>
    %130 = tpu.matmul %127, %129, %cst_136 {dimension_numbers = #tpu.dot_dimension_numbers<[1], [0], [0], [1], [0, 0, 1, 1], [], []>} : vector<16x16xf32>, vector<16x16xf32>, vector<16x16xf32> -> vector<16x16xf32>
    %131 = arith.addf %124, %130 : vector<16x16xf32>
    %c2_137 = arith.constant 2 : index
    %c0_138 = arith.constant 0 : index
    %c0_139 = arith.constant 0 : index
    %132 = vector.load %arg14[%c2_137, %c0_138, %c0_139] : memref<3x16x32xf32, #tpu.memory_space<vmem>>, vector<1x16x32xf32>
    %133 = vector.shape_cast %132 : vector<1x16x32xf32> to vector<16x32xf32>
    %cst_140 = arith.constant dense<0.000000e+00> : vector<16x16xf32>
    %134 = tpu.matmul %133, %109, %cst_140 {dimension_numbers = #tpu.dot_dimension_numbers<[1], [0], [0], [1], [0, 0, 1, 1], [], []>} : vector<16x32xf32>, vector<32x16xf32>, vector<16x16xf32> -> vector<16x16xf32>
    %c2_141 = arith.constant 2 : index
    %c0_142 = arith.constant 0 : index
    %c0_143 = arith.constant 0 : index
    %135 = vector.load %arg15[%c2_141, %c0_142, %c0_143] : memref<3x16x16xf32, #tpu.memory_space<vmem>>, vector<1x16x16xf32>
    %136 = vector.shape_cast %135 : vector<1x16x16xf32> to vector<16x16xf32>
    %cst_144 = arith.constant dense<0.000000e+00> : vector<16x16xf32>
    %137 = tpu.matmul %134, %136, %cst_144 {dimension_numbers = #tpu.dot_dimension_numbers<[1], [0], [0], [1], [0, 0, 1, 1], [], []>} : vector<16x16xf32>, vector<16x16xf32>, vector<16x16xf32> -> vector<16x16xf32>
    %138 = arith.addf %131, %137 : vector<16x16xf32>
    %c0_145 = arith.constant 0 : index
    %c0_146 = arith.constant 0 : index
    %139 = vector.load %arg16[%c0_145, %c0_146] : memref<1x16xf32, #tpu.memory_space<vmem>>, vector<1x16xf32>
    %140 = vector.broadcast %139 : vector<1x16xf32> to vector<16x16xf32>
    %141 = arith.addf %138, %140 : vector<16x16xf32>
    %cst_147 = arith.constant 0.000000e+00 : f32
    %142 = vector.broadcast %cst_147 : f32 to vector<16x16xf32>
    %143 = arith.maximumf %141, %142 : vector<16x16xf32>
    %c0_148 = arith.constant 0 : index
    %c0_149 = arith.constant 0 : index
    %c0_150 = arith.constant 0 : index
    %144 = vector.load %arg17[%c0_148, %c0_149, %c0_150] : memref<3x16x16xf32, #tpu.memory_space<vmem>>, vector<1x16x16xf32>
    %145 = vector.shape_cast %144 : vector<1x16x16xf32> to vector<16x16xf32>
    %cst_151 = arith.constant dense<0.000000e+00> : vector<16x16xf32>
    %146 = tpu.matmul %145, %143, %cst_151 {dimension_numbers = #tpu.dot_dimension_numbers<[1], [0], [0], [1], [0, 0, 1, 1], [], []>} : vector<16x16xf32>, vector<16x16xf32>, vector<16x16xf32> -> vector<16x16xf32>
    %c0_152 = arith.constant 0 : index
    %c0_153 = arith.constant 0 : index
    %c0_154 = arith.constant 0 : index
    %147 = vector.load %arg18[%c0_152, %c0_153, %c0_154] : memref<3x16x16xf32, #tpu.memory_space<vmem>>, vector<1x16x16xf32>
    %148 = vector.shape_cast %147 : vector<1x16x16xf32> to vector<16x16xf32>
    %cst_155 = arith.constant dense<0.000000e+00> : vector<16x16xf32>
    %149 = tpu.matmul %146, %148, %cst_155 {dimension_numbers = #tpu.dot_dimension_numbers<[1], [0], [0], [1], [0, 0, 1, 1], [], []>} : vector<16x16xf32>, vector<16x16xf32>, vector<16x16xf32> -> vector<16x16xf32>
    %c1_156 = arith.constant 1 : index
    %c0_157 = arith.constant 0 : index
    %c0_158 = arith.constant 0 : index
    %150 = vector.load %arg18[%c1_156, %c0_157, %c0_158] : memref<3x16x16xf32, #tpu.memory_space<vmem>>, vector<1x16x16xf32>
    %151 = vector.shape_cast %150 : vector<1x16x16xf32> to vector<16x16xf32>
    %cst_159 = arith.constant dense<0.000000e+00> : vector<16x16xf32>
    %152 = tpu.matmul %143, %151, %cst_159 {dimension_numbers = #tpu.dot_dimension_numbers<[1], [0], [0], [1], [0, 0, 1, 1], [], []>} : vector<16x16xf32>, vector<16x16xf32>, vector<16x16xf32> -> vector<16x16xf32>
    %153 = arith.addf %149, %152 : vector<16x16xf32>
    %c2_160 = arith.constant 2 : index
    %c0_161 = arith.constant 0 : index
    %c0_162 = arith.constant 0 : index
    %154 = vector.load %arg17[%c2_160, %c0_161, %c0_162] : memref<3x16x16xf32, #tpu.memory_space<vmem>>, vector<1x16x16xf32>
    %155 = vector.shape_cast %154 : vector<1x16x16xf32> to vector<16x16xf32>
    %cst_163 = arith.constant dense<0.000000e+00> : vector<16x16xf32>
    %156 = tpu.matmul %155, %143, %cst_163 {dimension_numbers = #tpu.dot_dimension_numbers<[1], [0], [0], [1], [0, 0, 1, 1], [], []>} : vector<16x16xf32>, vector<16x16xf32>, vector<16x16xf32> -> vector<16x16xf32>
    %c2_164 = arith.constant 2 : index
    %c0_165 = arith.constant 0 : index
    %c0_166 = arith.constant 0 : index
    %157 = vector.load %arg18[%c2_164, %c0_165, %c0_166] : memref<3x16x16xf32, #tpu.memory_space<vmem>>, vector<1x16x16xf32>
    %158 = vector.shape_cast %157 : vector<1x16x16xf32> to vector<16x16xf32>
    %cst_167 = arith.constant dense<0.000000e+00> : vector<16x16xf32>
    %159 = tpu.matmul %156, %158, %cst_167 {dimension_numbers = #tpu.dot_dimension_numbers<[1], [0], [0], [1], [0, 0, 1, 1], [], []>} : vector<16x16xf32>, vector<16x16xf32>, vector<16x16xf32> -> vector<16x16xf32>
    %160 = arith.addf %153, %159 : vector<16x16xf32>
    %c0_168 = arith.constant 0 : index
    %c0_169 = arith.constant 0 : index
    %161 = vector.load %arg19[%c0_168, %c0_169] : memref<1x16xf32, #tpu.memory_space<vmem>>, vector<1x16xf32>
    %162 = vector.broadcast %161 : vector<1x16xf32> to vector<16x16xf32>
    %163 = arith.addf %160, %162 : vector<16x16xf32>
    %164 = arith.addf %163, %118 : vector<16x16xf32>
    %cst_170 = arith.constant 0.000000e+00 : f32
    %165 = vector.broadcast %cst_170 : f32 to vector<16x16xf32>
    %166 = arith.maximumf %164, %165 : vector<16x16xf32>
    %c0_171 = arith.constant 0 : index
    %c0_172 = arith.constant 0 : index
    %c0_173 = arith.constant 0 : index
    %167 = vector.load %arg20[%c0_171, %c0_172, %c0_173] : memref<1x8x16xf32, #tpu.memory_space<vmem>>, vector<1x8x16xf32>
    %168 = vector.shape_cast %167 : vector<1x8x16xf32> to vector<8x16xf32>
    %cst_174 = arith.constant dense<0.000000e+00> : vector<8x16xf32>
    %169 = tpu.matmul %168, %166, %cst_174 {dimension_numbers = #tpu.dot_dimension_numbers<[1], [0], [0], [1], [0, 0, 1, 1], [], []>} : vector<8x16xf32>, vector<16x16xf32>, vector<8x16xf32> -> vector<8x16xf32>
    %c0_175 = arith.constant 0 : index
    %c0_176 = arith.constant 0 : index
    %c0_177 = arith.constant 0 : index
    %170 = vector.load %arg21[%c0_175, %c0_176, %c0_177] : memref<1x16x32xf32, #tpu.memory_space<vmem>>, vector<1x16x32xf32>
    %171 = vector.shape_cast %170 : vector<1x16x32xf32> to vector<16x32xf32>
    %cst_178 = arith.constant dense<0.000000e+00> : vector<8x32xf32>
    %172 = tpu.matmul %169, %171, %cst_178 {dimension_numbers = #tpu.dot_dimension_numbers<[1], [0], [0], [1], [0, 0, 1, 1], [], []>} : vector<8x16xf32>, vector<16x32xf32>, vector<8x32xf32> -> vector<8x32xf32>
    %c0_179 = arith.constant 0 : index
    %c0_180 = arith.constant 0 : index
    %173 = vector.load %arg22[%c0_179, %c0_180] : memref<1x32xf32, #tpu.memory_space<vmem>>, vector<1x32xf32>
    %174 = vector.broadcast %173 : vector<1x32xf32> to vector<8x32xf32>
    %175 = arith.addf %172, %174 : vector<8x32xf32>
    %c0_181 = arith.constant 0 : index
    %c0_182 = arith.constant 0 : index
    %c0_183 = arith.constant 0 : index
    %176 = vector.load %arg23[%c0_181, %c0_182, %c0_183] : memref<3x8x16xf32, #tpu.memory_space<vmem>>, vector<1x8x16xf32>
    %177 = vector.shape_cast %176 : vector<1x8x16xf32> to vector<8x16xf32>
    %cst_184 = arith.constant dense<0.000000e+00> : vector<8x16xf32>
    %178 = tpu.matmul %177, %166, %cst_184 {dimension_numbers = #tpu.dot_dimension_numbers<[1], [0], [0], [1], [0, 0, 1, 1], [], []>} : vector<8x16xf32>, vector<16x16xf32>, vector<8x16xf32> -> vector<8x16xf32>
    %c0_185 = arith.constant 0 : index
    %c0_186 = arith.constant 0 : index
    %c0_187 = arith.constant 0 : index
    %179 = vector.load %arg24[%c0_185, %c0_186, %c0_187] : memref<3x16x32xf32, #tpu.memory_space<vmem>>, vector<1x16x32xf32>
    %180 = vector.shape_cast %179 : vector<1x16x32xf32> to vector<16x32xf32>
    %cst_188 = arith.constant dense<0.000000e+00> : vector<8x32xf32>
    %181 = tpu.matmul %178, %180, %cst_188 {dimension_numbers = #tpu.dot_dimension_numbers<[1], [0], [0], [1], [0, 0, 1, 1], [], []>} : vector<8x16xf32>, vector<16x32xf32>, vector<8x32xf32> -> vector<8x32xf32>
    %c1_189 = arith.constant 1 : index
    %c0_190 = arith.constant 0 : index
    %c0_191 = arith.constant 0 : index
    %182 = vector.load %arg23[%c1_189, %c0_190, %c0_191] : memref<3x8x16xf32, #tpu.memory_space<vmem>>, vector<1x8x16xf32>
    %183 = vector.shape_cast %182 : vector<1x8x16xf32> to vector<8x16xf32>
    %cst_192 = arith.constant dense<0.000000e+00> : vector<8x16xf32>
    %184 = tpu.matmul %183, %166, %cst_192 {dimension_numbers = #tpu.dot_dimension_numbers<[1], [0], [0], [1], [0, 0, 1, 1], [], []>} : vector<8x16xf32>, vector<16x16xf32>, vector<8x16xf32> -> vector<8x16xf32>
    %c1_193 = arith.constant 1 : index
    %c0_194 = arith.constant 0 : index
    %c0_195 = arith.constant 0 : index
    %185 = vector.load %arg24[%c1_193, %c0_194, %c0_195] : memref<3x16x32xf32, #tpu.memory_space<vmem>>, vector<1x16x32xf32>
    %186 = vector.shape_cast %185 : vector<1x16x32xf32> to vector<16x32xf32>
    %cst_196 = arith.constant dense<0.000000e+00> : vector<8x32xf32>
    %187 = tpu.matmul %184, %186, %cst_196 {dimension_numbers = #tpu.dot_dimension_numbers<[1], [0], [0], [1], [0, 0, 1, 1], [], []>} : vector<8x16xf32>, vector<16x32xf32>, vector<8x32xf32> -> vector<8x32xf32>
    %188 = arith.addf %181, %187 : vector<8x32xf32>
    %c2_197 = arith.constant 2 : index
    %c0_198 = arith.constant 0 : index
    %c0_199 = arith.constant 0 : index
    %189 = vector.load %arg23[%c2_197, %c0_198, %c0_199] : memref<3x8x16xf32, #tpu.memory_space<vmem>>, vector<1x8x16xf32>
    %190 = vector.shape_cast %189 : vector<1x8x16xf32> to vector<8x16xf32>
    %cst_200 = arith.constant dense<0.000000e+00> : vector<8x16xf32>
    %191 = tpu.matmul %190, %166, %cst_200 {dimension_numbers = #tpu.dot_dimension_numbers<[1], [0], [0], [1], [0, 0, 1, 1], [], []>} : vector<8x16xf32>, vector<16x16xf32>, vector<8x16xf32> -> vector<8x16xf32>
    %c2_201 = arith.constant 2 : index
    %c0_202 = arith.constant 0 : index
    %c0_203 = arith.constant 0 : index
    %192 = vector.load %arg24[%c2_201, %c0_202, %c0_203] : memref<3x16x32xf32, #tpu.memory_space<vmem>>, vector<1x16x32xf32>
    %193 = vector.shape_cast %192 : vector<1x16x32xf32> to vector<16x32xf32>
    %cst_204 = arith.constant dense<0.000000e+00> : vector<8x32xf32>
    %194 = tpu.matmul %191, %193, %cst_204 {dimension_numbers = #tpu.dot_dimension_numbers<[1], [0], [0], [1], [0, 0, 1, 1], [], []>} : vector<8x16xf32>, vector<16x32xf32>, vector<8x32xf32> -> vector<8x32xf32>
    %195 = arith.addf %188, %194 : vector<8x32xf32>
    %c0_205 = arith.constant 0 : index
    %c0_206 = arith.constant 0 : index
    %196 = vector.load %arg25[%c0_205, %c0_206] : memref<1x32xf32, #tpu.memory_space<vmem>>, vector<1x32xf32>
    %197 = vector.broadcast %196 : vector<1x32xf32> to vector<8x32xf32>
    %198 = arith.addf %195, %197 : vector<8x32xf32>
    %cst_207 = arith.constant 0.000000e+00 : f32
    %199 = vector.broadcast %cst_207 : f32 to vector<8x32xf32>
    %200 = arith.maximumf %198, %199 : vector<8x32xf32>
    %c0_208 = arith.constant 0 : index
    %c0_209 = arith.constant 0 : index
    %c0_210 = arith.constant 0 : index
    %201 = vector.load %arg26[%c0_208, %c0_209, %c0_210] : memref<3x8x8xf32, #tpu.memory_space<vmem>>, vector<1x8x8xf32>
    %202 = vector.shape_cast %201 : vector<1x8x8xf32> to vector<8x8xf32>
    %cst_211 = arith.constant dense<0.000000e+00> : vector<8x32xf32>
    %203 = tpu.matmul %202, %200, %cst_211 {dimension_numbers = #tpu.dot_dimension_numbers<[1], [0], [0], [1], [0, 0, 1, 1], [], []>} : vector<8x8xf32>, vector<8x32xf32>, vector<8x32xf32> -> vector<8x32xf32>
    %c0_212 = arith.constant 0 : index
    %c0_213 = arith.constant 0 : index
    %c0_214 = arith.constant 0 : index
    %204 = vector.load %arg27[%c0_212, %c0_213, %c0_214] : memref<3x32x32xf32, #tpu.memory_space<vmem>>, vector<1x32x32xf32>
    %205 = vector.shape_cast %204 : vector<1x32x32xf32> to vector<32x32xf32>
    %cst_215 = arith.constant dense<0.000000e+00> : vector<8x32xf32>
    %206 = tpu.matmul %203, %205, %cst_215 {dimension_numbers = #tpu.dot_dimension_numbers<[1], [0], [0], [1], [0, 0, 1, 1], [], []>} : vector<8x32xf32>, vector<32x32xf32>, vector<8x32xf32> -> vector<8x32xf32>
    %c1_216 = arith.constant 1 : index
    %c0_217 = arith.constant 0 : index
    %c0_218 = arith.constant 0 : index
    %207 = vector.load %arg27[%c1_216, %c0_217, %c0_218] : memref<3x32x32xf32, #tpu.memory_space<vmem>>, vector<1x32x32xf32>
    %208 = vector.shape_cast %207 : vector<1x32x32xf32> to vector<32x32xf32>
    %cst_219 = arith.constant dense<0.000000e+00> : vector<8x32xf32>
    %209 = tpu.matmul %200, %208, %cst_219 {dimension_numbers = #tpu.dot_dimension_numbers<[1], [0], [0], [1], [0, 0, 1, 1], [], []>} : vector<8x32xf32>, vector<32x32xf32>, vector<8x32xf32> -> vector<8x32xf32>
    %210 = arith.addf %206, %209 : vector<8x32xf32>
    %c2_220 = arith.constant 2 : index
    %c0_221 = arith.constant 0 : index
    %c0_222 = arith.constant 0 : index
    %211 = vector.load %arg26[%c2_220, %c0_221, %c0_222] : memref<3x8x8xf32, #tpu.memory_space<vmem>>, vector<1x8x8xf32>
    %212 = vector.shape_cast %211 : vector<1x8x8xf32> to vector<8x8xf32>
    %cst_223 = arith.constant dense<0.000000e+00> : vector<8x32xf32>
    %213 = tpu.matmul %212, %200, %cst_223 {dimension_numbers = #tpu.dot_dimension_numbers<[1], [0], [0], [1], [0, 0, 1, 1], [], []>} : vector<8x8xf32>, vector<8x32xf32>, vector<8x32xf32> -> vector<8x32xf32>
    %c2_224 = arith.constant 2 : index
    %c0_225 = arith.constant 0 : index
    %c0_226 = arith.constant 0 : index
    %214 = vector.load %arg27[%c2_224, %c0_225, %c0_226] : memref<3x32x32xf32, #tpu.memory_space<vmem>>, vector<1x32x32xf32>
    %215 = vector.shape_cast %214 : vector<1x32x32xf32> to vector<32x32xf32>
    %cst_227 = arith.constant dense<0.000000e+00> : vector<8x32xf32>
    %216 = tpu.matmul %213, %215, %cst_227 {dimension_numbers = #tpu.dot_dimension_numbers<[1], [0], [0], [1], [0, 0, 1, 1], [], []>} : vector<8x32xf32>, vector<32x32xf32>, vector<8x32xf32> -> vector<8x32xf32>
    %217 = arith.addf %210, %216 : vector<8x32xf32>
    %c0_228 = arith.constant 0 : index
    %c0_229 = arith.constant 0 : index
    %218 = vector.load %arg28[%c0_228, %c0_229] : memref<1x32xf32, #tpu.memory_space<vmem>>, vector<1x32xf32>
    %219 = vector.broadcast %218 : vector<1x32xf32> to vector<8x32xf32>
    %220 = arith.addf %217, %219 : vector<8x32xf32>
    %221 = arith.addf %220, %175 : vector<8x32xf32>
    %cst_230 = arith.constant 0.000000e+00 : f32
    %222 = vector.broadcast %cst_230 : f32 to vector<8x32xf32>
    %223 = arith.maximumf %221, %222 : vector<8x32xf32>
    %c0_231 = arith.constant 0 : index
    %c0_232 = arith.constant 0 : index
    %c0_233 = arith.constant 0 : index
    %224 = vector.load %arg29[%c0_231, %c0_232, %c0_233] : memref<1x4x8xf32, #tpu.memory_space<vmem>>, vector<1x4x8xf32>
    %225 = vector.shape_cast %224 : vector<1x4x8xf32> to vector<4x8xf32>
    %cst_234 = arith.constant dense<0.000000e+00> : vector<4x32xf32>
    %226 = tpu.matmul %225, %223, %cst_234 {dimension_numbers = #tpu.dot_dimension_numbers<[1], [0], [0], [1], [0, 0, 1, 1], [], []>} : vector<4x8xf32>, vector<8x32xf32>, vector<4x32xf32> -> vector<4x32xf32>
    %c0_235 = arith.constant 0 : index
    %c0_236 = arith.constant 0 : index
    %c0_237 = arith.constant 0 : index
    %227 = vector.load %arg30[%c0_235, %c0_236, %c0_237] : memref<1x32x32xf32, #tpu.memory_space<vmem>>, vector<1x32x32xf32>
    %228 = vector.shape_cast %227 : vector<1x32x32xf32> to vector<32x32xf32>
    %cst_238 = arith.constant dense<0.000000e+00> : vector<4x32xf32>
    %229 = tpu.matmul %226, %228, %cst_238 {dimension_numbers = #tpu.dot_dimension_numbers<[1], [0], [0], [1], [0, 0, 1, 1], [], []>} : vector<4x32xf32>, vector<32x32xf32>, vector<4x32xf32> -> vector<4x32xf32>
    %c0_239 = arith.constant 0 : index
    %c0_240 = arith.constant 0 : index
    %230 = vector.load %arg31[%c0_239, %c0_240] : memref<1x32xf32, #tpu.memory_space<vmem>>, vector<1x32xf32>
    %231 = vector.broadcast %230 : vector<1x32xf32> to vector<4x32xf32>
    %232 = arith.addf %229, %231 : vector<4x32xf32>
    %c0_241 = arith.constant 0 : index
    %c0_242 = arith.constant 0 : index
    %c0_243 = arith.constant 0 : index
    %233 = vector.load %arg32[%c0_241, %c0_242, %c0_243] : memref<3x4x8xf32, #tpu.memory_space<vmem>>, vector<1x4x8xf32>
    %234 = vector.shape_cast %233 : vector<1x4x8xf32> to vector<4x8xf32>
    %cst_244 = arith.constant dense<0.000000e+00> : vector<4x32xf32>
    %235 = tpu.matmul %234, %223, %cst_244 {dimension_numbers = #tpu.dot_dimension_numbers<[1], [0], [0], [1], [0, 0, 1, 1], [], []>} : vector<4x8xf32>, vector<8x32xf32>, vector<4x32xf32> -> vector<4x32xf32>
    %c0_245 = arith.constant 0 : index
    %c0_246 = arith.constant 0 : index
    %c0_247 = arith.constant 0 : index
    %236 = vector.load %arg33[%c0_245, %c0_246, %c0_247] : memref<3x32x32xf32, #tpu.memory_space<vmem>>, vector<1x32x32xf32>
    %237 = vector.shape_cast %236 : vector<1x32x32xf32> to vector<32x32xf32>
    %cst_248 = arith.constant dense<0.000000e+00> : vector<4x32xf32>
    %238 = tpu.matmul %235, %237, %cst_248 {dimension_numbers = #tpu.dot_dimension_numbers<[1], [0], [0], [1], [0, 0, 1, 1], [], []>} : vector<4x32xf32>, vector<32x32xf32>, vector<4x32xf32> -> vector<4x32xf32>
    %c1_249 = arith.constant 1 : index
    %c0_250 = arith.constant 0 : index
    %c0_251 = arith.constant 0 : index
    %239 = vector.load %arg32[%c1_249, %c0_250, %c0_251] : memref<3x4x8xf32, #tpu.memory_space<vmem>>, vector<1x4x8xf32>
    %240 = vector.shape_cast %239 : vector<1x4x8xf32> to vector<4x8xf32>
    %cst_252 = arith.constant dense<0.000000e+00> : vector<4x32xf32>
    %241 = tpu.matmul %240, %223, %cst_252 {dimension_numbers = #tpu.dot_dimension_numbers<[1], [0], [0], [1], [0, 0, 1, 1], [], []>} : vector<4x8xf32>, vector<8x32xf32>, vector<4x32xf32> -> vector<4x32xf32>
    %c1_253 = arith.constant 1 : index
    %c0_254 = arith.constant 0 : index
    %c0_255 = arith.constant 0 : index
    %242 = vector.load %arg33[%c1_253, %c0_254, %c0_255] : memref<3x32x32xf32, #tpu.memory_space<vmem>>, vector<1x32x32xf32>
    %243 = vector.shape_cast %242 : vector<1x32x32xf32> to vector<32x32xf32>
    %cst_256 = arith.constant dense<0.000000e+00> : vector<4x32xf32>
    %244 = tpu.matmul %241, %243, %cst_256 {dimension_numbers = #tpu.dot_dimension_numbers<[1], [0], [0], [1], [0, 0, 1, 1], [], []>} : vector<4x32xf32>, vector<32x32xf32>, vector<4x32xf32> -> vector<4x32xf32>
    %245 = arith.addf %238, %244 : vector<4x32xf32>
    %c2_257 = arith.constant 2 : index
    %c0_258 = arith.constant 0 : index
    %c0_259 = arith.constant 0 : index
    %246 = vector.load %arg32[%c2_257, %c0_258, %c0_259] : memref<3x4x8xf32, #tpu.memory_space<vmem>>, vector<1x4x8xf32>
    %247 = vector.shape_cast %246 : vector<1x4x8xf32> to vector<4x8xf32>
    %cst_260 = arith.constant dense<0.000000e+00> : vector<4x32xf32>
    %248 = tpu.matmul %247, %223, %cst_260 {dimension_numbers = #tpu.dot_dimension_numbers<[1], [0], [0], [1], [0, 0, 1, 1], [], []>} : vector<4x8xf32>, vector<8x32xf32>, vector<4x32xf32> -> vector<4x32xf32>
    %c2_261 = arith.constant 2 : index
    %c0_262 = arith.constant 0 : index
    %c0_263 = arith.constant 0 : index
    %249 = vector.load %arg33[%c2_261, %c0_262, %c0_263] : memref<3x32x32xf32, #tpu.memory_space<vmem>>, vector<1x32x32xf32>
    %250 = vector.shape_cast %249 : vector<1x32x32xf32> to vector<32x32xf32>
    %cst_264 = arith.constant dense<0.000000e+00> : vector<4x32xf32>
    %251 = tpu.matmul %248, %250, %cst_264 {dimension_numbers = #tpu.dot_dimension_numbers<[1], [0], [0], [1], [0, 0, 1, 1], [], []>} : vector<4x32xf32>, vector<32x32xf32>, vector<4x32xf32> -> vector<4x32xf32>
    %252 = arith.addf %245, %251 : vector<4x32xf32>
    %c0_265 = arith.constant 0 : index
    %c0_266 = arith.constant 0 : index
    %253 = vector.load %arg34[%c0_265, %c0_266] : memref<1x32xf32, #tpu.memory_space<vmem>>, vector<1x32xf32>
    %254 = vector.broadcast %253 : vector<1x32xf32> to vector<4x32xf32>
    %255 = arith.addf %252, %254 : vector<4x32xf32>
    %cst_267 = arith.constant 0.000000e+00 : f32
    %256 = vector.broadcast %cst_267 : f32 to vector<4x32xf32>
    %257 = arith.maximumf %255, %256 : vector<4x32xf32>
    %c0_268 = arith.constant 0 : index
    %c0_269 = arith.constant 0 : index
    %c0_270 = arith.constant 0 : index
    %258 = vector.load %arg35[%c0_268, %c0_269, %c0_270] : memref<3x4x4xf32, #tpu.memory_space<vmem>>, vector<1x4x4xf32>
    %259 = vector.shape_cast %258 : vector<1x4x4xf32> to vector<4x4xf32>
    %cst_271 = arith.constant dense<0.000000e+00> : vector<4x32xf32>
    %260 = tpu.matmul %259, %257, %cst_271 {dimension_numbers = #tpu.dot_dimension_numbers<[1], [0], [0], [1], [0, 0, 1, 1], [], []>} : vector<4x4xf32>, vector<4x32xf32>, vector<4x32xf32> -> vector<4x32xf32>
    %c0_272 = arith.constant 0 : index
    %c0_273 = arith.constant 0 : index
    %c0_274 = arith.constant 0 : index
    %261 = vector.load %arg36[%c0_272, %c0_273, %c0_274] : memref<3x32x32xf32, #tpu.memory_space<vmem>>, vector<1x32x32xf32>
    %262 = vector.shape_cast %261 : vector<1x32x32xf32> to vector<32x32xf32>
    %cst_275 = arith.constant dense<0.000000e+00> : vector<4x32xf32>
    %263 = tpu.matmul %260, %262, %cst_275 {dimension_numbers = #tpu.dot_dimension_numbers<[1], [0], [0], [1], [0, 0, 1, 1], [], []>} : vector<4x32xf32>, vector<32x32xf32>, vector<4x32xf32> -> vector<4x32xf32>
    %c1_276 = arith.constant 1 : index
    %c0_277 = arith.constant 0 : index
    %c0_278 = arith.constant 0 : index
    %264 = vector.load %arg36[%c1_276, %c0_277, %c0_278] : memref<3x32x32xf32, #tpu.memory_space<vmem>>, vector<1x32x32xf32>
    %265 = vector.shape_cast %264 : vector<1x32x32xf32> to vector<32x32xf32>
    %cst_279 = arith.constant dense<0.000000e+00> : vector<4x32xf32>
    %266 = tpu.matmul %257, %265, %cst_279 {dimension_numbers = #tpu.dot_dimension_numbers<[1], [0], [0], [1], [0, 0, 1, 1], [], []>} : vector<4x32xf32>, vector<32x32xf32>, vector<4x32xf32> -> vector<4x32xf32>
    %267 = arith.addf %263, %266 : vector<4x32xf32>
    %c2_280 = arith.constant 2 : index
    %c0_281 = arith.constant 0 : index
    %c0_282 = arith.constant 0 : index
    %268 = vector.load %arg35[%c2_280, %c0_281, %c0_282] : memref<3x4x4xf32, #tpu.memory_space<vmem>>, vector<1x4x4xf32>
    %269 = vector.shape_cast %268 : vector<1x4x4xf32> to vector<4x4xf32>
    %cst_283 = arith.constant dense<0.000000e+00> : vector<4x32xf32>
    %270 = tpu.matmul %269, %257, %cst_283 {dimension_numbers = #tpu.dot_dimension_numbers<[1], [0], [0], [1], [0, 0, 1, 1], [], []>} : vector<4x4xf32>, vector<4x32xf32>, vector<4x32xf32> -> vector<4x32xf32>
    %c2_284 = arith.constant 2 : index
    %c0_285 = arith.constant 0 : index
    %c0_286 = arith.constant 0 : index
    %271 = vector.load %arg36[%c2_284, %c0_285, %c0_286] : memref<3x32x32xf32, #tpu.memory_space<vmem>>, vector<1x32x32xf32>
    %272 = vector.shape_cast %271 : vector<1x32x32xf32> to vector<32x32xf32>
    %cst_287 = arith.constant dense<0.000000e+00> : vector<4x32xf32>
    %273 = tpu.matmul %270, %272, %cst_287 {dimension_numbers = #tpu.dot_dimension_numbers<[1], [0], [0], [1], [0, 0, 1, 1], [], []>} : vector<4x32xf32>, vector<32x32xf32>, vector<4x32xf32> -> vector<4x32xf32>
    %274 = arith.addf %267, %273 : vector<4x32xf32>
    %c0_288 = arith.constant 0 : index
    %c0_289 = arith.constant 0 : index
    %275 = vector.load %arg37[%c0_288, %c0_289] : memref<1x32xf32, #tpu.memory_space<vmem>>, vector<1x32xf32>
    %276 = vector.broadcast %275 : vector<1x32xf32> to vector<4x32xf32>
    %277 = arith.addf %274, %276 : vector<4x32xf32>
    %278 = arith.addf %277, %232 : vector<4x32xf32>
    %cst_290 = arith.constant 0.000000e+00 : f32
    %279 = vector.broadcast %cst_290 : f32 to vector<4x32xf32>
    %280 = arith.maximumf %278, %279 : vector<4x32xf32>
    %c0_291 = arith.constant 0 : index
    %c0_292 = arith.constant 0 : index
    %281 = vector.load %arg38[%c0_291, %c0_292] : memref<2x4xf32, #tpu.memory_space<vmem>>, vector<2x4xf32>
    %cst_293 = arith.constant dense<0.000000e+00> : vector<2x32xf32>
    %282 = tpu.matmul %281, %280, %cst_293 {dimension_numbers = #tpu.dot_dimension_numbers<[1], [0], [0], [1], [0, 0, 1, 1], [], []>} : vector<2x4xf32>, vector<4x32xf32>, vector<2x32xf32> -> vector<2x32xf32>
    %c0_294 = arith.constant 0 : index
    %c0_295 = arith.constant 0 : index
    %283 = vector.load %arg39[%c0_294, %c0_295] : memref<32x10xf32, #tpu.memory_space<vmem>>, vector<32x10xf32>
    %cst_296 = arith.constant dense<0.000000e+00> : vector<2x10xf32>
    %284 = tpu.matmul %282, %283, %cst_296 {dimension_numbers = #tpu.dot_dimension_numbers<[1], [0], [0], [1], [0, 0, 1, 1], [], []>} : vector<2x32xf32>, vector<32x10xf32>, vector<2x10xf32> -> vector<2x10xf32>
    %c0_297 = arith.constant 0 : index
    %c0_298 = arith.constant 0 : index
    %285 = vector.load %arg40[%c0_297, %c0_298] : memref<1x10xf32, #tpu.memory_space<vmem>>, vector<1x10xf32>
    %286 = vector.broadcast %285 : vector<1x10xf32> to vector<2x10xf32>
    %287 = arith.addf %284, %286 : vector<2x10xf32>
    %c0_299 = arith.constant 0 : index
    %c0_300 = arith.constant 0 : index
    %288 = vector.load %arg41[%c0_299, %c0_300] : memref<2x10xf32, #tpu.memory_space<vmem>>, vector<2x10xf32>
    tpu.vector_store %arg41[%c0_299, %c0_300], %287 {strides = array<i32>} : memref<2x10xf32, #tpu.memory_space<vmem>>, vector<2x10xf32>,
    return
  }
}

</mosaic_0001>

<llo_original>
// kernel: resnet1d_small_forward.1
$region0: #{resnet1d_small_forward.1}
  #allocation0 [shape = 'u32[]', space=smem, size = 0x4, offset = 0x4, fixed_abs, tag = 'smem constant byte address 0x4 - core index']
  #allocation1 [shape = 'u32[144,128]{1,0:T(1,128)}', space=vmem, size = 0x12000, scoped, tag = 'internal scratch']
  %s0 = inlined_call_operand.smem [shape: u32[42], index: -1, kind: input, shape index: {}]
  %s1 = sld [smem:[%s0]]
  %s2 = scalar_lea.smem %s0, 1
  %s3 = sld [smem:[%s2]]
  %s4 = scalar_lea.smem %s0, 2
  %s5 = sld [smem:[%s4]]
  %s6 = scalar_lea.smem %s0, 3
  %s7 = sld [smem:[%s6]]
  %s8 = scalar_lea.smem %s0, 4
  %s9 = sld [smem:[%s8]]
  %s10 = scalar_lea.smem %s0, 5
  %s11 = sld [smem:[%s10]]
  %s12 = scalar_lea.smem %s0, 6
  %s13 = sld [smem:[%s12]]
  %s14 = scalar_lea.smem %s0, 7
  %s15 = sld [smem:[%s14]]
  %s16 = scalar_lea.smem %s0, 8
  %s17 = sld [smem:[%s16]]
  %s18 = scalar_lea.smem %s0, 9
  %s19 = sld [smem:[%s18]]
  %s20 = scalar_lea.smem %s0, 10
  %s21 = sld [smem:[%s20]]
  %s22 = scalar_lea.smem %s0, 11
  %s23 = sld [smem:[%s22]]
  %s24 = scalar_lea.smem %s0, 12
  %s25 = sld [smem:[%s24]]
  %s26 = scalar_lea.smem %s0, 13
  %s27 = sld [smem:[%s26]]
  %s28 = scalar_lea.smem %s0, 14
  %s29 = sld [smem:[%s28]]
  %s30 = scalar_lea.smem %s0, 15
  %s31 = sld [smem:[%s30]]
  %s32 = scalar_lea.smem %s0, 16
  %s33 = sld [smem:[%s32]]
  %s34 = scalar_lea.smem %s0, 17
  %s35 = sld [smem:[%s34]]
  %s36 = scalar_lea.smem %s0, 18
  %s37 = sld [smem:[%s36]]
  %s38 = scalar_lea.smem %s0, 19
  %s39 = sld [smem:[%s38]]
  %s40 = scalar_lea.smem %s0, 20
  %s41 = sld [smem:[%s40]]
  %s42 = scalar_lea.smem %s0, 21
  %s43 = sld [smem:[%s42]]
  %s44 = scalar_lea.smem %s0, 22
  %s45 = sld [smem:[%s44]]
  %s46 = scalar_lea.smem %s0, 23
  %s47 = sld [smem:[%s46]]
  %s48 = scalar_lea.smem %s0, 24
  %s49 = sld [smem:[%s48]]
  %s50 = scalar_lea.smem %s0, 25
  %s51 = sld [smem:[%s50]]
  %s52 = scalar_lea.smem %s0, 26
  %s53 = sld [smem:[%s52]]
  %s54 = scalar_lea.smem %s0, 27
  %s55 = sld [smem:[%s54]]
  %s56 = scalar_lea.smem %s0, 28
  %s57 = sld [smem:[%s56]]
  %s58 = scalar_lea.smem %s0, 29
  %s59 = sld [smem:[%s58]]
  %s60 = scalar_lea.smem %s0, 30
  %s61 = sld [smem:[%s60]]
  %s62 = scalar_lea.smem %s0, 31
  %s63 = sld [smem:[%s62]]
  %s64 = scalar_lea.smem %s0, 32
  %s65 = sld [smem:[%s64]]
  %s66 = scalar_lea.smem %s0, 33
  %s67 = sld [smem:[%s66]]
  %s68 = scalar_lea.smem %s0, 34
  %s69 = sld [smem:[%s68]]
  %s70 = scalar_lea.smem %s0, 35
  %s71 = sld [smem:[%s70]]
  %s72 = scalar_lea.smem %s0, 36
  %s73 = sld [smem:[%s72]]
  %s74 = scalar_lea.smem %s0, 37
  %s75 = sld [smem:[%s74]]
  %s76 = scalar_lea.smem %s0, 38
  %s77 = sld [smem:[%s76]]
  %s78 = scalar_lea.smem %s0, 39
  %s79 = sld [smem:[%s78]]
  %s80 = scalar_lea.smem %s0, 40
  %s81 = sld [smem:[%s80]]
  %s82 = scalar_lea.smem %s0, 41
  %s83 = sld [smem:[%s82]]
  %s84 = sld [smem:[#allocation0]]
  $region174: #{resnet1d_small_forward.1} parent=0
    _
  %s86 = ssub.s32 1, %s84
  %s87 = scalar_select 0, %s86, %s84
  $region1: #{resnet1d_small_forward.1} parent=0
    #allocation2 [shape = 'u8[1024]{0}', space=vmem, size = 0x400, scoped, tag = 'output window, operand 0, single buffered']
    #allocation3 [shape = 's32[1]{0}', space=sflag, size = 0x4, scoped, tag = 'scoped memory for resnet1d_small_forward.1']
    %88 = vsyncpa [#allocation3], 0
    // Predicated region
    $region2: #{resnet1d_small_forward.1} parent=1 // pred_check
      _
    $region3: #{resnet1d_small_forward.1} parent=1 // pred_check_branch
      %90 = sbr.rel (0) target = $region5
    $region4: #{resnet1d_small_forward.1} parent=1 // pred_region
      _
    $region5: #{resnet1d_small_forward.1} parent=1 // pred_fallthru
      _
    // Predicated region
    $region6: #{resnet1d_small_forward.1} parent=1 // pred_check
      _
    $region7: #{resnet1d_small_forward.1} parent=1 // pred_check_branch
      %92 = sbr.rel (0) target = $region9
    $region8: #{resnet1d_small_forward.1} parent=1 // pred_region
      _
    $region9: #{resnet1d_small_forward.1} parent=1 // pred_fallthru
      _
    // Predicated region
    $region10: #{resnet1d_small_forward.1} parent=1 // pred_check
      _
    $region11: #{resnet1d_small_forward.1} parent=1 // pred_check_branch
      %94 = sbr.rel (0) target = $region13
    $region12: #{resnet1d_small_forward.1} parent=1 // pred_region
      _
    $region13: #{resnet1d_small_forward.1} parent=1 // pred_fallthru
      _
    // Predicated region
    $region14: #{resnet1d_small_forward.1} parent=1 // pred_check
      _
    $region15: #{resnet1d_small_forward.1} parent=1 // pred_check_branch
      %96 = sbr.rel (0) target = $region17
    $region16: #{resnet1d_small_forward.1} parent=1 // pred_region
      _
    $region17: #{resnet1d_small_forward.1} parent=1 // pred_fallthru
      _
    // Predicated region
    $region18: #{resnet1d_small_forward.1} parent=1 // pred_check
      _
    $region19: #{resnet1d_small_forward.1} parent=1 // pred_check_branch
      %98 = sbr.rel (0) target = $region21
    $region20: #{resnet1d_small_forward.1} parent=1 // pred_region
      _
    $region21: #{resnet1d_small_forward.1} parent=1 // pred_fallthru
      _
    // Predicated region
    $region22: #{resnet1d_small_forward.1} parent=1 // pred_check
      _
    $region23: #{resnet1d_small_forward.1} parent=1 // pred_check_branch
      %100 = sbr.rel (0) target = $region25
    $region24: #{resnet1d_small_forward.1} parent=1 // pred_region
      _
    $region25: #{resnet1d_small_forward.1} parent=1 // pred_fallthru
      _
    // Predicated region
    $region26: #{resnet1d_small_forward.1} parent=1 // pred_check
      _
    $region27: #{resnet1d_small_forward.1} parent=1 // pred_check_branch
      %102 = sbr.rel (0) target = $region29
    $region28: #{resnet1d_small_forward.1} parent=1 // pred_region
      _
    $region29: #{resnet1d_small_forward.1} parent=1 // pred_fallthru
      _
    // Predicated region
    $region30: #{resnet1d_small_forward.1} parent=1 // pred_check
      _
    $region31: #{resnet1d_small_forward.1} parent=1 // pred_check_branch
      %104 = sbr.rel (0) target = $region33
    $region32: #{resnet1d_small_forward.1} parent=1 // pred_region
      _
    $region33: #{resnet1d_small_forward.1} parent=1 // pred_fallthru
      _
    // Predicated region
    $region34: #{resnet1d_small_forward.1} parent=1 // pred_check
      _
    $region35: #{resnet1d_small_forward.1} parent=1 // pred_check_branch
      %106 = sbr.rel (0) target = $region37
    $region36: #{resnet1d_small_forward.1} parent=1 // pred_region
      _
    $region37: #{resnet1d_small_forward.1} parent=1 // pred_fallthru
      _
    // Predicated region
    $region38: #{resnet1d_small_forward.1} parent=1 // pred_check
      _
    $region39: #{resnet1d_small_forward.1} parent=1 // pred_check_branch
      %108 = sbr.rel (0) target = $region41
    $region40: #{resnet1d_small_forward.1} parent=1 // pred_region
      _
    $region41: #{resnet1d_small_forward.1} parent=1 // pred_fallthru
      _
    // Predicated region
    $region42: #{resnet1d_small_forward.1} parent=1 // pred_check
      _
    $region43: #{resnet1d_small_forward.1} parent=1 // pred_check_branch
      %110 = sbr.rel (0) target = $region45
    $region44: #{resnet1d_small_forward.1} parent=1 // pred_region
      _
    $region45: #{resnet1d_small_forward.1} parent=1 // pred_fallthru
      _
    // Predicated region
    $region46: #{resnet1d_small_forward.1} parent=1 // pred_check
      _
    $region47: #{resnet1d_small_forward.1} parent=1 // pred_check_branch
      %112 = sbr.rel (0) target = $region49
    $region48: #{resnet1d_small_forward.1} parent=1 // pred_region
      _
    $region49: #{resnet1d_small_forward.1} parent=1 // pred_fallthru
      _
    // Predicated region
    $region50: #{resnet1d_small_forward.1} parent=1 // pred_check
      _
    $region51: #{resnet1d_small_forward.1} parent=1 // pred_check_branch
      %114 = sbr.rel (0) target = $region53
    $region52: #{resnet1d_small_forward.1} parent=1 // pred_region
      _
    $region53: #{resnet1d_small_forward.1} parent=1 // pred_fallthru
      _
    // Predicated region
    $region54: #{resnet1d_small_forward.1} parent=1 // pred_check
      _
    $region55: #{resnet1d_small_forward.1} parent=1 // pred_check_branch
      %116 = sbr.rel (0) target = $region57
    $region56: #{resnet1d_small_forward.1} parent=1 // pred_region
      _
    $region57: #{resnet1d_small_forward.1} parent=1 // pred_fallthru
      _
    // Predicated region
    $region58: #{resnet1d_small_forward.1} parent=1 // pred_check
      _
    $region59: #{resnet1d_small_forward.1} parent=1 // pred_check_branch
      %118 = sbr.rel (0) target = $region61
    $region60: #{resnet1d_small_forward.1} parent=1 // pred_region
      _
    $region61: #{resnet1d_small_forward.1} parent=1 // pred_fallthru
      _
    // Predicated region
    $region62: #{resnet1d_small_forward.1} parent=1 // pred_check
      _
    $region63: #{resnet1d_small_forward.1} parent=1 // pred_check_branch
      %120 = sbr.rel (0) target = $region65
    $region64: #{resnet1d_small_forward.1} parent=1 // pred_region
      _
    $region65: #{resnet1d_small_forward.1} parent=1 // pred_fallthru
      _
    // Predicated region
    $region66: #{resnet1d_small_forward.1} parent=1 // pred_check
      _
    $region67: #{resnet1d_small_forward.1} parent=1 // pred_check_branch
      %122 = sbr.rel (0) target = $region69
    $region68: #{resnet1d_small_forward.1} parent=1 // pred_region
      _
    $region69: #{resnet1d_small_forward.1} parent=1 // pred_fallthru
      _
    // Predicated region
    $region70: #{resnet1d_small_forward.1} parent=1 // pred_check
      _
    $region71: #{resnet1d_small_forward.1} parent=1 // pred_check_branch
      %124 = sbr.rel (0) target = $region73
    $region72: #{resnet1d_small_forward.1} parent=1 // pred_region
      _
    $region73: #{resnet1d_small_forward.1} parent=1 // pred_fallthru
      _
    // Predicated region
    $region74: #{resnet1d_small_forward.1} parent=1 // pred_check
      _
    $region75: #{resnet1d_small_forward.1} parent=1 // pred_check_branch
      %126 = sbr.rel (0) target = $region77
    $region76: #{resnet1d_small_forward.1} parent=1 // pred_region
      _
    $region77: #{resnet1d_small_forward.1} parent=1 // pred_fallthru
      _
    // Predicated region
    $region78: #{resnet1d_small_forward.1} parent=1 // pred_check
      _
    $region79: #{resnet1d_small_forward.1} parent=1 // pred_check_branch
      %128 = sbr.rel (0) target = $region81
    $region80: #{resnet1d_small_forward.1} parent=1 // pred_region
      _
    $region81: #{resnet1d_small_forward.1} parent=1 // pred_fallthru
      _
    // Predicated region
    $region82: #{resnet1d_small_forward.1} parent=1 // pred_check
      _
    $region83: #{resnet1d_small_forward.1} parent=1 // pred_check_branch
      %130 = sbr.rel (0) target = $region85
    $region84: #{resnet1d_small_forward.1} parent=1 // pred_region
      _
    $region85: #{resnet1d_small_forward.1} parent=1 // pred_fallthru
      _
    // Predicated region
    $region86: #{resnet1d_small_forward.1} parent=1 // pred_check
      _
    $region87: #{resnet1d_small_forward.1} parent=1 // pred_check_branch
      %132 = sbr.rel (0) target = $region89
    $region88: #{resnet1d_small_forward.1} parent=1 // pred_region
      _
    $region89: #{resnet1d_small_forward.1} parent=1 // pred_fallthru
      _
    // Predicated region
    $region90: #{resnet1d_small_forward.1} parent=1 // pred_check
      _
    $region91: #{resnet1d_small_forward.1} parent=1 // pred_check_branch
      %134 = sbr.rel (0) target = $region93
    $region92: #{resnet1d_small_forward.1} parent=1 // pred_region
      _
    $region93: #{resnet1d_small_forward.1} parent=1 // pred_fallthru
      _
    // Predicated region
    $region94: #{resnet1d_small_forward.1} parent=1 // pred_check
      _
    $region95: #{resnet1d_small_forward.1} parent=1 // pred_check_branch
      %136 = sbr.rel (0) target = $region97
    $region96: #{resnet1d_small_forward.1} parent=1 // pred_region
      _
    $region97: #{resnet1d_small_forward.1} parent=1 // pred_fallthru
      _
    // Predicated region
    $region98: #{resnet1d_small_forward.1} parent=1 // pred_check
      _
    $region99: #{resnet1d_small_forward.1} parent=1 // pred_check_branch
      %138 = sbr.rel (0) target = $region101
    $region100: #{resnet1d_small_forward.1} parent=1 // pred_region
      _
    $region101: #{resnet1d_small_forward.1} parent=1 // pred_fallthru
      _
    // Predicated region
    $region102: #{resnet1d_small_forward.1} parent=1 // pred_check
      _
    $region103: #{resnet1d_small_forward.1} parent=1 // pred_check_branch
      %140 = sbr.rel (0) target = $region105
    $region104: #{resnet1d_small_forward.1} parent=1 // pred_region
      _
    $region105: #{resnet1d_small_forward.1} parent=1 // pred_fallthru
      _
    // Predicated region
    $region106: #{resnet1d_small_forward.1} parent=1 // pred_check
      _
    $region107: #{resnet1d_small_forward.1} parent=1 // pred_check_branch
      %142 = sbr.rel (0) target = $region109
    $region108: #{resnet1d_small_forward.1} parent=1 // pred_region
      _
    $region109: #{resnet1d_small_forward.1} parent=1 // pred_fallthru
      _
    // Predicated region
    $region110: #{resnet1d_small_forward.1} parent=1 // pred_check
      _
    $region111: #{resnet1d_small_forward.1} parent=1 // pred_check_branch
      %144 = sbr.rel (0) target = $region113
    $region112: #{resnet1d_small_forward.1} parent=1 // pred_region
      _
    $region113: #{resnet1d_small_forward.1} parent=1 // pred_fallthru
      _
    // Predicated region
    $region114: #{resnet1d_small_forward.1} parent=1 // pred_check
      _
    $region115: #{resnet1d_small_forward.1} parent=1 // pred_check_branch
      %146 = sbr.rel (0) target = $region117
    $region116: #{resnet1d_small_forward.1} parent=1 // pred_region
      _
    $region117: #{resnet1d_small_forward.1} parent=1 // pred_fallthru
      _
    // Predicated region
    $region118: #{resnet1d_small_forward.1} parent=1 // pred_check
      _
    $region119: #{resnet1d_small_forward.1} parent=1 // pred_check_branch
      %148 = sbr.rel (0) target = $region121
    $region120: #{resnet1d_small_forward.1} parent=1 // pred_region
      _
    $region121: #{resnet1d_small_forward.1} parent=1 // pred_fallthru
      _
    // Predicated region
    $region122: #{resnet1d_small_forward.1} parent=1 // pred_check
      _
    $region123: #{resnet1d_small_forward.1} parent=1 // pred_check_branch
      %150 = sbr.rel (0) target = $region125
    $region124: #{resnet1d_small_forward.1} parent=1 // pred_region
      _
    $region125: #{resnet1d_small_forward.1} parent=1 // pred_fallthru
      _
    // Predicated region
    $region126: #{resnet1d_small_forward.1} parent=1 // pred_check
      _
    $region127: #{resnet1d_small_forward.1} parent=1 // pred_check_branch
      %152 = sbr.rel (0) target = $region129
    $region128: #{resnet1d_small_forward.1} parent=1 // pred_region
      _
    $region129: #{resnet1d_small_forward.1} parent=1 // pred_fallthru
      _
    // Predicated region
    $region130: #{resnet1d_small_forward.1} parent=1 // pred_check
      _
    $region131: #{resnet1d_small_forward.1} parent=1 // pred_check_branch
      %154 = sbr.rel (0) target = $region133
    $region132: #{resnet1d_small_forward.1} parent=1 // pred_region
      _
    $region133: #{resnet1d_small_forward.1} parent=1 // pred_fallthru
      _
    // Predicated region
    $region134: #{resnet1d_small_forward.1} parent=1 // pred_check
      _
    $region135: #{resnet1d_small_forward.1} parent=1 // pred_check_branch
      %156 = sbr.rel (0) target = $region137
    $region136: #{resnet1d_small_forward.1} parent=1 // pred_region
      _
    $region137: #{resnet1d_small_forward.1} parent=1 // pred_fallthru
      _
    // Predicated region
    $region138: #{resnet1d_small_forward.1} parent=1 // pred_check
      _
    $region139: #{resnet1d_small_forward.1} parent=1 // pred_check_branch
      %158 = sbr.rel (0) target = $region141
    $region140: #{resnet1d_small_forward.1} parent=1 // pred_region
      _
    $region141: #{resnet1d_small_forward.1} parent=1 // pred_fallthru
      _
    // Predicated region
    $region142: #{resnet1d_small_forward.1} parent=1 // pred_check
      _
    $region143: #{resnet1d_small_forward.1} parent=1 // pred_check_branch
      %160 = sbr.rel (0) target = $region145
    $region144: #{resnet1d_small_forward.1} parent=1 // pred_region
      _
    $region145: #{resnet1d_small_forward.1} parent=1 // pred_fallthru
      _
    // Predicated region
    $region146: #{resnet1d_small_forward.1} parent=1 // pred_check
      _
    $region147: #{resnet1d_small_forward.1} parent=1 // pred_check_branch
      %162 = sbr.rel (0) target = $region149
    $region148: #{resnet1d_small_forward.1} parent=1 // pred_region
      _
    $region149: #{resnet1d_small_forward.1} parent=1 // pred_fallthru
      _
    // Predicated region
    $region150: #{resnet1d_small_forward.1} parent=1 // pred_check
      _
    $region151: #{resnet1d_small_forward.1} parent=1 // pred_check_branch
      %164 = sbr.rel (0) target = $region153
    $region152: #{resnet1d_small_forward.1} parent=1 // pred_region
      _
    $region153: #{resnet1d_small_forward.1} parent=1 // pred_fallthru
      _
    // Predicated region
    $region154: #{resnet1d_small_forward.1} parent=1 // pred_check
      _
    $region155: #{resnet1d_small_forward.1} parent=1 // pred_check_branch
      %166 = sbr.rel (0) target = $region157
    $region156: #{resnet1d_small_forward.1} parent=1 // pred_region
      _
    $region157: #{resnet1d_small_forward.1} parent=1 // pred_fallthru
      _
    // Predicated region
    $region158: #{resnet1d_small_forward.1} parent=1 // pred_check
      _
    $region159: #{resnet1d_small_forward.1} parent=1 // pred_check_branch
      %168 = sbr.rel (0) target = $region161
    $region160: #{resnet1d_small_forward.1} parent=1 // pred_region
      _
    $region161: #{resnet1d_small_forward.1} parent=1 // pred_fallthru
      _
    // Predicated region
    $region162: #{resnet1d_small_forward.1} parent=1 // pred_check
      _
    $region163: #{resnet1d_small_forward.1} parent=1 // pred_check_branch
      %170 = sbr.rel (0) target = $region165
    $region164: #{resnet1d_small_forward.1} parent=1 // pred_region
      _
    $region165: #{resnet1d_small_forward.1} parent=1 // pred_fallthru
      _
    %v171 = vld [vmem:[%s1] sm:$0xff]
    %v172 = vld [vmem:[%s1 + $0x8] sm:$0xff]
    %v173 = vld [vmem:[%s1 + $0x10] sm:$0xff]
    %v174 = vld [vmem:[%s1 + $0x18] sm:$0xff]
    %v175 = vld [vmem:[%s1 + $0x20] sm:$0xff]
    %v176 = vld [vmem:[%s1 + $0x28] sm:$0xff]
    %v177 = vld [vmem:[%s1 + $0x30] sm:$0xff]
    %v178 = vld [vmem:[%s1 + $0x38] sm:$0xff]
    %v179 = vld [vmem:[%s1 + $0x40] sm:$0xff]
    %v180 = vld [vmem:[%s1 + $0x48] sm:$0xff]
    %v181 = vld [vmem:[%s1 + $0x50] sm:$0xff]
    %v182 = vld [vmem:[%s1 + $0x58] sm:$0xff]
    %v183 = vld [vmem:[%s1 + $0x60] sm:$0xff]
    %v184 = vld [vmem:[%s1 + $0x68] sm:$0xff]
    %v185 = vld [vmem:[%s1 + $0x70] sm:$0xff]
    %v186 = vld [vmem:[%s1 + $0x78] sm:$0xff]
    %v187 = vld [vmem:[%s3] sm:$0xff]
    %v188 = vld [vmem:[%s3 + $0x8] sm:$0xff]
    %v189 = vld [vmem:[%s3 + $0x10] sm:$0xff]
    %v190 = vld [vmem:[%s3 + $0x18] sm:$0xff]
    %v191 = vld [vmem:[%s3 + $0x20] sm:$0xff]
    %v192 = vld [vmem:[%s3 + $0x28] sm:$0xff]
    %v193 = vld [vmem:[%s3 + $0x30] sm:$0xff]
    %v194 = vld [vmem:[%s3 + $0x38] sm:$0xff]
    %195 = vmatprep.subr.mxu0 0.0
    %196 = vmatpush1.msra.mxu0 %v171
    %197 = vmatprep.subr.mxu0 0.0
    %198 = vmatpush1.msra.mxu0 %v172
    %199 = vmatprep.subr.mxu0 0.0
    %200 = vmatpush1.msra.mxu0 %v173
    %201 = vmatprep.subr.mxu0 0.0
    %202 = vmatpush1.msra.mxu0 %v174
    %203 = vmatprep.subr.mxu0 0.0
    %204 = vmatpush1.msra.mxu0 %v175
    %205 = vmatprep.subr.mxu0 0.0
    %206 = vmatpush1.msra.mxu0 %v176
    %207 = vmatprep.subr.mxu0 0.0
    %208 = vmatpush1.msra.mxu0 %v177
    %209 = vmatprep.subr.mxu0 0.0
    %210 = vmatpush1.msra.mxu0 %v178
    %211 = vmatprep.subr.mxu0 0.0
    %212 = vmatpush1.msra.mxu0 %v179
    %213 = vmatprep.subr.mxu0 0.0
    %214 = vmatpush1.msra.mxu0 %v180
    %215 = vmatprep.subr.mxu0 0.0
    %216 = vmatpush1.msra.mxu0 %v181
    %217 = vmatprep.subr.mxu0 0.0
    %218 = vmatpush1.msra.mxu0 %v182
    %219 = vmatprep.subr.mxu0 0.0
    %220 = vmatpush1.msra.mxu0 %v183
    %221 = vmatprep.subr.mxu0 0.0
    %222 = vmatpush1.msra.mxu0 %v184
    %223 = vmatprep.subr.mxu0 0.0
    %224 = vmatpush1.msra.mxu0 %v185
    %225 = vmatprep.subr.mxu0 0.0
    %226 = vmatpush1.msra.mxu0 %v186
    %227 = vmatprep.subr.mxu0 0.0
    %228 = vmatpush1.msra.mxu0 0.0
    %229 = vmatprep.subr.mxu0 0.0
    %230 = vmatpush1.msra.mxu0 0.0
    %231 = vmatprep.subr.mxu0 0.0
    %232 = vmatpush1.msra.mxu0 0.0
    %233 = vmatprep.subr.mxu0 0.0
    %234 = vmatpush1.msra.mxu0 0.0
    %235 = vmatprep.subr.mxu0 0.0
    %236 = vmatpush1.msra.mxu0 0.0
    %237 = vmatprep.subr.mxu0 0.0
    %238 = vmatpush1.msra.mxu0 0.0
    %239 = vmatprep.subr.mxu0 0.0
    %240 = vmatpush1.msra.mxu0 0.0
    %241 = vmatprep.subr.mxu0 0.0
    %242 = vmatpush1.msra.mxu0 0.0
    %243 = vmatprep.subr.mxu0 0.0
    %244 = vmatpush1.msra.mxu0 0.0
    %245 = vmatprep.subr.mxu0 0.0
    %246 = vmatpush1.msra.mxu0 0.0
    %247 = vmatprep.subr.mxu0 0.0
    %248 = vmatpush1.msra.mxu0 0.0
    %249 = vmatprep.subr.mxu0 0.0
    %250 = vmatpush1.msra.mxu0 0.0
    %251 = vmatprep.subr.mxu0 0.0
    %252 = vmatpush1.msra.mxu0 0.0
    %253 = vmatprep.subr.mxu0 0.0
    %254 = vmatpush1.msra.mxu0 0.0
    %255 = vmatprep.subr.mxu0 0.0
    %256 = vmatpush1.msra.mxu0 0.0
    %257 = vmatprep.subr.mxu0 0.0
    %258 = vmatpush1.msra.mxu0 0.0
    %259 = vmatprep.mubr.f32.mxu0 0.0
    %260 = vmatmul.mubr.f32.gmra.mrb[0].mxu0 %v187
    %v261 = vpop.f32.mrb[0].mxu0
    %v262 = vadd.f32 0.0, %v261
    %v263 = vpop.f32.mrb[0].mxu0
    %264 = vmatprep.mubr.f32.mxu0 0.0
    %265 = vmatmul.mubr.f32.gmra.mrb[0].mxu0 %v188
    %v266 = vpop.f32.mrb[0].mxu0
    %v267 = vadd.f32 0.0, %v266
    %v268 = vpop.f32.mrb[0].mxu0
    %269 = vmatprep.mubr.f32.mxu0 0.0
    %270 = vmatmul.mubr.f32.gmra.mrb[0].mxu0 %v189
    %v271 = vpop.f32.mrb[0].mxu0
    %v272 = vadd.f32 0.0, %v271
    %v273 = vpop.f32.mrb[0].mxu0
    %274 = vmatprep.mubr.f32.mxu0 0.0
    %275 = vmatmul.mubr.f32.gmra.mrb[0].mxu0 %v190
    %v276 = vpop.f32.mrb[0].mxu0
    %v277 = vadd.f32 0.0, %v276
    %v278 = vpop.f32.mrb[0].mxu0
    %279 = vmatprep.mubr.f32.mxu0 0.0
    %280 = vmatmul.mubr.f32.gmra.mrb[0].mxu0 %v191
    %v281 = vpop.f32.mrb[0].mxu0
    %v282 = vadd.f32 0.0, %v281
    %v283 = vpop.f32.mrb[0].mxu0
    %284 = vmatprep.mubr.f32.mxu0 0.0
    %285 = vmatmul.mubr.f32.gmra.mrb[0].mxu0 %v192
    %v286 = vpop.f32.mrb[0].mxu0
    %v287 = vadd.f32 0.0, %v286
    %v288 = vpop.f32.mrb[0].mxu0
    %289 = vmatprep.mubr.f32.mxu0 0.0
    %290 = vmatmul.mubr.f32.gmra.mrb[0].mxu0 %v193
    %v291 = vpop.f32.mrb[0].mxu0
    %v292 = vadd.f32 0.0, %v291
    %v293 = vpop.f32.mrb[0].mxu0
    %294 = vmatprep.mubr.f32.mxu0 0.0
    %295 = vmatmul.mubr.f32.gmra.mrb[0].mxu0 %v194
    %v296 = vpop.f32.mrb[0].mxu0
    %v297 = vadd.f32 0.0, %v296
    %v298 = vpop.f32.mrb[0].mxu0
    %299 = vdwg.mxu0
    %v300 = vld [vmem:[%s5] sm:$0x7]
    %s301 = scalar_lea.vmem %s3, 64
    %v302 = vld [vmem:[%s301] sm:$0xff]
    %v303 = vld [vmem:[%s301 + $0x8] sm:$0xff]
    %v304 = vld [vmem:[%s301 + $0x10] sm:$0xff]
    %v305 = vld [vmem:[%s301 + $0x18] sm:$0xff]
    %v306 = vld [vmem:[%s301 + $0x20] sm:$0xff]
    %v307 = vld [vmem:[%s301 + $0x28] sm:$0xff]
    %v308 = vld [vmem:[%s301 + $0x30] sm:$0xff]
    %v309 = vld [vmem:[%s301 + $0x38] sm:$0xff]
    %310 = vmatprep.subr.mxu0 0.0
    %311 = vmatpush1.msra.mxu0 %v171
    %312 = vmatprep.subr.mxu0 0.0
    %313 = vmatpush1.msra.mxu0 %v172
    %314 = vmatprep.subr.mxu0 0.0
    %315 = vmatpush1.msra.mxu0 %v173
    %316 = vmatprep.subr.mxu0 0.0
    %317 = vmatpush1.msra.mxu0 %v174
    %318 = vmatprep.subr.mxu0 0.0
    %319 = vmatpush1.msra.mxu0 %v175
    %320 = vmatprep.subr.mxu0 0.0
    %321 = vmatpush1.msra.mxu0 %v176
    %322 = vmatprep.subr.mxu0 0.0
    %323 = vmatpush1.msra.mxu0 %v177
    %324 = vmatprep.subr.mxu0 0.0
    %325 = vmatpush1.msra.mxu0 %v178
    %326 = vmatprep.subr.mxu0 0.0
    %327 = vmatpush1.msra.mxu0 %v179
    %328 = vmatprep.subr.mxu0 0.0
    %329 = vmatpush1.msra.mxu0 %v180
    %330 = vmatprep.subr.mxu0 0.0
    %331 = vmatpush1.msra.mxu0 %v181
    %332 = vmatprep.subr.mxu0 0.0
    %333 = vmatpush1.msra.mxu0 %v182
    %334 = vmatprep.subr.mxu0 0.0
    %335 = vmatpush1.msra.mxu0 %v183
    %336 = vmatprep.subr.mxu0 0.0
    %337 = vmatpush1.msra.mxu0 %v184
    %338 = vmatprep.subr.mxu0 0.0
    %339 = vmatpush1.msra.mxu0 %v185
    %340 = vmatprep.subr.mxu0 0.0
    %341 = vmatpush1.msra.mxu0 %v186
    %342 = vmatprep.subr.mxu0 0.0
    %343 = vmatpush1.msra.mxu0 0.0
    %344 = vmatprep.subr.mxu0 0.0
    %345 = vmatpush1.msra.mxu0 0.0
    %346 = vmatprep.subr.mxu0 0.0
    %347 = vmatpush1.msra.mxu0 0.0
    %348 = vmatprep.subr.mxu0 0.0
    %349 = vmatpush1.msra.mxu0 0.0
    %350 = vmatprep.subr.mxu0 0.0
    %351 = vmatpush1.msra.mxu0 0.0
    %352 = vmatprep.subr.mxu0 0.0
    %353 = vmatpush1.msra.mxu0 0.0
    %354 = vmatprep.subr.mxu0 0.0
    %355 = vmatpush1.msra.mxu0 0.0
    %356 = vmatprep.subr.mxu0 0.0
    %357 = vmatpush1.msra.mxu0 0.0
    %358 = vmatprep.subr.mxu0 0.0
    %359 = vmatpush1.msra.mxu0 0.0
    %360 = vmatprep.subr.mxu0 0.0
    %361 = vmatpush1.msra.mxu0 0.0
    %362 = vmatprep.subr.mxu0 0.0
    %363 = vmatpush1.msra.mxu0 0.0
    %364 = vmatprep.subr.mxu0 0.0
    %365 = vmatpush1.msra.mxu0 0.0
    %366 = vmatprep.subr.mxu0 0.0
    %367 = vmatpush1.msra.mxu0 0.0
    %368 = vmatprep.subr.mxu0 0.0
    %369 = vmatpush1.msra.mxu0 0.0
    %370 = vmatprep.subr.mxu0 0.0
    %371 = vmatpush1.msra.mxu0 0.0
    %372 = vmatprep.subr.mxu0 0.0
    %373 = vmatpush1.msra.mxu0 0.0
    %374 = vmatprep.mubr.f32.mxu0 0.0
    %375 = vmatmul.mubr.f32.gmra.mrb[0].mxu0 %v302
    %v376 = vpop.f32.mrb[0].mxu0
    %v377 = vadd.f32 0.0, %v376
    %v378 = vpop.f32.mrb[0].mxu0
    %379 = vmatprep.mubr.f32.mxu0 0.0
    %380 = vmatmul.mubr.f32.gmra.mrb[0].mxu0 %v303
    %v381 = vpop.f32.mrb[0].mxu0
    %v382 = vadd.f32 0.0, %v381
    %v383 = vpop.f32.mrb[0].mxu0
    %384 = vmatprep.mubr.f32.mxu0 0.0
    %385 = vmatmul.mubr.f32.gmra.mrb[0].mxu0 %v304
    %v386 = vpop.f32.mrb[0].mxu0
    %v387 = vadd.f32 0.0, %v386
    %v388 = vpop.f32.mrb[0].mxu0
    %389 = vmatprep.mubr.f32.mxu0 0.0
    %390 = vmatmul.mubr.f32.gmra.mrb[0].mxu0 %v305
    %v391 = vpop.f32.mrb[0].mxu0
    %v392 = vadd.f32 0.0, %v391
    %v393 = vpop.f32.mrb[0].mxu0
    %394 = vmatprep.mubr.f32.mxu0 0.0
    %395 = vmatmul.mubr.f32.gmra.mrb[0].mxu0 %v306
    %v396 = vpop.f32.mrb[0].mxu0
    %v397 = vadd.f32 0.0, %v396
    %v398 = vpop.f32.mrb[0].mxu0
    %399 = vmatprep.mubr.f32.mxu0 0.0
    %400 = vmatmul.mubr.f32.gmra.mrb[0].mxu0 %v307
    %v401 = vpop.f32.mrb[0].mxu0
    %v402 = vadd.f32 0.0, %v401
    %v403 = vpop.f32.mrb[0].mxu0
    %404 = vmatprep.mubr.f32.mxu0 0.0
    %405 = vmatmul.mubr.f32.gmra.mrb[0].mxu0 %v308
    %v406 = vpop.f32.mrb[0].mxu0
    %v407 = vadd.f32 0.0, %v406
    %v408 = vpop.f32.mrb[0].mxu0
    %409 = vmatprep.mubr.f32.mxu0 0.0
    %410 = vmatmul.mubr.f32.gmra.mrb[0].mxu0 %v309
    %v411 = vpop.f32.mrb[0].mxu0
    %v412 = vadd.f32 0.0, %v411
    %v413 = vpop.f32.mrb[0].mxu0
    %414 = vdwg.mxu0
    %s415 = scalar_lea.vmem %s5, 4
    %v416 = vld [vmem:[%s415] sm:$0x7]
    %vm417 = vcmask 23552
    %v419 = vsel %vm417, %v377, 0
    %v422 = vsel %vm417, %v382, 0
    %v425 = vsel %vm417, %v387, 0
    %v428 = vsel %vm417, %v392, 0
    %v431 = vsel %vm417, %v397, 0
    %v434 = vsel %vm417, %v402, 0
    %v437 = vsel %vm417, %v407, 0
    %v440 = vsel %vm417, %v412, 0
    %vm442 = vcmask 1042432
    %v444 = vsel %vm442, %v416, 0
    %446 = vmatprep.subr.mxu0 0.0
    %447 = vmatpush1.msra.mxu0 %v444
    %448 = vmatprep.subr.mxu0 0.0
    %449 = vmatpush1.msra.mxu0 0.0
    %450 = vmatprep.subr.mxu0 0.0
    %451 = vmatpush1.msra.mxu0 0.0
    %452 = vmatprep.subr.mxu0 0.0
    %453 = vmatpush1.msra.mxu0 0.0
    %454 = vmatprep.subr.mxu0 0.0
    %455 = vmatpush1.msra.mxu0 0.0
    %456 = vmatprep.subr.mxu0 0.0
    %457 = vmatpush1.msra.mxu0 0.0
    %458 = vmatprep.subr.mxu0 0.0
    %459 = vmatpush1.msra.mxu0 0.0
    %460 = vmatprep.subr.mxu0 0.0
    %461 = vmatpush1.msra.mxu0 0.0
    %462 = vmatprep.subr.mxu0 0.0
    %463 = vmatpush1.msra.mxu0 0.0
    %464 = vmatprep.subr.mxu0 0.0
    %465 = vmatpush1.msra.mxu0 0.0
    %466 = vmatprep.subr.mxu0 0.0
    %467 = vmatpush1.msra.mxu0 0.0
    %468 = vmatprep.subr.mxu0 0.0
    %469 = vmatpush1.msra.mxu0 0.0
    %470 = vmatprep.subr.mxu0 0.0
    %471 = vmatpush1.msra.mxu0 0.0
    %472 = vmatprep.subr.mxu0 0.0
    %473 = vmatpush1.msra.mxu0 0.0
    %474 = vmatprep.subr.mxu0 0.0
    %475 = vmatpush1.msra.mxu0 0.0
    %476 = vmatprep.subr.mxu0 0.0
    %477 = vmatpush1.msra.mxu0 0.0
    %478 = vmatprep.subr.mxu0 0.0
    %479 = vmatpush1.msra.mxu0 0.0
    %480 = vmatprep.subr.mxu0 0.0
    %481 = vmatpush1.msra.mxu0 0.0
    %482 = vmatprep.subr.mxu0 0.0
    %483 = vmatpush1.msra.mxu0 0.0
    %484 = vmatprep.subr.mxu0 0.0
    %485 = vmatpush1.msra.mxu0 0.0
    %486 = vmatprep.subr.mxu0 0.0
    %487 = vmatpush1.msra.mxu0 0.0
    %488 = vmatprep.subr.mxu0 0.0
    %489 = vmatpush1.msra.mxu0 0.0
    %490 = vmatprep.subr.mxu0 0.0
    %491 = vmatpush1.msra.mxu0 0.0
    %492 = vmatprep.subr.mxu0 0.0
    %493 = vmatpush1.msra.mxu0 0.0
    %494 = vmatprep.subr.mxu0 0.0
    %495 = vmatpush1.msra.mxu0 0.0
    %496 = vmatprep.subr.mxu0 0.0
    %497 = vmatpush1.msra.mxu0 0.0
    %498 = vmatprep.subr.mxu0 0.0
    %499 = vmatpush1.msra.mxu0 0.0
    %500 = vmatprep.subr.mxu0 0.0
    %501 = vmatpush1.msra.mxu0 0.0
    %502 = vmatprep.subr.mxu0 0.0
    %503 = vmatpush1.msra.mxu0 0.0
    %504 = vmatprep.subr.mxu0 0.0
    %505 = vmatpush1.msra.mxu0 0.0
    %506 = vmatprep.subr.mxu0 0.0
    %507 = vmatpush1.msra.mxu0 0.0
    %508 = vmatprep.subr.mxu0 0.0
    %509 = vmatpush1.msra.mxu0 0.0
    %510 = vmatprep.mubr.f32.mxu0 0.0
    %511 = vmatmul.mubr.f32.gmra.mrb[0].mxu0 %v419
    %v512 = vpop.f32.mrb[0].mxu0
    %v513 = vadd.f32 0.0, %v512
    %v514 = vpop.f32.mrb[0].mxu0
    %515 = vmatprep.mubr.f32.mxu0 0.0
    %516 = vmatmul.mubr.f32.gmra.mrb[0].mxu0 %v422
    %v517 = vpop.f32.mrb[0].mxu0
    %v518 = vadd.f32 0.0, %v517
    %v519 = vpop.f32.mrb[0].mxu0
    %520 = vmatprep.mubr.f32.mxu0 0.0
    %521 = vmatmul.mubr.f32.gmra.mrb[0].mxu0 %v425
    %v522 = vpop.f32.mrb[0].mxu0
    %v523 = vadd.f32 0.0, %v522
    %v524 = vpop.f32.mrb[0].mxu0
    %525 = vmatprep.mubr.f32.mxu0 0.0
    %526 = vmatmul.mubr.f32.gmra.mrb[0].mxu0 %v428
    %v527 = vpop.f32.mrb[0].mxu0
    %v528 = vadd.f32 0.0, %v527
    %v529 = vpop.f32.mrb[0].mxu0
    %530 = vmatprep.mubr.f32.mxu0 0.0
    %531 = vmatmul.mubr.f32.gmra.mrb[0].mxu0 %v431
    %v532 = vpop.f32.mrb[0].mxu0
    %v533 = vadd.f32 0.0, %v532
    %v534 = vpop.f32.mrb[0].mxu0
    %535 = vmatprep.mubr.f32.mxu0 0.0
    %536 = vmatmul.mubr.f32.gmra.mrb[0].mxu0 %v434
    %v537 = vpop.f32.mrb[0].mxu0
    %v538 = vadd.f32 0.0, %v537
    %v539 = vpop.f32.mrb[0].mxu0
    %540 = vmatprep.mubr.f32.mxu0 0.0
    %541 = vmatmul.mubr.f32.gmra.mrb[0].mxu0 %v437
    %v542 = vpop.f32.mrb[0].mxu0
    %v543 = vadd.f32 0.0, %v542
    %v544 = vpop.f32.mrb[0].mxu0
    %545 = vmatprep.mubr.f32.mxu0 0.0
    %546 = vmatmul.mubr.f32.gmra.mrb[0].mxu0 %v440
    %v547 = vpop.f32.mrb[0].mxu0
    %v548 = vadd.f32 0.0, %v547
    %v549 = vpop.f32.mrb[0].mxu0
    %550 = vdwg.mxu0
    %v552 = vsel %vm417, %v262, 0
    %v555 = vsel %vm417, %v267, 0
    %v558 = vsel %vm417, %v272, 0
    %v561 = vsel %vm417, %v277, 0
    %v564 = vsel %vm417, %v282, 0
    %v567 = vsel %vm417, %v287, 0
    %v570 = vsel %vm417, %v292, 0
    %v573 = vsel %vm417, %v297, 0
    %v576 = vsel %vm442, %v300, 0
    %578 = vmatprep.subr.mxu0 0.0
    %579 = vmatpush1.msra.mxu0 %v576
    %580 = vmatprep.subr.mxu0 0.0
    %581 = vmatpush1.msra.mxu0 0.0
    %582 = vmatprep.subr.mxu0 0.0
    %583 = vmatpush1.msra.mxu0 0.0
    %584 = vmatprep.subr.mxu0 0.0
    %585 = vmatpush1.msra.mxu0 0.0
    %586 = vmatprep.subr.mxu0 0.0
    %587 = vmatpush1.msra.mxu0 0.0
    %588 = vmatprep.subr.mxu0 0.0
    %589 = vmatpush1.msra.mxu0 0.0
    %590 = vmatprep.subr.mxu0 0.0
    %591 = vmatpush1.msra.mxu0 0.0
    %592 = vmatprep.subr.mxu0 0.0
    %593 = vmatpush1.msra.mxu0 0.0
    %594 = vmatprep.subr.mxu0 0.0
    %595 = vmatpush1.msra.mxu0 0.0
    %596 = vmatprep.subr.mxu0 0.0
    %597 = vmatpush1.msra.mxu0 0.0
    %598 = vmatprep.subr.mxu0 0.0
    %599 = vmatpush1.msra.mxu0 0.0
    %600 = vmatprep.subr.mxu0 0.0
    %601 = vmatpush1.msra.mxu0 0.0
    %602 = vmatprep.subr.mxu0 0.0
    %603 = vmatpush1.msra.mxu0 0.0
    %604 = vmatprep.subr.mxu0 0.0
    %605 = vmatpush1.msra.mxu0 0.0
    %606 = vmatprep.subr.mxu0 0.0
    %607 = vmatpush1.msra.mxu0 0.0
    %608 = vmatprep.subr.mxu0 0.0
    %609 = vmatpush1.msra.mxu0 0.0
    %610 = vmatprep.subr.mxu0 0.0
    %611 = vmatpush1.msra.mxu0 0.0
    %612 = vmatprep.subr.mxu0 0.0
    %613 = vmatpush1.msra.mxu0 0.0
    %614 = vmatprep.subr.mxu0 0.0
    %615 = vmatpush1.msra.mxu0 0.0
    %616 = vmatprep.subr.mxu0 0.0
    %617 = vmatpush1.msra.mxu0 0.0
    %618 = vmatprep.subr.mxu0 0.0
    %619 = vmatpush1.msra.mxu0 0.0
    %620 = vmatprep.subr.mxu0 0.0
    %621 = vmatpush1.msra.mxu0 0.0
    %622 = vmatprep.subr.mxu0 0.0
    %623 = vmatpush1.msra.mxu0 0.0
    %624 = vmatprep.subr.mxu0 0.0
    %625 = vmatpush1.msra.mxu0 0.0
    %626 = vmatprep.subr.mxu0 0.0
    %627 = vmatpush1.msra.mxu0 0.0
    %628 = vmatprep.subr.mxu0 0.0
    %629 = vmatpush1.msra.mxu0 0.0
    %630 = vmatprep.subr.mxu0 0.0
    %631 = vmatpush1.msra.mxu0 0.0
    %632 = vmatprep.subr.mxu0 0.0
    %633 = vmatpush1.msra.mxu0 0.0
    %634 = vmatprep.subr.mxu0 0.0
    %635 = vmatpush1.msra.mxu0 0.0
    %636 = vmatprep.subr.mxu0 0.0
    %637 = vmatpush1.msra.mxu0 0.0
    %638 = vmatprep.subr.mxu0 0.0
    %639 = vmatpush1.msra.mxu0 0.0
    %640 = vmatprep.subr.mxu0 0.0
    %641 = vmatpush1.msra.mxu0 0.0
    %642 = vmatprep.mubr.f32.mxu0 0.0
    %643 = vmatmul.mubr.f32.gmra.mrb[0].mxu0 %v552
    %v644 = vpop.f32.mrb[0].mxu0
    %v645 = vadd.f32 %v513, %v644
    %v646 = vpop.f32.mrb[0].mxu0
    %647 = vmatprep.mubr.f32.mxu0 0.0
    %648 = vmatmul.mubr.f32.gmra.mrb[0].mxu0 %v555
    %v649 = vpop.f32.mrb[0].mxu0
    %v650 = vadd.f32 %v518, %v649
    %v651 = vpop.f32.mrb[0].mxu0
    %652 = vmatprep.mubr.f32.mxu0 0.0
    %653 = vmatmul.mubr.f32.gmra.mrb[0].mxu0 %v558
    %v654 = vpop.f32.mrb[0].mxu0
    %v655 = vadd.f32 %v523, %v654
    %v656 = vpop.f32.mrb[0].mxu0
    %657 = vmatprep.mubr.f32.mxu0 0.0
    %658 = vmatmul.mubr.f32.gmra.mrb[0].mxu0 %v561
    %v659 = vpop.f32.mrb[0].mxu0
    %v660 = vadd.f32 %v528, %v659
    %v661 = vpop.f32.mrb[0].mxu0
    %662 = vmatprep.mubr.f32.mxu0 0.0
    %663 = vmatmul.mubr.f32.gmra.mrb[0].mxu0 %v564
    %v664 = vpop.f32.mrb[0].mxu0
    %v665 = vadd.f32 %v533, %v664
    %v666 = vpop.f32.mrb[0].mxu0
    %667 = vmatprep.mubr.f32.mxu0 0.0
    %668 = vmatmul.mubr.f32.gmra.mrb[0].mxu0 %v567
    %v669 = vpop.f32.mrb[0].mxu0
    %v670 = vadd.f32 %v538, %v669
    %v671 = vpop.f32.mrb[0].mxu0
    %672 = vmatprep.mubr.f32.mxu0 0.0
    %673 = vmatmul.mubr.f32.gmra.mrb[0].mxu0 %v570
    %v674 = vpop.f32.mrb[0].mxu0
    %v675 = vadd.f32 %v543, %v674
    %v676 = vpop.f32.mrb[0].mxu0
    %677 = vmatprep.mubr.f32.mxu0 0.0
    %678 = vmatmul.mubr.f32.gmra.mrb[0].mxu0 %v573
    %v679 = vpop.f32.mrb[0].mxu0
    %v680 = vadd.f32 %v548, %v679
    %v681 = vpop.f32.mrb[0].mxu0
    %682 = vdwg.mxu0
    %s683 = scalar_lea.vmem %s3, 128
    %v684 = vld [vmem:[%s683] sm:$0xff]
    %v685 = vld [vmem:[%s683 + $0x8] sm:$0xff]
    %v686 = vld [vmem:[%s683 + $0x10] sm:$0xff]
    %v687 = vld [vmem:[%s683 + $0x18] sm:$0xff]
    %v688 = vld [vmem:[%s683 + $0x20] sm:$0xff]
    %v689 = vld [vmem:[%s683 + $0x28] sm:$0xff]
    %v690 = vld [vmem:[%s683 + $0x30] sm:$0xff]
    %v691 = vld [vmem:[%s683 + $0x38] sm:$0xff]
    %692 = vmatprep.subr.mxu0 0.0
    %693 = vmatpush1.msra.mxu0 %v171
    %694 = vmatprep.subr.mxu0 0.0
    %695 = vmatpush1.msra.mxu0 %v172
    %696 = vmatprep.subr.mxu0 0.0
    %697 = vmatpush1.msra.mxu0 %v173
    %698 = vmatprep.subr.mxu0 0.0
    %699 = vmatpush1.msra.mxu0 %v174
    %700 = vmatprep.subr.mxu0 0.0
    %701 = vmatpush1.msra.mxu0 %v175
    %702 = vmatprep.subr.mxu0 0.0
    %703 = vmatpush1.msra.mxu0 %v176
    %704 = vmatprep.subr.mxu0 0.0
    %705 = vmatpush1.msra.mxu0 %v177
    %706 = vmatprep.subr.mxu0 0.0
    %707 = vmatpush1.msra.mxu0 %v178
    %708 = vmatprep.subr.mxu0 0.0
    %709 = vmatpush1.msra.mxu0 %v179
    %710 = vmatprep.subr.mxu0 0.0
    %711 = vmatpush1.msra.mxu0 %v180
    %712 = vmatprep.subr.mxu0 0.0
    %713 = vmatpush1.msra.mxu0 %v181
    %714 = vmatprep.subr.mxu0 0.0
    %715 = vmatpush1.msra.mxu0 %v182
    %716 = vmatprep.subr.mxu0 0.0
    %717 = vmatpush1.msra.mxu0 %v183
    %718 = vmatprep.subr.mxu0 0.0
    %719 = vmatpush1.msra.mxu0 %v184
    %720 = vmatprep.subr.mxu0 0.0
    %721 = vmatpush1.msra.mxu0 %v185
    %722 = vmatprep.subr.mxu0 0.0
    %723 = vmatpush1.msra.mxu0 %v186
    %724 = vmatprep.subr.mxu0 0.0
    %725 = vmatpush1.msra.mxu0 0.0
    %726 = vmatprep.subr.mxu0 0.0
    %727 = vmatpush1.msra.mxu0 0.0
    %728 = vmatprep.subr.mxu0 0.0
    %729 = vmatpush1.msra.mxu0 0.0
    %730 = vmatprep.subr.mxu0 0.0
    %731 = vmatpush1.msra.mxu0 0.0
    %732 = vmatprep.subr.mxu0 0.0
    %733 = vmatpush1.msra.mxu0 0.0
    %734 = vmatprep.subr.mxu0 0.0
    %735 = vmatpush1.msra.mxu0 0.0
    %736 = vmatprep.subr.mxu0 0.0
    %737 = vmatpush1.msra.mxu0 0.0
    %738 = vmatprep.subr.mxu0 0.0
    %739 = vmatpush1.msra.mxu0 0.0
    %740 = vmatprep.subr.mxu0 0.0
    %741 = vmatpush1.msra.mxu0 0.0
    %742 = vmatprep.subr.mxu0 0.0
    %743 = vmatpush1.msra.mxu0 0.0
    %744 = vmatprep.subr.mxu0 0.0
    %745 = vmatpush1.msra.mxu0 0.0
    %746 = vmatprep.subr.mxu0 0.0
    %747 = vmatpush1.msra.mxu0 0.0
    %748 = vmatprep.subr.mxu0 0.0
    %749 = vmatpush1.msra.mxu0 0.0
    %750 = vmatprep.subr.mxu0 0.0
    %751 = vmatpush1.msra.mxu0 0.0
    %752 = vmatprep.subr.mxu0 0.0
    %753 = vmatpush1.msra.mxu0 0.0
    %754 = vmatprep.subr.mxu0 0.0
    %755 = vmatpush1.msra.mxu0 0.0
    %756 = vmatprep.mubr.f32.mxu0 0.0
    %757 = vmatmul.mubr.f32.gmra.mrb[0].mxu0 %v684
    %v758 = vpop.f32.mrb[0].mxu0
    %v759 = vadd.f32 0.0, %v758
    %v760 = vpop.f32.mrb[0].mxu0
    %761 = vmatprep.mubr.f32.mxu0 0.0
    %762 = vmatmul.mubr.f32.gmra.mrb[0].mxu0 %v685
    %v763 = vpop.f32.mrb[0].mxu0
    %v764 = vadd.f32 0.0, %v763
    %v765 = vpop.f32.mrb[0].mxu0
    %766 = vmatprep.mubr.f32.mxu0 0.0
    %767 = vmatmul.mubr.f32.gmra.mrb[0].mxu0 %v686
    %v768 = vpop.f32.mrb[0].mxu0
    %v769 = vadd.f32 0.0, %v768
    %v770 = vpop.f32.mrb[0].mxu0
    %771 = vmatprep.mubr.f32.mxu0 0.0
    %772 = vmatmul.mubr.f32.gmra.mrb[0].mxu0 %v687
    %v773 = vpop.f32.mrb[0].mxu0
    %v774 = vadd.f32 0.0, %v773
    %v775 = vpop.f32.mrb[0].mxu0
    %776 = vmatprep.mubr.f32.mxu0 0.0
    %777 = vmatmul.mubr.f32.gmra.mrb[0].mxu0 %v688
    %v778 = vpop.f32.mrb[0].mxu0
    %v779 = vadd.f32 0.0, %v778
    %v780 = vpop.f32.mrb[0].mxu0
    %781 = vmatprep.mubr.f32.mxu0 0.0
    %782 = vmatmul.mubr.f32.gmra.mrb[0].mxu0 %v689
    %v783 = vpop.f32.mrb[0].mxu0
    %v784 = vadd.f32 0.0, %v783
    %v785 = vpop.f32.mrb[0].mxu0
    %786 = vmatprep.mubr.f32.mxu0 0.0
    %787 = vmatmul.mubr.f32.gmra.mrb[0].mxu0 %v690
    %v788 = vpop.f32.mrb[0].mxu0
    %v789 = vadd.f32 0.0, %v788
    %v790 = vpop.f32.mrb[0].mxu0
    %791 = vmatprep.mubr.f32.mxu0 0.0
    %792 = vmatmul.mubr.f32.gmra.mrb[0].mxu0 %v691
    %v793 = vpop.f32.mrb[0].mxu0
    %v794 = vadd.f32 0.0, %v793
    %v795 = vpop.f32.mrb[0].mxu0
    %796 = vdwg.mxu0
    %s797 = scalar_lea.vmem %s5, 8
    %v798 = vld [vmem:[%s797] sm:$0x7]
    %v800 = vsel %vm417, %v759, 0
    %v803 = vsel %vm417, %v764, 0
    %v806 = vsel %vm417, %v769, 0
    %v809 = vsel %vm417, %v774, 0
    %v812 = vsel %vm417, %v779, 0
    %v815 = vsel %vm417, %v784, 0
    %v818 = vsel %vm417, %v789, 0
    %v821 = vsel %vm417, %v794, 0
    %v824 = vsel %vm442, %v798, 0
    %826 = vmatprep.subr.mxu0 0.0
    %827 = vmatpush1.msra.mxu0 %v824
    %828 = vmatprep.subr.mxu0 0.0
    %829 = vmatpush1.msra.mxu0 0.0
    %830 = vmatprep.subr.mxu0 0.0
    %831 = vmatpush1.msra.mxu0 0.0
    %832 = vmatprep.subr.mxu0 0.0
    %833 = vmatpush1.msra.mxu0 0.0
    %834 = vmatprep.subr.mxu0 0.0
    %835 = vmatpush1.msra.mxu0 0.0
    %836 = vmatprep.subr.mxu0 0.0
    %837 = vmatpush1.msra.mxu0 0.0
    %838 = vmatprep.subr.mxu0 0.0
    %839 = vmatpush1.msra.mxu0 0.0
    %840 = vmatprep.subr.mxu0 0.0
    %841 = vmatpush1.msra.mxu0 0.0
    %842 = vmatprep.subr.mxu0 0.0
    %843 = vmatpush1.msra.mxu0 0.0
    %844 = vmatprep.subr.mxu0 0.0
    %845 = vmatpush1.msra.mxu0 0.0
    %846 = vmatprep.subr.mxu0 0.0
    %847 = vmatpush1.msra.mxu0 0.0
    %848 = vmatprep.subr.mxu0 0.0
    %849 = vmatpush1.msra.mxu0 0.0
    %850 = vmatprep.subr.mxu0 0.0
    %851 = vmatpush1.msra.mxu0 0.0
    %852 = vmatprep.subr.mxu0 0.0
    %853 = vmatpush1.msra.mxu0 0.0
    %854 = vmatprep.subr.mxu0 0.0
    %855 = vmatpush1.msra.mxu0 0.0
    %856 = vmatprep.subr.mxu0 0.0
    %857 = vmatpush1.msra.mxu0 0.0
    %858 = vmatprep.subr.mxu0 0.0
    %859 = vmatpush1.msra.mxu0 0.0
    %860 = vmatprep.subr.mxu0 0.0
    %861 = vmatpush1.msra.mxu0 0.0
    %862 = vmatprep.subr.mxu0 0.0
    %863 = vmatpush1.msra.mxu0 0.0
    %864 = vmatprep.subr.mxu0 0.0
    %865 = vmatpush1.msra.mxu0 0.0
    %866 = vmatprep.subr.mxu0 0.0
    %867 = vmatpush1.msra.mxu0 0.0
    %868 = vmatprep.subr.mxu0 0.0
    %869 = vmatpush1.msra.mxu0 0.0
    %870 = vmatprep.subr.mxu0 0.0
    %871 = vmatpush1.msra.mxu0 0.0
    %872 = vmatprep.subr.mxu0 0.0
    %873 = vmatpush1.msra.mxu0 0.0
    %874 = vmatprep.subr.mxu0 0.0
    %875 = vmatpush1.msra.mxu0 0.0
    %876 = vmatprep.subr.mxu0 0.0
    %877 = vmatpush1.msra.mxu0 0.0
    %878 = vmatprep.subr.mxu0 0.0
    %879 = vmatpush1.msra.mxu0 0.0
    %880 = vmatprep.subr.mxu0 0.0
    %881 = vmatpush1.msra.mxu0 0.0
    %882 = vmatprep.subr.mxu0 0.0
    %883 = vmatpush1.msra.mxu0 0.0
    %884 = vmatprep.subr.mxu0 0.0
    %885 = vmatpush1.msra.mxu0 0.0
    %886 = vmatprep.subr.mxu0 0.0
    %887 = vmatpush1.msra.mxu0 0.0
    %888 = vmatprep.subr.mxu0 0.0
    %889 = vmatpush1.msra.mxu0 0.0
    %890 = vmatprep.mubr.f32.mxu0 0.0
    %891 = vmatmul.mubr.f32.gmra.mrb[0].mxu0 %v800
    %v892 = vpop.f32.mrb[0].mxu0
    %v893 = vadd.f32 0.0, %v892
    %v894 = vpop.f32.mrb[0].mxu0
    %895 = vmatprep.mubr.f32.mxu0 0.0
    %896 = vmatmul.mubr.f32.gmra.mrb[0].mxu0 %v803
    %v897 = vpop.f32.mrb[0].mxu0
    %v898 = vadd.f32 0.0, %v897
    %v899 = vpop.f32.mrb[0].mxu0
    %900 = vmatprep.mubr.f32.mxu0 0.0
    %901 = vmatmul.mubr.f32.gmra.mrb[0].mxu0 %v806
    %v902 = vpop.f32.mrb[0].mxu0
    %v903 = vadd.f32 0.0, %v902
    %v904 = vpop.f32.mrb[0].mxu0
    %905 = vmatprep.mubr.f32.mxu0 0.0
    %906 = vmatmul.mubr.f32.gmra.mrb[0].mxu0 %v809
    %v907 = vpop.f32.mrb[0].mxu0
    %v908 = vadd.f32 0.0, %v907
    %v909 = vpop.f32.mrb[0].mxu0
    %910 = vmatprep.mubr.f32.mxu0 0.0
    %911 = vmatmul.mubr.f32.gmra.mrb[0].mxu0 %v812
    %v912 = vpop.f32.mrb[0].mxu0
    %v913 = vadd.f32 0.0, %v912
    %v914 = vpop.f32.mrb[0].mxu0
    %915 = vmatprep.mubr.f32.mxu0 0.0
    %916 = vmatmul.mubr.f32.gmra.mrb[0].mxu0 %v815
    %v917 = vpop.f32.mrb[0].mxu0
    %v918 = vadd.f32 0.0, %v917
    %v919 = vpop.f32.mrb[0].mxu0
    %920 = vmatprep.mubr.f32.mxu0 0.0
    %921 = vmatmul.mubr.f32.gmra.mrb[0].mxu0 %v818
    %v922 = vpop.f32.mrb[0].mxu0
    %v923 = vadd.f32 0.0, %v922
    %v924 = vpop.f32.mrb[0].mxu0
    %925 = vmatprep.mubr.f32.mxu0 0.0
    %926 = vmatmul.mubr.f32.gmra.mrb[0].mxu0 %v821
    %v927 = vpop.f32.mrb[0].mxu0
    %v928 = vadd.f32 0.0, %v927
    %v929 = vpop.f32.mrb[0].mxu0
    %930 = vdwg.mxu0
    %v931 = vadd.f32 %v645, %v893
    %v932 = vadd.f32 %v650, %v898
    %v933 = vadd.f32 %v655, %v903
    %v934 = vadd.f32 %v660, %v908
    %v935 = vadd.f32 %v665, %v913
    %v936 = vadd.f32 %v670, %v918
    %v937 = vadd.f32 %v675, %v923
    %v938 = vadd.f32 %v680, %v928
    %s939 = scalar_lea.vmem %s3, 192
    %v940 = vld [vmem:[%s939] sm:$0xff]
    %v941 = vld [vmem:[%s939 + $0x8] sm:$0xff]
    %v942 = vld [vmem:[%s939 + $0x10] sm:$0xff]
    %v943 = vld [vmem:[%s939 + $0x18] sm:$0xff]
    %v944 = vld [vmem:[%s939 + $0x20] sm:$0xff]
    %v945 = vld [vmem:[%s939 + $0x28] sm:$0xff]
    %v946 = vld [vmem:[%s939 + $0x30] sm:$0xff]
    %v947 = vld [vmem:[%s939 + $0x38] sm:$0xff]
    %948 = vmatprep.subr.mxu0 0.0
    %949 = vmatpush1.msra.mxu0 %v171
    %950 = vmatprep.subr.mxu0 0.0
    %951 = vmatpush1.msra.mxu0 %v172
    %952 = vmatprep.subr.mxu0 0.0
    %953 = vmatpush1.msra.mxu0 %v173
    %954 = vmatprep.subr.mxu0 0.0
    %955 = vmatpush1.msra.mxu0 %v174
    %956 = vmatprep.subr.mxu0 0.0
    %957 = vmatpush1.msra.mxu0 %v175
    %958 = vmatprep.subr.mxu0 0.0
    %959 = vmatpush1.msra.mxu0 %v176
    %960 = vmatprep.subr.mxu0 0.0
    %961 = vmatpush1.msra.mxu0 %v177
    %962 = vmatprep.subr.mxu0 0.0
    %963 = vmatpush1.msra.mxu0 %v178
    %964 = vmatprep.subr.mxu0 0.0
    %965 = vmatpush1.msra.mxu0 %v179
    %966 = vmatprep.subr.mxu0 0.0
    %967 = vmatpush1.msra.mxu0 %v180
    %968 = vmatprep.subr.mxu0 0.0
    %969 = vmatpush1.msra.mxu0 %v181
    %970 = vmatprep.subr.mxu0 0.0
    %971 = vmatpush1.msra.mxu0 %v182
    %972 = vmatprep.subr.mxu0 0.0
    %973 = vmatpush1.msra.mxu0 %v183
    %974 = vmatprep.subr.mxu0 0.0
    %975 = vmatpush1.msra.mxu0 %v184
    %976 = vmatprep.subr.mxu0 0.0
    %977 = vmatpush1.msra.mxu0 %v185
    %978 = vmatprep.subr.mxu0 0.0
    %979 = vmatpush1.msra.mxu0 %v186
    %980 = vmatprep.subr.mxu0 0.0
    %981 = vmatpush1.msra.mxu0 0.0
    %982 = vmatprep.subr.mxu0 0.0
    %983 = vmatpush1.msra.mxu0 0.0
    %984 = vmatprep.subr.mxu0 0.0
    %985 = vmatpush1.msra.mxu0 0.0
    %986 = vmatprep.subr.mxu0 0.0
    %987 = vmatpush1.msra.mxu0 0.0
    %988 = vmatprep.subr.mxu0 0.0
    %989 = vmatpush1.msra.mxu0 0.0
    %990 = vmatprep.subr.mxu0 0.0
    %991 = vmatpush1.msra.mxu0 0.0
    %992 = vmatprep.subr.mxu0 0.0
    %993 = vmatpush1.msra.mxu0 0.0
    %994 = vmatprep.subr.mxu0 0.0
    %995 = vmatpush1.msra.mxu0 0.0
    %996 = vmatprep.subr.mxu0 0.0
    %997 = vmatpush1.msra.mxu0 0.0
    %998 = vmatprep.subr.mxu0 0.0
    %999 = vmatpush1.msra.mxu0 0.0
    %1000 = vmatprep.subr.mxu0 0.0
    %1001 = vmatpush1.msra.mxu0 0.0
    %1002 = vmatprep.subr.mxu0 0.0
    %1003 = vmatpush1.msra.mxu0 0.0
    %1004 = vmatprep.subr.mxu0 0.0
    %1005 = vmatpush1.msra.mxu0 0.0
    %1006 = vmatprep.subr.mxu0 0.0
    %1007 = vmatpush1.msra.mxu0 0.0
    %1008 = vmatprep.subr.mxu0 0.0
    %1009 = vmatpush1.msra.mxu0 0.0
    %1010 = vmatprep.subr.mxu0 0.0
    %1011 = vmatpush1.msra.mxu0 0.0
    %1012 = vmatprep.mubr.f32.mxu0 0.0
    %1013 = vmatmul.mubr.f32.gmra.mrb[0].mxu0 %v940
    %v1014 = vpop.f32.mrb[0].mxu0
    %v1015 = vadd.f32 0.0, %v1014
    %v1016 = vpop.f32.mrb[0].mxu0
    %1017 = vmatprep.mubr.f32.mxu0 0.0
    %1018 = vmatmul.mubr.f32.gmra.mrb[0].mxu0 %v941
    %v1019 = vpop.f32.mrb[0].mxu0
    %v1020 = vadd.f32 0.0, %v1019
    %v1021 = vpop.f32.mrb[0].mxu0
    %1022 = vmatprep.mubr.f32.mxu0 0.0
    %1023 = vmatmul.mubr.f32.gmra.mrb[0].mxu0 %v942
    %v1024 = vpop.f32.mrb[0].mxu0
    %v1025 = vadd.f32 0.0, %v1024
    %v1026 = vpop.f32.mrb[0].mxu0
    %1027 = vmatprep.mubr.f32.mxu0 0.0
    %1028 = vmatmul.mubr.f32.gmra.mrb[0].mxu0 %v943
    %v1029 = vpop.f32.mrb[0].mxu0
    %v1030 = vadd.f32 0.0, %v1029
    %v1031 = vpop.f32.mrb[0].mxu0
    %1032 = vmatprep.mubr.f32.mxu0 0.0
    %1033 = vmatmul.mubr.f32.gmra.mrb[0].mxu0 %v944
    %v1034 = vpop.f32.mrb[0].mxu0
    %v1035 = vadd.f32 0.0, %v1034
    %v1036 = vpop.f32.mrb[0].mxu0
    %1037 = vmatprep.mubr.f32.mxu0 0.0
    %1038 = vmatmul.mubr.f32.gmra.mrb[0].mxu0 %v945
    %v1039 = vpop.f32.mrb[0].mxu0
    %v1040 = vadd.f32 0.0, %v1039
    %v1041 = vpop.f32.mrb[0].mxu0
    %1042 = vmatprep.mubr.f32.mxu0 0.0
    %1043 = vmatmul.mubr.f32.gmra.mrb[0].mxu0 %v946
    %v1044 = vpop.f32.mrb[0].mxu0
    %v1045 = vadd.f32 0.0, %v1044
    %v1046 = vpop.f32.mrb[0].mxu0
    %1047 = vmatprep.mubr.f32.mxu0 0.0
    %1048 = vmatmul.mubr.f32.gmra.mrb[0].mxu0 %v947
    %v1049 = vpop.f32.mrb[0].mxu0
    %v1050 = vadd.f32 0.0, %v1049
    %v1051 = vpop.f32.mrb[0].mxu0
    %1052 = vdwg.mxu0
    %s1053 = scalar_lea.vmem %s5, 12
    %v1054 = vld [vmem:[%s1053] sm:$0x7]
    %v1056 = vsel %vm417, %v1015, 0
    %v1059 = vsel %vm417, %v1020, 0
    %v1062 = vsel %vm417, %v1025, 0
    %v1065 = vsel %vm417, %v1030, 0
    %v1068 = vsel %vm417, %v1035, 0
    %v1071 = vsel %vm417, %v1040, 0
    %v1074 = vsel %vm417, %v1045, 0
    %v1077 = vsel %vm417, %v1050, 0
    %v1080 = vsel %vm442, %v1054, 0
    %1082 = vmatprep.subr.mxu0 0.0
    %1083 = vmatpush1.msra.mxu0 %v1080
    %1084 = vmatprep.subr.mxu0 0.0
    %1085 = vmatpush1.msra.mxu0 0.0
    %1086 = vmatprep.subr.mxu0 0.0
    %1087 = vmatpush1.msra.mxu0 0.0
    %1088 = vmatprep.subr.mxu0 0.0
    %1089 = vmatpush1.msra.mxu0 0.0
    %1090 = vmatprep.subr.mxu0 0.0
    %1091 = vmatpush1.msra.mxu0 0.0
    %1092 = vmatprep.subr.mxu0 0.0
    %1093 = vmatpush1.msra.mxu0 0.0
    %1094 = vmatprep.subr.mxu0 0.0
    %1095 = vmatpush1.msra.mxu0 0.0
    %1096 = vmatprep.subr.mxu0 0.0
    %1097 = vmatpush1.msra.mxu0 0.0
    %1098 = vmatprep.subr.mxu0 0.0
    %1099 = vmatpush1.msra.mxu0 0.0
    %1100 = vmatprep.subr.mxu0 0.0
    %1101 = vmatpush1.msra.mxu0 0.0
    %1102 = vmatprep.subr.mxu0 0.0
    %1103 = vmatpush1.msra.mxu0 0.0
    %1104 = vmatprep.subr.mxu0 0.0
    %1105 = vmatpush1.msra.mxu0 0.0
    %1106 = vmatprep.subr.mxu0 0.0
    %1107 = vmatpush1.msra.mxu0 0.0
    %1108 = vmatprep.subr.mxu0 0.0
    %1109 = vmatpush1.msra.mxu0 0.0
    %1110 = vmatprep.subr.mxu0 0.0
    %1111 = vmatpush1.msra.mxu0 0.0
    %1112 = vmatprep.subr.mxu0 0.0
    %1113 = vmatpush1.msra.mxu0 0.0
    %1114 = vmatprep.subr.mxu0 0.0
    %1115 = vmatpush1.msra.mxu0 0.0
    %1116 = vmatprep.subr.mxu0 0.0
    %1117 = vmatpush1.msra.mxu0 0.0
    %1118 = vmatprep.subr.mxu0 0.0
    %1119 = vmatpush1.msra.mxu0 0.0
    %1120 = vmatprep.subr.mxu0 0.0
    %1121 = vmatpush1.msra.mxu0 0.0
    %1122 = vmatprep.subr.mxu0 0.0
    %1123 = vmatpush1.msra.mxu0 0.0
    %1124 = vmatprep.subr.mxu0 0.0
    %1125 = vmatpush1.msra.mxu0 0.0
    %1126 = vmatprep.subr.mxu0 0.0
    %1127 = vmatpush1.msra.mxu0 0.0
    %1128 = vmatprep.subr.mxu0 0.0
    %1129 = vmatpush1.msra.mxu0 0.0
    %1130 = vmatprep.subr.mxu0 0.0
    %1131 = vmatpush1.msra.mxu0 0.0
    %1132 = vmatprep.subr.mxu0 0.0
    %1133 = vmatpush1.msra.mxu0 0.0
    %1134 = vmatprep.subr.mxu0 0.0
    %1135 = vmatpush1.msra.mxu0 0.0
    %1136 = vmatprep.subr.mxu0 0.0
    %1137 = vmatpush1.msra.mxu0 0.0
    %1138 = vmatprep.subr.mxu0 0.0
    %1139 = vmatpush1.msra.mxu0 0.0
    %1140 = vmatprep.subr.mxu0 0.0
    %1141 = vmatpush1.msra.mxu0 0.0
    %1142 = vmatprep.subr.mxu0 0.0
    %1143 = vmatpush1.msra.mxu0 0.0
    %1144 = vmatprep.subr.mxu0 0.0
    %1145 = vmatpush1.msra.mxu0 0.0
    %1146 = vmatprep.mubr.f32.mxu0 0.0
    %1147 = vmatmul.mubr.f32.gmra.mrb[0].mxu0 %v1056
    %v1148 = vpop.f32.mrb[0].mxu0
    %v1149 = vadd.f32 0.0, %v1148
    %v1150 = vpop.f32.mrb[0].mxu0
    %1151 = vmatprep.mubr.f32.mxu0 0.0
    %1152 = vmatmul.mubr.f32.gmra.mrb[0].mxu0 %v1059
    %v1153 = vpop.f32.mrb[0].mxu0
    %v1154 = vadd.f32 0.0, %v1153
    %v1155 = vpop.f32.mrb[0].mxu0
    %1156 = vmatprep.mubr.f32.mxu0 0.0
    %1157 = vmatmul.mubr.f32.gmra.mrb[0].mxu0 %v1062
    %v1158 = vpop.f32.mrb[0].mxu0
    %v1159 = vadd.f32 0.0, %v1158
    %v1160 = vpop.f32.mrb[0].mxu0
    %1161 = vmatprep.mubr.f32.mxu0 0.0
    %1162 = vmatmul.mubr.f32.gmra.mrb[0].mxu0 %v1065
    %v1163 = vpop.f32.mrb[0].mxu0
    %v1164 = vadd.f32 0.0, %v1163
    %v1165 = vpop.f32.mrb[0].mxu0
    %1166 = vmatprep.mubr.f32.mxu0 0.0
    %1167 = vmatmul.mubr.f32.gmra.mrb[0].mxu0 %v1068
    %v1168 = vpop.f32.mrb[0].mxu0
    %v1169 = vadd.f32 0.0, %v1168
    %v1170 = vpop.f32.mrb[0].mxu0
    %1171 = vmatprep.mubr.f32.mxu0 0.0
    %1172 = vmatmul.mubr.f32.gmra.mrb[0].mxu0 %v1071
    %v1173 = vpop.f32.mrb[0].mxu0
    %v1174 = vadd.f32 0.0, %v1173
    %v1175 = vpop.f32.mrb[0].mxu0
    %1176 = vmatprep.mubr.f32.mxu0 0.0
    %1177 = vmatmul.mubr.f32.gmra.mrb[0].mxu0 %v1074
    %v1178 = vpop.f32.mrb[0].mxu0
    %v1179 = vadd.f32 0.0, %v1178
    %v1180 = vpop.f32.mrb[0].mxu0
    %1181 = vmatprep.mubr.f32.mxu0 0.0
    %1182 = vmatmul.mubr.f32.gmra.mrb[0].mxu0 %v1077
    %v1183 = vpop.f32.mrb[0].mxu0
    %v1184 = vadd.f32 0.0, %v1183
    %v1185 = vpop.f32.mrb[0].mxu0
    %1186 = vdwg.mxu0
    %v1187 = vadd.f32 %v931, %v1149
    %v1188 = vadd.f32 %v932, %v1154
    %v1189 = vadd.f32 %v933, %v1159
    %v1190 = vadd.f32 %v934, %v1164
    %v1191 = vadd.f32 %v935, %v1169
    %v1192 = vadd.f32 %v936, %v1174
    %v1193 = vadd.f32 %v937, %v1179
    %v1194 = vadd.f32 %v938, %v1184
    %s1195 = scalar_lea.vmem %s3, 256
    %v1196 = vld [vmem:[%s1195] sm:$0xff]
    %v1197 = vld [vmem:[%s1195 + $0x8] sm:$0xff]
    %v1198 = vld [vmem:[%s1195 + $0x10] sm:$0xff]
    %v1199 = vld [vmem:[%s1195 + $0x18] sm:$0xff]
    %v1200 = vld [vmem:[%s1195 + $0x20] sm:$0xff]
    %v1201 = vld [vmem:[%s1195 + $0x28] sm:$0xff]
    %v1202 = vld [vmem:[%s1195 + $0x30] sm:$0xff]
    %v1203 = vld [vmem:[%s1195 + $0x38] sm:$0xff]
    %1204 = vmatprep.subr.mxu0 0.0
    %1205 = vmatpush1.msra.mxu0 %v171
    %1206 = vmatprep.subr.mxu0 0.0
    %1207 = vmatpush1.msra.mxu0 %v172
    %1208 = vmatprep.subr.mxu0 0.0
    %1209 = vmatpush1.msra.mxu0 %v173
    %1210 = vmatprep.subr.mxu0 0.0
    %1211 = vmatpush1.msra.mxu0 %v174
    %1212 = vmatprep.subr.mxu0 0.0
    %1213 = vmatpush1.msra.mxu0 %v175
    %1214 = vmatprep.subr.mxu0 0.0
    %1215 = vmatpush1.msra.mxu0 %v176
    %1216 = vmatprep.subr.mxu0 0.0
    %1217 = vmatpush1.msra.mxu0 %v177
    %1218 = vmatprep.subr.mxu0 0.0
    %1219 = vmatpush1.msra.mxu0 %v178
    %1220 = vmatprep.subr.mxu0 0.0
    %1221 = vmatpush1.msra.mxu0 %v179
    %1222 = vmatprep.subr.mxu0 0.0
    %1223 = vmatpush1.msra.mxu0 %v180
    %1224 = vmatprep.subr.mxu0 0.0
    %1225 = vmatpush1.msra.mxu0 %v181
    %1226 = vmatprep.subr.mxu0 0.0
    %1227 = vmatpush1.msra.mxu0 %v182
    %1228 = vmatprep.subr.mxu0 0.0
    %1229 = vmatpush1.msra.mxu0 %v183
    %1230 = vmatprep.subr.mxu0 0.0
    %1231 = vmatpush1.msra.mxu0 %v184
    %1232 = vmatprep.subr.mxu0 0.0
    %1233 = vmatpush1.msra.mxu0 %v185
    %1234 = vmatprep.subr.mxu0 0.0
    %1235 = vmatpush1.msra.mxu0 %v186
    %1236 = vmatprep.subr.mxu0 0.0
    %1237 = vmatpush1.msra.mxu0 0.0
    %1238 = vmatprep.subr.mxu0 0.0
    %1239 = vmatpush1.msra.mxu0 0.0
    %1240 = vmatprep.subr.mxu0 0.0
    %1241 = vmatpush1.msra.mxu0 0.0
    %1242 = vmatprep.subr.mxu0 0.0
    %1243 = vmatpush1.msra.mxu0 0.0
    %1244 = vmatprep.subr.mxu0 0.0
    %1245 = vmatpush1.msra.mxu0 0.0
    %1246 = vmatprep.subr.mxu0 0.0
    %1247 = vmatpush1.msra.mxu0 0.0
    %1248 = vmatprep.subr.mxu0 0.0
    %1249 = vmatpush1.msra.mxu0 0.0
    %1250 = vmatprep.subr.mxu0 0.0
    %1251 = vmatpush1.msra.mxu0 0.0
    %1252 = vmatprep.subr.mxu0 0.0
    %1253 = vmatpush1.msra.mxu0 0.0
    %1254 = vmatprep.subr.mxu0 0.0
    %1255 = vmatpush1.msra.mxu0 0.0
    %1256 = vmatprep.subr.mxu0 0.0
    %1257 = vmatpush1.msra.mxu0 0.0
    %1258 = vmatprep.subr.mxu0 0.0
    %1259 = vmatpush1.msra.mxu0 0.0
    %1260 = vmatprep.subr.mxu0 0.0
    %1261 = vmatpush1.msra.mxu0 0.0
    %1262 = vmatprep.subr.mxu0 0.0
    %1263 = vmatpush1.msra.mxu0 0.0
    %1264 = vmatprep.subr.mxu0 0.0
    %1265 = vmatpush1.msra.mxu0 0.0
    %1266 = vmatprep.subr.mxu0 0.0
    %1267 = vmatpush1.msra.mxu0 0.0
    %1268 = vmatprep.mubr.f32.mxu0 0.0
    %1269 = vmatmul.mubr.f32.gmra.mrb[0].mxu0 %v1196
    %v1270 = vpop.f32.mrb[0].mxu0
    %v1271 = vadd.f32 0.0, %v1270
    %v1272 = vpop.f32.mrb[0].mxu0
    %1273 = vmatprep.mubr.f32.mxu0 0.0
    %1274 = vmatmul.mubr.f32.gmra.mrb[0].mxu0 %v1197
    %v1275 = vpop.f32.mrb[0].mxu0
    %v1276 = vadd.f32 0.0, %v1275
    %v1277 = vpop.f32.mrb[0].mxu0
    %1278 = vmatprep.mubr.f32.mxu0 0.0
    %1279 = vmatmul.mubr.f32.gmra.mrb[0].mxu0 %v1198
    %v1280 = vpop.f32.mrb[0].mxu0
    %v1281 = vadd.f32 0.0, %v1280
    %v1282 = vpop.f32.mrb[0].mxu0
    %1283 = vmatprep.mubr.f32.mxu0 0.0
    %1284 = vmatmul.mubr.f32.gmra.mrb[0].mxu0 %v1199
    %v1285 = vpop.f32.mrb[0].mxu0
    %v1286 = vadd.f32 0.0, %v1285
    %v1287 = vpop.f32.mrb[0].mxu0
    %1288 = vmatprep.mubr.f32.mxu0 0.0
    %1289 = vmatmul.mubr.f32.gmra.mrb[0].mxu0 %v1200
    %v1290 = vpop.f32.mrb[0].mxu0
    %v1291 = vadd.f32 0.0, %v1290
    %v1292 = vpop.f32.mrb[0].mxu0
    %1293 = vmatprep.mubr.f32.mxu0 0.0
    %1294 = vmatmul.mubr.f32.gmra.mrb[0].mxu0 %v1201
    %v1295 = vpop.f32.mrb[0].mxu0
    %v1296 = vadd.f32 0.0, %v1295
    %v1297 = vpop.f32.mrb[0].mxu0
    %1298 = vmatprep.mubr.f32.mxu0 0.0
    %1299 = vmatmul.mubr.f32.gmra.mrb[0].mxu0 %v1202
    %v1300 = vpop.f32.mrb[0].mxu0
    %v1301 = vadd.f32 0.0, %v1300
    %v1302 = vpop.f32.mrb[0].mxu0
    %1303 = vmatprep.mubr.f32.mxu0 0.0
    %1304 = vmatmul.mubr.f32.gmra.mrb[0].mxu0 %v1203
    %v1305 = vpop.f32.mrb[0].mxu0
    %v1306 = vadd.f32 0.0, %v1305
    %v1307 = vpop.f32.mrb[0].mxu0
    %1308 = vdwg.mxu0
    %s1309 = scalar_lea.vmem %s5, 16
    %v1310 = vld [vmem:[%s1309] sm:$0x7]
    %v1312 = vsel %vm417, %v1271, 0
    %v1315 = vsel %vm417, %v1276, 0
    %v1318 = vsel %vm417, %v1281, 0
    %v1321 = vsel %vm417, %v1286, 0
    %v1324 = vsel %vm417, %v1291, 0
    %v1327 = vsel %vm417, %v1296, 0
    %v1330 = vsel %vm417, %v1301, 0
    %v1333 = vsel %vm417, %v1306, 0
    %v1336 = vsel %vm442, %v1310, 0
    %1338 = vmatprep.subr.mxu0 0.0
    %1339 = vmatpush1.msra.mxu0 %v1336
    %1340 = vmatprep.subr.mxu0 0.0
    %1341 = vmatpush1.msra.mxu0 0.0
    %1342 = vmatprep.subr.mxu0 0.0
    %1343 = vmatpush1.msra.mxu0 0.0
    %1344 = vmatprep.subr.mxu0 0.0
    %1345 = vmatpush1.msra.mxu0 0.0
    %1346 = vmatprep.subr.mxu0 0.0
    %1347 = vmatpush1.msra.mxu0 0.0
    %1348 = vmatprep.subr.mxu0 0.0
    %1349 = vmatpush1.msra.mxu0 0.0
    %1350 = vmatprep.subr.mxu0 0.0
    %1351 = vmatpush1.msra.mxu0 0.0
    %1352 = vmatprep.subr.mxu0 0.0
    %1353 = vmatpush1.msra.mxu0 0.0
    %1354 = vmatprep.subr.mxu0 0.0
    %1355 = vmatpush1.msra.mxu0 0.0
    %1356 = vmatprep.subr.mxu0 0.0
    %1357 = vmatpush1.msra.mxu0 0.0
    %1358 = vmatprep.subr.mxu0 0.0
    %1359 = vmatpush1.msra.mxu0 0.0
    %1360 = vmatprep.subr.mxu0 0.0
    %1361 = vmatpush1.msra.mxu0 0.0
    %1362 = vmatprep.subr.mxu0 0.0
    %1363 = vmatpush1.msra.mxu0 0.0
    %1364 = vmatprep.subr.mxu0 0.0
    %1365 = vmatpush1.msra.mxu0 0.0
    %1366 = vmatprep.subr.mxu0 0.0
    %1367 = vmatpush1.msra.mxu0 0.0
    %1368 = vmatprep.subr.mxu0 0.0
    %1369 = vmatpush1.msra.mxu0 0.0
    %1370 = vmatprep.subr.mxu0 0.0
    %1371 = vmatpush1.msra.mxu0 0.0
    %1372 = vmatprep.subr.mxu0 0.0
    %1373 = vmatpush1.msra.mxu0 0.0
    %1374 = vmatprep.subr.mxu0 0.0
    %1375 = vmatpush1.msra.mxu0 0.0
    %1376 = vmatprep.subr.mxu0 0.0
    %1377 = vmatpush1.msra.mxu0 0.0
    %1378 = vmatprep.subr.mxu0 0.0
    %1379 = vmatpush1.msra.mxu0 0.0
    %1380 = vmatprep.subr.mxu0 0.0
    %1381 = vmatpush1.msra.mxu0 0.0
    %1382 = vmatprep.subr.mxu0 0.0
    %1383 = vmatpush1.msra.mxu0 0.0
    %1384 = vmatprep.subr.mxu0 0.0
    %1385 = vmatpush1.msra.mxu0 0.0
    %1386 = vmatprep.subr.mxu0 0.0
    %1387 = vmatpush1.msra.mxu0 0.0
    %1388 = vmatprep.subr.mxu0 0.0
    %1389 = vmatpush1.msra.mxu0 0.0
    %1390 = vmatprep.subr.mxu0 0.0
    %1391 = vmatpush1.msra.mxu0 0.0
    %1392 = vmatprep.subr.mxu0 0.0
    %1393 = vmatpush1.msra.mxu0 0.0
    %1394 = vmatprep.subr.mxu0 0.0
    %1395 = vmatpush1.msra.mxu0 0.0
    %1396 = vmatprep.subr.mxu0 0.0
    %1397 = vmatpush1.msra.mxu0 0.0
    %1398 = vmatprep.subr.mxu0 0.0
    %1399 = vmatpush1.msra.mxu0 0.0
    %1400 = vmatprep.subr.mxu0 0.0
    %1401 = vmatpush1.msra.mxu0 0.0
    %1402 = vmatprep.mubr.f32.mxu0 0.0
    %1403 = vmatmul.mubr.f32.gmra.mrb[0].mxu0 %v1312
    %v1404 = vpop.f32.mrb[0].mxu0
    %v1405 = vadd.f32 0.0, %v1404
    %v1406 = vpop.f32.mrb[0].mxu0
    %1407 = vmatprep.mubr.f32.mxu0 0.0
    %1408 = vmatmul.mubr.f32.gmra.mrb[0].mxu0 %v1315
    %v1409 = vpop.f32.mrb[0].mxu0
    %v1410 = vadd.f32 0.0, %v1409
    %v1411 = vpop.f32.mrb[0].mxu0
    %1412 = vmatprep.mubr.f32.mxu0 0.0
    %1413 = vmatmul.mubr.f32.gmra.mrb[0].mxu0 %v1318
    %v1414 = vpop.f32.mrb[0].mxu0
    %v1415 = vadd.f32 0.0, %v1414
    %v1416 = vpop.f32.mrb[0].mxu0
    %1417 = vmatprep.mubr.f32.mxu0 0.0
    %1418 = vmatmul.mubr.f32.gmra.mrb[0].mxu0 %v1321
    %v1419 = vpop.f32.mrb[0].mxu0
    %v1420 = vadd.f32 0.0, %v1419
    %v1421 = vpop.f32.mrb[0].mxu0
    %1422 = vmatprep.mubr.f32.mxu0 0.0
    %1423 = vmatmul.mubr.f32.gmra.mrb[0].mxu0 %v1324
    %v1424 = vpop.f32.mrb[0].mxu0
    %v1425 = vadd.f32 0.0, %v1424
    %v1426 = vpop.f32.mrb[0].mxu0
    %1427 = vmatprep.mubr.f32.mxu0 0.0
    %1428 = vmatmul.mubr.f32.gmra.mrb[0].mxu0 %v1327
    %v1429 = vpop.f32.mrb[0].mxu0
    %v1430 = vadd.f32 0.0, %v1429
    %v1431 = vpop.f32.mrb[0].mxu0
    %1432 = vmatprep.mubr.f32.mxu0 0.0
    %1433 = vmatmul.mubr.f32.gmra.mrb[0].mxu0 %v1330
    %v1434 = vpop.f32.mrb[0].mxu0
    %v1435 = vadd.f32 0.0, %v1434
    %v1436 = vpop.f32.mrb[0].mxu0
    %1437 = vmatprep.mubr.f32.mxu0 0.0
    %1438 = vmatmul.mubr.f32.gmra.mrb[0].mxu0 %v1333
    %v1439 = vpop.f32.mrb[0].mxu0
    %v1440 = vadd.f32 0.0, %v1439
    %v1441 = vpop.f32.mrb[0].mxu0
    %1442 = vdwg.mxu0
    %v1443 = vadd.f32 %v1187, %v1405
    %v1444 = vadd.f32 %v1188, %v1410
    %v1445 = vadd.f32 %v1189, %v1415
    %v1446 = vadd.f32 %v1190, %v1420
    %v1447 = vadd.f32 %v1191, %v1425
    %v1448 = vadd.f32 %v1192, %v1430
    %v1449 = vadd.f32 %v1193, %v1435
    %v1450 = vadd.f32 %v1194, %v1440
    %s1451 = scalar_lea.vmem %s3, 320
    %v1452 = vld [vmem:[%s1451] sm:$0xff]
    %v1453 = vld [vmem:[%s1451 + $0x8] sm:$0xff]
    %v1454 = vld [vmem:[%s1451 + $0x10] sm:$0xff]
    %v1455 = vld [vmem:[%s1451 + $0x18] sm:$0xff]
    %v1456 = vld [vmem:[%s1451 + $0x20] sm:$0xff]
    %v1457 = vld [vmem:[%s1451 + $0x28] sm:$0xff]
    %v1458 = vld [vmem:[%s1451 + $0x30] sm:$0xff]
    %v1459 = vld [vmem:[%s1451 + $0x38] sm:$0xff]
    %1460 = vmatprep.subr.mxu0 0.0
    %1461 = vmatpush1.msra.mxu0 %v171
    %1462 = vmatprep.subr.mxu0 0.0
    %1463 = vmatpush1.msra.mxu0 %v172
    %1464 = vmatprep.subr.mxu0 0.0
    %1465 = vmatpush1.msra.mxu0 %v173
    %1466 = vmatprep.subr.mxu0 0.0
    %1467 = vmatpush1.msra.mxu0 %v174
    %1468 = vmatprep.subr.mxu0 0.0
    %1469 = vmatpush1.msra.mxu0 %v175
    %1470 = vmatprep.subr.mxu0 0.0
    %1471 = vmatpush1.msra.mxu0 %v176
    %1472 = vmatprep.subr.mxu0 0.0
    %1473 = vmatpush1.msra.mxu0 %v177
    %1474 = vmatprep.subr.mxu0 0.0
    %1475 = vmatpush1.msra.mxu0 %v178
    %1476 = vmatprep.subr.mxu0 0.0
    %1477 = vmatpush1.msra.mxu0 %v179
    %1478 = vmatprep.subr.mxu0 0.0
    %1479 = vmatpush1.msra.mxu0 %v180
    %1480 = vmatprep.subr.mxu0 0.0
    %1481 = vmatpush1.msra.mxu0 %v181
    %1482 = vmatprep.subr.mxu0 0.0
    %1483 = vmatpush1.msra.mxu0 %v182
    %1484 = vmatprep.subr.mxu0 0.0
    %1485 = vmatpush1.msra.mxu0 %v183
    %1486 = vmatprep.subr.mxu0 0.0
    %1487 = vmatpush1.msra.mxu0 %v184
    %1488 = vmatprep.subr.mxu0 0.0
    %1489 = vmatpush1.msra.mxu0 %v185
    %1490 = vmatprep.subr.mxu0 0.0
    %1491 = vmatpush1.msra.mxu0 %v186
    %1492 = vmatprep.subr.mxu0 0.0
    %1493 = vmatpush1.msra.mxu0 0.0
    %1494 = vmatprep.subr.mxu0 0.0
    %1495 = vmatpush1.msra.mxu0 0.0
    %1496 = vmatprep.subr.mxu0 0.0
    %1497 = vmatpush1.msra.mxu0 0.0
    %1498 = vmatprep.subr.mxu0 0.0
    %1499 = vmatpush1.msra.mxu0 0.0
    %1500 = vmatprep.subr.mxu0 0.0
    %1501 = vmatpush1.msra.mxu0 0.0
    %1502 = vmatprep.subr.mxu0 0.0
    %1503 = vmatpush1.msra.mxu0 0.0
    %1504 = vmatprep.subr.mxu0 0.0
    %1505 = vmatpush1.msra.mxu0 0.0
    %1506 = vmatprep.subr.mxu0 0.0
    %1507 = vmatpush1.msra.mxu0 0.0
    %1508 = vmatprep.subr.mxu0 0.0
    %1509 = vmatpush1.msra.mxu0 0.0
    %1510 = vmatprep.subr.mxu0 0.0
    %1511 = vmatpush1.msra.mxu0 0.0
    %1512 = vmatprep.subr.mxu0 0.0
    %1513 = vmatpush1.msra.mxu0 0.0
    %1514 = vmatprep.subr.mxu0 0.0
    %1515 = vmatpush1.msra.mxu0 0.0
    %1516 = vmatprep.subr.mxu0 0.0
    %1517 = vmatpush1.msra.mxu0 0.0
    %1518 = vmatprep.subr.mxu0 0.0
    %1519 = vmatpush1.msra.mxu0 0.0
    %1520 = vmatprep.subr.mxu0 0.0
    %1521 = vmatpush1.msra.mxu0 0.0
    %1522 = vmatprep.subr.mxu0 0.0
    %1523 = vmatpush1.msra.mxu0 0.0
    %1524 = vmatprep.mubr.f32.mxu0 0.0
    %1525 = vmatmul.mubr.f32.gmra.mrb[0].mxu0 %v1452
    %v1526 = vpop.f32.mrb[0].mxu0
    %v1527 = vadd.f32 0.0, %v1526
    %v1528 = vpop.f32.mrb[0].mxu0
    %1529 = vmatprep.mubr.f32.mxu0 0.0
    %1530 = vmatmul.mubr.f32.gmra.mrb[0].mxu0 %v1453
    %v1531 = vpop.f32.mrb[0].mxu0
    %v1532 = vadd.f32 0.0, %v1531
    %v1533 = vpop.f32.mrb[0].mxu0
    %1534 = vmatprep.mubr.f32.mxu0 0.0
    %1535 = vmatmul.mubr.f32.gmra.mrb[0].mxu0 %v1454
    %v1536 = vpop.f32.mrb[0].mxu0
    %v1537 = vadd.f32 0.0, %v1536
    %v1538 = vpop.f32.mrb[0].mxu0
    %1539 = vmatprep.mubr.f32.mxu0 0.0
    %1540 = vmatmul.mubr.f32.gmra.mrb[0].mxu0 %v1455
    %v1541 = vpop.f32.mrb[0].mxu0
    %v1542 = vadd.f32 0.0, %v1541
    %v1543 = vpop.f32.mrb[0].mxu0
    %1544 = vmatprep.mubr.f32.mxu0 0.0
    %1545 = vmatmul.mubr.f32.gmra.mrb[0].mxu0 %v1456
    %v1546 = vpop.f32.mrb[0].mxu0
    %v1547 = vadd.f32 0.0, %v1546
    %v1548 = vpop.f32.mrb[0].mxu0
    %1549 = vmatprep.mubr.f32.mxu0 0.0
    %1550 = vmatmul.mubr.f32.gmra.mrb[0].mxu0 %v1457
    %v1551 = vpop.f32.mrb[0].mxu0
    %v1552 = vadd.f32 0.0, %v1551
    %v1553 = vpop.f32.mrb[0].mxu0
    %1554 = vmatprep.mubr.f32.mxu0 0.0
    %1555 = vmatmul.mubr.f32.gmra.mrb[0].mxu0 %v1458
    %v1556 = vpop.f32.mrb[0].mxu0
    %v1557 = vadd.f32 0.0, %v1556
    %v1558 = vpop.f32.mrb[0].mxu0
    %1559 = vmatprep.mubr.f32.mxu0 0.0
    %1560 = vmatmul.mubr.f32.gmra.mrb[0].mxu0 %v1459
    %v1561 = vpop.f32.mrb[0].mxu0
    %v1562 = vadd.f32 0.0, %v1561
    %v1563 = vpop.f32.mrb[0].mxu0
    %1564 = vdwg.mxu0
    %s1565 = scalar_lea.vmem %s5, 20
    %v1566 = vld [vmem:[%s1565] sm:$0x7]
    %v1568 = vsel %vm417, %v1527, 0
    %v1571 = vsel %vm417, %v1532, 0
    %v1574 = vsel %vm417, %v1537, 0
    %v1577 = vsel %vm417, %v1542, 0
    %v1580 = vsel %vm417, %v1547, 0
    %v1583 = vsel %vm417, %v1552, 0
    %v1586 = vsel %vm417, %v1557, 0
    %v1589 = vsel %vm417, %v1562, 0
    %v1592 = vsel %vm442, %v1566, 0
    %1594 = vmatprep.subr.mxu0 0.0
    %1595 = vmatpush1.msra.mxu0 %v1592
    %1596 = vmatprep.subr.mxu0 0.0
    %1597 = vmatpush1.msra.mxu0 0.0
    %1598 = vmatprep.subr.mxu0 0.0
    %1599 = vmatpush1.msra.mxu0 0.0
    %1600 = vmatprep.subr.mxu0 0.0
    %1601 = vmatpush1.msra.mxu0 0.0
    %1602 = vmatprep.subr.mxu0 0.0
    %1603 = vmatpush1.msra.mxu0 0.0
    %1604 = vmatprep.subr.mxu0 0.0
    %1605 = vmatpush1.msra.mxu0 0.0
    %1606 = vmatprep.subr.mxu0 0.0
    %1607 = vmatpush1.msra.mxu0 0.0
    %1608 = vmatprep.subr.mxu0 0.0
    %1609 = vmatpush1.msra.mxu0 0.0
    %1610 = vmatprep.subr.mxu0 0.0
    %1611 = vmatpush1.msra.mxu0 0.0
    %1612 = vmatprep.subr.mxu0 0.0
    %1613 = vmatpush1.msra.mxu0 0.0
    %1614 = vmatprep.subr.mxu0 0.0
    %1615 = vmatpush1.msra.mxu0 0.0
    %1616 = vmatprep.subr.mxu0 0.0
    %1617 = vmatpush1.msra.mxu0 0.0
    %1618 = vmatprep.subr.mxu0 0.0
    %1619 = vmatpush1.msra.mxu0 0.0
    %1620 = vmatprep.subr.mxu0 0.0
    %1621 = vmatpush1.msra.mxu0 0.0
    %1622 = vmatprep.subr.mxu0 0.0
    %1623 = vmatpush1.msra.mxu0 0.0
    %1624 = vmatprep.subr.mxu0 0.0
    %1625 = vmatpush1.msra.mxu0 0.0
    %1626 = vmatprep.subr.mxu0 0.0
    %1627 = vmatpush1.msra.mxu0 0.0
    %1628 = vmatprep.subr.mxu0 0.0
    %1629 = vmatpush1.msra.mxu0 0.0
    %1630 = vmatprep.subr.mxu0 0.0
    %1631 = vmatpush1.msra.mxu0 0.0
    %1632 = vmatprep.subr.mxu0 0.0
    %1633 = vmatpush1.msra.mxu0 0.0
    %1634 = vmatprep.subr.mxu0 0.0
    %1635 = vmatpush1.msra.mxu0 0.0
    %1636 = vmatprep.subr.mxu0 0.0
    %1637 = vmatpush1.msra.mxu0 0.0
    %1638 = vmatprep.subr.mxu0 0.0
    %1639 = vmatpush1.msra.mxu0 0.0
    %1640 = vmatprep.subr.mxu0 0.0
    %1641 = vmatpush1.msra.mxu0 0.0
    %1642 = vmatprep.subr.mxu0 0.0
    %1643 = vmatpush1.msra.mxu0 0.0
    %1644 = vmatprep.subr.mxu0 0.0
    %1645 = vmatpush1.msra.mxu0 0.0
    %1646 = vmatprep.subr.mxu0 0.0
    %1647 = vmatpush1.msra.mxu0 0.0
    %1648 = vmatprep.subr.mxu0 0.0
    %1649 = vmatpush1.msra.mxu0 0.0
    %1650 = vmatprep.subr.mxu0 0.0
    %1651 = vmatpush1.msra.mxu0 0.0
    %1652 = vmatprep.subr.mxu0 0.0
    %1653 = vmatpush1.msra.mxu0 0.0
    %1654 = vmatprep.subr.mxu0 0.0
    %1655 = vmatpush1.msra.mxu0 0.0
    %1656 = vmatprep.subr.mxu0 0.0
    %1657 = vmatpush1.msra.mxu0 0.0
    %1658 = vmatprep.mubr.f32.mxu0 0.0
    %1659 = vmatmul.mubr.f32.gmra.mrb[0].mxu0 %v1568
    %v1660 = vpop.f32.mrb[0].mxu0
    %v1661 = vadd.f32 0.0, %v1660
    %v1662 = vpop.f32.mrb[0].mxu0
    %1663 = vmatprep.mubr.f32.mxu0 0.0
    %1664 = vmatmul.mubr.f32.gmra.mrb[0].mxu0 %v1571
    %v1665 = vpop.f32.mrb[0].mxu0
    %v1666 = vadd.f32 0.0, %v1665
    %v1667 = vpop.f32.mrb[0].mxu0
    %1668 = vmatprep.mubr.f32.mxu0 0.0
    %1669 = vmatmul.mubr.f32.gmra.mrb[0].mxu0 %v1574
    %v1670 = vpop.f32.mrb[0].mxu0
    %v1671 = vadd.f32 0.0, %v1670
    %v1672 = vpop.f32.mrb[0].mxu0
    %1673 = vmatprep.mubr.f32.mxu0 0.0
    %1674 = vmatmul.mubr.f32.gmra.mrb[0].mxu0 %v1577
    %v1675 = vpop.f32.mrb[0].mxu0
    %v1676 = vadd.f32 0.0, %v1675
    %v1677 = vpop.f32.mrb[0].mxu0
    %1678 = vmatprep.mubr.f32.mxu0 0.0
    %1679 = vmatmul.mubr.f32.gmra.mrb[0].mxu0 %v1580
    %v1680 = vpop.f32.mrb[0].mxu0
    %v1681 = vadd.f32 0.0, %v1680
    %v1682 = vpop.f32.mrb[0].mxu0
    %1683 = vmatprep.mubr.f32.mxu0 0.0
    %1684 = vmatmul.mubr.f32.gmra.mrb[0].mxu0 %v1583
    %v1685 = vpop.f32.mrb[0].mxu0
    %v1686 = vadd.f32 0.0, %v1685
    %v1687 = vpop.f32.mrb[0].mxu0
    %1688 = vmatprep.mubr.f32.mxu0 0.0
    %1689 = vmatmul.mubr.f32.gmra.mrb[0].mxu0 %v1586
    %v1690 = vpop.f32.mrb[0].mxu0
    %v1691 = vadd.f32 0.0, %v1690
    %v1692 = vpop.f32.mrb[0].mxu0
    %1693 = vmatprep.mubr.f32.mxu0 0.0
    %1694 = vmatmul.mubr.f32.gmra.mrb[0].mxu0 %v1589
    %v1695 = vpop.f32.mrb[0].mxu0
    %v1696 = vadd.f32 0.0, %v1695
    %v1697 = vpop.f32.mrb[0].mxu0
    %1698 = vdwg.mxu0
    %v1699 = vadd.f32 %v1443, %v1661
    %v1700 = vadd.f32 %v1444, %v1666
    %v1701 = vadd.f32 %v1445, %v1671
    %v1702 = vadd.f32 %v1446, %v1676
    %v1703 = vadd.f32 %v1447, %v1681
    %v1704 = vadd.f32 %v1448, %v1686
    %v1705 = vadd.f32 %v1449, %v1691
    %v1706 = vadd.f32 %v1450, %v1696
    %s1707 = scalar_lea.vmem %s3, 384
    %v1708 = vld [vmem:[%s1707] sm:$0xff]
    %v1709 = vld [vmem:[%s1707 + $0x8] sm:$0xff]
    %v1710 = vld [vmem:[%s1707 + $0x10] sm:$0xff]
    %v1711 = vld [vmem:[%s1707 + $0x18] sm:$0xff]
    %v1712 = vld [vmem:[%s1707 + $0x20] sm:$0xff]
    %v1713 = vld [vmem:[%s1707 + $0x28] sm:$0xff]
    %v1714 = vld [vmem:[%s1707 + $0x30] sm:$0xff]
    %v1715 = vld [vmem:[%s1707 + $0x38] sm:$0xff]
    %1716 = vmatprep.subr.mxu0 0.0
    %1717 = vmatpush1.msra.mxu0 %v171
    %1718 = vmatprep.subr.mxu0 0.0
    %1719 = vmatpush1.msra.mxu0 %v172
    %1720 = vmatprep.subr.mxu0 0.0
    %1721 = vmatpush1.msra.mxu0 %v173
    %1722 = vmatprep.subr.mxu0 0.0
    %1723 = vmatpush1.msra.mxu0 %v174
    %1724 = vmatprep.subr.mxu0 0.0
    %1725 = vmatpush1.msra.mxu0 %v175
    %1726 = vmatprep.subr.mxu0 0.0
    %1727 = vmatpush1.msra.mxu0 %v176
    %1728 = vmatprep.subr.mxu0 0.0
    %1729 = vmatpush1.msra.mxu0 %v177
    %1730 = vmatprep.subr.mxu0 0.0
    %1731 = vmatpush1.msra.mxu0 %v178
    %1732 = vmatprep.subr.mxu0 0.0
    %1733 = vmatpush1.msra.mxu0 %v179
    %1734 = vmatprep.subr.mxu0 0.0
    %1735 = vmatpush1.msra.mxu0 %v180
    %1736 = vmatprep.subr.mxu0 0.0
    %1737 = vmatpush1.msra.mxu0 %v181
    %1738 = vmatprep.subr.mxu0 0.0
    %1739 = vmatpush1.msra.mxu0 %v182
    %1740 = vmatprep.subr.mxu0 0.0
    %1741 = vmatpush1.msra.mxu0 %v183
    %1742 = vmatprep.subr.mxu0 0.0
    %1743 = vmatpush1.msra.mxu0 %v184
    %1744 = vmatprep.subr.mxu0 0.0
    %1745 = vmatpush1.msra.mxu0 %v185
    %1746 = vmatprep.subr.mxu0 0.0
    %1747 = vmatpush1.msra.mxu0 %v186
    %1748 = vmatprep.subr.mxu0 0.0
    %1749 = vmatpush1.msra.mxu0 0.0
    %1750 = vmatprep.subr.mxu0 0.0
    %1751 = vmatpush1.msra.mxu0 0.0
    %1752 = vmatprep.subr.mxu0 0.0
    %1753 = vmatpush1.msra.mxu0 0.0
    %1754 = vmatprep.subr.mxu0 0.0
    %1755 = vmatpush1.msra.mxu0 0.0
    %1756 = vmatprep.subr.mxu0 0.0
    %1757 = vmatpush1.msra.mxu0 0.0
    %1758 = vmatprep.subr.mxu0 0.0
    %1759 = vmatpush1.msra.mxu0 0.0
    %1760 = vmatprep.subr.mxu0 0.0
    %1761 = vmatpush1.msra.mxu0 0.0
    %1762 = vmatprep.subr.mxu0 0.0
    %1763 = vmatpush1.msra.mxu0 0.0
    %1764 = vmatprep.subr.mxu0 0.0
    %1765 = vmatpush1.msra.mxu0 0.0
    %1766 = vmatprep.subr.mxu0 0.0
    %1767 = vmatpush1.msra.mxu0 0.0
    %1768 = vmatprep.subr.mxu0 0.0
    %1769 = vmatpush1.msra.mxu0 0.0
    %1770 = vmatprep.subr.mxu0 0.0
    %1771 = vmatpush1.msra.mxu0 0.0
    %1772 = vmatprep.subr.mxu0 0.0
    %1773 = vmatpush1.msra.mxu0 0.0
    %1774 = vmatprep.subr.mxu0 0.0
    %1775 = vmatpush1.msra.mxu0 0.0
    %1776 = vmatprep.subr.mxu0 0.0
    %1777 = vmatpush1.msra.mxu0 0.0
    %1778 = vmatprep.subr.mxu0 0.0
    %1779 = vmatpush1.msra.mxu0 0.0
    %1780 = vmatprep.mubr.f32.mxu0 0.0
    %1781 = vmatmul.mubr.f32.gmra.mrb[0].mxu0 %v1708
    %v1782 = vpop.f32.mrb[0].mxu0
    %v1783 = vadd.f32 0.0, %v1782
    %v1784 = vpop.f32.mrb[0].mxu0
    %1785 = vmatprep.mubr.f32.mxu0 0.0
    %1786 = vmatmul.mubr.f32.gmra.mrb[0].mxu0 %v1709
    %v1787 = vpop.f32.mrb[0].mxu0
    %v1788 = vadd.f32 0.0, %v1787
    %v1789 = vpop.f32.mrb[0].mxu0
    %1790 = vmatprep.mubr.f32.mxu0 0.0
    %1791 = vmatmul.mubr.f32.gmra.mrb[0].mxu0 %v1710
    %v1792 = vpop.f32.mrb[0].mxu0
    %v1793 = vadd.f32 0.0, %v1792
    %v1794 = vpop.f32.mrb[0].mxu0
    %1795 = vmatprep.mubr.f32.mxu0 0.0
    %1796 = vmatmul.mubr.f32.gmra.mrb[0].mxu0 %v1711
    %v1797 = vpop.f32.mrb[0].mxu0
    %v1798 = vadd.f32 0.0, %v1797
    %v1799 = vpop.f32.mrb[0].mxu0
    %1800 = vmatprep.mubr.f32.mxu0 0.0
    %1801 = vmatmul.mubr.f32.gmra.mrb[0].mxu0 %v1712
    %v1802 = vpop.f32.mrb[0].mxu0
    %v1803 = vadd.f32 0.0, %v1802
    %v1804 = vpop.f32.mrb[0].mxu0
    %1805 = vmatprep.mubr.f32.mxu0 0.0
    %1806 = vmatmul.mubr.f32.gmra.mrb[0].mxu0 %v1713
    %v1807 = vpop.f32.mrb[0].mxu0
    %v1808 = vadd.f32 0.0, %v1807
    %v1809 = vpop.f32.mrb[0].mxu0
    %1810 = vmatprep.mubr.f32.mxu0 0.0
    %1811 = vmatmul.mubr.f32.gmra.mrb[0].mxu0 %v1714
    %v1812 = vpop.f32.mrb[0].mxu0
    %v1813 = vadd.f32 0.0, %v1812
    %v1814 = vpop.f32.mrb[0].mxu0
    %1815 = vmatprep.mubr.f32.mxu0 0.0
    %1816 = vmatmul.mubr.f32.gmra.mrb[0].mxu0 %v1715
    %v1817 = vpop.f32.mrb[0].mxu0
    %v1818 = vadd.f32 0.0, %v1817
    %v1819 = vpop.f32.mrb[0].mxu0
    %1820 = vdwg.mxu0
    %s1821 = scalar_lea.vmem %s5, 24
    %v1822 = vld [vmem:[%s1821] sm:$0x7]
    %v1824 = vsel %vm417, %v1783, 0
    %v1827 = vsel %vm417, %v1788, 0
    %v1830 = vsel %vm417, %v1793, 0
    %v1833 = vsel %vm417, %v1798, 0
    %v1836 = vsel %vm417, %v1803, 0
    %v1839 = vsel %vm417, %v1808, 0
    %v1842 = vsel %vm417, %v1813, 0
    %v1845 = vsel %vm417, %v1818, 0
    %v1848 = vsel %vm442, %v1822, 0
    %1850 = vmatprep.subr.mxu0 0.0
    %1851 = vmatpush1.msra.mxu0 %v1848
    %1852 = vmatprep.subr.mxu0 0.0
    %1853 = vmatpush1.msra.mxu0 0.0
    %1854 = vmatprep.subr.mxu0 0.0
    %1855 = vmatpush1.msra.mxu0 0.0
    %1856 = vmatprep.subr.mxu0 0.0
    %1857 = vmatpush1.msra.mxu0 0.0
    %1858 = vmatprep.subr.mxu0 0.0
    %1859 = vmatpush1.msra.mxu0 0.0
    %1860 = vmatprep.subr.mxu0 0.0
    %1861 = vmatpush1.msra.mxu0 0.0
    %1862 = vmatprep.subr.mxu0 0.0
    %1863 = vmatpush1.msra.mxu0 0.0
    %1864 = vmatprep.subr.mxu0 0.0
    %1865 = vmatpush1.msra.mxu0 0.0
    %1866 = vmatprep.subr.mxu0 0.0
    %1867 = vmatpush1.msra.mxu0 0.0
    %1868 = vmatprep.subr.mxu0 0.0
    %1869 = vmatpush1.msra.mxu0 0.0
    %1870 = vmatprep.subr.mxu0 0.0
    %1871 = vmatpush1.msra.mxu0 0.0
    %1872 = vmatprep.subr.mxu0 0.0
    %1873 = vmatpush1.msra.mxu0 0.0
    %1874 = vmatprep.subr.mxu0 0.0
    %1875 = vmatpush1.msra.mxu0 0.0
    %1876 = vmatprep.subr.mxu0 0.0
    %1877 = vmatpush1.msra.mxu0 0.0
    %1878 = vmatprep.subr.mxu0 0.0
    %1879 = vmatpush1.msra.mxu0 0.0
    %1880 = vmatprep.subr.mxu0 0.0
    %1881 = vmatpush1.msra.mxu0 0.0
    %1882 = vmatprep.subr.mxu0 0.0
    %1883 = vmatpush1.msra.mxu0 0.0
    %1884 = vmatprep.subr.mxu0 0.0
    %1885 = vmatpush1.msra.mxu0 0.0
    %1886 = vmatprep.subr.mxu0 0.0
    %1887 = vmatpush1.msra.mxu0 0.0
    %1888 = vmatprep.subr.mxu0 0.0
    %1889 = vmatpush1.msra.mxu0 0.0
    %1890 = vmatprep.subr.mxu0 0.0
    %1891 = vmatpush1.msra.mxu0 0.0
    %1892 = vmatprep.subr.mxu0 0.0
    %1893 = vmatpush1.msra.mxu0 0.0
    %1894 = vmatprep.subr.mxu0 0.0
    %1895 = vmatpush1.msra.mxu0 0.0
    %1896 = vmatprep.subr.mxu0 0.0
    %1897 = vmatpush1.msra.mxu0 0.0
    %1898 = vmatprep.subr.mxu0 0.0
    %1899 = vmatpush1.msra.mxu0 0.0
    %1900 = vmatprep.subr.mxu0 0.0
    %1901 = vmatpush1.msra.mxu0 0.0
    %1902 = vmatprep.subr.mxu0 0.0
    %1903 = vmatpush1.msra.mxu0 0.0
    %1904 = vmatprep.subr.mxu0 0.0
    %1905 = vmatpush1.msra.mxu0 0.0
    %1906 = vmatprep.subr.mxu0 0.0
    %1907 = vmatpush1.msra.mxu0 0.0
    %1908 = vmatprep.subr.mxu0 0.0
    %1909 = vmatpush1.msra.mxu0 0.0
    %1910 = vmatprep.subr.mxu0 0.0
    %1911 = vmatpush1.msra.mxu0 0.0
    %1912 = vmatprep.subr.mxu0 0.0
    %1913 = vmatpush1.msra.mxu0 0.0
    %1914 = vmatprep.mubr.f32.mxu0 0.0
    %1915 = vmatmul.mubr.f32.gmra.mrb[0].mxu0 %v1824
    %v1916 = vpop.f32.mrb[0].mxu0
    %v1917 = vadd.f32 0.0, %v1916
    %v1918 = vpop.f32.mrb[0].mxu0
    %1919 = vmatprep.mubr.f32.mxu0 0.0
    %1920 = vmatmul.mubr.f32.gmra.mrb[0].mxu0 %v1827
    %v1921 = vpop.f32.mrb[0].mxu0
    %v1922 = vadd.f32 0.0, %v1921
    %v1923 = vpop.f32.mrb[0].mxu0
    %1924 = vmatprep.mubr.f32.mxu0 0.0
    %1925 = vmatmul.mubr.f32.gmra.mrb[0].mxu0 %v1830
    %v1926 = vpop.f32.mrb[0].mxu0
    %v1927 = vadd.f32 0.0, %v1926
    %v1928 = vpop.f32.mrb[0].mxu0
    %1929 = vmatprep.mubr.f32.mxu0 0.0
    %1930 = vmatmul.mubr.f32.gmra.mrb[0].mxu0 %v1833
    %v1931 = vpop.f32.mrb[0].mxu0
    %v1932 = vadd.f32 0.0, %v1931
    %v1933 = vpop.f32.mrb[0].mxu0
    %1934 = vmatprep.mubr.f32.mxu0 0.0
    %1935 = vmatmul.mubr.f32.gmra.mrb[0].mxu0 %v1836
    %v1936 = vpop.f32.mrb[0].mxu0
    %v1937 = vadd.f32 0.0, %v1936
    %v1938 = vpop.f32.mrb[0].mxu0
    %1939 = vmatprep.mubr.f32.mxu0 0.0
    %1940 = vmatmul.mubr.f32.gmra.mrb[0].mxu0 %v1839
    %v1941 = vpop.f32.mrb[0].mxu0
    %v1942 = vadd.f32 0.0, %v1941
    %v1943 = vpop.f32.mrb[0].mxu0
    %1944 = vmatprep.mubr.f32.mxu0 0.0
    %1945 = vmatmul.mubr.f32.gmra.mrb[0].mxu0 %v1842
    %v1946 = vpop.f32.mrb[0].mxu0
    %v1947 = vadd.f32 0.0, %v1946
    %v1948 = vpop.f32.mrb[0].mxu0
    %1949 = vmatprep.mubr.f32.mxu0 0.0
    %1950 = vmatmul.mubr.f32.gmra.mrb[0].mxu0 %v1845
    %v1951 = vpop.f32.mrb[0].mxu0
    %v1952 = vadd.f32 0.0, %v1951
    %v1953 = vpop.f32.mrb[0].mxu0
    %1954 = vdwg.mxu0
    %v1955 = vadd.f32 %v1699, %v1917
    %v1956 = vadd.f32 %v1700, %v1922
    %v1957 = vadd.f32 %v1701, %v1927
    %v1958 = vadd.f32 %v1702, %v1932
    %v1959 = vadd.f32 %v1703, %v1937
    %v1960 = vadd.f32 %v1704, %v1942
    %v1961 = vadd.f32 %v1705, %v1947
    %v1962 = vadd.f32 %v1706, %v1952
    %v1963 = vld [vmem:[%s7] sm:$0x1]
    %v1965 = vlaneseq
    %v1966 = vshrl.u32 %v1965, 7
    %v1967 = vsub.s32 0, %v1966
    %v1968 = vrot.slane %v1963, %v1967
    %v1970 = vadd.f32 %v1955, %v1968
    %v1971 = vadd.f32 %v1956, %v1968
    %v1972 = vadd.f32 %v1957, %v1968
    %v1973 = vadd.f32 %v1958, %v1968
    %v1974 = vadd.f32 %v1959, %v1968
    %v1975 = vadd.f32 %v1960, %v1968
    %v1976 = vadd.f32 %v1961, %v1968
    %v1977 = vadd.f32 %v1962, %v1968
    %v1978 = vmax.f32 %v1970, 0.0
    %v1979 = vmax.f32 %v1971, 0.0
    %v1980 = vmax.f32 %v1972, 0.0
    %v1981 = vmax.f32 %v1973, 0.0
    %v1982 = vmax.f32 %v1974, 0.0
    %v1983 = vmax.f32 %v1975, 0.0
    %v1984 = vmax.f32 %v1976, 0.0
    %v1985 = vmax.f32 %v1977, 0.0
    %v1986 = vld [vmem:[%s9] sm:$0xff]
    %v1987 = vld [vmem:[%s9 + $0x8] sm:$0xff]
    %v1988 = vld [vmem:[%s9 + $0x10] sm:$0xff]
    %v1989 = vld [vmem:[%s9 + $0x18] sm:$0xff]
    %vm1990 = vcmask 523264
    %v1992 = vsel %vm1990, %v1986, 0
    %v1995 = vsel %vm1990, %v1987, 0
    %v1998 = vsel %vm1990, %v1988, 0
    %v2001 = vsel %vm1990, %v1989, 0
    %2003 = vmatprep.subr.mxu0 0.0
    %2004 = vmatpush1.msra.mxu0 %v1978
    %2005 = vmatprep.subr.mxu0 0.0
    %2006 = vmatpush1.msra.mxu0 %v1979
    %2007 = vmatprep.subr.mxu0 0.0
    %2008 = vmatpush1.msra.mxu0 %v1980
    %2009 = vmatprep.subr.mxu0 0.0
    %2010 = vmatpush1.msra.mxu0 %v1981
    %2011 = vmatprep.subr.mxu0 0.0
    %2012 = vmatpush1.msra.mxu0 %v1982
    %2013 = vmatprep.subr.mxu0 0.0
    %2014 = vmatpush1.msra.mxu0 %v1983
    %2015 = vmatprep.subr.mxu0 0.0
    %2016 = vmatpush1.msra.mxu0 %v1984
    %2017 = vmatprep.subr.mxu0 0.0
    %2018 = vmatpush1.msra.mxu0 %v1985
    %2019 = vmatprep.subr.mxu0 0.0
    %2020 = vmatpush1.msra.mxu0 0.0
    %2021 = vmatprep.subr.mxu0 0.0
    %2022 = vmatpush1.msra.mxu0 0.0
    %2023 = vmatprep.subr.mxu0 0.0
    %2024 = vmatpush1.msra.mxu0 0.0
    %2025 = vmatprep.subr.mxu0 0.0
    %2026 = vmatpush1.msra.mxu0 0.0
    %2027 = vmatprep.subr.mxu0 0.0
    %2028 = vmatpush1.msra.mxu0 0.0
    %2029 = vmatprep.subr.mxu0 0.0
    %2030 = vmatpush1.msra.mxu0 0.0
    %2031 = vmatprep.subr.mxu0 0.0
    %2032 = vmatpush1.msra.mxu0 0.0
    %2033 = vmatprep.subr.mxu0 0.0
    %2034 = vmatpush1.msra.mxu0 0.0
    %2035 = vmatprep.subr.mxu0 0.0
    %2036 = vmatpush1.msra.mxu0 0.0
    %2037 = vmatprep.subr.mxu0 0.0
    %2038 = vmatpush1.msra.mxu0 0.0
    %2039 = vmatprep.subr.mxu0 0.0
    %2040 = vmatpush1.msra.mxu0 0.0
    %2041 = vmatprep.subr.mxu0 0.0
    %2042 = vmatpush1.msra.mxu0 0.0
    %2043 = vmatprep.subr.mxu0 0.0
    %2044 = vmatpush1.msra.mxu0 0.0
    %2045 = vmatprep.subr.mxu0 0.0
    %2046 = vmatpush1.msra.mxu0 0.0
    %2047 = vmatprep.subr.mxu0 0.0
    %2048 = vmatpush1.msra.mxu0 0.0
    %2049 = vmatprep.subr.mxu0 0.0
    %2050 = vmatpush1.msra.mxu0 0.0
    %2051 = vmatprep.subr.mxu0 0.0
    %2052 = vmatpush1.msra.mxu0 0.0
    %2053 = vmatprep.subr.mxu0 0.0
    %2054 = vmatpush1.msra.mxu0 0.0
    %2055 = vmatprep.subr.mxu0 0.0
    %2056 = vmatpush1.msra.mxu0 0.0
    %2057 = vmatprep.subr.mxu0 0.0
    %2058 = vmatpush1.msra.mxu0 0.0
    %2059 = vmatprep.subr.mxu0 0.0
    %2060 = vmatpush1.msra.mxu0 0.0
    %2061 = vmatprep.subr.mxu0 0.0
    %2062 = vmatpush1.msra.mxu0 0.0
    %2063 = vmatprep.subr.mxu0 0.0
    %2064 = vmatpush1.msra.mxu0 0.0
    %2065 = vmatprep.subr.mxu0 0.0
    %2066 = vmatpush1.msra.mxu0 0.0
    %2067 = vmatprep.mubr.f32.mxu0 0.0
    %2068 = vmatmul.mubr.f32.gmra.mrb[0].mxu0 %v1992
    %v2069 = vpop.f32.mrb[0].mxu0
    %v2070 = vadd.f32 0.0, %v2069
    %v2071 = vpop.f32.mrb[0].mxu0
    %2072 = vmatprep.mubr.f32.mxu0 0.0
    %2073 = vmatmul.mubr.f32.gmra.mrb[0].mxu0 %v1995
    %v2074 = vpop.f32.mrb[0].mxu0
    %v2075 = vadd.f32 0.0, %v2074
    %v2076 = vpop.f32.mrb[0].mxu0
    %2077 = vmatprep.mubr.f32.mxu0 0.0
    %2078 = vmatmul.mubr.f32.gmra.mrb[0].mxu0 %v1998
    %v2079 = vpop.f32.mrb[0].mxu0
    %v2080 = vadd.f32 0.0, %v2079
    %v2081 = vpop.f32.mrb[0].mxu0
    %2082 = vmatprep.mubr.f32.mxu0 0.0
    %2083 = vmatmul.mubr.f32.gmra.mrb[0].mxu0 %v2001
    %v2084 = vpop.f32.mrb[0].mxu0
    %v2085 = vadd.f32 0.0, %v2084
    %v2086 = vpop.f32.mrb[0].mxu0
    %2087 = vdwg.mxu0
    %s2088 = scalar_lea.vmem %s9, 32
    %v2089 = vld [vmem:[%s2088] sm:$0xff]
    %v2090 = vld [vmem:[%s2088 + $0x8] sm:$0xff]
    %v2091 = vld [vmem:[%s2088 + $0x10] sm:$0xff]
    %v2092 = vld [vmem:[%s2088 + $0x18] sm:$0xff]
    %v2094 = vsel %vm1990, %v2089, 0
    %v2097 = vsel %vm1990, %v2090, 0
    %v2100 = vsel %vm1990, %v2091, 0
    %v2103 = vsel %vm1990, %v2092, 0
    %2105 = vmatprep.subr.mxu0 0.0
    %2106 = vmatpush1.msra.mxu0 %v1978
    %2107 = vmatprep.subr.mxu0 0.0
    %2108 = vmatpush1.msra.mxu0 %v1979
    %2109 = vmatprep.subr.mxu0 0.0
    %2110 = vmatpush1.msra.mxu0 %v1980
    %2111 = vmatprep.subr.mxu0 0.0
    %2112 = vmatpush1.msra.mxu0 %v1981
    %2113 = vmatprep.subr.mxu0 0.0
    %2114 = vmatpush1.msra.mxu0 %v1982
    %2115 = vmatprep.subr.mxu0 0.0
    %2116 = vmatpush1.msra.mxu0 %v1983
    %2117 = vmatprep.subr.mxu0 0.0
    %2118 = vmatpush1.msra.mxu0 %v1984
    %2119 = vmatprep.subr.mxu0 0.0
    %2120 = vmatpush1.msra.mxu0 %v1985
    %2121 = vmatprep.subr.mxu0 0.0
    %2122 = vmatpush1.msra.mxu0 0.0
    %2123 = vmatprep.subr.mxu0 0.0
    %2124 = vmatpush1.msra.mxu0 0.0
    %2125 = vmatprep.subr.mxu0 0.0
    %2126 = vmatpush1.msra.mxu0 0.0
    %2127 = vmatprep.subr.mxu0 0.0
    %2128 = vmatpush1.msra.mxu0 0.0
    %2129 = vmatprep.subr.mxu0 0.0
    %2130 = vmatpush1.msra.mxu0 0.0
    %2131 = vmatprep.subr.mxu0 0.0
    %2132 = vmatpush1.msra.mxu0 0.0
    %2133 = vmatprep.subr.mxu0 0.0
    %2134 = vmatpush1.msra.mxu0 0.0
    %2135 = vmatprep.subr.mxu0 0.0
    %2136 = vmatpush1.msra.mxu0 0.0
    %2137 = vmatprep.subr.mxu0 0.0
    %2138 = vmatpush1.msra.mxu0 0.0
    %2139 = vmatprep.subr.mxu0 0.0
    %2140 = vmatpush1.msra.mxu0 0.0
    %2141 = vmatprep.subr.mxu0 0.0
    %2142 = vmatpush1.msra.mxu0 0.0
    %2143 = vmatprep.subr.mxu0 0.0
    %2144 = vmatpush1.msra.mxu0 0.0
    %2145 = vmatprep.subr.mxu0 0.0
    %2146 = vmatpush1.msra.mxu0 0.0
    %2147 = vmatprep.subr.mxu0 0.0
    %2148 = vmatpush1.msra.mxu0 0.0
    %2149 = vmatprep.subr.mxu0 0.0
    %2150 = vmatpush1.msra.mxu0 0.0
    %2151 = vmatprep.subr.mxu0 0.0
    %2152 = vmatpush1.msra.mxu0 0.0
    %2153 = vmatprep.subr.mxu0 0.0
    %2154 = vmatpush1.msra.mxu0 0.0
    %2155 = vmatprep.subr.mxu0 0.0
    %2156 = vmatpush1.msra.mxu0 0.0
    %2157 = vmatprep.subr.mxu0 0.0
    %2158 = vmatpush1.msra.mxu0 0.0
    %2159 = vmatprep.subr.mxu0 0.0
    %2160 = vmatpush1.msra.mxu0 0.0
    %2161 = vmatprep.subr.mxu0 0.0
    %2162 = vmatpush1.msra.mxu0 0.0
    %2163 = vmatprep.subr.mxu0 0.0
    %2164 = vmatpush1.msra.mxu0 0.0
    %2165 = vmatprep.subr.mxu0 0.0
    %2166 = vmatpush1.msra.mxu0 0.0
    %2167 = vmatprep.subr.mxu0 0.0
    %2168 = vmatpush1.msra.mxu0 0.0
    %2169 = vmatprep.mubr.f32.mxu0 0.0
    %2170 = vmatmul.mubr.f32.gmra.mrb[0].mxu0 %v2094
    %v2171 = vpop.f32.mrb[0].mxu0
    %v2172 = vadd.f32 0.0, %v2171
    %v2173 = vpop.f32.mrb[0].mxu0
    %2174 = vmatprep.mubr.f32.mxu0 0.0
    %2175 = vmatmul.mubr.f32.gmra.mrb[0].mxu0 %v2097
    %v2176 = vpop.f32.mrb[0].mxu0
    %v2177 = vadd.f32 0.0, %v2176
    %v2178 = vpop.f32.mrb[0].mxu0
    %2179 = vmatprep.mubr.f32.mxu0 0.0
    %2180 = vmatmul.mubr.f32.gmra.mrb[0].mxu0 %v2100
    %v2181 = vpop.f32.mrb[0].mxu0
    %v2182 = vadd.f32 0.0, %v2181
    %v2183 = vpop.f32.mrb[0].mxu0
    %2184 = vmatprep.mubr.f32.mxu0 0.0
    %2185 = vmatmul.mubr.f32.gmra.mrb[0].mxu0 %v2103
    %v2186 = vpop.f32.mrb[0].mxu0
    %v2187 = vadd.f32 0.0, %v2186
    %v2188 = vpop.f32.mrb[0].mxu0
    %2189 = vdwg.mxu0
    %v2190 = vmax.f32 %v2070, %v2172
    %v2191 = vmax.f32 %v2075, %v2177
    %v2192 = vmax.f32 %v2080, %v2182
    %v2193 = vmax.f32 %v2085, %v2187
    %s2194 = scalar_lea.vmem %s9, 64
    %v2195 = vld [vmem:[%s2194] sm:$0xff]
    %v2196 = vld [vmem:[%s2194 + $0x8] sm:$0xff]
    %v2197 = vld [vmem:[%s2194 + $0x10] sm:$0xff]
    %v2198 = vld [vmem:[%s2194 + $0x18] sm:$0xff]
    %v2200 = vsel %vm1990, %v2195, 0
    %v2203 = vsel %vm1990, %v2196, 0
    %v2206 = vsel %vm1990, %v2197, 0
    %v2209 = vsel %vm1990, %v2198, 0
    %2211 = vmatprep.subr.mxu0 0.0
    %2212 = vmatpush1.msra.mxu0 %v1978
    %2213 = vmatprep.subr.mxu0 0.0
    %2214 = vmatpush1.msra.mxu0 %v1979
    %2215 = vmatprep.subr.mxu0 0.0
    %2216 = vmatpush1.msra.mxu0 %v1980
    %2217 = vmatprep.subr.mxu0 0.0
    %2218 = vmatpush1.msra.mxu0 %v1981
    %2219 = vmatprep.subr.mxu0 0.0
    %2220 = vmatpush1.msra.mxu0 %v1982
    %2221 = vmatprep.subr.mxu0 0.0
    %2222 = vmatpush1.msra.mxu0 %v1983
    %2223 = vmatprep.subr.mxu0 0.0
    %2224 = vmatpush1.msra.mxu0 %v1984
    %2225 = vmatprep.subr.mxu0 0.0
    %2226 = vmatpush1.msra.mxu0 %v1985
    %2227 = vmatprep.subr.mxu0 0.0
    %2228 = vmatpush1.msra.mxu0 0.0
    %2229 = vmatprep.subr.mxu0 0.0
    %2230 = vmatpush1.msra.mxu0 0.0
    %2231 = vmatprep.subr.mxu0 0.0
    %2232 = vmatpush1.msra.mxu0 0.0
    %2233 = vmatprep.subr.mxu0 0.0
    %2234 = vmatpush1.msra.mxu0 0.0
    %2235 = vmatprep.subr.mxu0 0.0
    %2236 = vmatpush1.msra.mxu0 0.0
    %2237 = vmatprep.subr.mxu0 0.0
    %2238 = vmatpush1.msra.mxu0 0.0
    %2239 = vmatprep.subr.mxu0 0.0
    %2240 = vmatpush1.msra.mxu0 0.0
    %2241 = vmatprep.subr.mxu0 0.0
    %2242 = vmatpush1.msra.mxu0 0.0
    %2243 = vmatprep.subr.mxu0 0.0
    %2244 = vmatpush1.msra.mxu0 0.0
    %2245 = vmatprep.subr.mxu0 0.0
    %2246 = vmatpush1.msra.mxu0 0.0
    %2247 = vmatprep.subr.mxu0 0.0
    %2248 = vmatpush1.msra.mxu0 0.0
    %2249 = vmatprep.subr.mxu0 0.0
    %2250 = vmatpush1.msra.mxu0 0.0
    %2251 = vmatprep.subr.mxu0 0.0
    %2252 = vmatpush1.msra.mxu0 0.0
    %2253 = vmatprep.subr.mxu0 0.0
    %2254 = vmatpush1.msra.mxu0 0.0
    %2255 = vmatprep.subr.mxu0 0.0
    %2256 = vmatpush1.msra.mxu0 0.0
    %2257 = vmatprep.subr.mxu0 0.0
    %2258 = vmatpush1.msra.mxu0 0.0
    %2259 = vmatprep.subr.mxu0 0.0
    %2260 = vmatpush1.msra.mxu0 0.0
    %2261 = vmatprep.subr.mxu0 0.0
    %2262 = vmatpush1.msra.mxu0 0.0
    %2263 = vmatprep.subr.mxu0 0.0
    %2264 = vmatpush1.msra.mxu0 0.0
    %2265 = vmatprep.subr.mxu0 0.0
    %2266 = vmatpush1.msra.mxu0 0.0
    %2267 = vmatprep.subr.mxu0 0.0
    %2268 = vmatpush1.msra.mxu0 0.0
    %2269 = vmatprep.subr.mxu0 0.0
    %2270 = vmatpush1.msra.mxu0 0.0
    %2271 = vmatprep.subr.mxu0 0.0
    %2272 = vmatpush1.msra.mxu0 0.0
    %2273 = vmatprep.subr.mxu0 0.0
    %2274 = vmatpush1.msra.mxu0 0.0
    %2275 = vmatprep.mubr.f32.mxu0 0.0
    %2276 = vmatmul.mubr.f32.gmra.mrb[0].mxu0 %v2200
    %v2277 = vpop.f32.mrb[0].mxu0
    %v2278 = vadd.f32 0.0, %v2277
    %v2279 = vpop.f32.mrb[0].mxu0
    %2280 = vmatprep.mubr.f32.mxu0 0.0
    %2281 = vmatmul.mubr.f32.gmra.mrb[0].mxu0 %v2203
    %v2282 = vpop.f32.mrb[0].mxu0
    %v2283 = vadd.f32 0.0, %v2282
    %v2284 = vpop.f32.mrb[0].mxu0
    %2285 = vmatprep.mubr.f32.mxu0 0.0
    %2286 = vmatmul.mubr.f32.gmra.mrb[0].mxu0 %v2206
    %v2287 = vpop.f32.mrb[0].mxu0
    %v2288 = vadd.f32 0.0, %v2287
    %v2289 = vpop.f32.mrb[0].mxu0
    %2290 = vmatprep.mubr.f32.mxu0 0.0
    %2291 = vmatmul.mubr.f32.gmra.mrb[0].mxu0 %v2209
    %v2292 = vpop.f32.mrb[0].mxu0
    %v2293 = vadd.f32 0.0, %v2292
    %v2294 = vpop.f32.mrb[0].mxu0
    %2295 = vdwg.mxu0
    %v2296 = vmax.f32 %v2190, %v2278
    %v2297 = vmax.f32 %v2191, %v2283
    %v2298 = vmax.f32 %v2192, %v2288
    %v2299 = vmax.f32 %v2193, %v2293
    %v2300 = vld [vmem:[%s11] sm:$0xff]
    %v2301 = vld [vmem:[%s11 + $0x8] sm:$0xff]
    %v2302 = vld [vmem:[%s11 + $0x10] sm:$0xff]
    %v2303 = vld [vmem:[%s11 + $0x18] sm:$0xff]
    %vm2304 = vcmask 261120
    %v2306 = vsel %vm2304, %v2300, 0
    %v2309 = vsel %vm2304, %v2301, 0
    %v2312 = vsel %vm2304, %v2302, 0
    %v2315 = vsel %vm2304, %v2303, 0
    %2317 = vmatprep.subr.mxu0 0.0
    %2318 = vmatpush1.msra.mxu0 %v2296
    %2319 = vmatprep.subr.mxu0 0.0
    %2320 = vmatpush1.msra.mxu0 %v2297
    %2321 = vmatprep.subr.mxu0 0.0
    %2322 = vmatpush1.msra.mxu0 %v2298
    %2323 = vmatprep.subr.mxu0 0.0
    %2324 = vmatpush1.msra.mxu0 %v2299
    %2325 = vmatprep.subr.mxu0 0.0
    %2326 = vmatpush1.msra.mxu0 0.0
    %2327 = vmatprep.subr.mxu0 0.0
    %2328 = vmatpush1.msra.mxu0 0.0
    %2329 = vmatprep.subr.mxu0 0.0
    %2330 = vmatpush1.msra.mxu0 0.0
    %2331 = vmatprep.subr.mxu0 0.0
    %2332 = vmatpush1.msra.mxu0 0.0
    %2333 = vmatprep.subr.mxu0 0.0
    %2334 = vmatpush1.msra.mxu0 0.0
    %2335 = vmatprep.subr.mxu0 0.0
    %2336 = vmatpush1.msra.mxu0 0.0
    %2337 = vmatprep.subr.mxu0 0.0
    %2338 = vmatpush1.msra.mxu0 0.0
    %2339 = vmatprep.subr.mxu0 0.0
    %2340 = vmatpush1.msra.mxu0 0.0
    %2341 = vmatprep.subr.mxu0 0.0
    %2342 = vmatpush1.msra.mxu0 0.0
    %2343 = vmatprep.subr.mxu0 0.0
    %2344 = vmatpush1.msra.mxu0 0.0
    %2345 = vmatprep.subr.mxu0 0.0
    %2346 = vmatpush1.msra.mxu0 0.0
    %2347 = vmatprep.subr.mxu0 0.0
    %2348 = vmatpush1.msra.mxu0 0.0
    %2349 = vmatprep.subr.mxu0 0.0
    %2350 = vmatpush1.msra.mxu0 0.0
    %2351 = vmatprep.subr.mxu0 0.0
    %2352 = vmatpush1.msra.mxu0 0.0
    %2353 = vmatprep.subr.mxu0 0.0
    %2354 = vmatpush1.msra.mxu0 0.0
    %2355 = vmatprep.subr.mxu0 0.0
    %2356 = vmatpush1.msra.mxu0 0.0
    %2357 = vmatprep.subr.mxu0 0.0
    %2358 = vmatpush1.msra.mxu0 0.0
    %2359 = vmatprep.subr.mxu0 0.0
    %2360 = vmatpush1.msra.mxu0 0.0
    %2361 = vmatprep.subr.mxu0 0.0
    %2362 = vmatpush1.msra.mxu0 0.0
    %2363 = vmatprep.subr.mxu0 0.0
    %2364 = vmatpush1.msra.mxu0 0.0
    %2365 = vmatprep.subr.mxu0 0.0
    %2366 = vmatpush1.msra.mxu0 0.0
    %2367 = vmatprep.subr.mxu0 0.0
    %2368 = vmatpush1.msra.mxu0 0.0
    %2369 = vmatprep.subr.mxu0 0.0
    %2370 = vmatpush1.msra.mxu0 0.0
    %2371 = vmatprep.subr.mxu0 0.0
    %2372 = vmatpush1.msra.mxu0 0.0
    %2373 = vmatprep.subr.mxu0 0.0
    %2374 = vmatpush1.msra.mxu0 0.0
    %2375 = vmatprep.subr.mxu0 0.0
    %2376 = vmatpush1.msra.mxu0 0.0
    %2377 = vmatprep.subr.mxu0 0.0
    %2378 = vmatpush1.msra.mxu0 0.0
    %2379 = vmatprep.subr.mxu0 0.0
    %2380 = vmatpush1.msra.mxu0 0.0
    %2381 = vmatprep.mubr.f32.mxu0 0.0
    %2382 = vmatmul.mubr.f32.gmra.mrb[0].mxu0 %v2306
    %v2383 = vpop.f32.mrb[0].mxu0
    %v2384 = vadd.f32 0.0, %v2383
    %v2385 = vpop.f32.mrb[0].mxu0
    %2386 = vmatprep.mubr.f32.mxu0 0.0
    %2387 = vmatmul.mubr.f32.gmra.mrb[0].mxu0 %v2309
    %v2388 = vpop.f32.mrb[0].mxu0
    %v2389 = vadd.f32 0.0, %v2388
    %v2390 = vpop.f32.mrb[0].mxu0
    %2391 = vmatprep.mubr.f32.mxu0 0.0
    %2392 = vmatmul.mubr.f32.gmra.mrb[0].mxu0 %v2312
    %v2393 = vpop.f32.mrb[0].mxu0
    %v2394 = vadd.f32 0.0, %v2393
    %v2395 = vpop.f32.mrb[0].mxu0
    %2396 = vmatprep.mubr.f32.mxu0 0.0
    %2397 = vmatmul.mubr.f32.gmra.mrb[0].mxu0 %v2315
    %v2398 = vpop.f32.mrb[0].mxu0
    %v2399 = vadd.f32 0.0, %v2398
    %v2400 = vpop.f32.mrb[0].mxu0
    %2401 = vdwg.mxu0
    %v2402 = vld [vmem:[%s13] sm:$0xff]
    %v2403 = vld [vmem:[%s13 + $0x8] sm:$0xff]
    %s2404 = scalar_lea.vmem %s13, 16
    %v2405 = vld [vmem:[%s2404] sm:$0xff]
    %v2406 = vld [vmem:[%s2404 + $0x8] sm:$0xff]
    %vm2407 = vcmask 130048
    %v2409 = vsel %vm2407, %v2296, 0
    %v2412 = vsel %vm2407, %v2297, 0
    %v2415 = vsel %vm2407, %v2298, 0
    %v2418 = vsel %vm2407, %v2299, 0
    %2420 = vmatprep.subr.mxu0 0.0
    %2421 = vmatpush1.msra.mxu0 %v2405
    %2422 = vmatprep.subr.mxu0 0.0
    %2423 = vmatpush1.msra.mxu0 %v2406
    %2424 = vmatprep.subr.mxu0 0.0
    %2425 = vmatpush1.msra.mxu0 0.0
    %2426 = vmatprep.subr.mxu0 0.0
    %2427 = vmatpush1.msra.mxu0 0.0
    %2428 = vmatprep.subr.mxu0 0.0
    %2429 = vmatpush1.msra.mxu0 0.0
    %2430 = vmatprep.subr.mxu0 0.0
    %2431 = vmatpush1.msra.mxu0 0.0
    %2432 = vmatprep.subr.mxu0 0.0
    %2433 = vmatpush1.msra.mxu0 0.0
    %2434 = vmatprep.subr.mxu0 0.0
    %2435 = vmatpush1.msra.mxu0 0.0
    %2436 = vmatprep.subr.mxu0 0.0
    %2437 = vmatpush1.msra.mxu0 0.0
    %2438 = vmatprep.subr.mxu0 0.0
    %2439 = vmatpush1.msra.mxu0 0.0
    %2440 = vmatprep.subr.mxu0 0.0
    %2441 = vmatpush1.msra.mxu0 0.0
    %2442 = vmatprep.subr.mxu0 0.0
    %2443 = vmatpush1.msra.mxu0 0.0
    %2444 = vmatprep.subr.mxu0 0.0
    %2445 = vmatpush1.msra.mxu0 0.0
    %2446 = vmatprep.subr.mxu0 0.0
    %2447 = vmatpush1.msra.mxu0 0.0
    %2448 = vmatprep.subr.mxu0 0.0
    %2449 = vmatpush1.msra.mxu0 0.0
    %2450 = vmatprep.subr.mxu0 0.0
    %2451 = vmatpush1.msra.mxu0 0.0
    %2452 = vmatprep.subr.mxu0 0.0
    %2453 = vmatpush1.msra.mxu0 0.0
    %2454 = vmatprep.subr.mxu0 0.0
    %2455 = vmatpush1.msra.mxu0 0.0
    %2456 = vmatprep.subr.mxu0 0.0
    %2457 = vmatpush1.msra.mxu0 0.0
    %2458 = vmatprep.subr.mxu0 0.0
    %2459 = vmatpush1.msra.mxu0 0.0
    %2460 = vmatprep.subr.mxu0 0.0
    %2461 = vmatpush1.msra.mxu0 0.0
    %2462 = vmatprep.subr.mxu0 0.0
    %2463 = vmatpush1.msra.mxu0 0.0
    %2464 = vmatprep.subr.mxu0 0.0
    %2465 = vmatpush1.msra.mxu0 0.0
    %2466 = vmatprep.subr.mxu0 0.0
    %2467 = vmatpush1.msra.mxu0 0.0
    %2468 = vmatprep.subr.mxu0 0.0
    %2469 = vmatpush1.msra.mxu0 0.0
    %2470 = vmatprep.subr.mxu0 0.0
    %2471 = vmatpush1.msra.mxu0 0.0
    %2472 = vmatprep.subr.mxu0 0.0
    %2473 = vmatpush1.msra.mxu0 0.0
    %2474 = vmatprep.subr.mxu0 0.0
    %2475 = vmatpush1.msra.mxu0 0.0
    %2476 = vmatprep.subr.mxu0 0.0
    %2477 = vmatpush1.msra.mxu0 0.0
    %2478 = vmatprep.subr.mxu0 0.0
    %2479 = vmatpush1.msra.mxu0 0.0
    %2480 = vmatprep.subr.mxu0 0.0
    %2481 = vmatpush1.msra.mxu0 0.0
    %2482 = vmatprep.subr.mxu0 0.0
    %2483 = vmatpush1.msra.mxu0 0.0
    %2484 = vmatprep.mubr.f32.mxu0 0.0
    %2485 = vmatmul.mubr.f32.gmra.mrb[0].mxu0 %v2409
    %v2486 = vpop.f32.mrb[0].mxu0
    %v2487 = vadd.f32 0.0, %v2486
    %v2488 = vpop.f32.mrb[0].mxu0
    %2489 = vmatprep.mubr.f32.mxu0 0.0
    %2490 = vmatmul.mubr.f32.gmra.mrb[0].mxu0 %v2412
    %v2491 = vpop.f32.mrb[0].mxu0
    %v2492 = vadd.f32 0.0, %v2491
    %v2493 = vpop.f32.mrb[0].mxu0
    %2494 = vmatprep.mubr.f32.mxu0 0.0
    %2495 = vmatmul.mubr.f32.gmra.mrb[0].mxu0 %v2415
    %v2496 = vpop.f32.mrb[0].mxu0
    %v2497 = vadd.f32 0.0, %v2496
    %v2498 = vpop.f32.mrb[0].mxu0
    %2499 = vmatprep.mubr.f32.mxu0 0.0
    %2500 = vmatmul.mubr.f32.gmra.mrb[0].mxu0 %v2418
    %v2501 = vpop.f32.mrb[0].mxu0
    %v2502 = vadd.f32 0.0, %v2501
    %v2503 = vpop.f32.mrb[0].mxu0
    %2504 = vdwg.mxu0
    %v2506 = vsel %vm2407, %v2384, 0
    %v2509 = vsel %vm2407, %v2389, 0
    %v2512 = vsel %vm2407, %v2394, 0
    %v2515 = vsel %vm2407, %v2399, 0
    %2517 = vmatprep.subr.mxu0 0.0
    %2518 = vmatpush1.msra.mxu0 %v2402
    %2519 = vmatprep.subr.mxu0 0.0
    %2520 = vmatpush1.msra.mxu0 %v2403
    %2521 = vmatprep.subr.mxu0 0.0
    %2522 = vmatpush1.msra.mxu0 0.0
    %2523 = vmatprep.subr.mxu0 0.0
    %2524 = vmatpush1.msra.mxu0 0.0
    %2525 = vmatprep.subr.mxu0 0.0
    %2526 = vmatpush1.msra.mxu0 0.0
    %2527 = vmatprep.subr.mxu0 0.0
    %2528 = vmatpush1.msra.mxu0 0.0
    %2529 = vmatprep.subr.mxu0 0.0
    %2530 = vmatpush1.msra.mxu0 0.0
    %2531 = vmatprep.subr.mxu0 0.0
    %2532 = vmatpush1.msra.mxu0 0.0
    %2533 = vmatprep.subr.mxu0 0.0
    %2534 = vmatpush1.msra.mxu0 0.0
    %2535 = vmatprep.subr.mxu0 0.0
    %2536 = vmatpush1.msra.mxu0 0.0
    %2537 = vmatprep.subr.mxu0 0.0
    %2538 = vmatpush1.msra.mxu0 0.0
    %2539 = vmatprep.subr.mxu0 0.0
    %2540 = vmatpush1.msra.mxu0 0.0
    %2541 = vmatprep.subr.mxu0 0.0
    %2542 = vmatpush1.msra.mxu0 0.0
    %2543 = vmatprep.subr.mxu0 0.0
    %2544 = vmatpush1.msra.mxu0 0.0
    %2545 = vmatprep.subr.mxu0 0.0
    %2546 = vmatpush1.msra.mxu0 0.0
    %2547 = vmatprep.subr.mxu0 0.0
    %2548 = vmatpush1.msra.mxu0 0.0
    %2549 = vmatprep.subr.mxu0 0.0
    %2550 = vmatpush1.msra.mxu0 0.0
    %2551 = vmatprep.subr.mxu0 0.0
    %2552 = vmatpush1.msra.mxu0 0.0
    %2553 = vmatprep.subr.mxu0 0.0
    %2554 = vmatpush1.msra.mxu0 0.0
    %2555 = vmatprep.subr.mxu0 0.0
    %2556 = vmatpush1.msra.mxu0 0.0
    %2557 = vmatprep.subr.mxu0 0.0
    %2558 = vmatpush1.msra.mxu0 0.0
    %2559 = vmatprep.subr.mxu0 0.0
    %2560 = vmatpush1.msra.mxu0 0.0
    %2561 = vmatprep.subr.mxu0 0.0
    %2562 = vmatpush1.msra.mxu0 0.0
    %2563 = vmatprep.subr.mxu0 0.0
    %2564 = vmatpush1.msra.mxu0 0.0
    %2565 = vmatprep.subr.mxu0 0.0
    %2566 = vmatpush1.msra.mxu0 0.0
    %2567 = vmatprep.subr.mxu0 0.0
    %2568 = vmatpush1.msra.mxu0 0.0
    %2569 = vmatprep.subr.mxu0 0.0
    %2570 = vmatpush1.msra.mxu0 0.0
    %2571 = vmatprep.subr.mxu0 0.0
    %2572 = vmatpush1.msra.mxu0 0.0
    %2573 = vmatprep.subr.mxu0 0.0
    %2574 = vmatpush1.msra.mxu0 0.0
    %2575 = vmatprep.subr.mxu0 0.0
    %2576 = vmatpush1.msra.mxu0 0.0
    %2577 = vmatprep.subr.mxu0 0.0
    %2578 = vmatpush1.msra.mxu0 0.0
    %2579 = vmatprep.subr.mxu0 0.0
    %2580 = vmatpush1.msra.mxu0 0.0
    %2581 = vmatprep.mubr.f32.mxu0 0.0
    %2582 = vmatmul.mubr.f32.gmra.mrb[0].mxu0 %v2506
    %v2583 = vpop.f32.mrb[0].mxu0
    %v2584 = vadd.f32 %v2487, %v2583
    %v2585 = vpop.f32.mrb[0].mxu0
    %2586 = vmatprep.mubr.f32.mxu0 0.0
    %2587 = vmatmul.mubr.f32.gmra.mrb[0].mxu0 %v2509
    %v2588 = vpop.f32.mrb[0].mxu0
    %v2589 = vadd.f32 %v2492, %v2588
    %v2590 = vpop.f32.mrb[0].mxu0
    %2591 = vmatprep.mubr.f32.mxu0 0.0
    %2592 = vmatmul.mubr.f32.gmra.mrb[0].mxu0 %v2512
    %v2593 = vpop.f32.mrb[0].mxu0
    %v2594 = vadd.f32 %v2497, %v2593
    %v2595 = vpop.f32.mrb[0].mxu0
    %2596 = vmatprep.mubr.f32.mxu0 0.0
    %2597 = vmatmul.mubr.f32.gmra.mrb[0].mxu0 %v2515
    %v2598 = vpop.f32.mrb[0].mxu0
    %v2599 = vadd.f32 %v2502, %v2598
    %v2600 = vpop.f32.mrb[0].mxu0
    %2601 = vdwg.mxu0
    %s2602 = scalar_lea.vmem %s11, 64
    %v2603 = vld [vmem:[%s2602] sm:$0xff]
    %v2604 = vld [vmem:[%s2602 + $0x8] sm:$0xff]
    %v2605 = vld [vmem:[%s2602 + $0x10] sm:$0xff]
    %v2606 = vld [vmem:[%s2602 + $0x18] sm:$0xff]
    %v2608 = vsel %vm2304, %v2603, 0
    %v2611 = vsel %vm2304, %v2604, 0
    %v2614 = vsel %vm2304, %v2605, 0
    %v2617 = vsel %vm2304, %v2606, 0
    %2619 = vmatprep.subr.mxu0 0.0
    %2620 = vmatpush1.msra.mxu0 %v2296
    %2621 = vmatprep.subr.mxu0 0.0
    %2622 = vmatpush1.msra.mxu0 %v2297
    %2623 = vmatprep.subr.mxu0 0.0
    %2624 = vmatpush1.msra.mxu0 %v2298
    %2625 = vmatprep.subr.mxu0 0.0
    %2626 = vmatpush1.msra.mxu0 %v2299
    %2627 = vmatprep.subr.mxu0 0.0
    %2628 = vmatpush1.msra.mxu0 0.0
    %2629 = vmatprep.subr.mxu0 0.0
    %2630 = vmatpush1.msra.mxu0 0.0
    %2631 = vmatprep.subr.mxu0 0.0
    %2632 = vmatpush1.msra.mxu0 0.0
    %2633 = vmatprep.subr.mxu0 0.0
    %2634 = vmatpush1.msra.mxu0 0.0
    %2635 = vmatprep.subr.mxu0 0.0
    %2636 = vmatpush1.msra.mxu0 0.0
    %2637 = vmatprep.subr.mxu0 0.0
    %2638 = vmatpush1.msra.mxu0 0.0
    %2639 = vmatprep.subr.mxu0 0.0
    %2640 = vmatpush1.msra.mxu0 0.0
    %2641 = vmatprep.subr.mxu0 0.0
    %2642 = vmatpush1.msra.mxu0 0.0
    %2643 = vmatprep.subr.mxu0 0.0
    %2644 = vmatpush1.msra.mxu0 0.0
    %2645 = vmatprep.subr.mxu0 0.0
    %2646 = vmatpush1.msra.mxu0 0.0
    %2647 = vmatprep.subr.mxu0 0.0
    %2648 = vmatpush1.msra.mxu0 0.0
    %2649 = vmatprep.subr.mxu0 0.0
    %2650 = vmatpush1.msra.mxu0 0.0
    %2651 = vmatprep.subr.mxu0 0.0
    %2652 = vmatpush1.msra.mxu0 0.0
    %2653 = vmatprep.subr.mxu0 0.0
    %2654 = vmatpush1.msra.mxu0 0.0
    %2655 = vmatprep.subr.mxu0 0.0
    %2656 = vmatpush1.msra.mxu0 0.0
    %2657 = vmatprep.subr.mxu0 0.0
    %2658 = vmatpush1.msra.mxu0 0.0
    %2659 = vmatprep.subr.mxu0 0.0
    %2660 = vmatpush1.msra.mxu0 0.0
    %2661 = vmatprep.subr.mxu0 0.0
    %2662 = vmatpush1.msra.mxu0 0.0
    %2663 = vmatprep.subr.mxu0 0.0
    %2664 = vmatpush1.msra.mxu0 0.0
    %2665 = vmatprep.subr.mxu0 0.0
    %2666 = vmatpush1.msra.mxu0 0.0
    %2667 = vmatprep.subr.mxu0 0.0
    %2668 = vmatpush1.msra.mxu0 0.0
    %2669 = vmatprep.subr.mxu0 0.0
    %2670 = vmatpush1.msra.mxu0 0.0
    %2671 = vmatprep.subr.mxu0 0.0
    %2672 = vmatpush1.msra.mxu0 0.0
    %2673 = vmatprep.subr.mxu0 0.0
    %2674 = vmatpush1.msra.mxu0 0.0
    %2675 = vmatprep.subr.mxu0 0.0
    %2676 = vmatpush1.msra.mxu0 0.0
    %2677 = vmatprep.subr.mxu0 0.0
    %2678 = vmatpush1.msra.mxu0 0.0
    %2679 = vmatprep.subr.mxu0 0.0
    %2680 = vmatpush1.msra.mxu0 0.0
    %2681 = vmatprep.subr.mxu0 0.0
    %2682 = vmatpush1.msra.mxu0 0.0
    %2683 = vmatprep.mubr.f32.mxu0 0.0
    %2684 = vmatmul.mubr.f32.gmra.mrb[0].mxu0 %v2608
    %v2685 = vpop.f32.mrb[0].mxu0
    %v2686 = vadd.f32 0.0, %v2685
    %v2687 = vpop.f32.mrb[0].mxu0
    %2688 = vmatprep.mubr.f32.mxu0 0.0
    %2689 = vmatmul.mubr.f32.gmra.mrb[0].mxu0 %v2611
    %v2690 = vpop.f32.mrb[0].mxu0
    %v2691 = vadd.f32 0.0, %v2690
    %v2692 = vpop.f32.mrb[0].mxu0
    %2693 = vmatprep.mubr.f32.mxu0 0.0
    %2694 = vmatmul.mubr.f32.gmra.mrb[0].mxu0 %v2614
    %v2695 = vpop.f32.mrb[0].mxu0
    %v2696 = vadd.f32 0.0, %v2695
    %v2697 = vpop.f32.mrb[0].mxu0
    %2698 = vmatprep.mubr.f32.mxu0 0.0
    %2699 = vmatmul.mubr.f32.gmra.mrb[0].mxu0 %v2617
    %v2700 = vpop.f32.mrb[0].mxu0
    %v2701 = vadd.f32 0.0, %v2700
    %v2702 = vpop.f32.mrb[0].mxu0
    %2703 = vdwg.mxu0
    %s2704 = scalar_lea.vmem %s13, 32
    %v2705 = vld [vmem:[%s2704] sm:$0xff]
    %v2706 = vld [vmem:[%s2704 + $0x8] sm:$0xff]
    %v2708 = vsel %vm2407, %v2686, 0
    %v2711 = vsel %vm2407, %v2691, 0
    %v2714 = vsel %vm2407, %v2696, 0
    %v2717 = vsel %vm2407, %v2701, 0
    %2719 = vmatprep.subr.mxu0 0.0
    %2720 = vmatpush1.msra.mxu0 %v2705
    %2721 = vmatprep.subr.mxu0 0.0
    %2722 = vmatpush1.msra.mxu0 %v2706
    %2723 = vmatprep.subr.mxu0 0.0
    %2724 = vmatpush1.msra.mxu0 0.0
    %2725 = vmatprep.subr.mxu0 0.0
    %2726 = vmatpush1.msra.mxu0 0.0
    %2727 = vmatprep.subr.mxu0 0.0
    %2728 = vmatpush1.msra.mxu0 0.0
    %2729 = vmatprep.subr.mxu0 0.0
    %2730 = vmatpush1.msra.mxu0 0.0
    %2731 = vmatprep.subr.mxu0 0.0
    %2732 = vmatpush1.msra.mxu0 0.0
    %2733 = vmatprep.subr.mxu0 0.0
    %2734 = vmatpush1.msra.mxu0 0.0
    %2735 = vmatprep.subr.mxu0 0.0
    %2736 = vmatpush1.msra.mxu0 0.0
    %2737 = vmatprep.subr.mxu0 0.0
    %2738 = vmatpush1.msra.mxu0 0.0
    %2739 = vmatprep.subr.mxu0 0.0
    %2740 = vmatpush1.msra.mxu0 0.0
    %2741 = vmatprep.subr.mxu0 0.0
    %2742 = vmatpush1.msra.mxu0 0.0
    %2743 = vmatprep.subr.mxu0 0.0
    %2744 = vmatpush1.msra.mxu0 0.0
    %2745 = vmatprep.subr.mxu0 0.0
    %2746 = vmatpush1.msra.mxu0 0.0
    %2747 = vmatprep.subr.mxu0 0.0
    %2748 = vmatpush1.msra.mxu0 0.0
    %2749 = vmatprep.subr.mxu0 0.0
    %2750 = vmatpush1.msra.mxu0 0.0
    %2751 = vmatprep.subr.mxu0 0.0
    %2752 = vmatpush1.msra.mxu0 0.0
    %2753 = vmatprep.subr.mxu0 0.0
    %2754 = vmatpush1.msra.mxu0 0.0
    %2755 = vmatprep.subr.mxu0 0.0
    %2756 = vmatpush1.msra.mxu0 0.0
    %2757 = vmatprep.subr.mxu0 0.0
    %2758 = vmatpush1.msra.mxu0 0.0
    %2759 = vmatprep.subr.mxu0 0.0
    %2760 = vmatpush1.msra.mxu0 0.0
    %2761 = vmatprep.subr.mxu0 0.0
    %2762 = vmatpush1.msra.mxu0 0.0
    %2763 = vmatprep.subr.mxu0 0.0
    %2764 = vmatpush1.msra.mxu0 0.0
    %2765 = vmatprep.subr.mxu0 0.0
    %2766 = vmatpush1.msra.mxu0 0.0
    %2767 = vmatprep.subr.mxu0 0.0
    %2768 = vmatpush1.msra.mxu0 0.0
    %2769 = vmatprep.subr.mxu0 0.0
    %2770 = vmatpush1.msra.mxu0 0.0
    %2771 = vmatprep.subr.mxu0 0.0
    %2772 = vmatpush1.msra.mxu0 0.0
    %2773 = vmatprep.subr.mxu0 0.0
    %2774 = vmatpush1.msra.mxu0 0.0
    %2775 = vmatprep.subr.mxu0 0.0
    %2776 = vmatpush1.msra.mxu0 0.0
    %2777 = vmatprep.subr.mxu0 0.0
    %2778 = vmatpush1.msra.mxu0 0.0
    %2779 = vmatprep.subr.mxu0 0.0
    %2780 = vmatpush1.msra.mxu0 0.0
    %2781 = vmatprep.subr.mxu0 0.0
    %2782 = vmatpush1.msra.mxu0 0.0
    %2783 = vmatprep.mubr.f32.mxu0 0.0
    %2784 = vmatmul.mubr.f32.gmra.mrb[0].mxu0 %v2708
    %v2785 = vpop.f32.mrb[0].mxu0
    %v2786 = vadd.f32 0.0, %v2785
    %v2787 = vpop.f32.mrb[0].mxu0
    %2788 = vmatprep.mubr.f32.mxu0 0.0
    %2789 = vmatmul.mubr.f32.gmra.mrb[0].mxu0 %v2711
    %v2790 = vpop.f32.mrb[0].mxu0
    %v2791 = vadd.f32 0.0, %v2790
    %v2792 = vpop.f32.mrb[0].mxu0
    %2793 = vmatprep.mubr.f32.mxu0 0.0
    %2794 = vmatmul.mubr.f32.gmra.mrb[0].mxu0 %v2714
    %v2795 = vpop.f32.mrb[0].mxu0
    %v2796 = vadd.f32 0.0, %v2795
    %v2797 = vpop.f32.mrb[0].mxu0
    %2798 = vmatprep.mubr.f32.mxu0 0.0
    %2799 = vmatmul.mubr.f32.gmra.mrb[0].mxu0 %v2717
    %v2800 = vpop.f32.mrb[0].mxu0
    %v2801 = vadd.f32 0.0, %v2800
    %v2802 = vpop.f32.mrb[0].mxu0
    %2803 = vdwg.mxu0
    %v2804 = vadd.f32 %v2584, %v2786
    %v2805 = vadd.f32 %v2589, %v2791
    %v2806 = vadd.f32 %v2594, %v2796
    %v2807 = vadd.f32 %v2599, %v2801
    %v2808 = vld [vmem:[%s15] sm:$0x1]
    %v2810 = vlaneseq
    %v2811 = vshrl.u32 %v2810, 7
    %v2812 = vsub.s32 0, %v2811
    %v2813 = vrot.slane %v2808, %v2812
    %v2815 = vadd.f32 %v2804, %v2813
    %v2816 = vadd.f32 %v2805, %v2813
    %v2817 = vadd.f32 %v2806, %v2813
    %v2818 = vadd.f32 %v2807, %v2813
    %v2819 = vmax.f32 %v2815, 0.0
    %v2820 = vmax.f32 %v2816, 0.0
    %v2821 = vmax.f32 %v2817, 0.0
    %v2822 = vmax.f32 %v2818, 0.0
    %v2823 = vld [vmem:[%s17] sm:$0xff]
    %v2824 = vld [vmem:[%s17 + $0x8] sm:$0xff]
    %v2825 = vld [vmem:[%s17 + $0x10] sm:$0xff]
    %v2826 = vld [vmem:[%s17 + $0x18] sm:$0xff]
    %v2828 = vsel %vm2304, %v2823, 0
    %v2831 = vsel %vm2304, %v2824, 0
    %v2834 = vsel %vm2304, %v2825, 0
    %v2837 = vsel %vm2304, %v2826, 0
    %2839 = vmatprep.subr.mxu0 0.0
    %2840 = vmatpush1.msra.mxu0 %v2819
    %2841 = vmatprep.subr.mxu0 0.0
    %2842 = vmatpush1.msra.mxu0 %v2820
    %2843 = vmatprep.subr.mxu0 0.0
    %2844 = vmatpush1.msra.mxu0 %v2821
    %2845 = vmatprep.subr.mxu0 0.0
    %2846 = vmatpush1.msra.mxu0 %v2822
    %2847 = vmatprep.subr.mxu0 0.0
    %2848 = vmatpush1.msra.mxu0 0.0
    %2849 = vmatprep.subr.mxu0 0.0
    %2850 = vmatpush1.msra.mxu0 0.0
    %2851 = vmatprep.subr.mxu0 0.0
    %2852 = vmatpush1.msra.mxu0 0.0
    %2853 = vmatprep.subr.mxu0 0.0
    %2854 = vmatpush1.msra.mxu0 0.0
    %2855 = vmatprep.subr.mxu0 0.0
    %2856 = vmatpush1.msra.mxu0 0.0
    %2857 = vmatprep.subr.mxu0 0.0
    %2858 = vmatpush1.msra.mxu0 0.0
    %2859 = vmatprep.subr.mxu0 0.0
    %2860 = vmatpush1.msra.mxu0 0.0
    %2861 = vmatprep.subr.mxu0 0.0
    %2862 = vmatpush1.msra.mxu0 0.0
    %2863 = vmatprep.subr.mxu0 0.0
    %2864 = vmatpush1.msra.mxu0 0.0
    %2865 = vmatprep.subr.mxu0 0.0
    %2866 = vmatpush1.msra.mxu0 0.0
    %2867 = vmatprep.subr.mxu0 0.0
    %2868 = vmatpush1.msra.mxu0 0.0
    %2869 = vmatprep.subr.mxu0 0.0
    %2870 = vmatpush1.msra.mxu0 0.0
    %2871 = vmatprep.subr.mxu0 0.0
    %2872 = vmatpush1.msra.mxu0 0.0
    %2873 = vmatprep.subr.mxu0 0.0
    %2874 = vmatpush1.msra.mxu0 0.0
    %2875 = vmatprep.subr.mxu0 0.0
    %2876 = vmatpush1.msra.mxu0 0.0
    %2877 = vmatprep.subr.mxu0 0.0
    %2878 = vmatpush1.msra.mxu0 0.0
    %2879 = vmatprep.subr.mxu0 0.0
    %2880 = vmatpush1.msra.mxu0 0.0
    %2881 = vmatprep.subr.mxu0 0.0
    %2882 = vmatpush1.msra.mxu0 0.0
    %2883 = vmatprep.subr.mxu0 0.0
    %2884 = vmatpush1.msra.mxu0 0.0
    %2885 = vmatprep.subr.mxu0 0.0
    %2886 = vmatpush1.msra.mxu0 0.0
    %2887 = vmatprep.subr.mxu0 0.0
    %2888 = vmatpush1.msra.mxu0 0.0
    %2889 = vmatprep.subr.mxu0 0.0
    %2890 = vmatpush1.msra.mxu0 0.0
    %2891 = vmatprep.subr.mxu0 0.0
    %2892 = vmatpush1.msra.mxu0 0.0
    %2893 = vmatprep.subr.mxu0 0.0
    %2894 = vmatpush1.msra.mxu0 0.0
    %2895 = vmatprep.subr.mxu0 0.0
    %2896 = vmatpush1.msra.mxu0 0.0
    %2897 = vmatprep.subr.mxu0 0.0
    %2898 = vmatpush1.msra.mxu0 0.0
    %2899 = vmatprep.subr.mxu0 0.0
    %2900 = vmatpush1.msra.mxu0 0.0
    %2901 = vmatprep.subr.mxu0 0.0
    %2902 = vmatpush1.msra.mxu0 0.0
    %2903 = vmatprep.mubr.f32.mxu0 0.0
    %2904 = vmatmul.mubr.f32.gmra.mrb[0].mxu0 %v2828
    %v2905 = vpop.f32.mrb[0].mxu0
    %v2906 = vadd.f32 0.0, %v2905
    %v2907 = vpop.f32.mrb[0].mxu0
    %2908 = vmatprep.mubr.f32.mxu0 0.0
    %2909 = vmatmul.mubr.f32.gmra.mrb[0].mxu0 %v2831
    %v2910 = vpop.f32.mrb[0].mxu0
    %v2911 = vadd.f32 0.0, %v2910
    %v2912 = vpop.f32.mrb[0].mxu0
    %2913 = vmatprep.mubr.f32.mxu0 0.0
    %2914 = vmatmul.mubr.f32.gmra.mrb[0].mxu0 %v2834
    %v2915 = vpop.f32.mrb[0].mxu0
    %v2916 = vadd.f32 0.0, %v2915
    %v2917 = vpop.f32.mrb[0].mxu0
    %2918 = vmatprep.mubr.f32.mxu0 0.0
    %2919 = vmatmul.mubr.f32.gmra.mrb[0].mxu0 %v2837
    %v2920 = vpop.f32.mrb[0].mxu0
    %v2921 = vadd.f32 0.0, %v2920
    %v2922 = vpop.f32.mrb[0].mxu0
    %2923 = vdwg.mxu0
    %v2924 = vld [vmem:[%s19] sm:$0xff]
    %v2925 = vld [vmem:[%s19 + $0x8] sm:$0xff]
    %s2926 = scalar_lea.vmem %s19, 16
    %v2927 = vld [vmem:[%s2926] sm:$0xff]
    %v2928 = vld [vmem:[%s2926 + $0x8] sm:$0xff]
    %v2930 = vsel %vm2407, %v2819, 0
    %v2933 = vsel %vm2407, %v2820, 0
    %v2936 = vsel %vm2407, %v2821, 0
    %v2939 = vsel %vm2407, %v2822, 0
    %2941 = vmatprep.subr.mxu0 0.0
    %2942 = vmatpush1.msra.mxu0 %v2927
    %2943 = vmatprep.subr.mxu0 0.0
    %2944 = vmatpush1.msra.mxu0 %v2928
    %2945 = vmatprep.subr.mxu0 0.0
    %2946 = vmatpush1.msra.mxu0 0.0
    %2947 = vmatprep.subr.mxu0 0.0
    %2948 = vmatpush1.msra.mxu0 0.0
    %2949 = vmatprep.subr.mxu0 0.0
    %2950 = vmatpush1.msra.mxu0 0.0
    %2951 = vmatprep.subr.mxu0 0.0
    %2952 = vmatpush1.msra.mxu0 0.0
    %2953 = vmatprep.subr.mxu0 0.0
    %2954 = vmatpush1.msra.mxu0 0.0
    %2955 = vmatprep.subr.mxu0 0.0
    %2956 = vmatpush1.msra.mxu0 0.0
    %2957 = vmatprep.subr.mxu0 0.0
    %2958 = vmatpush1.msra.mxu0 0.0
    %2959 = vmatprep.subr.mxu0 0.0
    %2960 = vmatpush1.msra.mxu0 0.0
    %2961 = vmatprep.subr.mxu0 0.0
    %2962 = vmatpush1.msra.mxu0 0.0
    %2963 = vmatprep.subr.mxu0 0.0
    %2964 = vmatpush1.msra.mxu0 0.0
    %2965 = vmatprep.subr.mxu0 0.0
    %2966 = vmatpush1.msra.mxu0 0.0
    %2967 = vmatprep.subr.mxu0 0.0
    %2968 = vmatpush1.msra.mxu0 0.0
    %2969 = vmatprep.subr.mxu0 0.0
    %2970 = vmatpush1.msra.mxu0 0.0
    %2971 = vmatprep.subr.mxu0 0.0
    %2972 = vmatpush1.msra.mxu0 0.0
    %2973 = vmatprep.subr.mxu0 0.0
    %2974 = vmatpush1.msra.mxu0 0.0
    %2975 = vmatprep.subr.mxu0 0.0
    %2976 = vmatpush1.msra.mxu0 0.0
    %2977 = vmatprep.subr.mxu0 0.0
    %2978 = vmatpush1.msra.mxu0 0.0
    %2979 = vmatprep.subr.mxu0 0.0
    %2980 = vmatpush1.msra.mxu0 0.0
    %2981 = vmatprep.subr.mxu0 0.0
    %2982 = vmatpush1.msra.mxu0 0.0
    %2983 = vmatprep.subr.mxu0 0.0
    %2984 = vmatpush1.msra.mxu0 0.0
    %2985 = vmatprep.subr.mxu0 0.0
    %2986 = vmatpush1.msra.mxu0 0.0
    %2987 = vmatprep.subr.mxu0 0.0
    %2988 = vmatpush1.msra.mxu0 0.0
    %2989 = vmatprep.subr.mxu0 0.0
    %2990 = vmatpush1.msra.mxu0 0.0
    %2991 = vmatprep.subr.mxu0 0.0
    %2992 = vmatpush1.msra.mxu0 0.0
    %2993 = vmatprep.subr.mxu0 0.0
    %2994 = vmatpush1.msra.mxu0 0.0
    %2995 = vmatprep.subr.mxu0 0.0
    %2996 = vmatpush1.msra.mxu0 0.0
    %2997 = vmatprep.subr.mxu0 0.0
    %2998 = vmatpush1.msra.mxu0 0.0
    %2999 = vmatprep.subr.mxu0 0.0
    %3000 = vmatpush1.msra.mxu0 0.0
    %3001 = vmatprep.subr.mxu0 0.0
    %3002 = vmatpush1.msra.mxu0 0.0
    %3003 = vmatprep.subr.mxu0 0.0
    %3004 = vmatpush1.msra.mxu0 0.0
    %3005 = vmatprep.mubr.f32.mxu0 0.0
    %3006 = vmatmul.mubr.f32.gmra.mrb[0].mxu0 %v2930
    %v3007 = vpop.f32.mrb[0].mxu0
    %v3008 = vadd.f32 0.0, %v3007
    %v3009 = vpop.f32.mrb[0].mxu0
    %3010 = vmatprep.mubr.f32.mxu0 0.0
    %3011 = vmatmul.mubr.f32.gmra.mrb[0].mxu0 %v2933
    %v3012 = vpop.f32.mrb[0].mxu0
    %v3013 = vadd.f32 0.0, %v3012
    %v3014 = vpop.f32.mrb[0].mxu0
    %3015 = vmatprep.mubr.f32.mxu0 0.0
    %3016 = vmatmul.mubr.f32.gmra.mrb[0].mxu0 %v2936
    %v3017 = vpop.f32.mrb[0].mxu0
    %v3018 = vadd.f32 0.0, %v3017
    %v3019 = vpop.f32.mrb[0].mxu0
    %3020 = vmatprep.mubr.f32.mxu0 0.0
    %3021 = vmatmul.mubr.f32.gmra.mrb[0].mxu0 %v2939
    %v3022 = vpop.f32.mrb[0].mxu0
    %v3023 = vadd.f32 0.0, %v3022
    %v3024 = vpop.f32.mrb[0].mxu0
    %3025 = vdwg.mxu0
    %v3027 = vsel %vm2407, %v2906, 0
    %v3030 = vsel %vm2407, %v2911, 0
    %v3033 = vsel %vm2407, %v2916, 0
    %v3036 = vsel %vm2407, %v2921, 0
    %3038 = vmatprep.subr.mxu0 0.0
    %3039 = vmatpush1.msra.mxu0 %v2924
    %3040 = vmatprep.subr.mxu0 0.0
    %3041 = vmatpush1.msra.mxu0 %v2925
    %3042 = vmatprep.subr.mxu0 0.0
    %3043 = vmatpush1.msra.mxu0 0.0
    %3044 = vmatprep.subr.mxu0 0.0
    %3045 = vmatpush1.msra.mxu0 0.0
    %3046 = vmatprep.subr.mxu0 0.0
    %3047 = vmatpush1.msra.mxu0 0.0
    %3048 = vmatprep.subr.mxu0 0.0
    %3049 = vmatpush1.msra.mxu0 0.0
    %3050 = vmatprep.subr.mxu0 0.0
    %3051 = vmatpush1.msra.mxu0 0.0
    %3052 = vmatprep.subr.mxu0 0.0
    %3053 = vmatpush1.msra.mxu0 0.0
    %3054 = vmatprep.subr.mxu0 0.0
    %3055 = vmatpush1.msra.mxu0 0.0
    %3056 = vmatprep.subr.mxu0 0.0
    %3057 = vmatpush1.msra.mxu0 0.0
    %3058 = vmatprep.subr.mxu0 0.0
    %3059 = vmatpush1.msra.mxu0 0.0
    %3060 = vmatprep.subr.mxu0 0.0
    %3061 = vmatpush1.msra.mxu0 0.0
    %3062 = vmatprep.subr.mxu0 0.0
    %3063 = vmatpush1.msra.mxu0 0.0
    %3064 = vmatprep.subr.mxu0 0.0
    %3065 = vmatpush1.msra.mxu0 0.0
    %3066 = vmatprep.subr.mxu0 0.0
    %3067 = vmatpush1.msra.mxu0 0.0
    %3068 = vmatprep.subr.mxu0 0.0
    %3069 = vmatpush1.msra.mxu0 0.0
    %3070 = vmatprep.subr.mxu0 0.0
    %3071 = vmatpush1.msra.mxu0 0.0
    %3072 = vmatprep.subr.mxu0 0.0
    %3073 = vmatpush1.msra.mxu0 0.0
    %3074 = vmatprep.subr.mxu0 0.0
    %3075 = vmatpush1.msra.mxu0 0.0
    %3076 = vmatprep.subr.mxu0 0.0
    %3077 = vmatpush1.msra.mxu0 0.0
    %3078 = vmatprep.subr.mxu0 0.0
    %3079 = vmatpush1.msra.mxu0 0.0
    %3080 = vmatprep.subr.mxu0 0.0
    %3081 = vmatpush1.msra.mxu0 0.0
    %3082 = vmatprep.subr.mxu0 0.0
    %3083 = vmatpush1.msra.mxu0 0.0
    %3084 = vmatprep.subr.mxu0 0.0
    %3085 = vmatpush1.msra.mxu0 0.0
    %3086 = vmatprep.subr.mxu0 0.0
    %3087 = vmatpush1.msra.mxu0 0.0
    %3088 = vmatprep.subr.mxu0 0.0
    %3089 = vmatpush1.msra.mxu0 0.0
    %3090 = vmatprep.subr.mxu0 0.0
    %3091 = vmatpush1.msra.mxu0 0.0
    %3092 = vmatprep.subr.mxu0 0.0
    %3093 = vmatpush1.msra.mxu0 0.0
    %3094 = vmatprep.subr.mxu0 0.0
    %3095 = vmatpush1.msra.mxu0 0.0
    %3096 = vmatprep.subr.mxu0 0.0
    %3097 = vmatpush1.msra.mxu0 0.0
    %3098 = vmatprep.subr.mxu0 0.0
    %3099 = vmatpush1.msra.mxu0 0.0
    %3100 = vmatprep.subr.mxu0 0.0
    %3101 = vmatpush1.msra.mxu0 0.0
    %3102 = vmatprep.mubr.f32.mxu0 0.0
    %3103 = vmatmul.mubr.f32.gmra.mrb[0].mxu0 %v3027
    %v3104 = vpop.f32.mrb[0].mxu0
    %v3105 = vadd.f32 %v3008, %v3104
    %v3106 = vpop.f32.mrb[0].mxu0
    %3107 = vmatprep.mubr.f32.mxu0 0.0
    %3108 = vmatmul.mubr.f32.gmra.mrb[0].mxu0 %v3030
    %v3109 = vpop.f32.mrb[0].mxu0
    %v3110 = vadd.f32 %v3013, %v3109
    %v3111 = vpop.f32.mrb[0].mxu0
    %3112 = vmatprep.mubr.f32.mxu0 0.0
    %3113 = vmatmul.mubr.f32.gmra.mrb[0].mxu0 %v3033
    %v3114 = vpop.f32.mrb[0].mxu0
    %v3115 = vadd.f32 %v3018, %v3114
    %v3116 = vpop.f32.mrb[0].mxu0
    %3117 = vmatprep.mubr.f32.mxu0 0.0
    %3118 = vmatmul.mubr.f32.gmra.mrb[0].mxu0 %v3036
    %v3119 = vpop.f32.mrb[0].mxu0
    %v3120 = vadd.f32 %v3023, %v3119
    %v3121 = vpop.f32.mrb[0].mxu0
    %3122 = vdwg.mxu0
    %s3123 = scalar_lea.vmem %s17, 64
    %v3124 = vld [vmem:[%s3123] sm:$0xff]
    %v3125 = vld [vmem:[%s3123 + $0x8] sm:$0xff]
    %v3126 = vld [vmem:[%s3123 + $0x10] sm:$0xff]
    %v3127 = vld [vmem:[%s3123 + $0x18] sm:$0xff]
    %v3129 = vsel %vm2304, %v3124, 0
    %v3132 = vsel %vm2304, %v3125, 0
    %v3135 = vsel %vm2304, %v3126, 0
    %v3138 = vsel %vm2304, %v3127, 0
    %3140 = vmatprep.subr.mxu0 0.0
    %3141 = vmatpush1.msra.mxu0 %v2819
    %3142 = vmatprep.subr.mxu0 0.0
    %3143 = vmatpush1.msra.mxu0 %v2820
    %3144 = vmatprep.subr.mxu0 0.0
    %3145 = vmatpush1.msra.mxu0 %v2821
    %3146 = vmatprep.subr.mxu0 0.0
    %3147 = vmatpush1.msra.mxu0 %v2822
    %3148 = vmatprep.subr.mxu0 0.0
    %3149 = vmatpush1.msra.mxu0 0.0
    %3150 = vmatprep.subr.mxu0 0.0
    %3151 = vmatpush1.msra.mxu0 0.0
    %3152 = vmatprep.subr.mxu0 0.0
    %3153 = vmatpush1.msra.mxu0 0.0
    %3154 = vmatprep.subr.mxu0 0.0
    %3155 = vmatpush1.msra.mxu0 0.0
    %3156 = vmatprep.subr.mxu0 0.0
    %3157 = vmatpush1.msra.mxu0 0.0
    %3158 = vmatprep.subr.mxu0 0.0
    %3159 = vmatpush1.msra.mxu0 0.0
    %3160 = vmatprep.subr.mxu0 0.0
    %3161 = vmatpush1.msra.mxu0 0.0
    %3162 = vmatprep.subr.mxu0 0.0
    %3163 = vmatpush1.msra.mxu0 0.0
    %3164 = vmatprep.subr.mxu0 0.0
    %3165 = vmatpush1.msra.mxu0 0.0
    %3166 = vmatprep.subr.mxu0 0.0
    %3167 = vmatpush1.msra.mxu0 0.0
    %3168 = vmatprep.subr.mxu0 0.0
    %3169 = vmatpush1.msra.mxu0 0.0
    %3170 = vmatprep.subr.mxu0 0.0
    %3171 = vmatpush1.msra.mxu0 0.0
    %3172 = vmatprep.subr.mxu0 0.0
    %3173 = vmatpush1.msra.mxu0 0.0
    %3174 = vmatprep.subr.mxu0 0.0
    %3175 = vmatpush1.msra.mxu0 0.0
    %3176 = vmatprep.subr.mxu0 0.0
    %3177 = vmatpush1.msra.mxu0 0.0
    %3178 = vmatprep.subr.mxu0 0.0
    %3179 = vmatpush1.msra.mxu0 0.0
    %3180 = vmatprep.subr.mxu0 0.0
    %3181 = vmatpush1.msra.mxu0 0.0
    %3182 = vmatprep.subr.mxu0 0.0
    %3183 = vmatpush1.msra.mxu0 0.0
    %3184 = vmatprep.subr.mxu0 0.0
    %3185 = vmatpush1.msra.mxu0 0.0
    %3186 = vmatprep.subr.mxu0 0.0
    %3187 = vmatpush1.msra.mxu0 0.0
    %3188 = vmatprep.subr.mxu0 0.0
    %3189 = vmatpush1.msra.mxu0 0.0
    %3190 = vmatprep.subr.mxu0 0.0
    %3191 = vmatpush1.msra.mxu0 0.0
    %3192 = vmatprep.subr.mxu0 0.0
    %3193 = vmatpush1.msra.mxu0 0.0
    %3194 = vmatprep.subr.mxu0 0.0
    %3195 = vmatpush1.msra.mxu0 0.0
    %3196 = vmatprep.subr.mxu0 0.0
    %3197 = vmatpush1.msra.mxu0 0.0
    %3198 = vmatprep.subr.mxu0 0.0
    %3199 = vmatpush1.msra.mxu0 0.0
    %3200 = vmatprep.subr.mxu0 0.0
    %3201 = vmatpush1.msra.mxu0 0.0
    %3202 = vmatprep.subr.mxu0 0.0
    %3203 = vmatpush1.msra.mxu0 0.0
    %3204 = vmatprep.mubr.f32.mxu0 0.0
    %3205 = vmatmul.mubr.f32.gmra.mrb[0].mxu0 %v3129
    %v3206 = vpop.f32.mrb[0].mxu0
    %v3207 = vadd.f32 0.0, %v3206
    %v3208 = vpop.f32.mrb[0].mxu0
    %3209 = vmatprep.mubr.f32.mxu0 0.0
    %3210 = vmatmul.mubr.f32.gmra.mrb[0].mxu0 %v3132
    %v3211 = vpop.f32.mrb[0].mxu0
    %v3212 = vadd.f32 0.0, %v3211
    %v3213 = vpop.f32.mrb[0].mxu0
    %3214 = vmatprep.mubr.f32.mxu0 0.0
    %3215 = vmatmul.mubr.f32.gmra.mrb[0].mxu0 %v3135
    %v3216 = vpop.f32.mrb[0].mxu0
    %v3217 = vadd.f32 0.0, %v3216
    %v3218 = vpop.f32.mrb[0].mxu0
    %3219 = vmatprep.mubr.f32.mxu0 0.0
    %3220 = vmatmul.mubr.f32.gmra.mrb[0].mxu0 %v3138
    %v3221 = vpop.f32.mrb[0].mxu0
    %v3222 = vadd.f32 0.0, %v3221
    %v3223 = vpop.f32.mrb[0].mxu0
    %3224 = vdwg.mxu0
    %s3225 = scalar_lea.vmem %s19, 32
    %v3226 = vld [vmem:[%s3225] sm:$0xff]
    %v3227 = vld [vmem:[%s3225 + $0x8] sm:$0xff]
    %v3229 = vsel %vm2407, %v3207, 0
    %v3232 = vsel %vm2407, %v3212, 0
    %v3235 = vsel %vm2407, %v3217, 0
    %v3238 = vsel %vm2407, %v3222, 0
    %3240 = vmatprep.subr.mxu0 0.0
    %3241 = vmatpush1.msra.mxu0 %v3226
    %3242 = vmatprep.subr.mxu0 0.0
    %3243 = vmatpush1.msra.mxu0 %v3227
    %3244 = vmatprep.subr.mxu0 0.0
    %3245 = vmatpush1.msra.mxu0 0.0
    %3246 = vmatprep.subr.mxu0 0.0
    %3247 = vmatpush1.msra.mxu0 0.0
    %3248 = vmatprep.subr.mxu0 0.0
    %3249 = vmatpush1.msra.mxu0 0.0
    %3250 = vmatprep.subr.mxu0 0.0
    %3251 = vmatpush1.msra.mxu0 0.0
    %3252 = vmatprep.subr.mxu0 0.0
    %3253 = vmatpush1.msra.mxu0 0.0
    %3254 = vmatprep.subr.mxu0 0.0
    %3255 = vmatpush1.msra.mxu0 0.0
    %3256 = vmatprep.subr.mxu0 0.0
    %3257 = vmatpush1.msra.mxu0 0.0
    %3258 = vmatprep.subr.mxu0 0.0
    %3259 = vmatpush1.msra.mxu0 0.0
    %3260 = vmatprep.subr.mxu0 0.0
    %3261 = vmatpush1.msra.mxu0 0.0
    %3262 = vmatprep.subr.mxu0 0.0
    %3263 = vmatpush1.msra.mxu0 0.0
    %3264 = vmatprep.subr.mxu0 0.0
    %3265 = vmatpush1.msra.mxu0 0.0
    %3266 = vmatprep.subr.mxu0 0.0
    %3267 = vmatpush1.msra.mxu0 0.0
    %3268 = vmatprep.subr.mxu0 0.0
    %3269 = vmatpush1.msra.mxu0 0.0
    %3270 = vmatprep.subr.mxu0 0.0
    %3271 = vmatpush1.msra.mxu0 0.0
    %3272 = vmatprep.subr.mxu0 0.0
    %3273 = vmatpush1.msra.mxu0 0.0
    %3274 = vmatprep.subr.mxu0 0.0
    %3275 = vmatpush1.msra.mxu0 0.0
    %3276 = vmatprep.subr.mxu0 0.0
    %3277 = vmatpush1.msra.mxu0 0.0
    %3278 = vmatprep.subr.mxu0 0.0
    %3279 = vmatpush1.msra.mxu0 0.0
    %3280 = vmatprep.subr.mxu0 0.0
    %3281 = vmatpush1.msra.mxu0 0.0
    %3282 = vmatprep.subr.mxu0 0.0
    %3283 = vmatpush1.msra.mxu0 0.0
    %3284 = vmatprep.subr.mxu0 0.0
    %3285 = vmatpush1.msra.mxu0 0.0
    %3286 = vmatprep.subr.mxu0 0.0
    %3287 = vmatpush1.msra.mxu0 0.0
    %3288 = vmatprep.subr.mxu0 0.0
    %3289 = vmatpush1.msra.mxu0 0.0
    %3290 = vmatprep.subr.mxu0 0.0
    %3291 = vmatpush1.msra.mxu0 0.0
    %3292 = vmatprep.subr.mxu0 0.0
    %3293 = vmatpush1.msra.mxu0 0.0
    %3294 = vmatprep.subr.mxu0 0.0
    %3295 = vmatpush1.msra.mxu0 0.0
    %3296 = vmatprep.subr.mxu0 0.0
    %3297 = vmatpush1.msra.mxu0 0.0
    %3298 = vmatprep.subr.mxu0 0.0
    %3299 = vmatpush1.msra.mxu0 0.0
    %3300 = vmatprep.subr.mxu0 0.0
    %3301 = vmatpush1.msra.mxu0 0.0
    %3302 = vmatprep.subr.mxu0 0.0
    %3303 = vmatpush1.msra.mxu0 0.0
    %3304 = vmatprep.mubr.f32.mxu0 0.0
    %3305 = vmatmul.mubr.f32.gmra.mrb[0].mxu0 %v3229
    %v3306 = vpop.f32.mrb[0].mxu0
    %v3307 = vadd.f32 0.0, %v3306
    %v3308 = vpop.f32.mrb[0].mxu0
    %3309 = vmatprep.mubr.f32.mxu0 0.0
    %3310 = vmatmul.mubr.f32.gmra.mrb[0].mxu0 %v3232
    %v3311 = vpop.f32.mrb[0].mxu0
    %v3312 = vadd.f32 0.0, %v3311
    %v3313 = vpop.f32.mrb[0].mxu0
    %3314 = vmatprep.mubr.f32.mxu0 0.0
    %3315 = vmatmul.mubr.f32.gmra.mrb[0].mxu0 %v3235
    %v3316 = vpop.f32.mrb[0].mxu0
    %v3317 = vadd.f32 0.0, %v3316
    %v3318 = vpop.f32.mrb[0].mxu0
    %3319 = vmatprep.mubr.f32.mxu0 0.0
    %3320 = vmatmul.mubr.f32.gmra.mrb[0].mxu0 %v3238
    %v3321 = vpop.f32.mrb[0].mxu0
    %v3322 = vadd.f32 0.0, %v3321
    %v3323 = vpop.f32.mrb[0].mxu0
    %3324 = vdwg.mxu0
    %v3325 = vadd.f32 %v3105, %v3307
    %v3326 = vadd.f32 %v3110, %v3312
    %v3327 = vadd.f32 %v3115, %v3317
    %v3328 = vadd.f32 %v3120, %v3322
    %v3329 = vld [vmem:[%s21] sm:$0x1]
    %v3331 = vlaneseq
    %v3332 = vshrl.u32 %v3331, 7
    %v3333 = vsub.s32 0, %v3332
    %v3334 = vrot.slane %v3329, %v3333
    %v3336 = vadd.f32 %v3325, %v3334
    %v3337 = vadd.f32 %v3326, %v3334
    %v3338 = vadd.f32 %v3327, %v3334
    %v3339 = vadd.f32 %v3328, %v3334
    %v3340 = vadd.f32 %v3336, %v2296
    %v3341 = vadd.f32 %v3337, %v2297
    %v3342 = vadd.f32 %v3338, %v2298
    %v3343 = vadd.f32 %v3339, %v2299
    %v3344 = vmax.f32 %v3340, 0.0
    %v3345 = vmax.f32 %v3341, 0.0
    %v3346 = vmax.f32 %v3342, 0.0
    %v3347 = vmax.f32 %v3343, 0.0
    %v3348 = vld [vmem:[%s23] sm:$0xff]
    %v3349 = vld [vmem:[%s23 + $0x8] sm:$0xff]
    %v3351 = vsel %vm2304, %v3348, 0
    %v3354 = vsel %vm2304, %v3349, 0
    %3356 = vmatprep.subr.mxu0 0.0
    %3357 = vmatpush1.msra.mxu0 %v3344
    %3358 = vmatprep.subr.mxu0 0.0
    %3359 = vmatpush1.msra.mxu0 %v3345
    %3360 = vmatprep.subr.mxu0 0.0
    %3361 = vmatpush1.msra.mxu0 %v3346
    %3362 = vmatprep.subr.mxu0 0.0
    %3363 = vmatpush1.msra.mxu0 %v3347
    %3364 = vmatprep.subr.mxu0 0.0
    %3365 = vmatpush1.msra.mxu0 0.0
    %3366 = vmatprep.subr.mxu0 0.0
    %3367 = vmatpush1.msra.mxu0 0.0
    %3368 = vmatprep.subr.mxu0 0.0
    %3369 = vmatpush1.msra.mxu0 0.0
    %3370 = vmatprep.subr.mxu0 0.0
    %3371 = vmatpush1.msra.mxu0 0.0
    %3372 = vmatprep.subr.mxu0 0.0
    %3373 = vmatpush1.msra.mxu0 0.0
    %3374 = vmatprep.subr.mxu0 0.0
    %3375 = vmatpush1.msra.mxu0 0.0
    %3376 = vmatprep.subr.mxu0 0.0
    %3377 = vmatpush1.msra.mxu0 0.0
    %3378 = vmatprep.subr.mxu0 0.0
    %3379 = vmatpush1.msra.mxu0 0.0
    %3380 = vmatprep.subr.mxu0 0.0
    %3381 = vmatpush1.msra.mxu0 0.0
    %3382 = vmatprep.subr.mxu0 0.0
    %3383 = vmatpush1.msra.mxu0 0.0
    %3384 = vmatprep.subr.mxu0 0.0
    %3385 = vmatpush1.msra.mxu0 0.0
    %3386 = vmatprep.subr.mxu0 0.0
    %3387 = vmatpush1.msra.mxu0 0.0
    %3388 = vmatprep.subr.mxu0 0.0
    %3389 = vmatpush1.msra.mxu0 0.0
    %3390 = vmatprep.subr.mxu0 0.0
    %3391 = vmatpush1.msra.mxu0 0.0
    %3392 = vmatprep.subr.mxu0 0.0
    %3393 = vmatpush1.msra.mxu0 0.0
    %3394 = vmatprep.subr.mxu0 0.0
    %3395 = vmatpush1.msra.mxu0 0.0
    %3396 = vmatprep.subr.mxu0 0.0
    %3397 = vmatpush1.msra.mxu0 0.0
    %3398 = vmatprep.subr.mxu0 0.0
    %3399 = vmatpush1.msra.mxu0 0.0
    %3400 = vmatprep.subr.mxu0 0.0
    %3401 = vmatpush1.msra.mxu0 0.0
    %3402 = vmatprep.subr.mxu0 0.0
    %3403 = vmatpush1.msra.mxu0 0.0
    %3404 = vmatprep.subr.mxu0 0.0
    %3405 = vmatpush1.msra.mxu0 0.0
    %3406 = vmatprep.subr.mxu0 0.0
    %3407 = vmatpush1.msra.mxu0 0.0
    %3408 = vmatprep.subr.mxu0 0.0
    %3409 = vmatpush1.msra.mxu0 0.0
    %3410 = vmatprep.subr.mxu0 0.0
    %3411 = vmatpush1.msra.mxu0 0.0
    %3412 = vmatprep.subr.mxu0 0.0
    %3413 = vmatpush1.msra.mxu0 0.0
    %3414 = vmatprep.subr.mxu0 0.0
    %3415 = vmatpush1.msra.mxu0 0.0
    %3416 = vmatprep.subr.mxu0 0.0
    %3417 = vmatpush1.msra.mxu0 0.0
    %3418 = vmatprep.subr.mxu0 0.0
    %3419 = vmatpush1.msra.mxu0 0.0
    %3420 = vmatprep.mubr.f32.mxu0 0.0
    %3421 = vmatmul.mubr.f32.gmra.mrb[0].mxu0 %v3351
    %v3422 = vpop.f32.mrb[0].mxu0
    %v3423 = vadd.f32 0.0, %v3422
    %v3424 = vpop.f32.mrb[0].mxu0
    %3425 = vmatprep.mubr.f32.mxu0 0.0
    %3426 = vmatmul.mubr.f32.gmra.mrb[0].mxu0 %v3354
    %v3427 = vpop.f32.mrb[0].mxu0
    %v3428 = vadd.f32 0.0, %v3427
    %v3429 = vpop.f32.mrb[0].mxu0
    %3430 = vdwg.mxu0
    %v3431 = vld [vmem:[%s25] sm:$0xff]
    %v3432 = vld [vmem:[%s25 + $0x8] sm:$0xff]
    %v3433 = vld [vmem:[%s27] sm:$0x1]
    %v3435 = vlaneseq
    %v3436 = vshrl.u32 %v3435, 7
    %v3437 = vsub.s32 0, %v3436
    %v3438 = vrot.slane %v3433, %v3437
    %v3441 = vsel %vm2407, %v3423, 0
    %v3444 = vsel %vm2407, %v3428, 0
    %3446 = vmatprep.subr.mxu0 0.0
    %3447 = vmatpush1.msra.mxu0 %v3431
    %3448 = vmatprep.subr.mxu0 0.0
    %3449 = vmatpush1.msra.mxu0 %v3432
    %3450 = vmatprep.subr.mxu0 0.0
    %3451 = vmatpush1.msra.mxu0 0.0
    %3452 = vmatprep.subr.mxu0 0.0
    %3453 = vmatpush1.msra.mxu0 0.0
    %3454 = vmatprep.subr.mxu0 0.0
    %3455 = vmatpush1.msra.mxu0 0.0
    %3456 = vmatprep.subr.mxu0 0.0
    %3457 = vmatpush1.msra.mxu0 0.0
    %3458 = vmatprep.subr.mxu0 0.0
    %3459 = vmatpush1.msra.mxu0 0.0
    %3460 = vmatprep.subr.mxu0 0.0
    %3461 = vmatpush1.msra.mxu0 0.0
    %3462 = vmatprep.subr.mxu0 0.0
    %3463 = vmatpush1.msra.mxu0 0.0
    %3464 = vmatprep.subr.mxu0 0.0
    %3465 = vmatpush1.msra.mxu0 0.0
    %3466 = vmatprep.subr.mxu0 0.0
    %3467 = vmatpush1.msra.mxu0 0.0
    %3468 = vmatprep.subr.mxu0 0.0
    %3469 = vmatpush1.msra.mxu0 0.0
    %3470 = vmatprep.subr.mxu0 0.0
    %3471 = vmatpush1.msra.mxu0 0.0
    %3472 = vmatprep.subr.mxu0 0.0
    %3473 = vmatpush1.msra.mxu0 0.0
    %3474 = vmatprep.subr.mxu0 0.0
    %3475 = vmatpush1.msra.mxu0 0.0
    %3476 = vmatprep.subr.mxu0 0.0
    %3477 = vmatpush1.msra.mxu0 0.0
    %3478 = vmatprep.subr.mxu0 0.0
    %3479 = vmatpush1.msra.mxu0 0.0
    %3480 = vmatprep.subr.mxu0 0.0
    %3481 = vmatpush1.msra.mxu0 0.0
    %3482 = vmatprep.subr.mxu0 0.0
    %3483 = vmatpush1.msra.mxu0 0.0
    %3484 = vmatprep.subr.mxu0 0.0
    %3485 = vmatpush1.msra.mxu0 0.0
    %3486 = vmatprep.subr.mxu0 0.0
    %3487 = vmatpush1.msra.mxu0 0.0
    %3488 = vmatprep.subr.mxu0 0.0
    %3489 = vmatpush1.msra.mxu0 0.0
    %3490 = vmatprep.subr.mxu0 0.0
    %3491 = vmatpush1.msra.mxu0 0.0
    %3492 = vmatprep.subr.mxu0 0.0
    %3493 = vmatpush1.msra.mxu0 0.0
    %3494 = vmatprep.subr.mxu0 0.0
    %3495 = vmatpush1.msra.mxu0 0.0
    %3496 = vmatprep.subr.mxu0 0.0
    %3497 = vmatpush1.msra.mxu0 0.0
    %3498 = vmatprep.subr.mxu0 0.0
    %3499 = vmatpush1.msra.mxu0 0.0
    %3500 = vmatprep.subr.mxu0 0.0
    %3501 = vmatpush1.msra.mxu0 0.0
    %3502 = vmatprep.subr.mxu0 0.0
    %3503 = vmatpush1.msra.mxu0 0.0
    %3504 = vmatprep.subr.mxu0 0.0
    %3505 = vmatpush1.msra.mxu0 0.0
    %3506 = vmatprep.subr.mxu0 0.0
    %3507 = vmatpush1.msra.mxu0 0.0
    %3508 = vmatprep.subr.mxu0 0.0
    %3509 = vmatpush1.msra.mxu0 0.0
    %3510 = vmatprep.mubr.f32.mxu0 0.0
    %3511 = vmatmul.mubr.f32.gmra.mrb[0].mxu0 %v3441
    %v3512 = vpop.f32.mrb[0].mxu0
    %v3513 = vadd.f32 %v3438, %v3512
    %v3514 = vpop.f32.mrb[0].mxu0
    %3515 = vmatprep.mubr.f32.mxu0 0.0
    %3516 = vmatmul.mubr.f32.gmra.mrb[0].mxu0 %v3444
    %v3517 = vpop.f32.mrb[0].mxu0
    %v3518 = vadd.f32 %v3438, %v3517
    %v3519 = vpop.f32.mrb[0].mxu0
    %3520 = vdwg.mxu0
    %v3521 = vld [vmem:[%s29] sm:$0xff]
    %v3522 = vld [vmem:[%s29 + $0x8] sm:$0xff]
    %v3524 = vsel %vm2304, %v3521, 0
    %v3527 = vsel %vm2304, %v3522, 0
    %3529 = vmatprep.subr.mxu0 0.0
    %3530 = vmatpush1.msra.mxu0 %v3344
    %3531 = vmatprep.subr.mxu0 0.0
    %3532 = vmatpush1.msra.mxu0 %v3345
    %3533 = vmatprep.subr.mxu0 0.0
    %3534 = vmatpush1.msra.mxu0 %v3346
    %3535 = vmatprep.subr.mxu0 0.0
    %3536 = vmatpush1.msra.mxu0 %v3347
    %3537 = vmatprep.subr.mxu0 0.0
    %3538 = vmatpush1.msra.mxu0 0.0
    %3539 = vmatprep.subr.mxu0 0.0
    %3540 = vmatpush1.msra.mxu0 0.0
    %3541 = vmatprep.subr.mxu0 0.0
    %3542 = vmatpush1.msra.mxu0 0.0
    %3543 = vmatprep.subr.mxu0 0.0
    %3544 = vmatpush1.msra.mxu0 0.0
    %3545 = vmatprep.subr.mxu0 0.0
    %3546 = vmatpush1.msra.mxu0 0.0
    %3547 = vmatprep.subr.mxu0 0.0
    %3548 = vmatpush1.msra.mxu0 0.0
    %3549 = vmatprep.subr.mxu0 0.0
    %3550 = vmatpush1.msra.mxu0 0.0
    %3551 = vmatprep.subr.mxu0 0.0
    %3552 = vmatpush1.msra.mxu0 0.0
    %3553 = vmatprep.subr.mxu0 0.0
    %3554 = vmatpush1.msra.mxu0 0.0
    %3555 = vmatprep.subr.mxu0 0.0
    %3556 = vmatpush1.msra.mxu0 0.0
    %3557 = vmatprep.subr.mxu0 0.0
    %3558 = vmatpush1.msra.mxu0 0.0
    %3559 = vmatprep.subr.mxu0 0.0
    %3560 = vmatpush1.msra.mxu0 0.0
    %3561 = vmatprep.subr.mxu0 0.0
    %3562 = vmatpush1.msra.mxu0 0.0
    %3563 = vmatprep.subr.mxu0 0.0
    %3564 = vmatpush1.msra.mxu0 0.0
    %3565 = vmatprep.subr.mxu0 0.0
    %3566 = vmatpush1.msra.mxu0 0.0
    %3567 = vmatprep.subr.mxu0 0.0
    %3568 = vmatpush1.msra.mxu0 0.0
    %3569 = vmatprep.subr.mxu0 0.0
    %3570 = vmatpush1.msra.mxu0 0.0
    %3571 = vmatprep.subr.mxu0 0.0
    %3572 = vmatpush1.msra.mxu0 0.0
    %3573 = vmatprep.subr.mxu0 0.0
    %3574 = vmatpush1.msra.mxu0 0.0
    %3575 = vmatprep.subr.mxu0 0.0
    %3576 = vmatpush1.msra.mxu0 0.0
    %3577 = vmatprep.subr.mxu0 0.0
    %3578 = vmatpush1.msra.mxu0 0.0
    %3579 = vmatprep.subr.mxu0 0.0
    %3580 = vmatpush1.msra.mxu0 0.0
    %3581 = vmatprep.subr.mxu0 0.0
    %3582 = vmatpush1.msra.mxu0 0.0
    %3583 = vmatprep.subr.mxu0 0.0
    %3584 = vmatpush1.msra.mxu0 0.0
    %3585 = vmatprep.subr.mxu0 0.0
    %3586 = vmatpush1.msra.mxu0 0.0
    %3587 = vmatprep.subr.mxu0 0.0
    %3588 = vmatpush1.msra.mxu0 0.0
    %3589 = vmatprep.subr.mxu0 0.0
    %3590 = vmatpush1.msra.mxu0 0.0
    %3591 = vmatprep.subr.mxu0 0.0
    %3592 = vmatpush1.msra.mxu0 0.0
    %3593 = vmatprep.mubr.f32.mxu0 0.0
    %3594 = vmatmul.mubr.f32.gmra.mrb[0].mxu0 %v3524
    %v3595 = vpop.f32.mrb[0].mxu0
    %v3596 = vadd.f32 0.0, %v3595
    %v3597 = vpop.f32.mrb[0].mxu0
    %3598 = vmatprep.mubr.f32.mxu0 0.0
    %3599 = vmatmul.mubr.f32.gmra.mrb[0].mxu0 %v3527
    %v3600 = vpop.f32.mrb[0].mxu0
    %v3601 = vadd.f32 0.0, %v3600
    %v3602 = vpop.f32.mrb[0].mxu0
    %3603 = vdwg.mxu0
    %v3604 = vld [vmem:[%s31] sm:$0xff]
    %v3605 = vld [vmem:[%s31 + $0x8] sm:$0xff]
    %s3606 = scalar_lea.vmem %s29, 16
    %v3607 = vld [vmem:[%s3606] sm:$0xff]
    %v3608 = vld [vmem:[%s3606 + $0x8] sm:$0xff]
    %v3610 = vsel %vm2304, %v3607, 0
    %v3613 = vsel %vm2304, %v3608, 0
    %3615 = vmatprep.subr.mxu0 0.0
    %3616 = vmatpush1.msra.mxu0 %v3344
    %3617 = vmatprep.subr.mxu0 0.0
    %3618 = vmatpush1.msra.mxu0 %v3345
    %3619 = vmatprep.subr.mxu0 0.0
    %3620 = vmatpush1.msra.mxu0 %v3346
    %3621 = vmatprep.subr.mxu0 0.0
    %3622 = vmatpush1.msra.mxu0 %v3347
    %3623 = vmatprep.subr.mxu0 0.0
    %3624 = vmatpush1.msra.mxu0 0.0
    %3625 = vmatprep.subr.mxu0 0.0
    %3626 = vmatpush1.msra.mxu0 0.0
    %3627 = vmatprep.subr.mxu0 0.0
    %3628 = vmatpush1.msra.mxu0 0.0
    %3629 = vmatprep.subr.mxu0 0.0
    %3630 = vmatpush1.msra.mxu0 0.0
    %3631 = vmatprep.subr.mxu0 0.0
    %3632 = vmatpush1.msra.mxu0 0.0
    %3633 = vmatprep.subr.mxu0 0.0
    %3634 = vmatpush1.msra.mxu0 0.0
    %3635 = vmatprep.subr.mxu0 0.0
    %3636 = vmatpush1.msra.mxu0 0.0
    %3637 = vmatprep.subr.mxu0 0.0
    %3638 = vmatpush1.msra.mxu0 0.0
    %3639 = vmatprep.subr.mxu0 0.0
    %3640 = vmatpush1.msra.mxu0 0.0
    %3641 = vmatprep.subr.mxu0 0.0
    %3642 = vmatpush1.msra.mxu0 0.0
    %3643 = vmatprep.subr.mxu0 0.0
    %3644 = vmatpush1.msra.mxu0 0.0
    %3645 = vmatprep.subr.mxu0 0.0
    %3646 = vmatpush1.msra.mxu0 0.0
    %3647 = vmatprep.subr.mxu0 0.0
    %3648 = vmatpush1.msra.mxu0 0.0
    %3649 = vmatprep.subr.mxu0 0.0
    %3650 = vmatpush1.msra.mxu0 0.0
    %3651 = vmatprep.subr.mxu0 0.0
    %3652 = vmatpush1.msra.mxu0 0.0
    %3653 = vmatprep.subr.mxu0 0.0
    %3654 = vmatpush1.msra.mxu0 0.0
    %3655 = vmatprep.subr.mxu0 0.0
    %3656 = vmatpush1.msra.mxu0 0.0
    %3657 = vmatprep.subr.mxu0 0.0
    %3658 = vmatpush1.msra.mxu0 0.0
    %3659 = vmatprep.subr.mxu0 0.0
    %3660 = vmatpush1.msra.mxu0 0.0
    %3661 = vmatprep.subr.mxu0 0.0
    %3662 = vmatpush1.msra.mxu0 0.0
    %3663 = vmatprep.subr.mxu0 0.0
    %3664 = vmatpush1.msra.mxu0 0.0
    %3665 = vmatprep.subr.mxu0 0.0
    %3666 = vmatpush1.msra.mxu0 0.0
    %3667 = vmatprep.subr.mxu0 0.0
    %3668 = vmatpush1.msra.mxu0 0.0
    %3669 = vmatprep.subr.mxu0 0.0
    %3670 = vmatpush1.msra.mxu0 0.0
    %3671 = vmatprep.subr.mxu0 0.0
    %3672 = vmatpush1.msra.mxu0 0.0
    %3673 = vmatprep.subr.mxu0 0.0
    %3674 = vmatpush1.msra.mxu0 0.0
    %3675 = vmatprep.subr.mxu0 0.0
    %3676 = vmatpush1.msra.mxu0 0.0
    %3677 = vmatprep.subr.mxu0 0.0
    %3678 = vmatpush1.msra.mxu0 0.0
    %3679 = vmatprep.mubr.f32.mxu0 0.0
    %3680 = vmatmul.mubr.f32.gmra.mrb[0].mxu0 %v3610
    %v3681 = vpop.f32.mrb[0].mxu0
    %v3682 = vadd.f32 0.0, %v3681
    %v3683 = vpop.f32.mrb[0].mxu0
    %3684 = vmatprep.mubr.f32.mxu0 0.0
    %3685 = vmatmul.mubr.f32.gmra.mrb[0].mxu0 %v3613
    %v3686 = vpop.f32.mrb[0].mxu0
    %v3687 = vadd.f32 0.0, %v3686
    %v3688 = vpop.f32.mrb[0].mxu0
    %3689 = vdwg.mxu0
    %s3690 = scalar_lea.vmem %s31, 16
    %v3691 = vld [vmem:[%s3690] sm:$0xff]
    %v3692 = vld [vmem:[%s3690 + $0x8] sm:$0xff]
    %v3694 = vsel %vm2407, %v3682, 0
    %v3697 = vsel %vm2407, %v3687, 0
    %3699 = vmatprep.subr.mxu0 0.0
    %3700 = vmatpush1.msra.mxu0 %v3691
    %3701 = vmatprep.subr.mxu0 0.0
    %3702 = vmatpush1.msra.mxu0 %v3692
    %3703 = vmatprep.subr.mxu0 0.0
    %3704 = vmatpush1.msra.mxu0 0.0
    %3705 = vmatprep.subr.mxu0 0.0
    %3706 = vmatpush1.msra.mxu0 0.0
    %3707 = vmatprep.subr.mxu0 0.0
    %3708 = vmatpush1.msra.mxu0 0.0
    %3709 = vmatprep.subr.mxu0 0.0
    %3710 = vmatpush1.msra.mxu0 0.0
    %3711 = vmatprep.subr.mxu0 0.0
    %3712 = vmatpush1.msra.mxu0 0.0
    %3713 = vmatprep.subr.mxu0 0.0
    %3714 = vmatpush1.msra.mxu0 0.0
    %3715 = vmatprep.subr.mxu0 0.0
    %3716 = vmatpush1.msra.mxu0 0.0
    %3717 = vmatprep.subr.mxu0 0.0
    %3718 = vmatpush1.msra.mxu0 0.0
    %3719 = vmatprep.subr.mxu0 0.0
    %3720 = vmatpush1.msra.mxu0 0.0
    %3721 = vmatprep.subr.mxu0 0.0
    %3722 = vmatpush1.msra.mxu0 0.0
    %3723 = vmatprep.subr.mxu0 0.0
    %3724 = vmatpush1.msra.mxu0 0.0
    %3725 = vmatprep.subr.mxu0 0.0
    %3726 = vmatpush1.msra.mxu0 0.0
    %3727 = vmatprep.subr.mxu0 0.0
    %3728 = vmatpush1.msra.mxu0 0.0
    %3729 = vmatprep.subr.mxu0 0.0
    %3730 = vmatpush1.msra.mxu0 0.0
    %3731 = vmatprep.subr.mxu0 0.0
    %3732 = vmatpush1.msra.mxu0 0.0
    %3733 = vmatprep.subr.mxu0 0.0
    %3734 = vmatpush1.msra.mxu0 0.0
    %3735 = vmatprep.subr.mxu0 0.0
    %3736 = vmatpush1.msra.mxu0 0.0
    %3737 = vmatprep.subr.mxu0 0.0
    %3738 = vmatpush1.msra.mxu0 0.0
    %3739 = vmatprep.subr.mxu0 0.0
    %3740 = vmatpush1.msra.mxu0 0.0
    %3741 = vmatprep.subr.mxu0 0.0
    %3742 = vmatpush1.msra.mxu0 0.0
    %3743 = vmatprep.subr.mxu0 0.0
    %3744 = vmatpush1.msra.mxu0 0.0
    %3745 = vmatprep.subr.mxu0 0.0
    %3746 = vmatpush1.msra.mxu0 0.0
    %3747 = vmatprep.subr.mxu0 0.0
    %3748 = vmatpush1.msra.mxu0 0.0
    %3749 = vmatprep.subr.mxu0 0.0
    %3750 = vmatpush1.msra.mxu0 0.0
    %3751 = vmatprep.subr.mxu0 0.0
    %3752 = vmatpush1.msra.mxu0 0.0
    %3753 = vmatprep.subr.mxu0 0.0
    %3754 = vmatpush1.msra.mxu0 0.0
    %3755 = vmatprep.subr.mxu0 0.0
    %3756 = vmatpush1.msra.mxu0 0.0
    %3757 = vmatprep.subr.mxu0 0.0
    %3758 = vmatpush1.msra.mxu0 0.0
    %3759 = vmatprep.subr.mxu0 0.0
    %3760 = vmatpush1.msra.mxu0 0.0
    %3761 = vmatprep.subr.mxu0 0.0
    %3762 = vmatpush1.msra.mxu0 0.0
    %3763 = vmatprep.mubr.f32.mxu0 0.0
    %3764 = vmatmul.mubr.f32.gmra.mrb[0].mxu0 %v3694
    %v3765 = vpop.f32.mrb[0].mxu0
    %v3766 = vadd.f32 0.0, %v3765
    %v3767 = vpop.f32.mrb[0].mxu0
    %3768 = vmatprep.mubr.f32.mxu0 0.0
    %3769 = vmatmul.mubr.f32.gmra.mrb[0].mxu0 %v3697
    %v3770 = vpop.f32.mrb[0].mxu0
    %v3771 = vadd.f32 0.0, %v3770
    %v3772 = vpop.f32.mrb[0].mxu0
    %3773 = vdwg.mxu0
    %v3775 = vsel %vm2407, %v3596, 0
    %v3778 = vsel %vm2407, %v3601, 0
    %3780 = vmatprep.subr.mxu0 0.0
    %3781 = vmatpush1.msra.mxu0 %v3604
    %3782 = vmatprep.subr.mxu0 0.0
    %3783 = vmatpush1.msra.mxu0 %v3605
    %3784 = vmatprep.subr.mxu0 0.0
    %3785 = vmatpush1.msra.mxu0 0.0
    %3786 = vmatprep.subr.mxu0 0.0
    %3787 = vmatpush1.msra.mxu0 0.0
    %3788 = vmatprep.subr.mxu0 0.0
    %3789 = vmatpush1.msra.mxu0 0.0
    %3790 = vmatprep.subr.mxu0 0.0
    %3791 = vmatpush1.msra.mxu0 0.0
    %3792 = vmatprep.subr.mxu0 0.0
    %3793 = vmatpush1.msra.mxu0 0.0
    %3794 = vmatprep.subr.mxu0 0.0
    %3795 = vmatpush1.msra.mxu0 0.0
    %3796 = vmatprep.subr.mxu0 0.0
    %3797 = vmatpush1.msra.mxu0 0.0
    %3798 = vmatprep.subr.mxu0 0.0
    %3799 = vmatpush1.msra.mxu0 0.0
    %3800 = vmatprep.subr.mxu0 0.0
    %3801 = vmatpush1.msra.mxu0 0.0
    %3802 = vmatprep.subr.mxu0 0.0
    %3803 = vmatpush1.msra.mxu0 0.0
    %3804 = vmatprep.subr.mxu0 0.0
    %3805 = vmatpush1.msra.mxu0 0.0
    %3806 = vmatprep.subr.mxu0 0.0
    %3807 = vmatpush1.msra.mxu0 0.0
    %3808 = vmatprep.subr.mxu0 0.0
    %3809 = vmatpush1.msra.mxu0 0.0
    %3810 = vmatprep.subr.mxu0 0.0
    %3811 = vmatpush1.msra.mxu0 0.0
    %3812 = vmatprep.subr.mxu0 0.0
    %3813 = vmatpush1.msra.mxu0 0.0
    %3814 = vmatprep.subr.mxu0 0.0
    %3815 = vmatpush1.msra.mxu0 0.0
    %3816 = vmatprep.subr.mxu0 0.0
    %3817 = vmatpush1.msra.mxu0 0.0
    %3818 = vmatprep.subr.mxu0 0.0
    %3819 = vmatpush1.msra.mxu0 0.0
    %3820 = vmatprep.subr.mxu0 0.0
    %3821 = vmatpush1.msra.mxu0 0.0
    %3822 = vmatprep.subr.mxu0 0.0
    %3823 = vmatpush1.msra.mxu0 0.0
    %3824 = vmatprep.subr.mxu0 0.0
    %3825 = vmatpush1.msra.mxu0 0.0
    %3826 = vmatprep.subr.mxu0 0.0
    %3827 = vmatpush1.msra.mxu0 0.0
    %3828 = vmatprep.subr.mxu0 0.0
    %3829 = vmatpush1.msra.mxu0 0.0
    %3830 = vmatprep.subr.mxu0 0.0
    %3831 = vmatpush1.msra.mxu0 0.0
    %3832 = vmatprep.subr.mxu0 0.0
    %3833 = vmatpush1.msra.mxu0 0.0
    %3834 = vmatprep.subr.mxu0 0.0
    %3835 = vmatpush1.msra.mxu0 0.0
    %3836 = vmatprep.subr.mxu0 0.0
    %3837 = vmatpush1.msra.mxu0 0.0
    %3838 = vmatprep.subr.mxu0 0.0
    %3839 = vmatpush1.msra.mxu0 0.0
    %3840 = vmatprep.subr.mxu0 0.0
    %3841 = vmatpush1.msra.mxu0 0.0
    %3842 = vmatprep.subr.mxu0 0.0
    %3843 = vmatpush1.msra.mxu0 0.0
    %3844 = vmatprep.mubr.f32.mxu0 0.0
    %3845 = vmatmul.mubr.f32.gmra.mrb[0].mxu0 %v3775
    %v3846 = vpop.f32.mrb[0].mxu0
    %v3847 = vadd.f32 %v3766, %v3846
    %v3848 = vpop.f32.mrb[0].mxu0
    %3849 = vmatprep.mubr.f32.mxu0 0.0
    %3850 = vmatmul.mubr.f32.gmra.mrb[0].mxu0 %v3778
    %v3851 = vpop.f32.mrb[0].mxu0
    %v3852 = vadd.f32 %v3771, %v3851
    %v3853 = vpop.f32.mrb[0].mxu0
    %3854 = vdwg.mxu0
    %s3855 = scalar_lea.vmem %s29, 32
    %v3856 = vld [vmem:[%s3855] sm:$0xff]
    %v3857 = vld [vmem:[%s3855 + $0x8] sm:$0xff]
    %v3859 = vsel %vm2304, %v3856, 0
    %v3862 = vsel %vm2304, %v3857, 0
    %3864 = vmatprep.subr.mxu0 0.0
    %3865 = vmatpush1.msra.mxu0 %v3344
    %3866 = vmatprep.subr.mxu0 0.0
    %3867 = vmatpush1.msra.mxu0 %v3345
    %3868 = vmatprep.subr.mxu0 0.0
    %3869 = vmatpush1.msra.mxu0 %v3346
    %3870 = vmatprep.subr.mxu0 0.0
    %3871 = vmatpush1.msra.mxu0 %v3347
    %3872 = vmatprep.subr.mxu0 0.0
    %3873 = vmatpush1.msra.mxu0 0.0
    %3874 = vmatprep.subr.mxu0 0.0
    %3875 = vmatpush1.msra.mxu0 0.0
    %3876 = vmatprep.subr.mxu0 0.0
    %3877 = vmatpush1.msra.mxu0 0.0
    %3878 = vmatprep.subr.mxu0 0.0
    %3879 = vmatpush1.msra.mxu0 0.0
    %3880 = vmatprep.subr.mxu0 0.0
    %3881 = vmatpush1.msra.mxu0 0.0
    %3882 = vmatprep.subr.mxu0 0.0
    %3883 = vmatpush1.msra.mxu0 0.0
    %3884 = vmatprep.subr.mxu0 0.0
    %3885 = vmatpush1.msra.mxu0 0.0
    %3886 = vmatprep.subr.mxu0 0.0
    %3887 = vmatpush1.msra.mxu0 0.0
    %3888 = vmatprep.subr.mxu0 0.0
    %3889 = vmatpush1.msra.mxu0 0.0
    %3890 = vmatprep.subr.mxu0 0.0
    %3891 = vmatpush1.msra.mxu0 0.0
    %3892 = vmatprep.subr.mxu0 0.0
    %3893 = vmatpush1.msra.mxu0 0.0
    %3894 = vmatprep.subr.mxu0 0.0
    %3895 = vmatpush1.msra.mxu0 0.0
    %3896 = vmatprep.subr.mxu0 0.0
    %3897 = vmatpush1.msra.mxu0 0.0
    %3898 = vmatprep.subr.mxu0 0.0
    %3899 = vmatpush1.msra.mxu0 0.0
    %3900 = vmatprep.subr.mxu0 0.0
    %3901 = vmatpush1.msra.mxu0 0.0
    %3902 = vmatprep.subr.mxu0 0.0
    %3903 = vmatpush1.msra.mxu0 0.0
    %3904 = vmatprep.subr.mxu0 0.0
    %3905 = vmatpush1.msra.mxu0 0.0
    %3906 = vmatprep.subr.mxu0 0.0
    %3907 = vmatpush1.msra.mxu0 0.0
    %3908 = vmatprep.subr.mxu0 0.0
    %3909 = vmatpush1.msra.mxu0 0.0
    %3910 = vmatprep.subr.mxu0 0.0
    %3911 = vmatpush1.msra.mxu0 0.0
    %3912 = vmatprep.subr.mxu0 0.0
    %3913 = vmatpush1.msra.mxu0 0.0
    %3914 = vmatprep.subr.mxu0 0.0
    %3915 = vmatpush1.msra.mxu0 0.0
    %3916 = vmatprep.subr.mxu0 0.0
    %3917 = vmatpush1.msra.mxu0 0.0
    %3918 = vmatprep.subr.mxu0 0.0
    %3919 = vmatpush1.msra.mxu0 0.0
    %3920 = vmatprep.subr.mxu0 0.0
    %3921 = vmatpush1.msra.mxu0 0.0
    %3922 = vmatprep.subr.mxu0 0.0
    %3923 = vmatpush1.msra.mxu0 0.0
    %3924 = vmatprep.subr.mxu0 0.0
    %3925 = vmatpush1.msra.mxu0 0.0
    %3926 = vmatprep.subr.mxu0 0.0
    %3927 = vmatpush1.msra.mxu0 0.0
    %3928 = vmatprep.mubr.f32.mxu0 0.0
    %3929 = vmatmul.mubr.f32.gmra.mrb[0].mxu0 %v3859
    %v3930 = vpop.f32.mrb[0].mxu0
    %v3931 = vadd.f32 0.0, %v3930
    %v3932 = vpop.f32.mrb[0].mxu0
    %3933 = vmatprep.mubr.f32.mxu0 0.0
    %3934 = vmatmul.mubr.f32.gmra.mrb[0].mxu0 %v3862
    %v3935 = vpop.f32.mrb[0].mxu0
    %v3936 = vadd.f32 0.0, %v3935
    %v3937 = vpop.f32.mrb[0].mxu0
    %3938 = vdwg.mxu0
    %s3939 = scalar_lea.vmem %s31, 32
    %v3940 = vld [vmem:[%s3939] sm:$0xff]
    %v3941 = vld [vmem:[%s3939 + $0x8] sm:$0xff]
    %v3943 = vsel %vm2407, %v3931, 0
    %v3946 = vsel %vm2407, %v3936, 0
    %3948 = vmatprep.subr.mxu0 0.0
    %3949 = vmatpush1.msra.mxu0 %v3940
    %3950 = vmatprep.subr.mxu0 0.0
    %3951 = vmatpush1.msra.mxu0 %v3941
    %3952 = vmatprep.subr.mxu0 0.0
    %3953 = vmatpush1.msra.mxu0 0.0
    %3954 = vmatprep.subr.mxu0 0.0
    %3955 = vmatpush1.msra.mxu0 0.0
    %3956 = vmatprep.subr.mxu0 0.0
    %3957 = vmatpush1.msra.mxu0 0.0
    %3958 = vmatprep.subr.mxu0 0.0
    %3959 = vmatpush1.msra.mxu0 0.0
    %3960 = vmatprep.subr.mxu0 0.0
    %3961 = vmatpush1.msra.mxu0 0.0
    %3962 = vmatprep.subr.mxu0 0.0
    %3963 = vmatpush1.msra.mxu0 0.0
    %3964 = vmatprep.subr.mxu0 0.0
    %3965 = vmatpush1.msra.mxu0 0.0
    %3966 = vmatprep.subr.mxu0 0.0
    %3967 = vmatpush1.msra.mxu0 0.0
    %3968 = vmatprep.subr.mxu0 0.0
    %3969 = vmatpush1.msra.mxu0 0.0
    %3970 = vmatprep.subr.mxu0 0.0
    %3971 = vmatpush1.msra.mxu0 0.0
    %3972 = vmatprep.subr.mxu0 0.0
    %3973 = vmatpush1.msra.mxu0 0.0
    %3974 = vmatprep.subr.mxu0 0.0
    %3975 = vmatpush1.msra.mxu0 0.0
    %3976 = vmatprep.subr.mxu0 0.0
    %3977 = vmatpush1.msra.mxu0 0.0
    %3978 = vmatprep.subr.mxu0 0.0
    %3979 = vmatpush1.msra.mxu0 0.0
    %3980 = vmatprep.subr.mxu0 0.0
    %3981 = vmatpush1.msra.mxu0 0.0
    %3982 = vmatprep.subr.mxu0 0.0
    %3983 = vmatpush1.msra.mxu0 0.0
    %3984 = vmatprep.subr.mxu0 0.0
    %3985 = vmatpush1.msra.mxu0 0.0
    %3986 = vmatprep.subr.mxu0 0.0
    %3987 = vmatpush1.msra.mxu0 0.0
    %3988 = vmatprep.subr.mxu0 0.0
    %3989 = vmatpush1.msra.mxu0 0.0
    %3990 = vmatprep.subr.mxu0 0.0
    %3991 = vmatpush1.msra.mxu0 0.0
    %3992 = vmatprep.subr.mxu0 0.0
    %3993 = vmatpush1.msra.mxu0 0.0
    %3994 = vmatprep.subr.mxu0 0.0
    %3995 = vmatpush1.msra.mxu0 0.0
    %3996 = vmatprep.subr.mxu0 0.0
    %3997 = vmatpush1.msra.mxu0 0.0
    %3998 = vmatprep.subr.mxu0 0.0
    %3999 = vmatpush1.msra.mxu0 0.0
    %4000 = vmatprep.subr.mxu0 0.0
    %4001 = vmatpush1.msra.mxu0 0.0
    %4002 = vmatprep.subr.mxu0 0.0
    %4003 = vmatpush1.msra.mxu0 0.0
    %4004 = vmatprep.subr.mxu0 0.0
    %4005 = vmatpush1.msra.mxu0 0.0
    %4006 = vmatprep.subr.mxu0 0.0
    %4007 = vmatpush1.msra.mxu0 0.0
    %4008 = vmatprep.subr.mxu0 0.0
    %4009 = vmatpush1.msra.mxu0 0.0
    %4010 = vmatprep.subr.mxu0 0.0
    %4011 = vmatpush1.msra.mxu0 0.0
    %4012 = vmatprep.mubr.f32.mxu0 0.0
    %4013 = vmatmul.mubr.f32.gmra.mrb[0].mxu0 %v3943
    %v4014 = vpop.f32.mrb[0].mxu0
    %v4015 = vadd.f32 0.0, %v4014
    %v4016 = vpop.f32.mrb[0].mxu0
    %4017 = vmatprep.mubr.f32.mxu0 0.0
    %4018 = vmatmul.mubr.f32.gmra.mrb[0].mxu0 %v3946
    %v4019 = vpop.f32.mrb[0].mxu0
    %v4020 = vadd.f32 0.0, %v4019
    %v4021 = vpop.f32.mrb[0].mxu0
    %4022 = vdwg.mxu0
    %v4023 = vadd.f32 %v3847, %v4015
    %v4024 = vadd.f32 %v3852, %v4020
    %v4025 = vld [vmem:[%s33] sm:$0x1]
    %v4027 = vlaneseq
    %v4028 = vshrl.u32 %v4027, 7
    %v4029 = vsub.s32 0, %v4028
    %v4030 = vrot.slane %v4025, %v4029
    %v4032 = vadd.f32 %v4023, %v4030
    %v4033 = vadd.f32 %v4024, %v4030
    %v4034 = vmax.f32 %v4032, 0.0
    %v4035 = vmax.f32 %v4033, 0.0
    %v4036 = vld [vmem:[%s35] sm:$0xff]
    %v4037 = vld [vmem:[%s35 + $0x8] sm:$0xff]
    %v4039 = vsel %vm2407, %v4036, 0
    %v4042 = vsel %vm2407, %v4037, 0
    %4044 = vmatprep.subr.mxu0 0.0
    %4045 = vmatpush1.msra.mxu0 %v4034
    %4046 = vmatprep.subr.mxu0 0.0
    %4047 = vmatpush1.msra.mxu0 %v4035
    %4048 = vmatprep.subr.mxu0 0.0
    %4049 = vmatpush1.msra.mxu0 0.0
    %4050 = vmatprep.subr.mxu0 0.0
    %4051 = vmatpush1.msra.mxu0 0.0
    %4052 = vmatprep.subr.mxu0 0.0
    %4053 = vmatpush1.msra.mxu0 0.0
    %4054 = vmatprep.subr.mxu0 0.0
    %4055 = vmatpush1.msra.mxu0 0.0
    %4056 = vmatprep.subr.mxu0 0.0
    %4057 = vmatpush1.msra.mxu0 0.0
    %4058 = vmatprep.subr.mxu0 0.0
    %4059 = vmatpush1.msra.mxu0 0.0
    %4060 = vmatprep.subr.mxu0 0.0
    %4061 = vmatpush1.msra.mxu0 0.0
    %4062 = vmatprep.subr.mxu0 0.0
    %4063 = vmatpush1.msra.mxu0 0.0
    %4064 = vmatprep.subr.mxu0 0.0
    %4065 = vmatpush1.msra.mxu0 0.0
    %4066 = vmatprep.subr.mxu0 0.0
    %4067 = vmatpush1.msra.mxu0 0.0
    %4068 = vmatprep.subr.mxu0 0.0
    %4069 = vmatpush1.msra.mxu0 0.0
    %4070 = vmatprep.subr.mxu0 0.0
    %4071 = vmatpush1.msra.mxu0 0.0
    %4072 = vmatprep.subr.mxu0 0.0
    %4073 = vmatpush1.msra.mxu0 0.0
    %4074 = vmatprep.subr.mxu0 0.0
    %4075 = vmatpush1.msra.mxu0 0.0
    %4076 = vmatprep.subr.mxu0 0.0
    %4077 = vmatpush1.msra.mxu0 0.0
    %4078 = vmatprep.subr.mxu0 0.0
    %4079 = vmatpush1.msra.mxu0 0.0
    %4080 = vmatprep.subr.mxu0 0.0
    %4081 = vmatpush1.msra.mxu0 0.0
    %4082 = vmatprep.subr.mxu0 0.0
    %4083 = vmatpush1.msra.mxu0 0.0
    %4084 = vmatprep.subr.mxu0 0.0
    %4085 = vmatpush1.msra.mxu0 0.0
    %4086 = vmatprep.subr.mxu0 0.0
    %4087 = vmatpush1.msra.mxu0 0.0
    %4088 = vmatprep.subr.mxu0 0.0
    %4089 = vmatpush1.msra.mxu0 0.0
    %4090 = vmatprep.subr.mxu0 0.0
    %4091 = vmatpush1.msra.mxu0 0.0
    %4092 = vmatprep.subr.mxu0 0.0
    %4093 = vmatpush1.msra.mxu0 0.0
    %4094 = vmatprep.subr.mxu0 0.0
    %4095 = vmatpush1.msra.mxu0 0.0
    %4096 = vmatprep.subr.mxu0 0.0
    %4097 = vmatpush1.msra.mxu0 0.0
    %4098 = vmatprep.subr.mxu0 0.0
    %4099 = vmatpush1.msra.mxu0 0.0
    %4100 = vmatprep.subr.mxu0 0.0
    %4101 = vmatpush1.msra.mxu0 0.0
    %4102 = vmatprep.subr.mxu0 0.0
    %4103 = vmatpush1.msra.mxu0 0.0
    %4104 = vmatprep.subr.mxu0 0.0
    %4105 = vmatpush1.msra.mxu0 0.0
    %4106 = vmatprep.subr.mxu0 0.0
    %4107 = vmatpush1.msra.mxu0 0.0
    %4108 = vmatprep.mubr.f32.mxu0 0.0
    %4109 = vmatmul.mubr.f32.gmra.mrb[0].mxu0 %v4039
    %v4110 = vpop.f32.mrb[0].mxu0
    %v4111 = vadd.f32 0.0, %v4110
    %v4112 = vpop.f32.mrb[0].mxu0
    %4113 = vmatprep.mubr.f32.mxu0 0.0
    %4114 = vmatmul.mubr.f32.gmra.mrb[0].mxu0 %v4042
    %v4115 = vpop.f32.mrb[0].mxu0
    %v4116 = vadd.f32 0.0, %v4115
    %v4117 = vpop.f32.mrb[0].mxu0
    %4118 = vdwg.mxu0
    %v4119 = vld [vmem:[%s37] sm:$0xff]
    %v4120 = vld [vmem:[%s37 + $0x8] sm:$0xff]
    %s4121 = scalar_lea.vmem %s37, 16
    %v4122 = vld [vmem:[%s4121] sm:$0xff]
    %v4123 = vld [vmem:[%s4121 + $0x8] sm:$0xff]
    %v4125 = vsel %vm2407, %v4034, 0
    %v4128 = vsel %vm2407, %v4035, 0
    %4130 = vmatprep.subr.mxu0 0.0
    %4131 = vmatpush1.msra.mxu0 %v4122
    %4132 = vmatprep.subr.mxu0 0.0
    %4133 = vmatpush1.msra.mxu0 %v4123
    %4134 = vmatprep.subr.mxu0 0.0
    %4135 = vmatpush1.msra.mxu0 0.0
    %4136 = vmatprep.subr.mxu0 0.0
    %4137 = vmatpush1.msra.mxu0 0.0
    %4138 = vmatprep.subr.mxu0 0.0
    %4139 = vmatpush1.msra.mxu0 0.0
    %4140 = vmatprep.subr.mxu0 0.0
    %4141 = vmatpush1.msra.mxu0 0.0
    %4142 = vmatprep.subr.mxu0 0.0
    %4143 = vmatpush1.msra.mxu0 0.0
    %4144 = vmatprep.subr.mxu0 0.0
    %4145 = vmatpush1.msra.mxu0 0.0
    %4146 = vmatprep.subr.mxu0 0.0
    %4147 = vmatpush1.msra.mxu0 0.0
    %4148 = vmatprep.subr.mxu0 0.0
    %4149 = vmatpush1.msra.mxu0 0.0
    %4150 = vmatprep.subr.mxu0 0.0
    %4151 = vmatpush1.msra.mxu0 0.0
    %4152 = vmatprep.subr.mxu0 0.0
    %4153 = vmatpush1.msra.mxu0 0.0
    %4154 = vmatprep.subr.mxu0 0.0
    %4155 = vmatpush1.msra.mxu0 0.0
    %4156 = vmatprep.subr.mxu0 0.0
    %4157 = vmatpush1.msra.mxu0 0.0
    %4158 = vmatprep.subr.mxu0 0.0
    %4159 = vmatpush1.msra.mxu0 0.0
    %4160 = vmatprep.subr.mxu0 0.0
    %4161 = vmatpush1.msra.mxu0 0.0
    %4162 = vmatprep.subr.mxu0 0.0
    %4163 = vmatpush1.msra.mxu0 0.0
    %4164 = vmatprep.subr.mxu0 0.0
    %4165 = vmatpush1.msra.mxu0 0.0
    %4166 = vmatprep.subr.mxu0 0.0
    %4167 = vmatpush1.msra.mxu0 0.0
    %4168 = vmatprep.subr.mxu0 0.0
    %4169 = vmatpush1.msra.mxu0 0.0
    %4170 = vmatprep.subr.mxu0 0.0
    %4171 = vmatpush1.msra.mxu0 0.0
    %4172 = vmatprep.subr.mxu0 0.0
    %4173 = vmatpush1.msra.mxu0 0.0
    %4174 = vmatprep.subr.mxu0 0.0
    %4175 = vmatpush1.msra.mxu0 0.0
    %4176 = vmatprep.subr.mxu0 0.0
    %4177 = vmatpush1.msra.mxu0 0.0
    %4178 = vmatprep.subr.mxu0 0.0
    %4179 = vmatpush1.msra.mxu0 0.0
    %4180 = vmatprep.subr.mxu0 0.0
    %4181 = vmatpush1.msra.mxu0 0.0
    %4182 = vmatprep.subr.mxu0 0.0
    %4183 = vmatpush1.msra.mxu0 0.0
    %4184 = vmatprep.subr.mxu0 0.0
    %4185 = vmatpush1.msra.mxu0 0.0
    %4186 = vmatprep.subr.mxu0 0.0
    %4187 = vmatpush1.msra.mxu0 0.0
    %4188 = vmatprep.subr.mxu0 0.0
    %4189 = vmatpush1.msra.mxu0 0.0
    %4190 = vmatprep.subr.mxu0 0.0
    %4191 = vmatpush1.msra.mxu0 0.0
    %4192 = vmatprep.subr.mxu0 0.0
    %4193 = vmatpush1.msra.mxu0 0.0
    %4194 = vmatprep.mubr.f32.mxu0 0.0
    %4195 = vmatmul.mubr.f32.gmra.mrb[0].mxu0 %v4125
    %v4196 = vpop.f32.mrb[0].mxu0
    %v4197 = vadd.f32 0.0, %v4196
    %v4198 = vpop.f32.mrb[0].mxu0
    %4199 = vmatprep.mubr.f32.mxu0 0.0
    %4200 = vmatmul.mubr.f32.gmra.mrb[0].mxu0 %v4128
    %v4201 = vpop.f32.mrb[0].mxu0
    %v4202 = vadd.f32 0.0, %v4201
    %v4203 = vpop.f32.mrb[0].mxu0
    %4204 = vdwg.mxu0
    %v4206 = vsel %vm2407, %v4111, 0
    %v4209 = vsel %vm2407, %v4116, 0
    %4211 = vmatprep.subr.mxu0 0.0
    %4212 = vmatpush1.msra.mxu0 %v4119
    %4213 = vmatprep.subr.mxu0 0.0
    %4214 = vmatpush1.msra.mxu0 %v4120
    %4215 = vmatprep.subr.mxu0 0.0
    %4216 = vmatpush1.msra.mxu0 0.0
    %4217 = vmatprep.subr.mxu0 0.0
    %4218 = vmatpush1.msra.mxu0 0.0
    %4219 = vmatprep.subr.mxu0 0.0
    %4220 = vmatpush1.msra.mxu0 0.0
    %4221 = vmatprep.subr.mxu0 0.0
    %4222 = vmatpush1.msra.mxu0 0.0
    %4223 = vmatprep.subr.mxu0 0.0
    %4224 = vmatpush1.msra.mxu0 0.0
    %4225 = vmatprep.subr.mxu0 0.0
    %4226 = vmatpush1.msra.mxu0 0.0
    %4227 = vmatprep.subr.mxu0 0.0
    %4228 = vmatpush1.msra.mxu0 0.0
    %4229 = vmatprep.subr.mxu0 0.0
    %4230 = vmatpush1.msra.mxu0 0.0
    %4231 = vmatprep.subr.mxu0 0.0
    %4232 = vmatpush1.msra.mxu0 0.0
    %4233 = vmatprep.subr.mxu0 0.0
    %4234 = vmatpush1.msra.mxu0 0.0
    %4235 = vmatprep.subr.mxu0 0.0
    %4236 = vmatpush1.msra.mxu0 0.0
    %4237 = vmatprep.subr.mxu0 0.0
    %4238 = vmatpush1.msra.mxu0 0.0
    %4239 = vmatprep.subr.mxu0 0.0
    %4240 = vmatpush1.msra.mxu0 0.0
    %4241 = vmatprep.subr.mxu0 0.0
    %4242 = vmatpush1.msra.mxu0 0.0
    %4243 = vmatprep.subr.mxu0 0.0
    %4244 = vmatpush1.msra.mxu0 0.0
    %4245 = vmatprep.subr.mxu0 0.0
    %4246 = vmatpush1.msra.mxu0 0.0
    %4247 = vmatprep.subr.mxu0 0.0
    %4248 = vmatpush1.msra.mxu0 0.0
    %4249 = vmatprep.subr.mxu0 0.0
    %4250 = vmatpush1.msra.mxu0 0.0
    %4251 = vmatprep.subr.mxu0 0.0
    %4252 = vmatpush1.msra.mxu0 0.0
    %4253 = vmatprep.subr.mxu0 0.0
    %4254 = vmatpush1.msra.mxu0 0.0
    %4255 = vmatprep.subr.mxu0 0.0
    %4256 = vmatpush1.msra.mxu0 0.0
    %4257 = vmatprep.subr.mxu0 0.0
    %4258 = vmatpush1.msra.mxu0 0.0
    %4259 = vmatprep.subr.mxu0 0.0
    %4260 = vmatpush1.msra.mxu0 0.0
    %4261 = vmatprep.subr.mxu0 0.0
    %4262 = vmatpush1.msra.mxu0 0.0
    %4263 = vmatprep.subr.mxu0 0.0
    %4264 = vmatpush1.msra.mxu0 0.0
    %4265 = vmatprep.subr.mxu0 0.0
    %4266 = vmatpush1.msra.mxu0 0.0
    %4267 = vmatprep.subr.mxu0 0.0
    %4268 = vmatpush1.msra.mxu0 0.0
    %4269 = vmatprep.subr.mxu0 0.0
    %4270 = vmatpush1.msra.mxu0 0.0
    %4271 = vmatprep.subr.mxu0 0.0
    %4272 = vmatpush1.msra.mxu0 0.0
    %4273 = vmatprep.subr.mxu0 0.0
    %4274 = vmatpush1.msra.mxu0 0.0
    %4275 = vmatprep.mubr.f32.mxu0 0.0
    %4276 = vmatmul.mubr.f32.gmra.mrb[0].mxu0 %v4206
    %v4277 = vpop.f32.mrb[0].mxu0
    %v4278 = vadd.f32 %v4197, %v4277
    %v4279 = vpop.f32.mrb[0].mxu0
    %4280 = vmatprep.mubr.f32.mxu0 0.0
    %4281 = vmatmul.mubr.f32.gmra.mrb[0].mxu0 %v4209
    %v4282 = vpop.f32.mrb[0].mxu0
    %v4283 = vadd.f32 %v4202, %v4282
    %v4284 = vpop.f32.mrb[0].mxu0
    %4285 = vdwg.mxu0
    %s4286 = scalar_lea.vmem %s35, 32
    %v4287 = vld [vmem:[%s4286] sm:$0xff]
    %v4288 = vld [vmem:[%s4286 + $0x8] sm:$0xff]
    %v4290 = vsel %vm2407, %v4287, 0
    %v4293 = vsel %vm2407, %v4288, 0
    %4295 = vmatprep.subr.mxu0 0.0
    %4296 = vmatpush1.msra.mxu0 %v4034
    %4297 = vmatprep.subr.mxu0 0.0
    %4298 = vmatpush1.msra.mxu0 %v4035
    %4299 = vmatprep.subr.mxu0 0.0
    %4300 = vmatpush1.msra.mxu0 0.0
    %4301 = vmatprep.subr.mxu0 0.0
    %4302 = vmatpush1.msra.mxu0 0.0
    %4303 = vmatprep.subr.mxu0 0.0
    %4304 = vmatpush1.msra.mxu0 0.0
    %4305 = vmatprep.subr.mxu0 0.0
    %4306 = vmatpush1.msra.mxu0 0.0
    %4307 = vmatprep.subr.mxu0 0.0
    %4308 = vmatpush1.msra.mxu0 0.0
    %4309 = vmatprep.subr.mxu0 0.0
    %4310 = vmatpush1.msra.mxu0 0.0
    %4311 = vmatprep.subr.mxu0 0.0
    %4312 = vmatpush1.msra.mxu0 0.0
    %4313 = vmatprep.subr.mxu0 0.0
    %4314 = vmatpush1.msra.mxu0 0.0
    %4315 = vmatprep.subr.mxu0 0.0
    %4316 = vmatpush1.msra.mxu0 0.0
    %4317 = vmatprep.subr.mxu0 0.0
    %4318 = vmatpush1.msra.mxu0 0.0
    %4319 = vmatprep.subr.mxu0 0.0
    %4320 = vmatpush1.msra.mxu0 0.0
    %4321 = vmatprep.subr.mxu0 0.0
    %4322 = vmatpush1.msra.mxu0 0.0
    %4323 = vmatprep.subr.mxu0 0.0
    %4324 = vmatpush1.msra.mxu0 0.0
    %4325 = vmatprep.subr.mxu0 0.0
    %4326 = vmatpush1.msra.mxu0 0.0
    %4327 = vmatprep.subr.mxu0 0.0
    %4328 = vmatpush1.msra.mxu0 0.0
    %4329 = vmatprep.subr.mxu0 0.0
    %4330 = vmatpush1.msra.mxu0 0.0
    %4331 = vmatprep.subr.mxu0 0.0
    %4332 = vmatpush1.msra.mxu0 0.0
    %4333 = vmatprep.subr.mxu0 0.0
    %4334 = vmatpush1.msra.mxu0 0.0
    %4335 = vmatprep.subr.mxu0 0.0
    %4336 = vmatpush1.msra.mxu0 0.0
    %4337 = vmatprep.subr.mxu0 0.0
    %4338 = vmatpush1.msra.mxu0 0.0
    %4339 = vmatprep.subr.mxu0 0.0
    %4340 = vmatpush1.msra.mxu0 0.0
    %4341 = vmatprep.subr.mxu0 0.0
    %4342 = vmatpush1.msra.mxu0 0.0
    %4343 = vmatprep.subr.mxu0 0.0
    %4344 = vmatpush1.msra.mxu0 0.0
    %4345 = vmatprep.subr.mxu0 0.0
    %4346 = vmatpush1.msra.mxu0 0.0
    %4347 = vmatprep.subr.mxu0 0.0
    %4348 = vmatpush1.msra.mxu0 0.0
    %4349 = vmatprep.subr.mxu0 0.0
    %4350 = vmatpush1.msra.mxu0 0.0
    %4351 = vmatprep.subr.mxu0 0.0
    %4352 = vmatpush1.msra.mxu0 0.0
    %4353 = vmatprep.subr.mxu0 0.0
    %4354 = vmatpush1.msra.mxu0 0.0
    %4355 = vmatprep.subr.mxu0 0.0
    %4356 = vmatpush1.msra.mxu0 0.0
    %4357 = vmatprep.subr.mxu0 0.0
    %4358 = vmatpush1.msra.mxu0 0.0
    %4359 = vmatprep.mubr.f32.mxu0 0.0
    %4360 = vmatmul.mubr.f32.gmra.mrb[0].mxu0 %v4290
    %v4361 = vpop.f32.mrb[0].mxu0
    %v4362 = vadd.f32 0.0, %v4361
    %v4363 = vpop.f32.mrb[0].mxu0
    %4364 = vmatprep.mubr.f32.mxu0 0.0
    %4365 = vmatmul.mubr.f32.gmra.mrb[0].mxu0 %v4293
    %v4366 = vpop.f32.mrb[0].mxu0
    %v4367 = vadd.f32 0.0, %v4366
    %v4368 = vpop.f32.mrb[0].mxu0
    %4369 = vdwg.mxu0
    %s4370 = scalar_lea.vmem %s37, 32
    %v4371 = vld [vmem:[%s4370] sm:$0xff]
    %v4372 = vld [vmem:[%s4370 + $0x8] sm:$0xff]
    %v4374 = vsel %vm2407, %v4362, 0
    %v4377 = vsel %vm2407, %v4367, 0
    %4379 = vmatprep.subr.mxu0 0.0
    %4380 = vmatpush1.msra.mxu0 %v4371
    %4381 = vmatprep.subr.mxu0 0.0
    %4382 = vmatpush1.msra.mxu0 %v4372
    %4383 = vmatprep.subr.mxu0 0.0
    %4384 = vmatpush1.msra.mxu0 0.0
    %4385 = vmatprep.subr.mxu0 0.0
    %4386 = vmatpush1.msra.mxu0 0.0
    %4387 = vmatprep.subr.mxu0 0.0
    %4388 = vmatpush1.msra.mxu0 0.0
    %4389 = vmatprep.subr.mxu0 0.0
    %4390 = vmatpush1.msra.mxu0 0.0
    %4391 = vmatprep.subr.mxu0 0.0
    %4392 = vmatpush1.msra.mxu0 0.0
    %4393 = vmatprep.subr.mxu0 0.0
    %4394 = vmatpush1.msra.mxu0 0.0
    %4395 = vmatprep.subr.mxu0 0.0
    %4396 = vmatpush1.msra.mxu0 0.0
    %4397 = vmatprep.subr.mxu0 0.0
    %4398 = vmatpush1.msra.mxu0 0.0
    %4399 = vmatprep.subr.mxu0 0.0
    %4400 = vmatpush1.msra.mxu0 0.0
    %4401 = vmatprep.subr.mxu0 0.0
    %4402 = vmatpush1.msra.mxu0 0.0
    %4403 = vmatprep.subr.mxu0 0.0
    %4404 = vmatpush1.msra.mxu0 0.0
    %4405 = vmatprep.subr.mxu0 0.0
    %4406 = vmatpush1.msra.mxu0 0.0
    %4407 = vmatprep.subr.mxu0 0.0
    %4408 = vmatpush1.msra.mxu0 0.0
    %4409 = vmatprep.subr.mxu0 0.0
    %4410 = vmatpush1.msra.mxu0 0.0
    %4411 = vmatprep.subr.mxu0 0.0
    %4412 = vmatpush1.msra.mxu0 0.0
    %4413 = vmatprep.subr.mxu0 0.0
    %4414 = vmatpush1.msra.mxu0 0.0
    %4415 = vmatprep.subr.mxu0 0.0
    %4416 = vmatpush1.msra.mxu0 0.0
    %4417 = vmatprep.subr.mxu0 0.0
    %4418 = vmatpush1.msra.mxu0 0.0
    %4419 = vmatprep.subr.mxu0 0.0
    %4420 = vmatpush1.msra.mxu0 0.0
    %4421 = vmatprep.subr.mxu0 0.0
    %4422 = vmatpush1.msra.mxu0 0.0
    %4423 = vmatprep.subr.mxu0 0.0
    %4424 = vmatpush1.msra.mxu0 0.0
    %4425 = vmatprep.subr.mxu0 0.0
    %4426 = vmatpush1.msra.mxu0 0.0
    %4427 = vmatprep.subr.mxu0 0.0
    %4428 = vmatpush1.msra.mxu0 0.0
    %4429 = vmatprep.subr.mxu0 0.0
    %4430 = vmatpush1.msra.mxu0 0.0
    %4431 = vmatprep.subr.mxu0 0.0
    %4432 = vmatpush1.msra.mxu0 0.0
    %4433 = vmatprep.subr.mxu0 0.0
    %4434 = vmatpush1.msra.mxu0 0.0
    %4435 = vmatprep.subr.mxu0 0.0
    %4436 = vmatpush1.msra.mxu0 0.0
    %4437 = vmatprep.subr.mxu0 0.0
    %4438 = vmatpush1.msra.mxu0 0.0
    %4439 = vmatprep.subr.mxu0 0.0
    %4440 = vmatpush1.msra.mxu0 0.0
    %4441 = vmatprep.subr.mxu0 0.0
    %4442 = vmatpush1.msra.mxu0 0.0
    %4443 = vmatprep.mubr.f32.mxu0 0.0
    %4444 = vmatmul.mubr.f32.gmra.mrb[0].mxu0 %v4374
    %v4445 = vpop.f32.mrb[0].mxu0
    %v4446 = vadd.f32 0.0, %v4445
    %v4447 = vpop.f32.mrb[0].mxu0
    %4448 = vmatprep.mubr.f32.mxu0 0.0
    %4449 = vmatmul.mubr.f32.gmra.mrb[0].mxu0 %v4377
    %v4450 = vpop.f32.mrb[0].mxu0
    %v4451 = vadd.f32 0.0, %v4450
    %v4452 = vpop.f32.mrb[0].mxu0
    %4453 = vdwg.mxu0
    %v4454 = vadd.f32 %v4278, %v4446
    %v4455 = vadd.f32 %v4283, %v4451
    %v4456 = vld [vmem:[%s39] sm:$0x1]
    %v4458 = vlaneseq
    %v4459 = vshrl.u32 %v4458, 7
    %v4460 = vsub.s32 0, %v4459
    %v4461 = vrot.slane %v4456, %v4460
    %v4463 = vadd.f32 %v4454, %v4461
    %v4464 = vadd.f32 %v4455, %v4461
    %v4465 = vadd.f32 %v4463, %v3513
    %v4466 = vadd.f32 %v4464, %v3518
    %v4467 = vmax.f32 %v4465, 0.0
    %v4468 = vmax.f32 %v4466, 0.0
    %v4469 = vld [vmem:[%s41] sm:$0xff]
    %v4471 = vsel %vm2407, %v4469, 0
    %4473 = vmatprep.subr.mxu0 0.0
    %4474 = vmatpush1.msra.mxu0 %v4467
    %4475 = vmatprep.subr.mxu0 0.0
    %4476 = vmatpush1.msra.mxu0 %v4468
    %4477 = vmatprep.subr.mxu0 0.0
    %4478 = vmatpush1.msra.mxu0 0.0
    %4479 = vmatprep.subr.mxu0 0.0
    %4480 = vmatpush1.msra.mxu0 0.0
    %4481 = vmatprep.subr.mxu0 0.0
    %4482 = vmatpush1.msra.mxu0 0.0
    %4483 = vmatprep.subr.mxu0 0.0
    %4484 = vmatpush1.msra.mxu0 0.0
    %4485 = vmatprep.subr.mxu0 0.0
    %4486 = vmatpush1.msra.mxu0 0.0
    %4487 = vmatprep.subr.mxu0 0.0
    %4488 = vmatpush1.msra.mxu0 0.0
    %4489 = vmatprep.subr.mxu0 0.0
    %4490 = vmatpush1.msra.mxu0 0.0
    %4491 = vmatprep.subr.mxu0 0.0
    %4492 = vmatpush1.msra.mxu0 0.0
    %4493 = vmatprep.subr.mxu0 0.0
    %4494 = vmatpush1.msra.mxu0 0.0
    %4495 = vmatprep.subr.mxu0 0.0
    %4496 = vmatpush1.msra.mxu0 0.0
    %4497 = vmatprep.subr.mxu0 0.0
    %4498 = vmatpush1.msra.mxu0 0.0
    %4499 = vmatprep.subr.mxu0 0.0
    %4500 = vmatpush1.msra.mxu0 0.0
    %4501 = vmatprep.subr.mxu0 0.0
    %4502 = vmatpush1.msra.mxu0 0.0
    %4503 = vmatprep.subr.mxu0 0.0
    %4504 = vmatpush1.msra.mxu0 0.0
    %4505 = vmatprep.subr.mxu0 0.0
    %4506 = vmatpush1.msra.mxu0 0.0
    %4507 = vmatprep.subr.mxu0 0.0
    %4508 = vmatpush1.msra.mxu0 0.0
    %4509 = vmatprep.subr.mxu0 0.0
    %4510 = vmatpush1.msra.mxu0 0.0
    %4511 = vmatprep.subr.mxu0 0.0
    %4512 = vmatpush1.msra.mxu0 0.0
    %4513 = vmatprep.subr.mxu0 0.0
    %4514 = vmatpush1.msra.mxu0 0.0
    %4515 = vmatprep.subr.mxu0 0.0
    %4516 = vmatpush1.msra.mxu0 0.0
    %4517 = vmatprep.subr.mxu0 0.0
    %4518 = vmatpush1.msra.mxu0 0.0
    %4519 = vmatprep.subr.mxu0 0.0
    %4520 = vmatpush1.msra.mxu0 0.0
    %4521 = vmatprep.subr.mxu0 0.0
    %4522 = vmatpush1.msra.mxu0 0.0
    %4523 = vmatprep.subr.mxu0 0.0
    %4524 = vmatpush1.msra.mxu0 0.0
    %4525 = vmatprep.subr.mxu0 0.0
    %4526 = vmatpush1.msra.mxu0 0.0
    %4527 = vmatprep.subr.mxu0 0.0
    %4528 = vmatpush1.msra.mxu0 0.0
    %4529 = vmatprep.subr.mxu0 0.0
    %4530 = vmatpush1.msra.mxu0 0.0
    %4531 = vmatprep.subr.mxu0 0.0
    %4532 = vmatpush1.msra.mxu0 0.0
    %4533 = vmatprep.subr.mxu0 0.0
    %4534 = vmatpush1.msra.mxu0 0.0
    %4535 = vmatprep.subr.mxu0 0.0
    %4536 = vmatpush1.msra.mxu0 0.0
    %4537 = vmatprep.mubr.f32.mxu0 0.0
    %4538 = vmatmul.mubr.f32.gmra.mrb[0].mxu0 %v4471
    %v4539 = vpop.f32.mrb[0].mxu0
    %v4540 = vadd.f32 0.0, %v4539
    %v4541 = vpop.f32.mrb[0].mxu0
    %4542 = vdwg.mxu0
    %v4543 = vld [vmem:[%s43] sm:$0xff]
    %v4544 = vld [vmem:[%s43 + $0x8] sm:$0xff]
    %v4545 = vld [vmem:[%s45] sm:$0x1]
    %v4547 = vlaneseq
    %v4548 = vshrl.u32 %v4547, 7
    %v4549 = vsub.s32 0, %v4548
    %v4550 = vrot.slane %v4545, %v4549
    %v4553 = vsel %vm2407, %v4540, 0
    %4555 = vmatprep.subr.mxu0 0.0
    %4556 = vmatpush1.msra.mxu0 %v4543
    %4557 = vmatprep.subr.mxu0 0.0
    %4558 = vmatpush1.msra.mxu0 %v4544
    %4559 = vmatprep.subr.mxu0 0.0
    %4560 = vmatpush1.msra.mxu0 0.0
    %4561 = vmatprep.subr.mxu0 0.0
    %4562 = vmatpush1.msra.mxu0 0.0
    %4563 = vmatprep.subr.mxu0 0.0
    %4564 = vmatpush1.msra.mxu0 0.0
    %4565 = vmatprep.subr.mxu0 0.0
    %4566 = vmatpush1.msra.mxu0 0.0
    %4567 = vmatprep.subr.mxu0 0.0
    %4568 = vmatpush1.msra.mxu0 0.0
    %4569 = vmatprep.subr.mxu0 0.0
    %4570 = vmatpush1.msra.mxu0 0.0
    %4571 = vmatprep.subr.mxu0 0.0
    %4572 = vmatpush1.msra.mxu0 0.0
    %4573 = vmatprep.subr.mxu0 0.0
    %4574 = vmatpush1.msra.mxu0 0.0
    %4575 = vmatprep.subr.mxu0 0.0
    %4576 = vmatpush1.msra.mxu0 0.0
    %4577 = vmatprep.subr.mxu0 0.0
    %4578 = vmatpush1.msra.mxu0 0.0
    %4579 = vmatprep.subr.mxu0 0.0
    %4580 = vmatpush1.msra.mxu0 0.0
    %4581 = vmatprep.subr.mxu0 0.0
    %4582 = vmatpush1.msra.mxu0 0.0
    %4583 = vmatprep.subr.mxu0 0.0
    %4584 = vmatpush1.msra.mxu0 0.0
    %4585 = vmatprep.subr.mxu0 0.0
    %4586 = vmatpush1.msra.mxu0 0.0
    %4587 = vmatprep.subr.mxu0 0.0
    %4588 = vmatpush1.msra.mxu0 0.0
    %4589 = vmatprep.subr.mxu0 0.0
    %4590 = vmatpush1.msra.mxu0 0.0
    %4591 = vmatprep.subr.mxu0 0.0
    %4592 = vmatpush1.msra.mxu0 0.0
    %4593 = vmatprep.subr.mxu0 0.0
    %4594 = vmatpush1.msra.mxu0 0.0
    %4595 = vmatprep.subr.mxu0 0.0
    %4596 = vmatpush1.msra.mxu0 0.0
    %4597 = vmatprep.subr.mxu0 0.0
    %4598 = vmatpush1.msra.mxu0 0.0
    %4599 = vmatprep.subr.mxu0 0.0
    %4600 = vmatpush1.msra.mxu0 0.0
    %4601 = vmatprep.subr.mxu0 0.0
    %4602 = vmatpush1.msra.mxu0 0.0
    %4603 = vmatprep.subr.mxu0 0.0
    %4604 = vmatpush1.msra.mxu0 0.0
    %4605 = vmatprep.subr.mxu0 0.0
    %4606 = vmatpush1.msra.mxu0 0.0
    %4607 = vmatprep.subr.mxu0 0.0
    %4608 = vmatpush1.msra.mxu0 0.0
    %4609 = vmatprep.subr.mxu0 0.0
    %4610 = vmatpush1.msra.mxu0 0.0
    %4611 = vmatprep.subr.mxu0 0.0
    %4612 = vmatpush1.msra.mxu0 0.0
    %4613 = vmatprep.subr.mxu0 0.0
    %4614 = vmatpush1.msra.mxu0 0.0
    %4615 = vmatprep.subr.mxu0 0.0
    %4616 = vmatpush1.msra.mxu0 0.0
    %4617 = vmatprep.subr.mxu0 0.0
    %4618 = vmatpush1.msra.mxu0 0.0
    %4619 = vmatprep.mubr.f32.mxu0 0.0
    %4620 = vmatmul.mubr.f32.gmra.mrb[0].mxu0 %v4553
    %v4621 = vpop.f32.mrb[0].mxu0
    %v4622 = vadd.f32 %v4550, %v4621
    %v4623 = vpop.f32.mrb[0].mxu0
    %4624 = vdwg.mxu0
    %v4625 = vld [vmem:[%s47] sm:$0xff]
    %v4627 = vsel %vm2407, %v4625, 0
    %4629 = vmatprep.subr.mxu0 0.0
    %4630 = vmatpush1.msra.mxu0 %v4467
    %4631 = vmatprep.subr.mxu0 0.0
    %4632 = vmatpush1.msra.mxu0 %v4468
    %4633 = vmatprep.subr.mxu0 0.0
    %4634 = vmatpush1.msra.mxu0 0.0
    %4635 = vmatprep.subr.mxu0 0.0
    %4636 = vmatpush1.msra.mxu0 0.0
    %4637 = vmatprep.subr.mxu0 0.0
    %4638 = vmatpush1.msra.mxu0 0.0
    %4639 = vmatprep.subr.mxu0 0.0
    %4640 = vmatpush1.msra.mxu0 0.0
    %4641 = vmatprep.subr.mxu0 0.0
    %4642 = vmatpush1.msra.mxu0 0.0
    %4643 = vmatprep.subr.mxu0 0.0
    %4644 = vmatpush1.msra.mxu0 0.0
    %4645 = vmatprep.subr.mxu0 0.0
    %4646 = vmatpush1.msra.mxu0 0.0
    %4647 = vmatprep.subr.mxu0 0.0
    %4648 = vmatpush1.msra.mxu0 0.0
    %4649 = vmatprep.subr.mxu0 0.0
    %4650 = vmatpush1.msra.mxu0 0.0
    %4651 = vmatprep.subr.mxu0 0.0
    %4652 = vmatpush1.msra.mxu0 0.0
    %4653 = vmatprep.subr.mxu0 0.0
    %4654 = vmatpush1.msra.mxu0 0.0
    %4655 = vmatprep.subr.mxu0 0.0
    %4656 = vmatpush1.msra.mxu0 0.0
    %4657 = vmatprep.subr.mxu0 0.0
    %4658 = vmatpush1.msra.mxu0 0.0
    %4659 = vmatprep.subr.mxu0 0.0
    %4660 = vmatpush1.msra.mxu0 0.0
    %4661 = vmatprep.subr.mxu0 0.0
    %4662 = vmatpush1.msra.mxu0 0.0
    %4663 = vmatprep.subr.mxu0 0.0
    %4664 = vmatpush1.msra.mxu0 0.0
    %4665 = vmatprep.subr.mxu0 0.0
    %4666 = vmatpush1.msra.mxu0 0.0
    %4667 = vmatprep.subr.mxu0 0.0
    %4668 = vmatpush1.msra.mxu0 0.0
    %4669 = vmatprep.subr.mxu0 0.0
    %4670 = vmatpush1.msra.mxu0 0.0
    %4671 = vmatprep.subr.mxu0 0.0
    %4672 = vmatpush1.msra.mxu0 0.0
    %4673 = vmatprep.subr.mxu0 0.0
    %4674 = vmatpush1.msra.mxu0 0.0
    %4675 = vmatprep.subr.mxu0 0.0
    %4676 = vmatpush1.msra.mxu0 0.0
    %4677 = vmatprep.subr.mxu0 0.0
    %4678 = vmatpush1.msra.mxu0 0.0
    %4679 = vmatprep.subr.mxu0 0.0
    %4680 = vmatpush1.msra.mxu0 0.0
    %4681 = vmatprep.subr.mxu0 0.0
    %4682 = vmatpush1.msra.mxu0 0.0
    %4683 = vmatprep.subr.mxu0 0.0
    %4684 = vmatpush1.msra.mxu0 0.0
    %4685 = vmatprep.subr.mxu0 0.0
    %4686 = vmatpush1.msra.mxu0 0.0
    %4687 = vmatprep.subr.mxu0 0.0
    %4688 = vmatpush1.msra.mxu0 0.0
    %4689 = vmatprep.subr.mxu0 0.0
    %4690 = vmatpush1.msra.mxu0 0.0
    %4691 = vmatprep.subr.mxu0 0.0
    %4692 = vmatpush1.msra.mxu0 0.0
    %4693 = vmatprep.mubr.f32.mxu0 0.0
    %4694 = vmatmul.mubr.f32.gmra.mrb[0].mxu0 %v4627
    %v4695 = vpop.f32.mrb[0].mxu0
    %v4696 = vadd.f32 0.0, %v4695
    %v4697 = vpop.f32.mrb[0].mxu0
    %4698 = vdwg.mxu0
    %v4699 = vld [vmem:[%s49] sm:$0xff]
    %v4700 = vld [vmem:[%s49 + $0x8] sm:$0xff]
    %s4701 = scalar_lea.vmem %s47, 8
    %v4702 = vld [vmem:[%s4701] sm:$0xff]
    %v4704 = vsel %vm2407, %v4702, 0
    %4706 = vmatprep.subr.mxu0 0.0
    %4707 = vmatpush1.msra.mxu0 %v4467
    %4708 = vmatprep.subr.mxu0 0.0
    %4709 = vmatpush1.msra.mxu0 %v4468
    %4710 = vmatprep.subr.mxu0 0.0
    %4711 = vmatpush1.msra.mxu0 0.0
    %4712 = vmatprep.subr.mxu0 0.0
    %4713 = vmatpush1.msra.mxu0 0.0
    %4714 = vmatprep.subr.mxu0 0.0
    %4715 = vmatpush1.msra.mxu0 0.0
    %4716 = vmatprep.subr.mxu0 0.0
    %4717 = vmatpush1.msra.mxu0 0.0
    %4718 = vmatprep.subr.mxu0 0.0
    %4719 = vmatpush1.msra.mxu0 0.0
    %4720 = vmatprep.subr.mxu0 0.0
    %4721 = vmatpush1.msra.mxu0 0.0
    %4722 = vmatprep.subr.mxu0 0.0
    %4723 = vmatpush1.msra.mxu0 0.0
    %4724 = vmatprep.subr.mxu0 0.0
    %4725 = vmatpush1.msra.mxu0 0.0
    %4726 = vmatprep.subr.mxu0 0.0
    %4727 = vmatpush1.msra.mxu0 0.0
    %4728 = vmatprep.subr.mxu0 0.0
    %4729 = vmatpush1.msra.mxu0 0.0
    %4730 = vmatprep.subr.mxu0 0.0
    %4731 = vmatpush1.msra.mxu0 0.0
    %4732 = vmatprep.subr.mxu0 0.0
    %4733 = vmatpush1.msra.mxu0 0.0
    %4734 = vmatprep.subr.mxu0 0.0
    %4735 = vmatpush1.msra.mxu0 0.0
    %4736 = vmatprep.subr.mxu0 0.0
    %4737 = vmatpush1.msra.mxu0 0.0
    %4738 = vmatprep.subr.mxu0 0.0
    %4739 = vmatpush1.msra.mxu0 0.0
    %4740 = vmatprep.subr.mxu0 0.0
    %4741 = vmatpush1.msra.mxu0 0.0
    %4742 = vmatprep.subr.mxu0 0.0
    %4743 = vmatpush1.msra.mxu0 0.0
    %4744 = vmatprep.subr.mxu0 0.0
    %4745 = vmatpush1.msra.mxu0 0.0
    %4746 = vmatprep.subr.mxu0 0.0
    %4747 = vmatpush1.msra.mxu0 0.0
    %4748 = vmatprep.subr.mxu0 0.0
    %4749 = vmatpush1.msra.mxu0 0.0
    %4750 = vmatprep.subr.mxu0 0.0
    %4751 = vmatpush1.msra.mxu0 0.0
    %4752 = vmatprep.subr.mxu0 0.0
    %4753 = vmatpush1.msra.mxu0 0.0
    %4754 = vmatprep.subr.mxu0 0.0
    %4755 = vmatpush1.msra.mxu0 0.0
    %4756 = vmatprep.subr.mxu0 0.0
    %4757 = vmatpush1.msra.mxu0 0.0
    %4758 = vmatprep.subr.mxu0 0.0
    %4759 = vmatpush1.msra.mxu0 0.0
    %4760 = vmatprep.subr.mxu0 0.0
    %4761 = vmatpush1.msra.mxu0 0.0
    %4762 = vmatprep.subr.mxu0 0.0
    %4763 = vmatpush1.msra.mxu0 0.0
    %4764 = vmatprep.subr.mxu0 0.0
    %4765 = vmatpush1.msra.mxu0 0.0
    %4766 = vmatprep.subr.mxu0 0.0
    %4767 = vmatpush1.msra.mxu0 0.0
    %4768 = vmatprep.subr.mxu0 0.0
    %4769 = vmatpush1.msra.mxu0 0.0
    %4770 = vmatprep.mubr.f32.mxu0 0.0
    %4771 = vmatmul.mubr.f32.gmra.mrb[0].mxu0 %v4704
    %v4772 = vpop.f32.mrb[0].mxu0
    %v4773 = vadd.f32 0.0, %v4772
    %v4774 = vpop.f32.mrb[0].mxu0
    %4775 = vdwg.mxu0
    %s4776 = scalar_lea.vmem %s49, 16
    %v4777 = vld [vmem:[%s4776] sm:$0xff]
    %v4778 = vld [vmem:[%s4776 + $0x8] sm:$0xff]
    %v4780 = vsel %vm2407, %v4773, 0
    %4782 = vmatprep.subr.mxu0 0.0
    %4783 = vmatpush1.msra.mxu0 %v4777
    %4784 = vmatprep.subr.mxu0 0.0
    %4785 = vmatpush1.msra.mxu0 %v4778
    %4786 = vmatprep.subr.mxu0 0.0
    %4787 = vmatpush1.msra.mxu0 0.0
    %4788 = vmatprep.subr.mxu0 0.0
    %4789 = vmatpush1.msra.mxu0 0.0
    %4790 = vmatprep.subr.mxu0 0.0
    %4791 = vmatpush1.msra.mxu0 0.0
    %4792 = vmatprep.subr.mxu0 0.0
    %4793 = vmatpush1.msra.mxu0 0.0
    %4794 = vmatprep.subr.mxu0 0.0
    %4795 = vmatpush1.msra.mxu0 0.0
    %4796 = vmatprep.subr.mxu0 0.0
    %4797 = vmatpush1.msra.mxu0 0.0
    %4798 = vmatprep.subr.mxu0 0.0
    %4799 = vmatpush1.msra.mxu0 0.0
    %4800 = vmatprep.subr.mxu0 0.0
    %4801 = vmatpush1.msra.mxu0 0.0
    %4802 = vmatprep.subr.mxu0 0.0
    %4803 = vmatpush1.msra.mxu0 0.0
    %4804 = vmatprep.subr.mxu0 0.0
    %4805 = vmatpush1.msra.mxu0 0.0
    %4806 = vmatprep.subr.mxu0 0.0
    %4807 = vmatpush1.msra.mxu0 0.0
    %4808 = vmatprep.subr.mxu0 0.0
    %4809 = vmatpush1.msra.mxu0 0.0
    %4810 = vmatprep.subr.mxu0 0.0
    %4811 = vmatpush1.msra.mxu0 0.0
    %4812 = vmatprep.subr.mxu0 0.0
    %4813 = vmatpush1.msra.mxu0 0.0
    %4814 = vmatprep.subr.mxu0 0.0
    %4815 = vmatpush1.msra.mxu0 0.0
    %4816 = vmatprep.subr.mxu0 0.0
    %4817 = vmatpush1.msra.mxu0 0.0
    %4818 = vmatprep.subr.mxu0 0.0
    %4819 = vmatpush1.msra.mxu0 0.0
    %4820 = vmatprep.subr.mxu0 0.0
    %4821 = vmatpush1.msra.mxu0 0.0
    %4822 = vmatprep.subr.mxu0 0.0
    %4823 = vmatpush1.msra.mxu0 0.0
    %4824 = vmatprep.subr.mxu0 0.0
    %4825 = vmatpush1.msra.mxu0 0.0
    %4826 = vmatprep.subr.mxu0 0.0
    %4827 = vmatpush1.msra.mxu0 0.0
    %4828 = vmatprep.subr.mxu0 0.0
    %4829 = vmatpush1.msra.mxu0 0.0
    %4830 = vmatprep.subr.mxu0 0.0
    %4831 = vmatpush1.msra.mxu0 0.0
    %4832 = vmatprep.subr.mxu0 0.0
    %4833 = vmatpush1.msra.mxu0 0.0
    %4834 = vmatprep.subr.mxu0 0.0
    %4835 = vmatpush1.msra.mxu0 0.0
    %4836 = vmatprep.subr.mxu0 0.0
    %4837 = vmatpush1.msra.mxu0 0.0
    %4838 = vmatprep.subr.mxu0 0.0
    %4839 = vmatpush1.msra.mxu0 0.0
    %4840 = vmatprep.subr.mxu0 0.0
    %4841 = vmatpush1.msra.mxu0 0.0
    %4842 = vmatprep.subr.mxu0 0.0
    %4843 = vmatpush1.msra.mxu0 0.0
    %4844 = vmatprep.subr.mxu0 0.0
    %4845 = vmatpush1.msra.mxu0 0.0
    %4846 = vmatprep.mubr.f32.mxu0 0.0
    %4847 = vmatmul.mubr.f32.gmra.mrb[0].mxu0 %v4780
    %v4848 = vpop.f32.mrb[0].mxu0
    %v4849 = vadd.f32 0.0, %v4848
    %v4850 = vpop.f32.mrb[0].mxu0
    %4851 = vdwg.mxu0
    %v4853 = vsel %vm2407, %v4696, 0
    %4855 = vmatprep.subr.mxu0 0.0
    %4856 = vmatpush1.msra.mxu0 %v4699
    %4857 = vmatprep.subr.mxu0 0.0
    %4858 = vmatpush1.msra.mxu0 %v4700
    %4859 = vmatprep.subr.mxu0 0.0
    %4860 = vmatpush1.msra.mxu0 0.0
    %4861 = vmatprep.subr.mxu0 0.0
    %4862 = vmatpush1.msra.mxu0 0.0
    %4863 = vmatprep.subr.mxu0 0.0
    %4864 = vmatpush1.msra.mxu0 0.0
    %4865 = vmatprep.subr.mxu0 0.0
    %4866 = vmatpush1.msra.mxu0 0.0
    %4867 = vmatprep.subr.mxu0 0.0
    %4868 = vmatpush1.msra.mxu0 0.0
    %4869 = vmatprep.subr.mxu0 0.0
    %4870 = vmatpush1.msra.mxu0 0.0
    %4871 = vmatprep.subr.mxu0 0.0
    %4872 = vmatpush1.msra.mxu0 0.0
    %4873 = vmatprep.subr.mxu0 0.0
    %4874 = vmatpush1.msra.mxu0 0.0
    %4875 = vmatprep.subr.mxu0 0.0
    %4876 = vmatpush1.msra.mxu0 0.0
    %4877 = vmatprep.subr.mxu0 0.0
    %4878 = vmatpush1.msra.mxu0 0.0
    %4879 = vmatprep.subr.mxu0 0.0
    %4880 = vmatpush1.msra.mxu0 0.0
    %4881 = vmatprep.subr.mxu0 0.0
    %4882 = vmatpush1.msra.mxu0 0.0
    %4883 = vmatprep.subr.mxu0 0.0
    %4884 = vmatpush1.msra.mxu0 0.0
    %4885 = vmatprep.subr.mxu0 0.0
    %4886 = vmatpush1.msra.mxu0 0.0
    %4887 = vmatprep.subr.mxu0 0.0
    %4888 = vmatpush1.msra.mxu0 0.0
    %4889 = vmatprep.subr.mxu0 0.0
    %4890 = vmatpush1.msra.mxu0 0.0
    %4891 = vmatprep.subr.mxu0 0.0
    %4892 = vmatpush1.msra.mxu0 0.0
    %4893 = vmatprep.subr.mxu0 0.0
    %4894 = vmatpush1.msra.mxu0 0.0
    %4895 = vmatprep.subr.mxu0 0.0
    %4896 = vmatpush1.msra.mxu0 0.0
    %4897 = vmatprep.subr.mxu0 0.0
    %4898 = vmatpush1.msra.mxu0 0.0
    %4899 = vmatprep.subr.mxu0 0.0
    %4900 = vmatpush1.msra.mxu0 0.0
    %4901 = vmatprep.subr.mxu0 0.0
    %4902 = vmatpush1.msra.mxu0 0.0
    %4903 = vmatprep.subr.mxu0 0.0
    %4904 = vmatpush1.msra.mxu0 0.0
    %4905 = vmatprep.subr.mxu0 0.0
    %4906 = vmatpush1.msra.mxu0 0.0
    %4907 = vmatprep.subr.mxu0 0.0
    %4908 = vmatpush1.msra.mxu0 0.0
    %4909 = vmatprep.subr.mxu0 0.0
    %4910 = vmatpush1.msra.mxu0 0.0
    %4911 = vmatprep.subr.mxu0 0.0
    %4912 = vmatpush1.msra.mxu0 0.0
    %4913 = vmatprep.subr.mxu0 0.0
    %4914 = vmatpush1.msra.mxu0 0.0
    %4915 = vmatprep.subr.mxu0 0.0
    %4916 = vmatpush1.msra.mxu0 0.0
    %4917 = vmatprep.subr.mxu0 0.0
    %4918 = vmatpush1.msra.mxu0 0.0
    %4919 = vmatprep.mubr.f32.mxu0 0.0
    %4920 = vmatmul.mubr.f32.gmra.mrb[0].mxu0 %v4853
    %v4921 = vpop.f32.mrb[0].mxu0
    %v4922 = vadd.f32 %v4849, %v4921
    %v4923 = vpop.f32.mrb[0].mxu0
    %4924 = vdwg.mxu0
    %s4925 = scalar_lea.vmem %s47, 16
    %v4926 = vld [vmem:[%s4925] sm:$0xff]
    %v4928 = vsel %vm2407, %v4926, 0
    %4930 = vmatprep.subr.mxu0 0.0
    %4931 = vmatpush1.msra.mxu0 %v4467
    %4932 = vmatprep.subr.mxu0 0.0
    %4933 = vmatpush1.msra.mxu0 %v4468
    %4934 = vmatprep.subr.mxu0 0.0
    %4935 = vmatpush1.msra.mxu0 0.0
    %4936 = vmatprep.subr.mxu0 0.0
    %4937 = vmatpush1.msra.mxu0 0.0
    %4938 = vmatprep.subr.mxu0 0.0
    %4939 = vmatpush1.msra.mxu0 0.0
    %4940 = vmatprep.subr.mxu0 0.0
    %4941 = vmatpush1.msra.mxu0 0.0
    %4942 = vmatprep.subr.mxu0 0.0
    %4943 = vmatpush1.msra.mxu0 0.0
    %4944 = vmatprep.subr.mxu0 0.0
    %4945 = vmatpush1.msra.mxu0 0.0
    %4946 = vmatprep.subr.mxu0 0.0
    %4947 = vmatpush1.msra.mxu0 0.0
    %4948 = vmatprep.subr.mxu0 0.0
    %4949 = vmatpush1.msra.mxu0 0.0
    %4950 = vmatprep.subr.mxu0 0.0
    %4951 = vmatpush1.msra.mxu0 0.0
    %4952 = vmatprep.subr.mxu0 0.0
    %4953 = vmatpush1.msra.mxu0 0.0
    %4954 = vmatprep.subr.mxu0 0.0
    %4955 = vmatpush1.msra.mxu0 0.0
    %4956 = vmatprep.subr.mxu0 0.0
    %4957 = vmatpush1.msra.mxu0 0.0
    %4958 = vmatprep.subr.mxu0 0.0
    %4959 = vmatpush1.msra.mxu0 0.0
    %4960 = vmatprep.subr.mxu0 0.0
    %4961 = vmatpush1.msra.mxu0 0.0
    %4962 = vmatprep.subr.mxu0 0.0
    %4963 = vmatpush1.msra.mxu0 0.0
    %4964 = vmatprep.subr.mxu0 0.0
    %4965 = vmatpush1.msra.mxu0 0.0
    %4966 = vmatprep.subr.mxu0 0.0
    %4967 = vmatpush1.msra.mxu0 0.0
    %4968 = vmatprep.subr.mxu0 0.0
    %4969 = vmatpush1.msra.mxu0 0.0
    %4970 = vmatprep.subr.mxu0 0.0
    %4971 = vmatpush1.msra.mxu0 0.0
    %4972 = vmatprep.subr.mxu0 0.0
    %4973 = vmatpush1.msra.mxu0 0.0
    %4974 = vmatprep.subr.mxu0 0.0
    %4975 = vmatpush1.msra.mxu0 0.0
    %4976 = vmatprep.subr.mxu0 0.0
    %4977 = vmatpush1.msra.mxu0 0.0
    %4978 = vmatprep.subr.mxu0 0.0
    %4979 = vmatpush1.msra.mxu0 0.0
    %4980 = vmatprep.subr.mxu0 0.0
    %4981 = vmatpush1.msra.mxu0 0.0
    %4982 = vmatprep.subr.mxu0 0.0
    %4983 = vmatpush1.msra.mxu0 0.0
    %4984 = vmatprep.subr.mxu0 0.0
    %4985 = vmatpush1.msra.mxu0 0.0
    %4986 = vmatprep.subr.mxu0 0.0
    %4987 = vmatpush1.msra.mxu0 0.0
    %4988 = vmatprep.subr.mxu0 0.0
    %4989 = vmatpush1.msra.mxu0 0.0
    %4990 = vmatprep.subr.mxu0 0.0
    %4991 = vmatpush1.msra.mxu0 0.0
    %4992 = vmatprep.subr.mxu0 0.0
    %4993 = vmatpush1.msra.mxu0 0.0
    %4994 = vmatprep.mubr.f32.mxu0 0.0
    %4995 = vmatmul.mubr.f32.gmra.mrb[0].mxu0 %v4928
    %v4996 = vpop.f32.mrb[0].mxu0
    %v4997 = vadd.f32 0.0, %v4996
    %v4998 = vpop.f32.mrb[0].mxu0
    %4999 = vdwg.mxu0
    %s5000 = scalar_lea.vmem %s49, 32
    %v5001 = vld [vmem:[%s5000] sm:$0xff]
    %v5002 = vld [vmem:[%s5000 + $0x8] sm:$0xff]
    %v5004 = vsel %vm2407, %v4997, 0
    %5006 = vmatprep.subr.mxu0 0.0
    %5007 = vmatpush1.msra.mxu0 %v5001
    %5008 = vmatprep.subr.mxu0 0.0
    %5009 = vmatpush1.msra.mxu0 %v5002
    %5010 = vmatprep.subr.mxu0 0.0
    %5011 = vmatpush1.msra.mxu0 0.0
    %5012 = vmatprep.subr.mxu0 0.0
    %5013 = vmatpush1.msra.mxu0 0.0
    %5014 = vmatprep.subr.mxu0 0.0
    %5015 = vmatpush1.msra.mxu0 0.0
    %5016 = vmatprep.subr.mxu0 0.0
    %5017 = vmatpush1.msra.mxu0 0.0
    %5018 = vmatprep.subr.mxu0 0.0
    %5019 = vmatpush1.msra.mxu0 0.0
    %5020 = vmatprep.subr.mxu0 0.0
    %5021 = vmatpush1.msra.mxu0 0.0
    %5022 = vmatprep.subr.mxu0 0.0
    %5023 = vmatpush1.msra.mxu0 0.0
    %5024 = vmatprep.subr.mxu0 0.0
    %5025 = vmatpush1.msra.mxu0 0.0
    %5026 = vmatprep.subr.mxu0 0.0
    %5027 = vmatpush1.msra.mxu0 0.0
    %5028 = vmatprep.subr.mxu0 0.0
    %5029 = vmatpush1.msra.mxu0 0.0
    %5030 = vmatprep.subr.mxu0 0.0
    %5031 = vmatpush1.msra.mxu0 0.0
    %5032 = vmatprep.subr.mxu0 0.0
    %5033 = vmatpush1.msra.mxu0 0.0
    %5034 = vmatprep.subr.mxu0 0.0
    %5035 = vmatpush1.msra.mxu0 0.0
    %5036 = vmatprep.subr.mxu0 0.0
    %5037 = vmatpush1.msra.mxu0 0.0
    %5038 = vmatprep.subr.mxu0 0.0
    %5039 = vmatpush1.msra.mxu0 0.0
    %5040 = vmatprep.subr.mxu0 0.0
    %5041 = vmatpush1.msra.mxu0 0.0
    %5042 = vmatprep.subr.mxu0 0.0
    %5043 = vmatpush1.msra.mxu0 0.0
    %5044 = vmatprep.subr.mxu0 0.0
    %5045 = vmatpush1.msra.mxu0 0.0
    %5046 = vmatprep.subr.mxu0 0.0
    %5047 = vmatpush1.msra.mxu0 0.0
    %5048 = vmatprep.subr.mxu0 0.0
    %5049 = vmatpush1.msra.mxu0 0.0
    %5050 = vmatprep.subr.mxu0 0.0
    %5051 = vmatpush1.msra.mxu0 0.0
    %5052 = vmatprep.subr.mxu0 0.0
    %5053 = vmatpush1.msra.mxu0 0.0
    %5054 = vmatprep.subr.mxu0 0.0
    %5055 = vmatpush1.msra.mxu0 0.0
    %5056 = vmatprep.subr.mxu0 0.0
    %5057 = vmatpush1.msra.mxu0 0.0
    %5058 = vmatprep.subr.mxu0 0.0
    %5059 = vmatpush1.msra.mxu0 0.0
    %5060 = vmatprep.subr.mxu0 0.0
    %5061 = vmatpush1.msra.mxu0 0.0
    %5062 = vmatprep.subr.mxu0 0.0
    %5063 = vmatpush1.msra.mxu0 0.0
    %5064 = vmatprep.subr.mxu0 0.0
    %5065 = vmatpush1.msra.mxu0 0.0
    %5066 = vmatprep.subr.mxu0 0.0
    %5067 = vmatpush1.msra.mxu0 0.0
    %5068 = vmatprep.subr.mxu0 0.0
    %5069 = vmatpush1.msra.mxu0 0.0
    %5070 = vmatprep.mubr.f32.mxu0 0.0
    %5071 = vmatmul.mubr.f32.gmra.mrb[0].mxu0 %v5004
    %v5072 = vpop.f32.mrb[0].mxu0
    %v5073 = vadd.f32 0.0, %v5072
    %v5074 = vpop.f32.mrb[0].mxu0
    %5075 = vdwg.mxu0
    %v5076 = vadd.f32 %v4922, %v5073
    %v5077 = vld [vmem:[%s51] sm:$0x1]
    %v5079 = vlaneseq
    %v5080 = vshrl.u32 %v5079, 7
    %v5081 = vsub.s32 0, %v5080
    %v5082 = vrot.slane %v5077, %v5081
    %v5084 = vadd.f32 %v5076, %v5082
    %v5085 = vmax.f32 %v5084, 0.0
    %v5086 = vld [vmem:[%s53] sm:$0xff]
    %vm5087 = vcmask 64512
    %v5089 = vsel %vm5087, %v5086, 0
    %5091 = vmatprep.subr.mxu0 0.0
    %5092 = vmatpush1.msra.mxu0 %v5085
    %5093 = vmatprep.subr.mxu0 0.0
    %5094 = vmatpush1.msra.mxu0 0.0
    %5095 = vmatprep.subr.mxu0 0.0
    %5096 = vmatpush1.msra.mxu0 0.0
    %5097 = vmatprep.subr.mxu0 0.0
    %5098 = vmatpush1.msra.mxu0 0.0
    %5099 = vmatprep.subr.mxu0 0.0
    %5100 = vmatpush1.msra.mxu0 0.0
    %5101 = vmatprep.subr.mxu0 0.0
    %5102 = vmatpush1.msra.mxu0 0.0
    %5103 = vmatprep.subr.mxu0 0.0
    %5104 = vmatpush1.msra.mxu0 0.0
    %5105 = vmatprep.subr.mxu0 0.0
    %5106 = vmatpush1.msra.mxu0 0.0
    %5107 = vmatprep.subr.mxu0 0.0
    %5108 = vmatpush1.msra.mxu0 0.0
    %5109 = vmatprep.subr.mxu0 0.0
    %5110 = vmatpush1.msra.mxu0 0.0
    %5111 = vmatprep.subr.mxu0 0.0
    %5112 = vmatpush1.msra.mxu0 0.0
    %5113 = vmatprep.subr.mxu0 0.0
    %5114 = vmatpush1.msra.mxu0 0.0
    %5115 = vmatprep.subr.mxu0 0.0
    %5116 = vmatpush1.msra.mxu0 0.0
    %5117 = vmatprep.subr.mxu0 0.0
    %5118 = vmatpush1.msra.mxu0 0.0
    %5119 = vmatprep.subr.mxu0 0.0
    %5120 = vmatpush1.msra.mxu0 0.0
    %5121 = vmatprep.subr.mxu0 0.0
    %5122 = vmatpush1.msra.mxu0 0.0
    %5123 = vmatprep.subr.mxu0 0.0
    %5124 = vmatpush1.msra.mxu0 0.0
    %5125 = vmatprep.subr.mxu0 0.0
    %5126 = vmatpush1.msra.mxu0 0.0
    %5127 = vmatprep.subr.mxu0 0.0
    %5128 = vmatpush1.msra.mxu0 0.0
    %5129 = vmatprep.subr.mxu0 0.0
    %5130 = vmatpush1.msra.mxu0 0.0
    %5131 = vmatprep.subr.mxu0 0.0
    %5132 = vmatpush1.msra.mxu0 0.0
    %5133 = vmatprep.subr.mxu0 0.0
    %5134 = vmatpush1.msra.mxu0 0.0
    %5135 = vmatprep.subr.mxu0 0.0
    %5136 = vmatpush1.msra.mxu0 0.0
    %5137 = vmatprep.subr.mxu0 0.0
    %5138 = vmatpush1.msra.mxu0 0.0
    %5139 = vmatprep.subr.mxu0 0.0
    %5140 = vmatpush1.msra.mxu0 0.0
    %5141 = vmatprep.subr.mxu0 0.0
    %5142 = vmatpush1.msra.mxu0 0.0
    %5143 = vmatprep.subr.mxu0 0.0
    %5144 = vmatpush1.msra.mxu0 0.0
    %5145 = vmatprep.subr.mxu0 0.0
    %5146 = vmatpush1.msra.mxu0 0.0
    %5147 = vmatprep.subr.mxu0 0.0
    %5148 = vmatpush1.msra.mxu0 0.0
    %5149 = vmatprep.subr.mxu0 0.0
    %5150 = vmatpush1.msra.mxu0 0.0
    %5151 = vmatprep.subr.mxu0 0.0
    %5152 = vmatpush1.msra.mxu0 0.0
    %5153 = vmatprep.subr.mxu0 0.0
    %5154 = vmatpush1.msra.mxu0 0.0
    %5155 = vmatprep.mubr.f32.mxu0 0.0
    %5156 = vmatmul.mubr.f32.gmra.mrb[0].mxu0 %v5089
    %v5157 = vpop.f32.mrb[0].mxu0
    %v5158 = vadd.f32 0.0, %v5157
    %v5159 = vpop.f32.mrb[0].mxu0
    %5160 = vdwg.mxu0
    %v5161 = vld [vmem:[%s55] sm:$0xff]
    %v5162 = vld [vmem:[%s55 + $0x8] sm:$0xff]
    %v5163 = vld [vmem:[%s55 + $0x10] sm:$0xff]
    %v5164 = vld [vmem:[%s55 + $0x18] sm:$0xff]
    %s5165 = scalar_lea.vmem %s55, 32
    %v5166 = vld [vmem:[%s5165] sm:$0xff]
    %v5167 = vld [vmem:[%s5165 + $0x8] sm:$0xff]
    %v5168 = vld [vmem:[%s5165 + $0x10] sm:$0xff]
    %v5169 = vld [vmem:[%s5165 + $0x18] sm:$0xff]
    %v5171 = vsel %vm2304, %v5085, 0
    %5173 = vmatprep.subr.mxu0 0.0
    %5174 = vmatpush1.msra.mxu0 %v5166
    %5175 = vmatprep.subr.mxu0 0.0
    %5176 = vmatpush1.msra.mxu0 %v5167
    %5177 = vmatprep.subr.mxu0 0.0
    %5178 = vmatpush1.msra.mxu0 %v5168
    %5179 = vmatprep.subr.mxu0 0.0
    %5180 = vmatpush1.msra.mxu0 %v5169
    %5181 = vmatprep.subr.mxu0 0.0
    %5182 = vmatpush1.msra.mxu0 0.0
    %5183 = vmatprep.subr.mxu0 0.0
    %5184 = vmatpush1.msra.mxu0 0.0
    %5185 = vmatprep.subr.mxu0 0.0
    %5186 = vmatpush1.msra.mxu0 0.0
    %5187 = vmatprep.subr.mxu0 0.0
    %5188 = vmatpush1.msra.mxu0 0.0
    %5189 = vmatprep.subr.mxu0 0.0
    %5190 = vmatpush1.msra.mxu0 0.0
    %5191 = vmatprep.subr.mxu0 0.0
    %5192 = vmatpush1.msra.mxu0 0.0
    %5193 = vmatprep.subr.mxu0 0.0
    %5194 = vmatpush1.msra.mxu0 0.0
    %5195 = vmatprep.subr.mxu0 0.0
    %5196 = vmatpush1.msra.mxu0 0.0
    %5197 = vmatprep.subr.mxu0 0.0
    %5198 = vmatpush1.msra.mxu0 0.0
    %5199 = vmatprep.subr.mxu0 0.0
    %5200 = vmatpush1.msra.mxu0 0.0
    %5201 = vmatprep.subr.mxu0 0.0
    %5202 = vmatpush1.msra.mxu0 0.0
    %5203 = vmatprep.subr.mxu0 0.0
    %5204 = vmatpush1.msra.mxu0 0.0
    %5205 = vmatprep.subr.mxu0 0.0
    %5206 = vmatpush1.msra.mxu0 0.0
    %5207 = vmatprep.subr.mxu0 0.0
    %5208 = vmatpush1.msra.mxu0 0.0
    %5209 = vmatprep.subr.mxu0 0.0
    %5210 = vmatpush1.msra.mxu0 0.0
    %5211 = vmatprep.subr.mxu0 0.0
    %5212 = vmatpush1.msra.mxu0 0.0
    %5213 = vmatprep.subr.mxu0 0.0
    %5214 = vmatpush1.msra.mxu0 0.0
    %5215 = vmatprep.subr.mxu0 0.0
    %5216 = vmatpush1.msra.mxu0 0.0
    %5217 = vmatprep.subr.mxu0 0.0
    %5218 = vmatpush1.msra.mxu0 0.0
    %5219 = vmatprep.subr.mxu0 0.0
    %5220 = vmatpush1.msra.mxu0 0.0
    %5221 = vmatprep.subr.mxu0 0.0
    %5222 = vmatpush1.msra.mxu0 0.0
    %5223 = vmatprep.subr.mxu0 0.0
    %5224 = vmatpush1.msra.mxu0 0.0
    %5225 = vmatprep.subr.mxu0 0.0
    %5226 = vmatpush1.msra.mxu0 0.0
    %5227 = vmatprep.subr.mxu0 0.0
    %5228 = vmatpush1.msra.mxu0 0.0
    %5229 = vmatprep.subr.mxu0 0.0
    %5230 = vmatpush1.msra.mxu0 0.0
    %5231 = vmatprep.subr.mxu0 0.0
    %5232 = vmatpush1.msra.mxu0 0.0
    %5233 = vmatprep.subr.mxu0 0.0
    %5234 = vmatpush1.msra.mxu0 0.0
    %5235 = vmatprep.subr.mxu0 0.0
    %5236 = vmatpush1.msra.mxu0 0.0
    %5237 = vmatprep.mubr.f32.mxu0 0.0
    %5238 = vmatmul.mubr.f32.gmra.mrb[0].mxu0 %v5171
    %v5239 = vpop.f32.mrb[0].mxu0
    %v5240 = vadd.f32 0.0, %v5239
    %v5241 = vpop.f32.mrb[0].mxu0
    %5242 = vdwg.mxu0
    %v5244 = vsel %vm2304, %v5158, 0
    %5246 = vmatprep.subr.mxu0 0.0
    %5247 = vmatpush1.msra.mxu0 %v5161
    %5248 = vmatprep.subr.mxu0 0.0
    %5249 = vmatpush1.msra.mxu0 %v5162
    %5250 = vmatprep.subr.mxu0 0.0
    %5251 = vmatpush1.msra.mxu0 %v5163
    %5252 = vmatprep.subr.mxu0 0.0
    %5253 = vmatpush1.msra.mxu0 %v5164
    %5254 = vmatprep.subr.mxu0 0.0
    %5255 = vmatpush1.msra.mxu0 0.0
    %5256 = vmatprep.subr.mxu0 0.0
    %5257 = vmatpush1.msra.mxu0 0.0
    %5258 = vmatprep.subr.mxu0 0.0
    %5259 = vmatpush1.msra.mxu0 0.0
    %5260 = vmatprep.subr.mxu0 0.0
    %5261 = vmatpush1.msra.mxu0 0.0
    %5262 = vmatprep.subr.mxu0 0.0
    %5263 = vmatpush1.msra.mxu0 0.0
    %5264 = vmatprep.subr.mxu0 0.0
    %5265 = vmatpush1.msra.mxu0 0.0
    %5266 = vmatprep.subr.mxu0 0.0
    %5267 = vmatpush1.msra.mxu0 0.0
    %5268 = vmatprep.subr.mxu0 0.0
    %5269 = vmatpush1.msra.mxu0 0.0
    %5270 = vmatprep.subr.mxu0 0.0
    %5271 = vmatpush1.msra.mxu0 0.0
    %5272 = vmatprep.subr.mxu0 0.0
    %5273 = vmatpush1.msra.mxu0 0.0
    %5274 = vmatprep.subr.mxu0 0.0
    %5275 = vmatpush1.msra.mxu0 0.0
    %5276 = vmatprep.subr.mxu0 0.0
    %5277 = vmatpush1.msra.mxu0 0.0
    %5278 = vmatprep.subr.mxu0 0.0
    %5279 = vmatpush1.msra.mxu0 0.0
    %5280 = vmatprep.subr.mxu0 0.0
    %5281 = vmatpush1.msra.mxu0 0.0
    %5282 = vmatprep.subr.mxu0 0.0
    %5283 = vmatpush1.msra.mxu0 0.0
    %5284 = vmatprep.subr.mxu0 0.0
    %5285 = vmatpush1.msra.mxu0 0.0
    %5286 = vmatprep.subr.mxu0 0.0
    %5287 = vmatpush1.msra.mxu0 0.0
    %5288 = vmatprep.subr.mxu0 0.0
    %5289 = vmatpush1.msra.mxu0 0.0
    %5290 = vmatprep.subr.mxu0 0.0
    %5291 = vmatpush1.msra.mxu0 0.0
    %5292 = vmatprep.subr.mxu0 0.0
    %5293 = vmatpush1.msra.mxu0 0.0
    %5294 = vmatprep.subr.mxu0 0.0
    %5295 = vmatpush1.msra.mxu0 0.0
    %5296 = vmatprep.subr.mxu0 0.0
    %5297 = vmatpush1.msra.mxu0 0.0
    %5298 = vmatprep.subr.mxu0 0.0
    %5299 = vmatpush1.msra.mxu0 0.0
    %5300 = vmatprep.subr.mxu0 0.0
    %5301 = vmatpush1.msra.mxu0 0.0
    %5302 = vmatprep.subr.mxu0 0.0
    %5303 = vmatpush1.msra.mxu0 0.0
    %5304 = vmatprep.subr.mxu0 0.0
    %5305 = vmatpush1.msra.mxu0 0.0
    %5306 = vmatprep.subr.mxu0 0.0
    %5307 = vmatpush1.msra.mxu0 0.0
    %5308 = vmatprep.subr.mxu0 0.0
    %5309 = vmatpush1.msra.mxu0 0.0
    %5310 = vmatprep.mubr.f32.mxu0 0.0
    %5311 = vmatmul.mubr.f32.gmra.mrb[0].mxu0 %v5244
    %v5312 = vpop.f32.mrb[0].mxu0
    %v5313 = vadd.f32 %v5240, %v5312
    %v5314 = vpop.f32.mrb[0].mxu0
    %5315 = vdwg.mxu0
    %s5316 = scalar_lea.vmem %s53, 16
    %v5317 = vld [vmem:[%s5316] sm:$0xff]
    %v5319 = vsel %vm5087, %v5317, 0
    %5321 = vmatprep.subr.mxu0 0.0
    %5322 = vmatpush1.msra.mxu0 %v5085
    %5323 = vmatprep.subr.mxu0 0.0
    %5324 = vmatpush1.msra.mxu0 0.0
    %5325 = vmatprep.subr.mxu0 0.0
    %5326 = vmatpush1.msra.mxu0 0.0
    %5327 = vmatprep.subr.mxu0 0.0
    %5328 = vmatpush1.msra.mxu0 0.0
    %5329 = vmatprep.subr.mxu0 0.0
    %5330 = vmatpush1.msra.mxu0 0.0
    %5331 = vmatprep.subr.mxu0 0.0
    %5332 = vmatpush1.msra.mxu0 0.0
    %5333 = vmatprep.subr.mxu0 0.0
    %5334 = vmatpush1.msra.mxu0 0.0
    %5335 = vmatprep.subr.mxu0 0.0
    %5336 = vmatpush1.msra.mxu0 0.0
    %5337 = vmatprep.subr.mxu0 0.0
    %5338 = vmatpush1.msra.mxu0 0.0
    %5339 = vmatprep.subr.mxu0 0.0
    %5340 = vmatpush1.msra.mxu0 0.0
    %5341 = vmatprep.subr.mxu0 0.0
    %5342 = vmatpush1.msra.mxu0 0.0
    %5343 = vmatprep.subr.mxu0 0.0
    %5344 = vmatpush1.msra.mxu0 0.0
    %5345 = vmatprep.subr.mxu0 0.0
    %5346 = vmatpush1.msra.mxu0 0.0
    %5347 = vmatprep.subr.mxu0 0.0
    %5348 = vmatpush1.msra.mxu0 0.0
    %5349 = vmatprep.subr.mxu0 0.0
    %5350 = vmatpush1.msra.mxu0 0.0
    %5351 = vmatprep.subr.mxu0 0.0
    %5352 = vmatpush1.msra.mxu0 0.0
    %5353 = vmatprep.subr.mxu0 0.0
    %5354 = vmatpush1.msra.mxu0 0.0
    %5355 = vmatprep.subr.mxu0 0.0
    %5356 = vmatpush1.msra.mxu0 0.0
    %5357 = vmatprep.subr.mxu0 0.0
    %5358 = vmatpush1.msra.mxu0 0.0
    %5359 = vmatprep.subr.mxu0 0.0
    %5360 = vmatpush1.msra.mxu0 0.0
    %5361 = vmatprep.subr.mxu0 0.0
    %5362 = vmatpush1.msra.mxu0 0.0
    %5363 = vmatprep.subr.mxu0 0.0
    %5364 = vmatpush1.msra.mxu0 0.0
    %5365 = vmatprep.subr.mxu0 0.0
    %5366 = vmatpush1.msra.mxu0 0.0
    %5367 = vmatprep.subr.mxu0 0.0
    %5368 = vmatpush1.msra.mxu0 0.0
    %5369 = vmatprep.subr.mxu0 0.0
    %5370 = vmatpush1.msra.mxu0 0.0
    %5371 = vmatprep.subr.mxu0 0.0
    %5372 = vmatpush1.msra.mxu0 0.0
    %5373 = vmatprep.subr.mxu0 0.0
    %5374 = vmatpush1.msra.mxu0 0.0
    %5375 = vmatprep.subr.mxu0 0.0
    %5376 = vmatpush1.msra.mxu0 0.0
    %5377 = vmatprep.subr.mxu0 0.0
    %5378 = vmatpush1.msra.mxu0 0.0
    %5379 = vmatprep.subr.mxu0 0.0
    %5380 = vmatpush1.msra.mxu0 0.0
    %5381 = vmatprep.subr.mxu0 0.0
    %5382 = vmatpush1.msra.mxu0 0.0
    %5383 = vmatprep.subr.mxu0 0.0
    %5384 = vmatpush1.msra.mxu0 0.0
    %5385 = vmatprep.mubr.f32.mxu0 0.0
    %5386 = vmatmul.mubr.f32.gmra.mrb[0].mxu0 %v5319
    %v5387 = vpop.f32.mrb[0].mxu0
    %v5388 = vadd.f32 0.0, %v5387
    %v5389 = vpop.f32.mrb[0].mxu0
    %5390 = vdwg.mxu0
    %s5391 = scalar_lea.vmem %s55, 64
    %v5392 = vld [vmem:[%s5391] sm:$0xff]
    %v5393 = vld [vmem:[%s5391 + $0x8] sm:$0xff]
    %v5394 = vld [vmem:[%s5391 + $0x10] sm:$0xff]
    %v5395 = vld [vmem:[%s5391 + $0x18] sm:$0xff]
    %v5397 = vsel %vm2304, %v5388, 0
    %5399 = vmatprep.subr.mxu0 0.0
    %5400 = vmatpush1.msra.mxu0 %v5392
    %5401 = vmatprep.subr.mxu0 0.0
    %5402 = vmatpush1.msra.mxu0 %v5393
    %5403 = vmatprep.subr.mxu0 0.0
    %5404 = vmatpush1.msra.mxu0 %v5394
    %5405 = vmatprep.subr.mxu0 0.0
    %5406 = vmatpush1.msra.mxu0 %v5395
    %5407 = vmatprep.subr.mxu0 0.0
    %5408 = vmatpush1.msra.mxu0 0.0
    %5409 = vmatprep.subr.mxu0 0.0
    %5410 = vmatpush1.msra.mxu0 0.0
    %5411 = vmatprep.subr.mxu0 0.0
    %5412 = vmatpush1.msra.mxu0 0.0
    %5413 = vmatprep.subr.mxu0 0.0
    %5414 = vmatpush1.msra.mxu0 0.0
    %5415 = vmatprep.subr.mxu0 0.0
    %5416 = vmatpush1.msra.mxu0 0.0
    %5417 = vmatprep.subr.mxu0 0.0
    %5418 = vmatpush1.msra.mxu0 0.0
    %5419 = vmatprep.subr.mxu0 0.0
    %5420 = vmatpush1.msra.mxu0 0.0
    %5421 = vmatprep.subr.mxu0 0.0
    %5422 = vmatpush1.msra.mxu0 0.0
    %5423 = vmatprep.subr.mxu0 0.0
    %5424 = vmatpush1.msra.mxu0 0.0
    %5425 = vmatprep.subr.mxu0 0.0
    %5426 = vmatpush1.msra.mxu0 0.0
    %5427 = vmatprep.subr.mxu0 0.0
    %5428 = vmatpush1.msra.mxu0 0.0
    %5429 = vmatprep.subr.mxu0 0.0
    %5430 = vmatpush1.msra.mxu0 0.0
    %5431 = vmatprep.subr.mxu0 0.0
    %5432 = vmatpush1.msra.mxu0 0.0
    %5433 = vmatprep.subr.mxu0 0.0
    %5434 = vmatpush1.msra.mxu0 0.0
    %5435 = vmatprep.subr.mxu0 0.0
    %5436 = vmatpush1.msra.mxu0 0.0
    %5437 = vmatprep.subr.mxu0 0.0
    %5438 = vmatpush1.msra.mxu0 0.0
    %5439 = vmatprep.subr.mxu0 0.0
    %5440 = vmatpush1.msra.mxu0 0.0
    %5441 = vmatprep.subr.mxu0 0.0
    %5442 = vmatpush1.msra.mxu0 0.0
    %5443 = vmatprep.subr.mxu0 0.0
    %5444 = vmatpush1.msra.mxu0 0.0
    %5445 = vmatprep.subr.mxu0 0.0
    %5446 = vmatpush1.msra.mxu0 0.0
    %5447 = vmatprep.subr.mxu0 0.0
    %5448 = vmatpush1.msra.mxu0 0.0
    %5449 = vmatprep.subr.mxu0 0.0
    %5450 = vmatpush1.msra.mxu0 0.0
    %5451 = vmatprep.subr.mxu0 0.0
    %5452 = vmatpush1.msra.mxu0 0.0
    %5453 = vmatprep.subr.mxu0 0.0
    %5454 = vmatpush1.msra.mxu0 0.0
    %5455 = vmatprep.subr.mxu0 0.0
    %5456 = vmatpush1.msra.mxu0 0.0
    %5457 = vmatprep.subr.mxu0 0.0
    %5458 = vmatpush1.msra.mxu0 0.0
    %5459 = vmatprep.subr.mxu0 0.0
    %5460 = vmatpush1.msra.mxu0 0.0
    %5461 = vmatprep.subr.mxu0 0.0
    %5462 = vmatpush1.msra.mxu0 0.0
    %5463 = vmatprep.mubr.f32.mxu0 0.0
    %5464 = vmatmul.mubr.f32.gmra.mrb[0].mxu0 %v5397
    %v5465 = vpop.f32.mrb[0].mxu0
    %v5466 = vadd.f32 0.0, %v5465
    %v5467 = vpop.f32.mrb[0].mxu0
    %5468 = vdwg.mxu0
    %v5469 = vadd.f32 %v5313, %v5466
    %v5470 = vld [vmem:[%s57] sm:$0x1]
    %v5472 = vlaneseq
    %v5473 = vshrl.u32 %v5472, 7
    %v5474 = vsub.s32 0, %v5473
    %v5475 = vrot.slane %v5470, %v5474
    %v5477 = vadd.f32 %v5469, %v5475
    %v5478 = vadd.f32 %v5477, %v4622
    %v5479 = vmax.f32 %v5478, 0.0
    %v5480 = vld [vmem:[%s59] sm:$0xf]
    %v5482 = vsel %vm5087, %v5480, 0
    %5484 = vmatprep.subr.mxu0 0.0
    %5485 = vmatpush1.msra.mxu0 %v5479
    %5486 = vmatprep.subr.mxu0 0.0
    %5487 = vmatpush1.msra.mxu0 0.0
    %5488 = vmatprep.subr.mxu0 0.0
    %5489 = vmatpush1.msra.mxu0 0.0
    %5490 = vmatprep.subr.mxu0 0.0
    %5491 = vmatpush1.msra.mxu0 0.0
    %5492 = vmatprep.subr.mxu0 0.0
    %5493 = vmatpush1.msra.mxu0 0.0
    %5494 = vmatprep.subr.mxu0 0.0
    %5495 = vmatpush1.msra.mxu0 0.0
    %5496 = vmatprep.subr.mxu0 0.0
    %5497 = vmatpush1.msra.mxu0 0.0
    %5498 = vmatprep.subr.mxu0 0.0
    %5499 = vmatpush1.msra.mxu0 0.0
    %5500 = vmatprep.subr.mxu0 0.0
    %5501 = vmatpush1.msra.mxu0 0.0
    %5502 = vmatprep.subr.mxu0 0.0
    %5503 = vmatpush1.msra.mxu0 0.0
    %5504 = vmatprep.subr.mxu0 0.0
    %5505 = vmatpush1.msra.mxu0 0.0
    %5506 = vmatprep.subr.mxu0 0.0
    %5507 = vmatpush1.msra.mxu0 0.0
    %5508 = vmatprep.subr.mxu0 0.0
    %5509 = vmatpush1.msra.mxu0 0.0
    %5510 = vmatprep.subr.mxu0 0.0
    %5511 = vmatpush1.msra.mxu0 0.0
    %5512 = vmatprep.subr.mxu0 0.0
    %5513 = vmatpush1.msra.mxu0 0.0
    %5514 = vmatprep.subr.mxu0 0.0
    %5515 = vmatpush1.msra.mxu0 0.0
    %5516 = vmatprep.subr.mxu0 0.0
    %5517 = vmatpush1.msra.mxu0 0.0
    %5518 = vmatprep.subr.mxu0 0.0
    %5519 = vmatpush1.msra.mxu0 0.0
    %5520 = vmatprep.subr.mxu0 0.0
    %5521 = vmatpush1.msra.mxu0 0.0
    %5522 = vmatprep.subr.mxu0 0.0
    %5523 = vmatpush1.msra.mxu0 0.0
    %5524 = vmatprep.subr.mxu0 0.0
    %5525 = vmatpush1.msra.mxu0 0.0
    %5526 = vmatprep.subr.mxu0 0.0
    %5527 = vmatpush1.msra.mxu0 0.0
    %5528 = vmatprep.subr.mxu0 0.0
    %5529 = vmatpush1.msra.mxu0 0.0
    %5530 = vmatprep.subr.mxu0 0.0
    %5531 = vmatpush1.msra.mxu0 0.0
    %5532 = vmatprep.subr.mxu0 0.0
    %5533 = vmatpush1.msra.mxu0 0.0
    %5534 = vmatprep.subr.mxu0 0.0
    %5535 = vmatpush1.msra.mxu0 0.0
    %5536 = vmatprep.subr.mxu0 0.0
    %5537 = vmatpush1.msra.mxu0 0.0
    %5538 = vmatprep.subr.mxu0 0.0
    %5539 = vmatpush1.msra.mxu0 0.0
    %5540 = vmatprep.subr.mxu0 0.0
    %5541 = vmatpush1.msra.mxu0 0.0
    %5542 = vmatprep.subr.mxu0 0.0
    %5543 = vmatpush1.msra.mxu0 0.0
    %5544 = vmatprep.subr.mxu0 0.0
    %5545 = vmatpush1.msra.mxu0 0.0
    %5546 = vmatprep.subr.mxu0 0.0
    %5547 = vmatpush1.msra.mxu0 0.0
    %5548 = vmatprep.mubr.f32.mxu0 0.0
    %5549 = vmatmul.mubr.f32.gmra.mrb[0].mxu0 %v5482
    %v5550 = vpop.f32.mrb[0].mxu0
    %v5551 = vadd.f32 0.0, %v5550
    %v5552 = vpop.f32.mrb[0].mxu0
    %5553 = vdwg.mxu0
    %v5554 = vld [vmem:[%s61] sm:$0xff]
    %v5555 = vld [vmem:[%s61 + $0x8] sm:$0xff]
    %v5556 = vld [vmem:[%s61 + $0x10] sm:$0xff]
    %v5557 = vld [vmem:[%s61 + $0x18] sm:$0xff]
    %v5558 = vld [vmem:[%s63] sm:$0x1]
    %v5560 = vlaneseq
    %v5561 = vshrl.u32 %v5560, 7
    %v5562 = vsub.s32 0, %v5561
    %v5563 = vrot.slane %v5558, %v5562
    %v5566 = vsel %vm2304, %v5551, 0
    %5568 = vmatprep.subr.mxu0 0.0
    %5569 = vmatpush1.msra.mxu0 %v5554
    %5570 = vmatprep.subr.mxu0 0.0
    %5571 = vmatpush1.msra.mxu0 %v5555
    %5572 = vmatprep.subr.mxu0 0.0
    %5573 = vmatpush1.msra.mxu0 %v5556
    %5574 = vmatprep.subr.mxu0 0.0
    %5575 = vmatpush1.msra.mxu0 %v5557
    %5576 = vmatprep.subr.mxu0 0.0
    %5577 = vmatpush1.msra.mxu0 0.0
    %5578 = vmatprep.subr.mxu0 0.0
    %5579 = vmatpush1.msra.mxu0 0.0
    %5580 = vmatprep.subr.mxu0 0.0
    %5581 = vmatpush1.msra.mxu0 0.0
    %5582 = vmatprep.subr.mxu0 0.0
    %5583 = vmatpush1.msra.mxu0 0.0
    %5584 = vmatprep.subr.mxu0 0.0
    %5585 = vmatpush1.msra.mxu0 0.0
    %5586 = vmatprep.subr.mxu0 0.0
    %5587 = vmatpush1.msra.mxu0 0.0
    %5588 = vmatprep.subr.mxu0 0.0
    %5589 = vmatpush1.msra.mxu0 0.0
    %5590 = vmatprep.subr.mxu0 0.0
    %5591 = vmatpush1.msra.mxu0 0.0
    %5592 = vmatprep.subr.mxu0 0.0
    %5593 = vmatpush1.msra.mxu0 0.0
    %5594 = vmatprep.subr.mxu0 0.0
    %5595 = vmatpush1.msra.mxu0 0.0
    %5596 = vmatprep.subr.mxu0 0.0
    %5597 = vmatpush1.msra.mxu0 0.0
    %5598 = vmatprep.subr.mxu0 0.0
    %5599 = vmatpush1.msra.mxu0 0.0
    %5600 = vmatprep.subr.mxu0 0.0
    %5601 = vmatpush1.msra.mxu0 0.0
    %5602 = vmatprep.subr.mxu0 0.0
    %5603 = vmatpush1.msra.mxu0 0.0
    %5604 = vmatprep.subr.mxu0 0.0
    %5605 = vmatpush1.msra.mxu0 0.0
    %5606 = vmatprep.subr.mxu0 0.0
    %5607 = vmatpush1.msra.mxu0 0.0
    %5608 = vmatprep.subr.mxu0 0.0
    %5609 = vmatpush1.msra.mxu0 0.0
    %5610 = vmatprep.subr.mxu0 0.0
    %5611 = vmatpush1.msra.mxu0 0.0
    %5612 = vmatprep.subr.mxu0 0.0
    %5613 = vmatpush1.msra.mxu0 0.0
    %5614 = vmatprep.subr.mxu0 0.0
    %5615 = vmatpush1.msra.mxu0 0.0
    %5616 = vmatprep.subr.mxu0 0.0
    %5617 = vmatpush1.msra.mxu0 0.0
    %5618 = vmatprep.subr.mxu0 0.0
    %5619 = vmatpush1.msra.mxu0 0.0
    %5620 = vmatprep.subr.mxu0 0.0
    %5621 = vmatpush1.msra.mxu0 0.0
    %5622 = vmatprep.subr.mxu0 0.0
    %5623 = vmatpush1.msra.mxu0 0.0
    %5624 = vmatprep.subr.mxu0 0.0
    %5625 = vmatpush1.msra.mxu0 0.0
    %5626 = vmatprep.subr.mxu0 0.0
    %5627 = vmatpush1.msra.mxu0 0.0
    %5628 = vmatprep.subr.mxu0 0.0
    %5629 = vmatpush1.msra.mxu0 0.0
    %5630 = vmatprep.subr.mxu0 0.0
    %5631 = vmatpush1.msra.mxu0 0.0
    %5632 = vmatprep.mubr.f32.mxu0 0.0
    %5633 = vmatmul.mubr.f32.gmra.mrb[0].mxu0 %v5566
    %v5634 = vpop.f32.mrb[0].mxu0
    %v5635 = vadd.f32 %v5563, %v5634
    %v5636 = vpop.f32.mrb[0].mxu0
    %5637 = vdwg.mxu0
    %v5638 = vld [vmem:[%s65] sm:$0xf]
    %v5640 = vsel %vm5087, %v5638, 0
    %5642 = vmatprep.subr.mxu0 0.0
    %5643 = vmatpush1.msra.mxu0 %v5479
    %5644 = vmatprep.subr.mxu0 0.0
    %5645 = vmatpush1.msra.mxu0 0.0
    %5646 = vmatprep.subr.mxu0 0.0
    %5647 = vmatpush1.msra.mxu0 0.0
    %5648 = vmatprep.subr.mxu0 0.0
    %5649 = vmatpush1.msra.mxu0 0.0
    %5650 = vmatprep.subr.mxu0 0.0
    %5651 = vmatpush1.msra.mxu0 0.0
    %5652 = vmatprep.subr.mxu0 0.0
    %5653 = vmatpush1.msra.mxu0 0.0
    %5654 = vmatprep.subr.mxu0 0.0
    %5655 = vmatpush1.msra.mxu0 0.0
    %5656 = vmatprep.subr.mxu0 0.0
    %5657 = vmatpush1.msra.mxu0 0.0
    %5658 = vmatprep.subr.mxu0 0.0
    %5659 = vmatpush1.msra.mxu0 0.0
    %5660 = vmatprep.subr.mxu0 0.0
    %5661 = vmatpush1.msra.mxu0 0.0
    %5662 = vmatprep.subr.mxu0 0.0
    %5663 = vmatpush1.msra.mxu0 0.0
    %5664 = vmatprep.subr.mxu0 0.0
    %5665 = vmatpush1.msra.mxu0 0.0
    %5666 = vmatprep.subr.mxu0 0.0
    %5667 = vmatpush1.msra.mxu0 0.0
    %5668 = vmatprep.subr.mxu0 0.0
    %5669 = vmatpush1.msra.mxu0 0.0
    %5670 = vmatprep.subr.mxu0 0.0
    %5671 = vmatpush1.msra.mxu0 0.0
    %5672 = vmatprep.subr.mxu0 0.0
    %5673 = vmatpush1.msra.mxu0 0.0
    %5674 = vmatprep.subr.mxu0 0.0
    %5675 = vmatpush1.msra.mxu0 0.0
    %5676 = vmatprep.subr.mxu0 0.0
    %5677 = vmatpush1.msra.mxu0 0.0
    %5678 = vmatprep.subr.mxu0 0.0
    %5679 = vmatpush1.msra.mxu0 0.0
    %5680 = vmatprep.subr.mxu0 0.0
    %5681 = vmatpush1.msra.mxu0 0.0
    %5682 = vmatprep.subr.mxu0 0.0
    %5683 = vmatpush1.msra.mxu0 0.0
    %5684 = vmatprep.subr.mxu0 0.0
    %5685 = vmatpush1.msra.mxu0 0.0
    %5686 = vmatprep.subr.mxu0 0.0
    %5687 = vmatpush1.msra.mxu0 0.0
    %5688 = vmatprep.subr.mxu0 0.0
    %5689 = vmatpush1.msra.mxu0 0.0
    %5690 = vmatprep.subr.mxu0 0.0
    %5691 = vmatpush1.msra.mxu0 0.0
    %5692 = vmatprep.subr.mxu0 0.0
    %5693 = vmatpush1.msra.mxu0 0.0
    %5694 = vmatprep.subr.mxu0 0.0
    %5695 = vmatpush1.msra.mxu0 0.0
    %5696 = vmatprep.subr.mxu0 0.0
    %5697 = vmatpush1.msra.mxu0 0.0
    %5698 = vmatprep.subr.mxu0 0.0
    %5699 = vmatpush1.msra.mxu0 0.0
    %5700 = vmatprep.subr.mxu0 0.0
    %5701 = vmatpush1.msra.mxu0 0.0
    %5702 = vmatprep.subr.mxu0 0.0
    %5703 = vmatpush1.msra.mxu0 0.0
    %5704 = vmatprep.subr.mxu0 0.0
    %5705 = vmatpush1.msra.mxu0 0.0
    %5706 = vmatprep.mubr.f32.mxu0 0.0
    %5707 = vmatmul.mubr.f32.gmra.mrb[0].mxu0 %v5640
    %v5708 = vpop.f32.mrb[0].mxu0
    %v5709 = vadd.f32 0.0, %v5708
    %v5710 = vpop.f32.mrb[0].mxu0
    %5711 = vdwg.mxu0
    %v5712 = vld [vmem:[%s67] sm:$0xff]
    %v5713 = vld [vmem:[%s67 + $0x8] sm:$0xff]
    %v5714 = vld [vmem:[%s67 + $0x10] sm:$0xff]
    %v5715 = vld [vmem:[%s67 + $0x18] sm:$0xff]
    %s5716 = scalar_lea.vmem %s65, 4
    %v5717 = vld [vmem:[%s5716] sm:$0xf]
    %v5719 = vsel %vm5087, %v5717, 0
    %5721 = vmatprep.subr.mxu0 0.0
    %5722 = vmatpush1.msra.mxu0 %v5479
    %5723 = vmatprep.subr.mxu0 0.0
    %5724 = vmatpush1.msra.mxu0 0.0
    %5725 = vmatprep.subr.mxu0 0.0
    %5726 = vmatpush1.msra.mxu0 0.0
    %5727 = vmatprep.subr.mxu0 0.0
    %5728 = vmatpush1.msra.mxu0 0.0
    %5729 = vmatprep.subr.mxu0 0.0
    %5730 = vmatpush1.msra.mxu0 0.0
    %5731 = vmatprep.subr.mxu0 0.0
    %5732 = vmatpush1.msra.mxu0 0.0
    %5733 = vmatprep.subr.mxu0 0.0
    %5734 = vmatpush1.msra.mxu0 0.0
    %5735 = vmatprep.subr.mxu0 0.0
    %5736 = vmatpush1.msra.mxu0 0.0
    %5737 = vmatprep.subr.mxu0 0.0
    %5738 = vmatpush1.msra.mxu0 0.0
    %5739 = vmatprep.subr.mxu0 0.0
    %5740 = vmatpush1.msra.mxu0 0.0
    %5741 = vmatprep.subr.mxu0 0.0
    %5742 = vmatpush1.msra.mxu0 0.0
    %5743 = vmatprep.subr.mxu0 0.0
    %5744 = vmatpush1.msra.mxu0 0.0
    %5745 = vmatprep.subr.mxu0 0.0
    %5746 = vmatpush1.msra.mxu0 0.0
    %5747 = vmatprep.subr.mxu0 0.0
    %5748 = vmatpush1.msra.mxu0 0.0
    %5749 = vmatprep.subr.mxu0 0.0
    %5750 = vmatpush1.msra.mxu0 0.0
    %5751 = vmatprep.subr.mxu0 0.0
    %5752 = vmatpush1.msra.mxu0 0.0
    %5753 = vmatprep.subr.mxu0 0.0
    %5754 = vmatpush1.msra.mxu0 0.0
    %5755 = vmatprep.subr.mxu0 0.0
    %5756 = vmatpush1.msra.mxu0 0.0
    %5757 = vmatprep.subr.mxu0 0.0
    %5758 = vmatpush1.msra.mxu0 0.0
    %5759 = vmatprep.subr.mxu0 0.0
    %5760 = vmatpush1.msra.mxu0 0.0
    %5761 = vmatprep.subr.mxu0 0.0
    %5762 = vmatpush1.msra.mxu0 0.0
    %5763 = vmatprep.subr.mxu0 0.0
    %5764 = vmatpush1.msra.mxu0 0.0
    %5765 = vmatprep.subr.mxu0 0.0
    %5766 = vmatpush1.msra.mxu0 0.0
    %5767 = vmatprep.subr.mxu0 0.0
    %5768 = vmatpush1.msra.mxu0 0.0
    %5769 = vmatprep.subr.mxu0 0.0
    %5770 = vmatpush1.msra.mxu0 0.0
    %5771 = vmatprep.subr.mxu0 0.0
    %5772 = vmatpush1.msra.mxu0 0.0
    %5773 = vmatprep.subr.mxu0 0.0
    %5774 = vmatpush1.msra.mxu0 0.0
    %5775 = vmatprep.subr.mxu0 0.0
    %5776 = vmatpush1.msra.mxu0 0.0
    %5777 = vmatprep.subr.mxu0 0.0
    %5778 = vmatpush1.msra.mxu0 0.0
    %5779 = vmatprep.subr.mxu0 0.0
    %5780 = vmatpush1.msra.mxu0 0.0
    %5781 = vmatprep.subr.mxu0 0.0
    %5782 = vmatpush1.msra.mxu0 0.0
    %5783 = vmatprep.subr.mxu0 0.0
    %5784 = vmatpush1.msra.mxu0 0.0
    %5785 = vmatprep.mubr.f32.mxu0 0.0
    %5786 = vmatmul.mubr.f32.gmra.mrb[0].mxu0 %v5719
    %v5787 = vpop.f32.mrb[0].mxu0
    %v5788 = vadd.f32 0.0, %v5787
    %v5789 = vpop.f32.mrb[0].mxu0
    %5790 = vdwg.mxu0
    %s5791 = scalar_lea.vmem %s67, 32
    %v5792 = vld [vmem:[%s5791] sm:$0xff]
    %v5793 = vld [vmem:[%s5791 + $0x8] sm:$0xff]
    %v5794 = vld [vmem:[%s5791 + $0x10] sm:$0xff]
    %v5795 = vld [vmem:[%s5791 + $0x18] sm:$0xff]
    %v5797 = vsel %vm2304, %v5788, 0
    %5799 = vmatprep.subr.mxu0 0.0
    %5800 = vmatpush1.msra.mxu0 %v5792
    %5801 = vmatprep.subr.mxu0 0.0
    %5802 = vmatpush1.msra.mxu0 %v5793
    %5803 = vmatprep.subr.mxu0 0.0
    %5804 = vmatpush1.msra.mxu0 %v5794
    %5805 = vmatprep.subr.mxu0 0.0
    %5806 = vmatpush1.msra.mxu0 %v5795
    %5807 = vmatprep.subr.mxu0 0.0
    %5808 = vmatpush1.msra.mxu0 0.0
    %5809 = vmatprep.subr.mxu0 0.0
    %5810 = vmatpush1.msra.mxu0 0.0
    %5811 = vmatprep.subr.mxu0 0.0
    %5812 = vmatpush1.msra.mxu0 0.0
    %5813 = vmatprep.subr.mxu0 0.0
    %5814 = vmatpush1.msra.mxu0 0.0
    %5815 = vmatprep.subr.mxu0 0.0
    %5816 = vmatpush1.msra.mxu0 0.0
    %5817 = vmatprep.subr.mxu0 0.0
    %5818 = vmatpush1.msra.mxu0 0.0
    %5819 = vmatprep.subr.mxu0 0.0
    %5820 = vmatpush1.msra.mxu0 0.0
    %5821 = vmatprep.subr.mxu0 0.0
    %5822 = vmatpush1.msra.mxu0 0.0
    %5823 = vmatprep.subr.mxu0 0.0
    %5824 = vmatpush1.msra.mxu0 0.0
    %5825 = vmatprep.subr.mxu0 0.0
    %5826 = vmatpush1.msra.mxu0 0.0
    %5827 = vmatprep.subr.mxu0 0.0
    %5828 = vmatpush1.msra.mxu0 0.0
    %5829 = vmatprep.subr.mxu0 0.0
    %5830 = vmatpush1.msra.mxu0 0.0
    %5831 = vmatprep.subr.mxu0 0.0
    %5832 = vmatpush1.msra.mxu0 0.0
    %5833 = vmatprep.subr.mxu0 0.0
    %5834 = vmatpush1.msra.mxu0 0.0
    %5835 = vmatprep.subr.mxu0 0.0
    %5836 = vmatpush1.msra.mxu0 0.0
    %5837 = vmatprep.subr.mxu0 0.0
    %5838 = vmatpush1.msra.mxu0 0.0
    %5839 = vmatprep.subr.mxu0 0.0
    %5840 = vmatpush1.msra.mxu0 0.0
    %5841 = vmatprep.subr.mxu0 0.0
    %5842 = vmatpush1.msra.mxu0 0.0
    %5843 = vmatprep.subr.mxu0 0.0
    %5844 = vmatpush1.msra.mxu0 0.0
    %5845 = vmatprep.subr.mxu0 0.0
    %5846 = vmatpush1.msra.mxu0 0.0
    %5847 = vmatprep.subr.mxu0 0.0
    %5848 = vmatpush1.msra.mxu0 0.0
    %5849 = vmatprep.subr.mxu0 0.0
    %5850 = vmatpush1.msra.mxu0 0.0
    %5851 = vmatprep.subr.mxu0 0.0
    %5852 = vmatpush1.msra.mxu0 0.0
    %5853 = vmatprep.subr.mxu0 0.0
    %5854 = vmatpush1.msra.mxu0 0.0
    %5855 = vmatprep.subr.mxu0 0.0
    %5856 = vmatpush1.msra.mxu0 0.0
    %5857 = vmatprep.subr.mxu0 0.0
    %5858 = vmatpush1.msra.mxu0 0.0
    %5859 = vmatprep.subr.mxu0 0.0
    %5860 = vmatpush1.msra.mxu0 0.0
    %5861 = vmatprep.subr.mxu0 0.0
    %5862 = vmatpush1.msra.mxu0 0.0
    %5863 = vmatprep.mubr.f32.mxu0 0.0
    %5864 = vmatmul.mubr.f32.gmra.mrb[0].mxu0 %v5797
    %v5865 = vpop.f32.mrb[0].mxu0
    %v5866 = vadd.f32 0.0, %v5865
    %v5867 = vpop.f32.mrb[0].mxu0
    %5868 = vdwg.mxu0
    %v5870 = vsel %vm2304, %v5709, 0
    %5872 = vmatprep.subr.mxu0 0.0
    %5873 = vmatpush1.msra.mxu0 %v5712
    %5874 = vmatprep.subr.mxu0 0.0
    %5875 = vmatpush1.msra.mxu0 %v5713
    %5876 = vmatprep.subr.mxu0 0.0
    %5877 = vmatpush1.msra.mxu0 %v5714
    %5878 = vmatprep.subr.mxu0 0.0
    %5879 = vmatpush1.msra.mxu0 %v5715
    %5880 = vmatprep.subr.mxu0 0.0
    %5881 = vmatpush1.msra.mxu0 0.0
    %5882 = vmatprep.subr.mxu0 0.0
    %5883 = vmatpush1.msra.mxu0 0.0
    %5884 = vmatprep.subr.mxu0 0.0
    %5885 = vmatpush1.msra.mxu0 0.0
    %5886 = vmatprep.subr.mxu0 0.0
    %5887 = vmatpush1.msra.mxu0 0.0
    %5888 = vmatprep.subr.mxu0 0.0
    %5889 = vmatpush1.msra.mxu0 0.0
    %5890 = vmatprep.subr.mxu0 0.0
    %5891 = vmatpush1.msra.mxu0 0.0
    %5892 = vmatprep.subr.mxu0 0.0
    %5893 = vmatpush1.msra.mxu0 0.0
    %5894 = vmatprep.subr.mxu0 0.0
    %5895 = vmatpush1.msra.mxu0 0.0
    %5896 = vmatprep.subr.mxu0 0.0
    %5897 = vmatpush1.msra.mxu0 0.0
    %5898 = vmatprep.subr.mxu0 0.0
    %5899 = vmatpush1.msra.mxu0 0.0
    %5900 = vmatprep.subr.mxu0 0.0
    %5901 = vmatpush1.msra.mxu0 0.0
    %5902 = vmatprep.subr.mxu0 0.0
    %5903 = vmatpush1.msra.mxu0 0.0
    %5904 = vmatprep.subr.mxu0 0.0
    %5905 = vmatpush1.msra.mxu0 0.0
    %5906 = vmatprep.subr.mxu0 0.0
    %5907 = vmatpush1.msra.mxu0 0.0
    %5908 = vmatprep.subr.mxu0 0.0
    %5909 = vmatpush1.msra.mxu0 0.0
    %5910 = vmatprep.subr.mxu0 0.0
    %5911 = vmatpush1.msra.mxu0 0.0
    %5912 = vmatprep.subr.mxu0 0.0
    %5913 = vmatpush1.msra.mxu0 0.0
    %5914 = vmatprep.subr.mxu0 0.0
    %5915 = vmatpush1.msra.mxu0 0.0
    %5916 = vmatprep.subr.mxu0 0.0
    %5917 = vmatpush1.msra.mxu0 0.0
    %5918 = vmatprep.subr.mxu0 0.0
    %5919 = vmatpush1.msra.mxu0 0.0
    %5920 = vmatprep.subr.mxu0 0.0
    %5921 = vmatpush1.msra.mxu0 0.0
    %5922 = vmatprep.subr.mxu0 0.0
    %5923 = vmatpush1.msra.mxu0 0.0
    %5924 = vmatprep.subr.mxu0 0.0
    %5925 = vmatpush1.msra.mxu0 0.0
    %5926 = vmatprep.subr.mxu0 0.0
    %5927 = vmatpush1.msra.mxu0 0.0
    %5928 = vmatprep.subr.mxu0 0.0
    %5929 = vmatpush1.msra.mxu0 0.0
    %5930 = vmatprep.subr.mxu0 0.0
    %5931 = vmatpush1.msra.mxu0 0.0
    %5932 = vmatprep.subr.mxu0 0.0
    %5933 = vmatpush1.msra.mxu0 0.0
    %5934 = vmatprep.subr.mxu0 0.0
    %5935 = vmatpush1.msra.mxu0 0.0
    %5936 = vmatprep.mubr.f32.mxu0 0.0
    %5937 = vmatmul.mubr.f32.gmra.mrb[0].mxu0 %v5870
    %v5938 = vpop.f32.mrb[0].mxu0
    %v5939 = vadd.f32 %v5866, %v5938
    %v5940 = vpop.f32.mrb[0].mxu0
    %5941 = vdwg.mxu0
    %s5942 = scalar_lea.vmem %s65, 8
    %v5943 = vld [vmem:[%s5942] sm:$0xf]
    %v5945 = vsel %vm5087, %v5943, 0
    %5947 = vmatprep.subr.mxu0 0.0
    %5948 = vmatpush1.msra.mxu0 %v5479
    %5949 = vmatprep.subr.mxu0 0.0
    %5950 = vmatpush1.msra.mxu0 0.0
    %5951 = vmatprep.subr.mxu0 0.0
    %5952 = vmatpush1.msra.mxu0 0.0
    %5953 = vmatprep.subr.mxu0 0.0
    %5954 = vmatpush1.msra.mxu0 0.0
    %5955 = vmatprep.subr.mxu0 0.0
    %5956 = vmatpush1.msra.mxu0 0.0
    %5957 = vmatprep.subr.mxu0 0.0
    %5958 = vmatpush1.msra.mxu0 0.0
    %5959 = vmatprep.subr.mxu0 0.0
    %5960 = vmatpush1.msra.mxu0 0.0
    %5961 = vmatprep.subr.mxu0 0.0
    %5962 = vmatpush1.msra.mxu0 0.0
    %5963 = vmatprep.subr.mxu0 0.0
    %5964 = vmatpush1.msra.mxu0 0.0
    %5965 = vmatprep.subr.mxu0 0.0
    %5966 = vmatpush1.msra.mxu0 0.0
    %5967 = vmatprep.subr.mxu0 0.0
    %5968 = vmatpush1.msra.mxu0 0.0
    %5969 = vmatprep.subr.mxu0 0.0
    %5970 = vmatpush1.msra.mxu0 0.0
    %5971 = vmatprep.subr.mxu0 0.0
    %5972 = vmatpush1.msra.mxu0 0.0
    %5973 = vmatprep.subr.mxu0 0.0
    %5974 = vmatpush1.msra.mxu0 0.0
    %5975 = vmatprep.subr.mxu0 0.0
    %5976 = vmatpush1.msra.mxu0 0.0
    %5977 = vmatprep.subr.mxu0 0.0
    %5978 = vmatpush1.msra.mxu0 0.0
    %5979 = vmatprep.subr.mxu0 0.0
    %5980 = vmatpush1.msra.mxu0 0.0
    %5981 = vmatprep.subr.mxu0 0.0
    %5982 = vmatpush1.msra.mxu0 0.0
    %5983 = vmatprep.subr.mxu0 0.0
    %5984 = vmatpush1.msra.mxu0 0.0
    %5985 = vmatprep.subr.mxu0 0.0
    %5986 = vmatpush1.msra.mxu0 0.0
    %5987 = vmatprep.subr.mxu0 0.0
    %5988 = vmatpush1.msra.mxu0 0.0
    %5989 = vmatprep.subr.mxu0 0.0
    %5990 = vmatpush1.msra.mxu0 0.0
    %5991 = vmatprep.subr.mxu0 0.0
    %5992 = vmatpush1.msra.mxu0 0.0
    %5993 = vmatprep.subr.mxu0 0.0
    %5994 = vmatpush1.msra.mxu0 0.0
    %5995 = vmatprep.subr.mxu0 0.0
    %5996 = vmatpush1.msra.mxu0 0.0
    %5997 = vmatprep.subr.mxu0 0.0
    %5998 = vmatpush1.msra.mxu0 0.0
    %5999 = vmatprep.subr.mxu0 0.0
    %6000 = vmatpush1.msra.mxu0 0.0
    %6001 = vmatprep.subr.mxu0 0.0
    %6002 = vmatpush1.msra.mxu0 0.0
    %6003 = vmatprep.subr.mxu0 0.0
    %6004 = vmatpush1.msra.mxu0 0.0
    %6005 = vmatprep.subr.mxu0 0.0
    %6006 = vmatpush1.msra.mxu0 0.0
    %6007 = vmatprep.subr.mxu0 0.0
    %6008 = vmatpush1.msra.mxu0 0.0
    %6009 = vmatprep.subr.mxu0 0.0
    %6010 = vmatpush1.msra.mxu0 0.0
    %6011 = vmatprep.mubr.f32.mxu0 0.0
    %6012 = vmatmul.mubr.f32.gmra.mrb[0].mxu0 %v5945
    %v6013 = vpop.f32.mrb[0].mxu0
    %v6014 = vadd.f32 0.0, %v6013
    %v6015 = vpop.f32.mrb[0].mxu0
    %6016 = vdwg.mxu0
    %s6017 = scalar_lea.vmem %s67, 64
    %v6018 = vld [vmem:[%s6017] sm:$0xff]
    %v6019 = vld [vmem:[%s6017 + $0x8] sm:$0xff]
    %v6020 = vld [vmem:[%s6017 + $0x10] sm:$0xff]
    %v6021 = vld [vmem:[%s6017 + $0x18] sm:$0xff]
    %v6023 = vsel %vm2304, %v6014, 0
    %6025 = vmatprep.subr.mxu0 0.0
    %6026 = vmatpush1.msra.mxu0 %v6018
    %6027 = vmatprep.subr.mxu0 0.0
    %6028 = vmatpush1.msra.mxu0 %v6019
    %6029 = vmatprep.subr.mxu0 0.0
    %6030 = vmatpush1.msra.mxu0 %v6020
    %6031 = vmatprep.subr.mxu0 0.0
    %6032 = vmatpush1.msra.mxu0 %v6021
    %6033 = vmatprep.subr.mxu0 0.0
    %6034 = vmatpush1.msra.mxu0 0.0
    %6035 = vmatprep.subr.mxu0 0.0
    %6036 = vmatpush1.msra.mxu0 0.0
    %6037 = vmatprep.subr.mxu0 0.0
    %6038 = vmatpush1.msra.mxu0 0.0
    %6039 = vmatprep.subr.mxu0 0.0
    %6040 = vmatpush1.msra.mxu0 0.0
    %6041 = vmatprep.subr.mxu0 0.0
    %6042 = vmatpush1.msra.mxu0 0.0
    %6043 = vmatprep.subr.mxu0 0.0
    %6044 = vmatpush1.msra.mxu0 0.0
    %6045 = vmatprep.subr.mxu0 0.0
    %6046 = vmatpush1.msra.mxu0 0.0
    %6047 = vmatprep.subr.mxu0 0.0
    %6048 = vmatpush1.msra.mxu0 0.0
    %6049 = vmatprep.subr.mxu0 0.0
    %6050 = vmatpush1.msra.mxu0 0.0
    %6051 = vmatprep.subr.mxu0 0.0
    %6052 = vmatpush1.msra.mxu0 0.0
    %6053 = vmatprep.subr.mxu0 0.0
    %6054 = vmatpush1.msra.mxu0 0.0
    %6055 = vmatprep.subr.mxu0 0.0
    %6056 = vmatpush1.msra.mxu0 0.0
    %6057 = vmatprep.subr.mxu0 0.0
    %6058 = vmatpush1.msra.mxu0 0.0
    %6059 = vmatprep.subr.mxu0 0.0
    %6060 = vmatpush1.msra.mxu0 0.0
    %6061 = vmatprep.subr.mxu0 0.0
    %6062 = vmatpush1.msra.mxu0 0.0
    %6063 = vmatprep.subr.mxu0 0.0
    %6064 = vmatpush1.msra.mxu0 0.0
    %6065 = vmatprep.subr.mxu0 0.0
    %6066 = vmatpush1.msra.mxu0 0.0
    %6067 = vmatprep.subr.mxu0 0.0
    %6068 = vmatpush1.msra.mxu0 0.0
    %6069 = vmatprep.subr.mxu0 0.0
    %6070 = vmatpush1.msra.mxu0 0.0
    %6071 = vmatprep.subr.mxu0 0.0
    %6072 = vmatpush1.msra.mxu0 0.0
    %6073 = vmatprep.subr.mxu0 0.0
    %6074 = vmatpush1.msra.mxu0 0.0
    %6075 = vmatprep.subr.mxu0 0.0
    %6076 = vmatpush1.msra.mxu0 0.0
    %6077 = vmatprep.subr.mxu0 0.0
    %6078 = vmatpush1.msra.mxu0 0.0
    %6079 = vmatprep.subr.mxu0 0.0
    %6080 = vmatpush1.msra.mxu0 0.0
    %6081 = vmatprep.subr.mxu0 0.0
    %6082 = vmatpush1.msra.mxu0 0.0
    %6083 = vmatprep.subr.mxu0 0.0
    %6084 = vmatpush1.msra.mxu0 0.0
    %6085 = vmatprep.subr.mxu0 0.0
    %6086 = vmatpush1.msra.mxu0 0.0
    %6087 = vmatprep.subr.mxu0 0.0
    %6088 = vmatpush1.msra.mxu0 0.0
    %6089 = vmatprep.mubr.f32.mxu0 0.0
    %6090 = vmatmul.mubr.f32.gmra.mrb[0].mxu0 %v6023
    %v6091 = vpop.f32.mrb[0].mxu0
    %v6092 = vadd.f32 0.0, %v6091
    %v6093 = vpop.f32.mrb[0].mxu0
    %6094 = vdwg.mxu0
    %v6095 = vadd.f32 %v5939, %v6092
    %v6096 = vld [vmem:[%s69] sm:$0x1]
    %v6098 = vlaneseq
    %v6099 = vshrl.u32 %v6098, 7
    %v6100 = vsub.s32 0, %v6099
    %v6101 = vrot.slane %v6096, %v6100
    %v6103 = vadd.f32 %v6095, %v6101
    %v6104 = vmax.f32 %v6103, 0.0
    %v6105 = vld [vmem:[%s71] sm:$0xf]
    %vm6106 = vcmask 31744
    %v6108 = vsel %vm6106, %v6105, 0
    %vm6110 = vcmask 1043456
    %v6112 = vsel %vm6110, %v6104, 0
    %6114 = vmatprep.subr.mxu0 0.0
    %6115 = vmatpush1.msra.mxu0 %v6112
    %6116 = vmatprep.subr.mxu0 0.0
    %6117 = vmatpush1.msra.mxu0 0.0
    %6118 = vmatprep.subr.mxu0 0.0
    %6119 = vmatpush1.msra.mxu0 0.0
    %6120 = vmatprep.subr.mxu0 0.0
    %6121 = vmatpush1.msra.mxu0 0.0
    %6122 = vmatprep.subr.mxu0 0.0
    %6123 = vmatpush1.msra.mxu0 0.0
    %6124 = vmatprep.subr.mxu0 0.0
    %6125 = vmatpush1.msra.mxu0 0.0
    %6126 = vmatprep.subr.mxu0 0.0
    %6127 = vmatpush1.msra.mxu0 0.0
    %6128 = vmatprep.subr.mxu0 0.0
    %6129 = vmatpush1.msra.mxu0 0.0
    %6130 = vmatprep.subr.mxu0 0.0
    %6131 = vmatpush1.msra.mxu0 0.0
    %6132 = vmatprep.subr.mxu0 0.0
    %6133 = vmatpush1.msra.mxu0 0.0
    %6134 = vmatprep.subr.mxu0 0.0
    %6135 = vmatpush1.msra.mxu0 0.0
    %6136 = vmatprep.subr.mxu0 0.0
    %6137 = vmatpush1.msra.mxu0 0.0
    %6138 = vmatprep.subr.mxu0 0.0
    %6139 = vmatpush1.msra.mxu0 0.0
    %6140 = vmatprep.subr.mxu0 0.0
    %6141 = vmatpush1.msra.mxu0 0.0
    %6142 = vmatprep.subr.mxu0 0.0
    %6143 = vmatpush1.msra.mxu0 0.0
    %6144 = vmatprep.subr.mxu0 0.0
    %6145 = vmatpush1.msra.mxu0 0.0
    %6146 = vmatprep.subr.mxu0 0.0
    %6147 = vmatpush1.msra.mxu0 0.0
    %6148 = vmatprep.subr.mxu0 0.0
    %6149 = vmatpush1.msra.mxu0 0.0
    %6150 = vmatprep.subr.mxu0 0.0
    %6151 = vmatpush1.msra.mxu0 0.0
    %6152 = vmatprep.subr.mxu0 0.0
    %6153 = vmatpush1.msra.mxu0 0.0
    %6154 = vmatprep.subr.mxu0 0.0
    %6155 = vmatpush1.msra.mxu0 0.0
    %6156 = vmatprep.subr.mxu0 0.0
    %6157 = vmatpush1.msra.mxu0 0.0
    %6158 = vmatprep.subr.mxu0 0.0
    %6159 = vmatpush1.msra.mxu0 0.0
    %6160 = vmatprep.subr.mxu0 0.0
    %6161 = vmatpush1.msra.mxu0 0.0
    %6162 = vmatprep.subr.mxu0 0.0
    %6163 = vmatpush1.msra.mxu0 0.0
    %6164 = vmatprep.subr.mxu0 0.0
    %6165 = vmatpush1.msra.mxu0 0.0
    %6166 = vmatprep.subr.mxu0 0.0
    %6167 = vmatpush1.msra.mxu0 0.0
    %6168 = vmatprep.subr.mxu0 0.0
    %6169 = vmatpush1.msra.mxu0 0.0
    %6170 = vmatprep.subr.mxu0 0.0
    %6171 = vmatpush1.msra.mxu0 0.0
    %6172 = vmatprep.subr.mxu0 0.0
    %6173 = vmatpush1.msra.mxu0 0.0
    %6174 = vmatprep.subr.mxu0 0.0
    %6175 = vmatpush1.msra.mxu0 0.0
    %6176 = vmatprep.subr.mxu0 0.0
    %6177 = vmatpush1.msra.mxu0 0.0
    %6178 = vmatprep.mubr.f32.mxu0 0.0
    %6179 = vmatmul.mubr.f32.gmra.mrb[0].mxu0 %v6108
    %v6180 = vpop.f32.mrb[0].mxu0
    %v6181 = vadd.f32 0.0, %v6180
    %v6182 = vpop.f32.mrb[0].mxu0
    %6183 = vdwg.mxu0
    %v6184 = vld [vmem:[%s73] sm:$0xff]
    %v6185 = vld [vmem:[%s73 + $0x8] sm:$0xff]
    %v6186 = vld [vmem:[%s73 + $0x10] sm:$0xff]
    %v6187 = vld [vmem:[%s73 + $0x18] sm:$0xff]
    %s6188 = scalar_lea.vmem %s73, 32
    %v6189 = vld [vmem:[%s6188] sm:$0xff]
    %v6190 = vld [vmem:[%s6188 + $0x8] sm:$0xff]
    %v6191 = vld [vmem:[%s6188 + $0x10] sm:$0xff]
    %v6192 = vld [vmem:[%s6188 + $0x18] sm:$0xff]
    %v6193 = vsel %vm2304, %v6104, 0
    %6195 = vmatprep.subr.mxu0 0.0
    %6196 = vmatpush1.msra.mxu0 %v6189
    %6197 = vmatprep.subr.mxu0 0.0
    %6198 = vmatpush1.msra.mxu0 %v6190
    %6199 = vmatprep.subr.mxu0 0.0
    %6200 = vmatpush1.msra.mxu0 %v6191
    %6201 = vmatprep.subr.mxu0 0.0
    %6202 = vmatpush1.msra.mxu0 %v6192
    %6203 = vmatprep.subr.mxu0 0.0
    %6204 = vmatpush1.msra.mxu0 0.0
    %6205 = vmatprep.subr.mxu0 0.0
    %6206 = vmatpush1.msra.mxu0 0.0
    %6207 = vmatprep.subr.mxu0 0.0
    %6208 = vmatpush1.msra.mxu0 0.0
    %6209 = vmatprep.subr.mxu0 0.0
    %6210 = vmatpush1.msra.mxu0 0.0
    %6211 = vmatprep.subr.mxu0 0.0
    %6212 = vmatpush1.msra.mxu0 0.0
    %6213 = vmatprep.subr.mxu0 0.0
    %6214 = vmatpush1.msra.mxu0 0.0
    %6215 = vmatprep.subr.mxu0 0.0
    %6216 = vmatpush1.msra.mxu0 0.0
    %6217 = vmatprep.subr.mxu0 0.0
    %6218 = vmatpush1.msra.mxu0 0.0
    %6219 = vmatprep.subr.mxu0 0.0
    %6220 = vmatpush1.msra.mxu0 0.0
    %6221 = vmatprep.subr.mxu0 0.0
    %6222 = vmatpush1.msra.mxu0 0.0
    %6223 = vmatprep.subr.mxu0 0.0
    %6224 = vmatpush1.msra.mxu0 0.0
    %6225 = vmatprep.subr.mxu0 0.0
    %6226 = vmatpush1.msra.mxu0 0.0
    %6227 = vmatprep.subr.mxu0 0.0
    %6228 = vmatpush1.msra.mxu0 0.0
    %6229 = vmatprep.subr.mxu0 0.0
    %6230 = vmatpush1.msra.mxu0 0.0
    %6231 = vmatprep.subr.mxu0 0.0
    %6232 = vmatpush1.msra.mxu0 0.0
    %6233 = vmatprep.subr.mxu0 0.0
    %6234 = vmatpush1.msra.mxu0 0.0
    %6235 = vmatprep.subr.mxu0 0.0
    %6236 = vmatpush1.msra.mxu0 0.0
    %6237 = vmatprep.subr.mxu0 0.0
    %6238 = vmatpush1.msra.mxu0 0.0
    %6239 = vmatprep.subr.mxu0 0.0
    %6240 = vmatpush1.msra.mxu0 0.0
    %6241 = vmatprep.subr.mxu0 0.0
    %6242 = vmatpush1.msra.mxu0 0.0
    %6243 = vmatprep.subr.mxu0 0.0
    %6244 = vmatpush1.msra.mxu0 0.0
    %6245 = vmatprep.subr.mxu0 0.0
    %6246 = vmatpush1.msra.mxu0 0.0
    %6247 = vmatprep.subr.mxu0 0.0
    %6248 = vmatpush1.msra.mxu0 0.0
    %6249 = vmatprep.subr.mxu0 0.0
    %6250 = vmatpush1.msra.mxu0 0.0
    %6251 = vmatprep.subr.mxu0 0.0
    %6252 = vmatpush1.msra.mxu0 0.0
    %6253 = vmatprep.subr.mxu0 0.0
    %6254 = vmatpush1.msra.mxu0 0.0
    %6255 = vmatprep.subr.mxu0 0.0
    %6256 = vmatpush1.msra.mxu0 0.0
    %6257 = vmatprep.subr.mxu0 0.0
    %6258 = vmatpush1.msra.mxu0 0.0
    %6259 = vmatprep.mubr.f32.mxu0 0.0
    %6260 = vmatmul.mubr.f32.gmra.mrb[0].mxu0 %v6193
    %v6261 = vpop.f32.mrb[0].mxu0
    %v6262 = vadd.f32 0.0, %v6261
    %v6263 = vpop.f32.mrb[0].mxu0
    %6264 = vdwg.mxu0
    %v6266 = vsel %vm2304, %v6181, 0
    %6268 = vmatprep.subr.mxu0 0.0
    %6269 = vmatpush1.msra.mxu0 %v6184
    %6270 = vmatprep.subr.mxu0 0.0
    %6271 = vmatpush1.msra.mxu0 %v6185
    %6272 = vmatprep.subr.mxu0 0.0
    %6273 = vmatpush1.msra.mxu0 %v6186
    %6274 = vmatprep.subr.mxu0 0.0
    %6275 = vmatpush1.msra.mxu0 %v6187
    %6276 = vmatprep.subr.mxu0 0.0
    %6277 = vmatpush1.msra.mxu0 0.0
    %6278 = vmatprep.subr.mxu0 0.0
    %6279 = vmatpush1.msra.mxu0 0.0
    %6280 = vmatprep.subr.mxu0 0.0
    %6281 = vmatpush1.msra.mxu0 0.0
    %6282 = vmatprep.subr.mxu0 0.0
    %6283 = vmatpush1.msra.mxu0 0.0
    %6284 = vmatprep.subr.mxu0 0.0
    %6285 = vmatpush1.msra.mxu0 0.0
    %6286 = vmatprep.subr.mxu0 0.0
    %6287 = vmatpush1.msra.mxu0 0.0
    %6288 = vmatprep.subr.mxu0 0.0
    %6289 = vmatpush1.msra.mxu0 0.0
    %6290 = vmatprep.subr.mxu0 0.0
    %6291 = vmatpush1.msra.mxu0 0.0
    %6292 = vmatprep.subr.mxu0 0.0
    %6293 = vmatpush1.msra.mxu0 0.0
    %6294 = vmatprep.subr.mxu0 0.0
    %6295 = vmatpush1.msra.mxu0 0.0
    %6296 = vmatprep.subr.mxu0 0.0
    %6297 = vmatpush1.msra.mxu0 0.0
    %6298 = vmatprep.subr.mxu0 0.0
    %6299 = vmatpush1.msra.mxu0 0.0
    %6300 = vmatprep.subr.mxu0 0.0
    %6301 = vmatpush1.msra.mxu0 0.0
    %6302 = vmatprep.subr.mxu0 0.0
    %6303 = vmatpush1.msra.mxu0 0.0
    %6304 = vmatprep.subr.mxu0 0.0
    %6305 = vmatpush1.msra.mxu0 0.0
    %6306 = vmatprep.subr.mxu0 0.0
    %6307 = vmatpush1.msra.mxu0 0.0
    %6308 = vmatprep.subr.mxu0 0.0
    %6309 = vmatpush1.msra.mxu0 0.0
    %6310 = vmatprep.subr.mxu0 0.0
    %6311 = vmatpush1.msra.mxu0 0.0
    %6312 = vmatprep.subr.mxu0 0.0
    %6313 = vmatpush1.msra.mxu0 0.0
    %6314 = vmatprep.subr.mxu0 0.0
    %6315 = vmatpush1.msra.mxu0 0.0
    %6316 = vmatprep.subr.mxu0 0.0
    %6317 = vmatpush1.msra.mxu0 0.0
    %6318 = vmatprep.subr.mxu0 0.0
    %6319 = vmatpush1.msra.mxu0 0.0
    %6320 = vmatprep.subr.mxu0 0.0
    %6321 = vmatpush1.msra.mxu0 0.0
    %6322 = vmatprep.subr.mxu0 0.0
    %6323 = vmatpush1.msra.mxu0 0.0
    %6324 = vmatprep.subr.mxu0 0.0
    %6325 = vmatpush1.msra.mxu0 0.0
    %6326 = vmatprep.subr.mxu0 0.0
    %6327 = vmatpush1.msra.mxu0 0.0
    %6328 = vmatprep.subr.mxu0 0.0
    %6329 = vmatpush1.msra.mxu0 0.0
    %6330 = vmatprep.subr.mxu0 0.0
    %6331 = vmatpush1.msra.mxu0 0.0
    %6332 = vmatprep.mubr.f32.mxu0 0.0
    %6333 = vmatmul.mubr.f32.gmra.mrb[0].mxu0 %v6266
    %v6334 = vpop.f32.mrb[0].mxu0
    %v6335 = vadd.f32 %v6262, %v6334
    %v6336 = vpop.f32.mrb[0].mxu0
    %6337 = vdwg.mxu0
    %s6338 = scalar_lea.vmem %s71, 8
    %v6339 = vld [vmem:[%s6338] sm:$0xf]
    %v6341 = vsel %vm6106, %v6339, 0
    %6343 = vmatprep.subr.mxu0 0.0
    %6344 = vmatpush1.msra.mxu0 %v6112
    %6345 = vmatprep.subr.mxu0 0.0
    %6346 = vmatpush1.msra.mxu0 0.0
    %6347 = vmatprep.subr.mxu0 0.0
    %6348 = vmatpush1.msra.mxu0 0.0
    %6349 = vmatprep.subr.mxu0 0.0
    %6350 = vmatpush1.msra.mxu0 0.0
    %6351 = vmatprep.subr.mxu0 0.0
    %6352 = vmatpush1.msra.mxu0 0.0
    %6353 = vmatprep.subr.mxu0 0.0
    %6354 = vmatpush1.msra.mxu0 0.0
    %6355 = vmatprep.subr.mxu0 0.0
    %6356 = vmatpush1.msra.mxu0 0.0
    %6357 = vmatprep.subr.mxu0 0.0
    %6358 = vmatpush1.msra.mxu0 0.0
    %6359 = vmatprep.subr.mxu0 0.0
    %6360 = vmatpush1.msra.mxu0 0.0
    %6361 = vmatprep.subr.mxu0 0.0
    %6362 = vmatpush1.msra.mxu0 0.0
    %6363 = vmatprep.subr.mxu0 0.0
    %6364 = vmatpush1.msra.mxu0 0.0
    %6365 = vmatprep.subr.mxu0 0.0
    %6366 = vmatpush1.msra.mxu0 0.0
    %6367 = vmatprep.subr.mxu0 0.0
    %6368 = vmatpush1.msra.mxu0 0.0
    %6369 = vmatprep.subr.mxu0 0.0
    %6370 = vmatpush1.msra.mxu0 0.0
    %6371 = vmatprep.subr.mxu0 0.0
    %6372 = vmatpush1.msra.mxu0 0.0
    %6373 = vmatprep.subr.mxu0 0.0
    %6374 = vmatpush1.msra.mxu0 0.0
    %6375 = vmatprep.subr.mxu0 0.0
    %6376 = vmatpush1.msra.mxu0 0.0
    %6377 = vmatprep.subr.mxu0 0.0
    %6378 = vmatpush1.msra.mxu0 0.0
    %6379 = vmatprep.subr.mxu0 0.0
    %6380 = vmatpush1.msra.mxu0 0.0
    %6381 = vmatprep.subr.mxu0 0.0
    %6382 = vmatpush1.msra.mxu0 0.0
    %6383 = vmatprep.subr.mxu0 0.0
    %6384 = vmatpush1.msra.mxu0 0.0
    %6385 = vmatprep.subr.mxu0 0.0
    %6386 = vmatpush1.msra.mxu0 0.0
    %6387 = vmatprep.subr.mxu0 0.0
    %6388 = vmatpush1.msra.mxu0 0.0
    %6389 = vmatprep.subr.mxu0 0.0
    %6390 = vmatpush1.msra.mxu0 0.0
    %6391 = vmatprep.subr.mxu0 0.0
    %6392 = vmatpush1.msra.mxu0 0.0
    %6393 = vmatprep.subr.mxu0 0.0
    %6394 = vmatpush1.msra.mxu0 0.0
    %6395 = vmatprep.subr.mxu0 0.0
    %6396 = vmatpush1.msra.mxu0 0.0
    %6397 = vmatprep.subr.mxu0 0.0
    %6398 = vmatpush1.msra.mxu0 0.0
    %6399 = vmatprep.subr.mxu0 0.0
    %6400 = vmatpush1.msra.mxu0 0.0
    %6401 = vmatprep.subr.mxu0 0.0
    %6402 = vmatpush1.msra.mxu0 0.0
    %6403 = vmatprep.subr.mxu0 0.0
    %6404 = vmatpush1.msra.mxu0 0.0
    %6405 = vmatprep.subr.mxu0 0.0
    %6406 = vmatpush1.msra.mxu0 0.0
    %6407 = vmatprep.mubr.f32.mxu0 0.0
    %6408 = vmatmul.mubr.f32.gmra.mrb[0].mxu0 %v6341
    %v6409 = vpop.f32.mrb[0].mxu0
    %v6410 = vadd.f32 0.0, %v6409
    %v6411 = vpop.f32.mrb[0].mxu0
    %6412 = vdwg.mxu0
    %s6413 = scalar_lea.vmem %s73, 64
    %v6414 = vld [vmem:[%s6413] sm:$0xff]
    %v6415 = vld [vmem:[%s6413 + $0x8] sm:$0xff]
    %v6416 = vld [vmem:[%s6413 + $0x10] sm:$0xff]
    %v6417 = vld [vmem:[%s6413 + $0x18] sm:$0xff]
    %v6419 = vsel %vm2304, %v6410, 0
    %6421 = vmatprep.subr.mxu0 0.0
    %6422 = vmatpush1.msra.mxu0 %v6414
    %6423 = vmatprep.subr.mxu0 0.0
    %6424 = vmatpush1.msra.mxu0 %v6415
    %6425 = vmatprep.subr.mxu0 0.0
    %6426 = vmatpush1.msra.mxu0 %v6416
    %6427 = vmatprep.subr.mxu0 0.0
    %6428 = vmatpush1.msra.mxu0 %v6417
    %6429 = vmatprep.subr.mxu0 0.0
    %6430 = vmatpush1.msra.mxu0 0.0
    %6431 = vmatprep.subr.mxu0 0.0
    %6432 = vmatpush1.msra.mxu0 0.0
    %6433 = vmatprep.subr.mxu0 0.0
    %6434 = vmatpush1.msra.mxu0 0.0
    %6435 = vmatprep.subr.mxu0 0.0
    %6436 = vmatpush1.msra.mxu0 0.0
    %6437 = vmatprep.subr.mxu0 0.0
    %6438 = vmatpush1.msra.mxu0 0.0
    %6439 = vmatprep.subr.mxu0 0.0
    %6440 = vmatpush1.msra.mxu0 0.0
    %6441 = vmatprep.subr.mxu0 0.0
    %6442 = vmatpush1.msra.mxu0 0.0
    %6443 = vmatprep.subr.mxu0 0.0
    %6444 = vmatpush1.msra.mxu0 0.0
    %6445 = vmatprep.subr.mxu0 0.0
    %6446 = vmatpush1.msra.mxu0 0.0
    %6447 = vmatprep.subr.mxu0 0.0
    %6448 = vmatpush1.msra.mxu0 0.0
    %6449 = vmatprep.subr.mxu0 0.0
    %6450 = vmatpush1.msra.mxu0 0.0
    %6451 = vmatprep.subr.mxu0 0.0
    %6452 = vmatpush1.msra.mxu0 0.0
    %6453 = vmatprep.subr.mxu0 0.0
    %6454 = vmatpush1.msra.mxu0 0.0
    %6455 = vmatprep.subr.mxu0 0.0
    %6456 = vmatpush1.msra.mxu0 0.0
    %6457 = vmatprep.subr.mxu0 0.0
    %6458 = vmatpush1.msra.mxu0 0.0
    %6459 = vmatprep.subr.mxu0 0.0
    %6460 = vmatpush1.msra.mxu0 0.0
    %6461 = vmatprep.subr.mxu0 0.0
    %6462 = vmatpush1.msra.mxu0 0.0
    %6463 = vmatprep.subr.mxu0 0.0
    %6464 = vmatpush1.msra.mxu0 0.0
    %6465 = vmatprep.subr.mxu0 0.0
    %6466 = vmatpush1.msra.mxu0 0.0
    %6467 = vmatprep.subr.mxu0 0.0
    %6468 = vmatpush1.msra.mxu0 0.0
    %6469 = vmatprep.subr.mxu0 0.0
    %6470 = vmatpush1.msra.mxu0 0.0
    %6471 = vmatprep.subr.mxu0 0.0
    %6472 = vmatpush1.msra.mxu0 0.0
    %6473 = vmatprep.subr.mxu0 0.0
    %6474 = vmatpush1.msra.mxu0 0.0
    %6475 = vmatprep.subr.mxu0 0.0
    %6476 = vmatpush1.msra.mxu0 0.0
    %6477 = vmatprep.subr.mxu0 0.0
    %6478 = vmatpush1.msra.mxu0 0.0
    %6479 = vmatprep.subr.mxu0 0.0
    %6480 = vmatpush1.msra.mxu0 0.0
    %6481 = vmatprep.subr.mxu0 0.0
    %6482 = vmatpush1.msra.mxu0 0.0
    %6483 = vmatprep.subr.mxu0 0.0
    %6484 = vmatpush1.msra.mxu0 0.0
    %6485 = vmatprep.mubr.f32.mxu0 0.0
    %6486 = vmatmul.mubr.f32.gmra.mrb[0].mxu0 %v6419
    %v6487 = vpop.f32.mrb[0].mxu0
    %v6488 = vadd.f32 0.0, %v6487
    %v6489 = vpop.f32.mrb[0].mxu0
    %6490 = vdwg.mxu0
    %v6491 = vadd.f32 %v6335, %v6488
    %v6492 = vld [vmem:[%s75] sm:$0x1]
    %v6494 = vlaneseq
    %v6495 = vshrl.u32 %v6494, 7
    %v6496 = vsub.s32 0, %v6495
    %v6497 = vrot.slane %v6492, %v6496
    %v6499 = vadd.f32 %v6491, %v6497
    %v6500 = vadd.f32 %v6499, %v5635
    %v6501 = vmax.f32 %v6500, 0.0
    %v6502 = vld [vmem:[%s77] sm:$0x3]
    %v6504 = vsel %vm6106, %v6502, 0
    %v6507 = vsel %vm6110, %v6501, 0
    %6509 = vmatprep.subr.mxu0 0.0
    %6510 = vmatpush1.msra.mxu0 %v6507
    %6511 = vmatprep.subr.mxu0 0.0
    %6512 = vmatpush1.msra.mxu0 0.0
    %6513 = vmatprep.subr.mxu0 0.0
    %6514 = vmatpush1.msra.mxu0 0.0
    %6515 = vmatprep.subr.mxu0 0.0
    %6516 = vmatpush1.msra.mxu0 0.0
    %6517 = vmatprep.subr.mxu0 0.0
    %6518 = vmatpush1.msra.mxu0 0.0
    %6519 = vmatprep.subr.mxu0 0.0
    %6520 = vmatpush1.msra.mxu0 0.0
    %6521 = vmatprep.subr.mxu0 0.0
    %6522 = vmatpush1.msra.mxu0 0.0
    %6523 = vmatprep.subr.mxu0 0.0
    %6524 = vmatpush1.msra.mxu0 0.0
    %6525 = vmatprep.subr.mxu0 0.0
    %6526 = vmatpush1.msra.mxu0 0.0
    %6527 = vmatprep.subr.mxu0 0.0
    %6528 = vmatpush1.msra.mxu0 0.0
    %6529 = vmatprep.subr.mxu0 0.0
    %6530 = vmatpush1.msra.mxu0 0.0
    %6531 = vmatprep.subr.mxu0 0.0
    %6532 = vmatpush1.msra.mxu0 0.0
    %6533 = vmatprep.subr.mxu0 0.0
    %6534 = vmatpush1.msra.mxu0 0.0
    %6535 = vmatprep.subr.mxu0 0.0
    %6536 = vmatpush1.msra.mxu0 0.0
    %6537 = vmatprep.subr.mxu0 0.0
    %6538 = vmatpush1.msra.mxu0 0.0
    %6539 = vmatprep.subr.mxu0 0.0
    %6540 = vmatpush1.msra.mxu0 0.0
    %6541 = vmatprep.subr.mxu0 0.0
    %6542 = vmatpush1.msra.mxu0 0.0
    %6543 = vmatprep.subr.mxu0 0.0
    %6544 = vmatpush1.msra.mxu0 0.0
    %6545 = vmatprep.subr.mxu0 0.0
    %6546 = vmatpush1.msra.mxu0 0.0
    %6547 = vmatprep.subr.mxu0 0.0
    %6548 = vmatpush1.msra.mxu0 0.0
    %6549 = vmatprep.subr.mxu0 0.0
    %6550 = vmatpush1.msra.mxu0 0.0
    %6551 = vmatprep.subr.mxu0 0.0
    %6552 = vmatpush1.msra.mxu0 0.0
    %6553 = vmatprep.subr.mxu0 0.0
    %6554 = vmatpush1.msra.mxu0 0.0
    %6555 = vmatprep.subr.mxu0 0.0
    %6556 = vmatpush1.msra.mxu0 0.0
    %6557 = vmatprep.subr.mxu0 0.0
    %6558 = vmatpush1.msra.mxu0 0.0
    %6559 = vmatprep.subr.mxu0 0.0
    %6560 = vmatpush1.msra.mxu0 0.0
    %6561 = vmatprep.subr.mxu0 0.0
    %6562 = vmatpush1.msra.mxu0 0.0
    %6563 = vmatprep.subr.mxu0 0.0
    %6564 = vmatpush1.msra.mxu0 0.0
    %6565 = vmatprep.subr.mxu0 0.0
    %6566 = vmatpush1.msra.mxu0 0.0
    %6567 = vmatprep.subr.mxu0 0.0
    %6568 = vmatpush1.msra.mxu0 0.0
    %6569 = vmatprep.subr.mxu0 0.0
    %6570 = vmatpush1.msra.mxu0 0.0
    %6571 = vmatprep.subr.mxu0 0.0
    %6572 = vmatpush1.msra.mxu0 0.0
    %6573 = vmatprep.mubr.f32.mxu0 0.0
    %6574 = vmatmul.mubr.f32.gmra.mrb[0].mxu0 %v6504
    %v6575 = vpop.f32.mrb[0].mxu0
    %v6576 = vadd.f32 0.0, %v6575
    %v6577 = vpop.f32.mrb[0].mxu0
    %6578 = vdwg.mxu0
    %v6579 = vld [vmem:[%s79] sm:$0xff]
    %v6580 = vld [vmem:[%s79 + $0x8] sm:$0xff]
    %v6581 = vld [vmem:[%s79 + $0x10] sm:$0xff]
    %v6582 = vld [vmem:[%s79 + $0x18] sm:$0xff]
    %v6583 = vld [vmem:[%s81] sm:$0x1]
    %v6585 = vlaneseq
    %v6586 = vshrl.u32 %v6585, 7
    %v6587 = vsub.s32 0, %v6586
    %v6588 = vrot.slane %v6583, %v6587
    %v6591 = vsel %vm2304, %v6576, 0
    %6593 = vmatprep.subr.mxu0 0.0
    %6594 = vmatpush1.msra.mxu0 %v6579
    %6595 = vmatprep.subr.mxu0 0.0
    %6596 = vmatpush1.msra.mxu0 %v6580
    %6597 = vmatprep.subr.mxu0 0.0
    %6598 = vmatpush1.msra.mxu0 %v6581
    %6599 = vmatprep.subr.mxu0 0.0
    %6600 = vmatpush1.msra.mxu0 %v6582
    %6601 = vmatprep.subr.mxu0 0.0
    %6602 = vmatpush1.msra.mxu0 0.0
    %6603 = vmatprep.subr.mxu0 0.0
    %6604 = vmatpush1.msra.mxu0 0.0
    %6605 = vmatprep.subr.mxu0 0.0
    %6606 = vmatpush1.msra.mxu0 0.0
    %6607 = vmatprep.subr.mxu0 0.0
    %6608 = vmatpush1.msra.mxu0 0.0
    %6609 = vmatprep.subr.mxu0 0.0
    %6610 = vmatpush1.msra.mxu0 0.0
    %6611 = vmatprep.subr.mxu0 0.0
    %6612 = vmatpush1.msra.mxu0 0.0
    %6613 = vmatprep.subr.mxu0 0.0
    %6614 = vmatpush1.msra.mxu0 0.0
    %6615 = vmatprep.subr.mxu0 0.0
    %6616 = vmatpush1.msra.mxu0 0.0
    %6617 = vmatprep.subr.mxu0 0.0
    %6618 = vmatpush1.msra.mxu0 0.0
    %6619 = vmatprep.subr.mxu0 0.0
    %6620 = vmatpush1.msra.mxu0 0.0
    %6621 = vmatprep.subr.mxu0 0.0
    %6622 = vmatpush1.msra.mxu0 0.0
    %6623 = vmatprep.subr.mxu0 0.0
    %6624 = vmatpush1.msra.mxu0 0.0
    %6625 = vmatprep.subr.mxu0 0.0
    %6626 = vmatpush1.msra.mxu0 0.0
    %6627 = vmatprep.subr.mxu0 0.0
    %6628 = vmatpush1.msra.mxu0 0.0
    %6629 = vmatprep.subr.mxu0 0.0
    %6630 = vmatpush1.msra.mxu0 0.0
    %6631 = vmatprep.subr.mxu0 0.0
    %6632 = vmatpush1.msra.mxu0 0.0
    %6633 = vmatprep.subr.mxu0 0.0
    %6634 = vmatpush1.msra.mxu0 0.0
    %6635 = vmatprep.subr.mxu0 0.0
    %6636 = vmatpush1.msra.mxu0 0.0
    %6637 = vmatprep.subr.mxu0 0.0
    %6638 = vmatpush1.msra.mxu0 0.0
    %6639 = vmatprep.subr.mxu0 0.0
    %6640 = vmatpush1.msra.mxu0 0.0
    %6641 = vmatprep.subr.mxu0 0.0
    %6642 = vmatpush1.msra.mxu0 0.0
    %6643 = vmatprep.subr.mxu0 0.0
    %6644 = vmatpush1.msra.mxu0 0.0
    %6645 = vmatprep.subr.mxu0 0.0
    %6646 = vmatpush1.msra.mxu0 0.0
    %6647 = vmatprep.subr.mxu0 0.0
    %6648 = vmatpush1.msra.mxu0 0.0
    %6649 = vmatprep.subr.mxu0 0.0
    %6650 = vmatpush1.msra.mxu0 0.0
    %6651 = vmatprep.subr.mxu0 0.0
    %6652 = vmatpush1.msra.mxu0 0.0
    %6653 = vmatprep.subr.mxu0 0.0
    %6654 = vmatpush1.msra.mxu0 0.0
    %6655 = vmatprep.subr.mxu0 0.0
    %6656 = vmatpush1.msra.mxu0 0.0
    %6657 = vmatprep.mubr.f32.mxu0 0.0
    %6658 = vmatmul.mubr.f32.gmra.mrb[0].mxu0 %v6591
    %v6659 = vpop.f32.mrb[0].mxu0
    %v6660 = vadd.f32 %v6588, %v6659
    %v6661 = vpop.f32.mrb[0].mxu0
    %6662 = vdwg.mxu0
    %vm6663 = vcmask 74752
    %6664 = vst.msk [vmem:[#allocation2] sm:$0x3] %vm6663, %v6660
    // Predicated region
    $region166: #{resnet1d_small_forward.1} parent=1 // pred_check
      _
    $region167: #{resnet1d_small_forward.1} parent=1 // pred_check_branch
      %6666 = sbr.rel (0) target = $region169
    $region168: #{resnet1d_small_forward.1} parent=1 // pred_region
      %s6668 = ssub.s32 32, 32
      %6669 = vsyncadd [#allocation3], %s6668
      %s6671 = sshll.u32 [#allocation2], 4
      %s6672 = int_to_ptr.vmem [resolvable:$true] %s6671
      %6674 = dma.vmem_to_hbm [thread:$0]  %s6672, 32, %s83, [#allocation3]
    $region169: #{resnet1d_small_forward.1} parent=1 // pred_fallthru
      _
    // Predicated region
    $region170: #{resnet1d_small_forward.1} parent=1 // pred_check
      _
    $region171: #{resnet1d_small_forward.1} parent=1 // pred_check_branch
      %6676 = sbr.rel (0) target = $region173
    $region172: #{resnet1d_small_forward.1} parent=1 // pred_region
      %6677 = dma.done [#allocation3], 32
    $region173: #{resnet1d_small_forward.1} parent=1 // pred_fallthru
      _
    %6678 = vsyncpa [#allocation3], 1

</llo_original>
